<compile_context>
chip_gen: v6e
topology: v6e:2x2x1
jax: 0.10.0
libtpu: 0.0.40
codegen_flags: <defaults>
</compile_context>

<pallas_src>
import jax
import jax.numpy as jnp
from jax import lax
from jax.experimental import pallas as pl
from jax.experimental.pallas import tpu as pltpu

CP = 128                 # lane-dense padded channel width
NP = 128                 # lane-dense padded logits width (num_classes <= 128)
KS_LIST = (8, 5, 3)      # Conv1DBlock kernel sizes inside every ResNet1DBlock
KMAX = max(KS_LIST)
N_BLOCKS = 3
_BN_EPS = 1e-5
_TARGET_M = 256          # target rows per conv matmul (v6e/v7x MXU is 256 wide; >=128 for v5e)


# ----------------------------------------------------------------------------
# Fused forward kernel
# ----------------------------------------------------------------------------

def _make_fused_kernel(b_tile, L, mismatch, pool_type):
    """Builds the fused kernel body (closure over static config)."""
    M = b_tile * L  # flat activation rows per grid step

    def kernel(x_ref, w8_ref, w5_ref, w3_ref, sc_ref, sh_ref,
               scr_ref, shr_ref, wl_ref, bl_ref, o_ref, h_ref, res_ref):
        w_by_ks = {8: w8_ref, 5: w5_ref, 3: w3_ref}
        # Per-batch-element row index, hoisted once (JAX does not CSE iota/broadcast in loops).
        row = lax.broadcasted_iota(jnp.int32, (b_tile, L, CP), 1).reshape(M, CP)
        # Permanent zero tail so the last element's shifted windows read defined zeros.
        h_ref[M:M + KMAX - 1, :] = jnp.zeros((KMAX - 1, CP), jnp.bfloat16)

        act = x_ref[...].reshape(M, CP)               # (M, CP) f32; padded lanes are zero
        ci = 0
        for blk in range(N_BLOCKS):
            if not mismatch[blk]:
                # Stash the residual input in VMEM instead of carrying ~M*CP f32 live in
                # vregs across three matmuls (one vst/vld pair per block, spill-free hot loop).
                res_ref[...] = act
            for K in KS_LIST:
                Lout = L - K + 1
                # Stage the activation (bf16) so shifted im2col windows are plain ref slices.
                h_ref[0:M, :] = act.astype(jnp.bfloat16)
                # im2col: one lane-dense bf16 MXU matmul, M = b_tile*L, contraction K*CP.
                cols = jnp.concatenate(
                    [h_ref[k:k + M, :] for k in range(K)], axis=1)        # (M, K*CP) bf16
                y = jnp.dot(cols, w_by_ks[K][blk],
                            preferred_element_type=jnp.float32)           # (M, CP) f32
                # folded (eval) BatchNorm + ReLU (padded lanes: scale = shift = 0 -> stay 0)
                y = jnp.maximum(y * sc_ref[ci] + sh_ref[ci], 0.0)
                # valid conv has Lout rows; ConstantPad1d((0, L-Lout), 0) -> zero rows >= Lout.
                # This also kills rows whose window crossed into the next batch element.
                act = jnp.where(row < Lout, y, 0.0)
                ci += 1
            if mismatch[blk]:
                # PyTorch quirk: res = bn_res(out); expand_res_channels result is discarded.
                act = jnp.maximum(act + (act * scr_ref[blk] + shr_ref[blk]), 0.0)
            else:
                act = jnp.maximum(act + res_ref[...], 0.0)
            # TODO(synk): Dropout(p=0.2) output is discarded in the original forward -> no-op.

        # permute(0,2,1) + MaxPool1d(2)/AvgPool1d(2): pool adjacent channel pairs (lanes).
        if pool_type == "max":
            # nbr[:, c] = act[:, (c+1) % 128]  (== jnp.roll(act, -1, axis=1); one XLU rotate).
            nbr = pltpu.roll(act, CP - 1, 1)
            pooled = jnp.maximum(act, nbr)            # valid pair-max sits on even lanes
        else:
            pooled = act                              # avg pool is folded into wl at init time

        # flatten + Linear as an accumulated per-position matmul (no sublane->lane flatten):
        # logits[b, n] = sum_l pooled[b, l, :] @ wl[l, :, n].  For 'max' the odd lanes of wl are
        # zero, so the cross-pair garbage on odd lanes never contributes.
        p3 = pooled.astype(jnp.bfloat16).reshape(b_tile, L, CP)
        logits = jnp.zeros((b_tile, NP), jnp.float32)
        for l in range(L):
            logits = logits + jnp.dot(p3[:, l, :], wl_ref[l],
                                      preferred_element_type=jnp.float32)
        o_ref[...] = (logits + bl_ref[...]).astype(o_ref.dtype)

    return kernel


def resnet1d_forward(x_ncl, params, b_tile=None):
    """x_ncl: (B, C_in, L) exactly like the PyTorch module's NCL input."""
    B, c_in, L = x_ncl.shape
    assert c_in <= CP and L >= KMAX
    ncls = params["num_classes"]
    pool_type = params["global_pool"]
    mismatch = params["mismatch"]

    if b_tile is None:
        # Aim for M = b_tile*L ~ 256 rows per conv matmul (saturates v6e/v7x MXU along M, and
        # >=128 saturates v5e).  For large B on v7x, callers can pass b_tile <= B//2 so the grid
        # keeps >=2 steps and dimension_semantics=("parallel",) can shard over both TensorCores.
        b_tile = max(1, min(B, _TARGET_M // max(L, 1)))
        if L % 8 != 0:
            b_tile = 1   # keeps (b_tile, L, CP) <-> (b_tile*L, CP) reshapes layout-trivial
    n_steps = pl.cdiv(B, b_tile)
    Bp = n_steps * b_tile
    M = b_tile * L

    # NCL -> channels-last; zero-pad channels to the 128-lane width (padded lanes stay zero
    # through the whole net because padded weights / BN scale+shift are zero) and pad the
    # batch up to a multiple of the tile.
    x = jnp.transpose(x_ncl, (0, 2, 1)).astype(jnp.float32)
    x = jnp.pad(x, ((0, Bp - B), (0, 0), (0, CP - c_in)))

    kernel = _make_fused_kernel(b_tile, L, mismatch, pool_type)
    out = pl.pallas_call(
        kernel,
        out_shape=jax.ShapeDtypeStruct((n_steps, b_tile, NP), jnp.float32),
        grid=(n_steps,),
        in_specs=[
            pl.BlockSpec((b_tile, L, CP), lambda g: (g, 0, 0)),           # x (batch tile)
            # All weight/BN specs below have constant index maps -> DMA'd once for the grid.
            pl.BlockSpec((N_BLOCKS, 8 * CP, CP), lambda g: (0, 0, 0)),    # ks=8 im2col W (bf16)
            pl.BlockSpec((N_BLOCKS, 5 * CP, CP), lambda g: (0, 0, 0)),    # ks=5 im2col W (bf16)
            pl.BlockSpec((N_BLOCKS, 3 * CP, CP), lambda g: (0, 0, 0)),    # ks=3 im2col W (bf16)
            pl.BlockSpec((3 * N_BLOCKS, 1, CP), lambda g: (0, 0, 0)),     # folded BN scale
            pl.BlockSpec((3 * N_BLOCKS, 1, CP), lambda g: (0, 0, 0)),     # folded BN shift
            pl.BlockSpec((N_BLOCKS, 1, CP), lambda g: (0, 0, 0)),         # bn_res scale
            pl.BlockSpec((N_BLOCKS, 1, CP), lambda g: (0, 0, 0)),         # bn_res shift
            pl.BlockSpec((L, CP, NP), lambda g: (0, 0, 0)),               # linear W (bf16)
            pl.BlockSpec((1, NP), lambda g: (0, 0)),                      # linear bias
        ],
        out_specs=pl.BlockSpec((None, b_tile, NP), lambda g: (g, 0, 0)),  # lane-dense logits
        scratch_shapes=[
            pltpu.VMEM((M + KMAX - 1, CP), jnp.bfloat16),  # im2col staging (+ zero tail)
            pltpu.VMEM((M, CP), jnp.float32),              # residual-input stash
        ],
        compiler_params=pltpu.CompilerParams(
            dimension_semantics=("parallel",),     # batch tiles split across TCs on v7x
            vmem_limit_bytes=32 * 1024 * 1024),    # safe on v5e/v6e/v7x for this budget
    )(x, params["w8"], params["w5"], params["w3"], params["scale"], params["shift"],
      params["scale_r"], params["shift_r"], params["lin_w"], params["lin_b"])
    return out.reshape(Bp, NP)[:B, :ncls]


# ----------------------------------------------------------------------------
# Parameter construction (deterministic, synthetic, eval-mode BN folded)
# ----------------------------------------------------------------------------

def _fold_bn(gamma, beta, rm, rv, conv_bias=None, eps=_BN_EPS):
    scale = gamma / jnp.sqrt(rv + eps)
    if conv_bias is None:
        shift = beta - rm * scale
    else:
        shift = (conv_bias - rm) * scale + beta
    return scale, shift


def _pad_row(v):
    out = jnp.zeros((1, CP), jnp.float32)
    return out.at[0, :v.shape[0]].set(v)


def init_resnet1d_params(key, c_in, length, num_classes, global_pool="max"):
    assert global_pool in ("max", "avg") and num_classes <= NP
    blocks_cfg = [(c_in, 64), (64, 128), (128, 128)]
    w_stacks = {ks: [] for ks in KS_LIST}
    scales, shifts, scale_r, shift_r, mismatch = [], [], [], [], []

    for ci, nf in blocks_cfg:
        cur = ci
        for ks in KS_LIST:
            key, sub = jax.random.split(key)
            kw, kb, kg, kbt, km, kv = jax.random.split(sub, 6)
            bound = (cur * ks) ** -0.5
            w = jax.random.uniform(kw, (nf, cur, ks), jnp.float32, -bound, bound)  # torch layout
            b = jax.random.uniform(kb, (nf,), jnp.float32, -bound, bound)
            gamma = jax.random.uniform(kg, (nf,), jnp.float32, 0.8, 1.2)
            beta = 0.05 * jax.random.normal(kbt, (nf,), jnp.float32)
            rm = 0.05 * jax.random.normal(km, (nf,), jnp.float32)
            rv = jax.random.uniform(kv, (nf,), jnp.float32, 0.5, 1.5)
            sc, sh = _fold_bn(gamma, beta, rm, rv, conv_bias=b)
            # im2col weight (ks*CP, CP): row = k*CP + c_in, col = c_out ; zero-padded lanes.
            w_t = jnp.transpose(w, (2, 1, 0))                                   # (ks, cur, nf)
            w_p = jnp.zeros((ks, CP, CP), jnp.float32).at[:, :cur, :nf].set(w_t)
            w_stacks[ks].append(w_p.reshape(ks * CP, CP))
            scales.append(_pad_row(sc))
            shifts.append(_pad_row(sh))
            cur = nf
        mm = (ci != nf)
        mismatch.append(mm)
        if mm:
            key, sub = jax.random.split(key)
            kg, kbt, km, kv = jax.random.split(sub, 4)
            gamma = jax.random.uniform(kg, (nf,), jnp.float32, 0.8, 1.2)
            beta = 0.05 * jax.random.normal(kbt, (nf,), jnp.float32)
            rm = 0.05 * jax.random.normal(km, (nf,), jnp.float32)
            rv = jax.random.uniform(kv, (nf,), jnp.float32, 0.5, 1.5)
            sc, sh = _fold_bn(gamma, beta, rm, rv)
            scale_r.append(_pad_row(sc))
            shift_r.append(_pad_row(sh))
            # TODO(synk): expand_res_channels conv params are dead code in the original forward
            # (its result is overwritten by bn_res(out)); not initialized.
        else:
            scale_r.append(jnp.zeros((1, CP), jnp.float32))
            shift_r.append(jnp.zeros((1, CP), jnp.float32))

    # Linear: in_features = 128*L/2; PyTorch flat index = l*64 + j for channel pair (2j, 2j+1).
    in_feat = int(128 * length / 2)
    key, kw, kb = jax.random.split(key, 3)
    bound = in_feat ** -0.5
    w_lin = jax.random.uniform(kw, (num_classes, in_feat), jnp.float32, -bound, bound)
    b_lin = jax.random.uniform(kb, (num_classes,), jnp.float32, -bound, bound)
    w_pairs = jnp.transpose(w_lin).reshape(length, CP // 2, num_classes)       # (L, 64, ncls)
    w_exp = jnp.zeros((length, CP, NP), jnp.float32)
    if global_pool == "max":
        # In-kernel pair-max lives on even lanes; odd lanes (cross-pair garbage) get 0 weight.
        w_exp = w_exp.at[:, 0::2, :num_classes].set(w_pairs)
    else:
        # Avg pool is linear -> fold 0.5*(c_2j + c_2j+1) into the weights; kernel skips pooling.
        w_exp = w_exp.at[:, 0::2, :num_classes].set(0.5 * w_pairs)
        w_exp = w_exp.at[:, 1::2, :num_classes].set(0.5 * w_pairs)
    b_pad = jnp.zeros((1, NP), jnp.float32).at[0, :num_classes].set(b_lin)

    return dict(
        w8=jnp.stack(w_stacks[8]).astype(jnp.bfloat16),
        w5=jnp.stack(w_stacks[5]).astype(jnp.bfloat16),
        w3=jnp.stack(w_stacks[3]).astype(jnp.bfloat16),
        scale=jnp.stack(scales), shift=jnp.stack(shifts),
        scale_r=jnp.stack(scale_r), shift_r=jnp.stack(shift_r),
        lin_w=w_exp.astype(jnp.bfloat16), lin_b=b_pad,
        mismatch=tuple(mismatch), num_classes=num_classes, global_pool=global_pool,
    )


# ----------------------------------------------------------------------------
# Demo
# ----------------------------------------------------------------------------

if __name__ == "__main__":
    B, C_IN, L = 2, 4, 16          # params['input_shape'] = (C_IN, L)
    NUM_CLASSES = 10               # params['num_output_classes']

    key = jax.random.PRNGKey(0)
    kx, kp = jax.random.split(key)
    x = jax.random.normal(kx, (B, C_IN, L), jnp.float32)
    params = init_resnet1d_params(kp, C_IN, L, NUM_CLASSES, global_pool="max")

    out = resnet1d_forward(x, params)
    out = jax.block_until_ready(out)
    assert out.shape == (B, NUM_CLASSES) and out.dtype == jnp.float32
    print("KERNEL_OK")
</pallas_src>

<mosaic_0001>
module attributes {stable_mosaic.version = 11 : i64} {
  func.func @kernel(%arg0: i32, %arg1: memref<2x16x128xf32, #tpu.memory_space<vmem>>, %arg2: memref<3x1024x128xbf16, #tpu.memory_space<vmem>>, %arg3: memref<3x640x128xbf16, #tpu.memory_space<vmem>>, %arg4: memref<3x384x128xbf16, #tpu.memory_space<vmem>>, %arg5: memref<9x1x128xf32, #tpu.memory_space<vmem>>, %arg6: memref<9x1x128xf32, #tpu.memory_space<vmem>>, %arg7: memref<3x1x128xf32, #tpu.memory_space<vmem>>, %arg8: memref<3x1x128xf32, #tpu.memory_space<vmem>>, %arg9: memref<16x128x128xbf16, #tpu.memory_space<vmem>>, %arg10: memref<1x128xf32, #tpu.memory_space<vmem>>, %arg11: memref<1x2x128xf32, #tpu.memory_space<vmem>>, %arg12: memref<39x128xbf16, #tpu.memory_space<vmem>>, %arg13: memref<32x128xf32, #tpu.memory_space<vmem>>) attributes {dimension_semantics = [#tpu.dimension_semantics<parallel>], iteration_bounds = array<i64: 1>, scalar_prefetch = 0 : i64, scratch_operands = 2 : i64, tpu.core_type = #tpu.core_type<tc>, window_params = [{transform_indices = @transform_0, window_bounds = array<i64: 2, 16, 128>}, {pipeline_mode = #tpu.pipeline_mode<synchronous>, transform_indices = @transform_1, window_bounds = array<i64: 3, 1024, 128>}, {pipeline_mode = #tpu.pipeline_mode<synchronous>, transform_indices = @transform_2, window_bounds = array<i64: 3, 640, 128>}, {pipeline_mode = #tpu.pipeline_mode<synchronous>, transform_indices = @transform_3, window_bounds = array<i64: 3, 384, 128>}, {pipeline_mode = #tpu.pipeline_mode<synchronous>, transform_indices = @transform_4, window_bounds = array<i64: 9, 1, 128>}, {pipeline_mode = #tpu.pipeline_mode<synchronous>, transform_indices = @transform_5, window_bounds = array<i64: 9, 1, 128>}, {pipeline_mode = #tpu.pipeline_mode<synchronous>, transform_indices = @transform_6, window_bounds = array<i64: 3, 1, 128>}, {pipeline_mode = #tpu.pipeline_mode<synchronous>, transform_indices = @transform_7, window_bounds = array<i64: 3, 1, 128>}, {pipeline_mode = #tpu.pipeline_mode<synchronous>, transform_indices = @transform_8, window_bounds = array<i64: 16, 128, 128>}, {pipeline_mode = #tpu.pipeline_mode<synchronous>, transform_indices = @transform_9, window_bounds = array<i64: 1, 128>}, {transform_indices = @transform_10, window_bounds = array<i64: 1, 2, 128>}]} {
    %0 = tpu.iota {dimensions = array<i32: 1>} : vector<2x16x128xi32>
    %1 = vector.shape_cast %0 : vector<2x16x128xi32> to vector<32x128xi32>
    %cst = arith.constant 0.000000e+00 : bf16
    %2 = vector.broadcast %cst : bf16 to vector<7x128xbf16>
    %c32 = arith.constant 32 : index
    %c0 = arith.constant 0 : index
    %3 = vector.load %arg12[%c32, %c0] : memref<39x128xbf16, #tpu.memory_space<vmem>>, vector<7x128xbf16>
    tpu.vector_store %arg12[%c32, %c0], %2 {strides = array<i32>} : memref<39x128xbf16, #tpu.memory_space<vmem>>, vector<7x128xbf16>,
    %c0_0 = arith.constant 0 : index
    %c0_1 = arith.constant 0 : index
    %c0_2 = arith.constant 0 : index
    %4 = vector.load %arg1[%c0_0, %c0_1, %c0_2] : memref<2x16x128xf32, #tpu.memory_space<vmem>>, vector<2x16x128xf32>
    %5 = vector.shape_cast %4 : vector<2x16x128xf32> to vector<32x128xf32>
    %6 = arith.truncf %5 : vector<32x128xf32> to vector<32x128xbf16>
    %c0_3 = arith.constant 0 : index
    %c0_4 = arith.constant 0 : index
    %7 = vector.load %arg12[%c0_3, %c0_4] : memref<39x128xbf16, #tpu.memory_space<vmem>>, vector<32x128xbf16>
    tpu.vector_store %arg12[%c0_3, %c0_4], %6 {strides = array<i32>} : memref<39x128xbf16, #tpu.memory_space<vmem>>, vector<32x128xbf16>,
    %c0_5 = arith.constant 0 : index
    %c0_6 = arith.constant 0 : index
    %8 = vector.load %arg12[%c0_5, %c0_6] : memref<39x128xbf16, #tpu.memory_space<vmem>>, vector<32x128xbf16>
    %c1 = arith.constant 1 : index
    %c0_7 = arith.constant 0 : index
    %9 = vector.load %arg12[%c1, %c0_7] : memref<39x128xbf16, #tpu.memory_space<vmem>>, vector<32x128xbf16>
    %c2 = arith.constant 2 : index
    %c0_8 = arith.constant 0 : index
    %10 = vector.load %arg12[%c2, %c0_8] : memref<39x128xbf16, #tpu.memory_space<vmem>>, vector<32x128xbf16>
    %c3 = arith.constant 3 : index
    %c0_9 = arith.constant 0 : index
    %11 = vector.load %arg12[%c3, %c0_9] : memref<39x128xbf16, #tpu.memory_space<vmem>>, vector<32x128xbf16>
    %c4 = arith.constant 4 : index
    %c0_10 = arith.constant 0 : index
    %12 = vector.load %arg12[%c4, %c0_10] : memref<39x128xbf16, #tpu.memory_space<vmem>>, vector<32x128xbf16>
    %c5 = arith.constant 5 : index
    %c0_11 = arith.constant 0 : index
    %13 = vector.load %arg12[%c5, %c0_11] : memref<39x128xbf16, #tpu.memory_space<vmem>>, vector<32x128xbf16>
    %c6 = arith.constant 6 : index
    %c0_12 = arith.constant 0 : index
    %14 = vector.load %arg12[%c6, %c0_12] : memref<39x128xbf16, #tpu.memory_space<vmem>>, vector<32x128xbf16>
    %c7 = arith.constant 7 : index
    %c0_13 = arith.constant 0 : index
    %15 = vector.load %arg12[%c7, %c0_13] : memref<39x128xbf16, #tpu.memory_space<vmem>>, vector<32x128xbf16>
    %16 = tpu.concatenate %8, %9, %10, %11, %12, %13, %14, %15 in 1 : vector<32x128xbf16>, vector<32x128xbf16>, vector<32x128xbf16>, vector<32x128xbf16>, vector<32x128xbf16>, vector<32x128xbf16>, vector<32x128xbf16>, vector<32x128xbf16> -> vector<32x1024xbf16>
    %c0_14 = arith.constant 0 : index
    %c0_15 = arith.constant 0 : index
    %c0_16 = arith.constant 0 : index
    %17 = vector.load %arg2[%c0_14, %c0_15, %c0_16] : memref<3x1024x128xbf16, #tpu.memory_space<vmem>>, vector<1x1024x128xbf16>
    %18 = vector.shape_cast %17 : vector<1x1024x128xbf16> to vector<1024x128xbf16>
    %cst_17 = arith.constant dense<0.000000e+00> : vector<32x128xf32>
    %19 = tpu.matmul %16, %18, %cst_17 {dimension_numbers = #tpu.dot_dimension_numbers<[1], [0], [0], [1], [0, 0, 1, 1], [], []>} : vector<32x1024xbf16>, vector<1024x128xbf16>, vector<32x128xf32> -> vector<32x128xf32>
    %c0_18 = arith.constant 0 : index
    %c0_19 = arith.constant 0 : index
    %c0_20 = arith.constant 0 : index
    %20 = vector.load %arg5[%c0_18, %c0_19, %c0_20] : memref<9x1x128xf32, #tpu.memory_space<vmem>>, vector<1x1x128xf32>
    %21 = vector.shape_cast %20 : vector<1x1x128xf32> to vector<1x128xf32>
    %22 = vector.broadcast %21 : vector<1x128xf32> to vector<32x128xf32>
    %23 = arith.mulf %19, %22 : vector<32x128xf32>
    %c0_21 = arith.constant 0 : index
    %c0_22 = arith.constant 0 : index
    %c0_23 = arith.constant 0 : index
    %24 = vector.load %arg6[%c0_21, %c0_22, %c0_23] : memref<9x1x128xf32, #tpu.memory_space<vmem>>, vector<1x1x128xf32>
    %25 = vector.shape_cast %24 : vector<1x1x128xf32> to vector<1x128xf32>
    %26 = vector.broadcast %25 : vector<1x128xf32> to vector<32x128xf32>
    %27 = arith.addf %23, %26 : vector<32x128xf32>
    %cst_24 = arith.constant 0.000000e+00 : f32
    %28 = vector.broadcast %cst_24 : f32 to vector<32x128xf32>
    %29 = arith.maximumf %27, %28 : vector<32x128xf32>
    %c9_i32 = arith.constant 9 : i32
    %30 = vector.broadcast %c9_i32 : i32 to vector<32x128xi32>
    %31 = arith.cmpi slt, %1, %30 : vector<32x128xi32>
    %cst_25 = arith.constant 0.000000e+00 : f32
    %32 = vector.broadcast %cst_25 : f32 to vector<32x128xf32>
    %33 = arith.select %31, %29, %32 : vector<32x128xi1>, vector<32x128xf32>
    %34 = arith.truncf %33 : vector<32x128xf32> to vector<32x128xbf16>
    %c0_26 = arith.constant 0 : index
    %c0_27 = arith.constant 0 : index
    %35 = vector.load %arg12[%c0_26, %c0_27] : memref<39x128xbf16, #tpu.memory_space<vmem>>, vector<32x128xbf16>
    tpu.vector_store %arg12[%c0_26, %c0_27], %34 {strides = array<i32>} : memref<39x128xbf16, #tpu.memory_space<vmem>>, vector<32x128xbf16>,
    %c0_28 = arith.constant 0 : index
    %c0_29 = arith.constant 0 : index
    %36 = vector.load %arg12[%c0_28, %c0_29] : memref<39x128xbf16, #tpu.memory_space<vmem>>, vector<32x128xbf16>
    %c1_30 = arith.constant 1 : index
    %c0_31 = arith.constant 0 : index
    %37 = vector.load %arg12[%c1_30, %c0_31] : memref<39x128xbf16, #tpu.memory_space<vmem>>, vector<32x128xbf16>
    %c2_32 = arith.constant 2 : index
    %c0_33 = arith.constant 0 : index
    %38 = vector.load %arg12[%c2_32, %c0_33] : memref<39x128xbf16, #tpu.memory_space<vmem>>, vector<32x128xbf16>
    %c3_34 = arith.constant 3 : index
    %c0_35 = arith.constant 0 : index
    %39 = vector.load %arg12[%c3_34, %c0_35] : memref<39x128xbf16, #tpu.memory_space<vmem>>, vector<32x128xbf16>
    %c4_36 = arith.constant 4 : index
    %c0_37 = arith.constant 0 : index
    %40 = vector.load %arg12[%c4_36, %c0_37] : memref<39x128xbf16, #tpu.memory_space<vmem>>, vector<32x128xbf16>
    %41 = tpu.concatenate %36, %37, %38, %39, %40 in 1 : vector<32x128xbf16>, vector<32x128xbf16>, vector<32x128xbf16>, vector<32x128xbf16>, vector<32x128xbf16> -> vector<32x640xbf16>
    %c0_38 = arith.constant 0 : index
    %c0_39 = arith.constant 0 : index
    %c0_40 = arith.constant 0 : index
    %42 = vector.load %arg3[%c0_38, %c0_39, %c0_40] : memref<3x640x128xbf16, #tpu.memory_space<vmem>>, vector<1x640x128xbf16>
    %43 = vector.shape_cast %42 : vector<1x640x128xbf16> to vector<640x128xbf16>
    %cst_41 = arith.constant dense<0.000000e+00> : vector<32x128xf32>
    %44 = tpu.matmul %41, %43, %cst_41 {dimension_numbers = #tpu.dot_dimension_numbers<[1], [0], [0], [1], [0, 0, 1, 1], [], []>} : vector<32x640xbf16>, vector<640x128xbf16>, vector<32x128xf32> -> vector<32x128xf32>
    %c1_42 = arith.constant 1 : index
    %c0_43 = arith.constant 0 : index
    %c0_44 = arith.constant 0 : index
    %45 = vector.load %arg5[%c1_42, %c0_43, %c0_44] : memref<9x1x128xf32, #tpu.memory_space<vmem>>, vector<1x1x128xf32>
    %46 = vector.shape_cast %45 : vector<1x1x128xf32> to vector<1x128xf32>
    %47 = vector.broadcast %46 : vector<1x128xf32> to vector<32x128xf32>
    %48 = arith.mulf %44, %47 : vector<32x128xf32>
    %c1_45 = arith.constant 1 : index
    %c0_46 = arith.constant 0 : index
    %c0_47 = arith.constant 0 : index
    %49 = vector.load %arg6[%c1_45, %c0_46, %c0_47] : memref<9x1x128xf32, #tpu.memory_space<vmem>>, vector<1x1x128xf32>
    %50 = vector.shape_cast %49 : vector<1x1x128xf32> to vector<1x128xf32>
    %51 = vector.broadcast %50 : vector<1x128xf32> to vector<32x128xf32>
    %52 = arith.addf %48, %51 : vector<32x128xf32>
    %cst_48 = arith.constant 0.000000e+00 : f32
    %53 = vector.broadcast %cst_48 : f32 to vector<32x128xf32>
    %54 = arith.maximumf %52, %53 : vector<32x128xf32>
    %c12_i32 = arith.constant 12 : i32
    %55 = vector.broadcast %c12_i32 : i32 to vector<32x128xi32>
    %56 = arith.cmpi slt, %1, %55 : vector<32x128xi32>
    %cst_49 = arith.constant 0.000000e+00 : f32
    %57 = vector.broadcast %cst_49 : f32 to vector<32x128xf32>
    %58 = arith.select %56, %54, %57 : vector<32x128xi1>, vector<32x128xf32>
    %59 = arith.truncf %58 : vector<32x128xf32> to vector<32x128xbf16>
    %c0_50 = arith.constant 0 : index
    %c0_51 = arith.constant 0 : index
    %60 = vector.load %arg12[%c0_50, %c0_51] : memref<39x128xbf16, #tpu.memory_space<vmem>>, vector<32x128xbf16>
    tpu.vector_store %arg12[%c0_50, %c0_51], %59 {strides = array<i32>} : memref<39x128xbf16, #tpu.memory_space<vmem>>, vector<32x128xbf16>,
    %c0_52 = arith.constant 0 : index
    %c0_53 = arith.constant 0 : index
    %61 = vector.load %arg12[%c0_52, %c0_53] : memref<39x128xbf16, #tpu.memory_space<vmem>>, vector<32x128xbf16>
    %c1_54 = arith.constant 1 : index
    %c0_55 = arith.constant 0 : index
    %62 = vector.load %arg12[%c1_54, %c0_55] : memref<39x128xbf16, #tpu.memory_space<vmem>>, vector<32x128xbf16>
    %c2_56 = arith.constant 2 : index
    %c0_57 = arith.constant 0 : index
    %63 = vector.load %arg12[%c2_56, %c0_57] : memref<39x128xbf16, #tpu.memory_space<vmem>>, vector<32x128xbf16>
    %64 = tpu.concatenate %61, %62, %63 in 1 : vector<32x128xbf16>, vector<32x128xbf16>, vector<32x128xbf16> -> vector<32x384xbf16>
    %c0_58 = arith.constant 0 : index
    %c0_59 = arith.constant 0 : index
    %c0_60 = arith.constant 0 : index
    %65 = vector.load %arg4[%c0_58, %c0_59, %c0_60] : memref<3x384x128xbf16, #tpu.memory_space<vmem>>, vector<1x384x128xbf16>
    %66 = vector.shape_cast %65 : vector<1x384x128xbf16> to vector<384x128xbf16>
    %cst_61 = arith.constant dense<0.000000e+00> : vector<32x128xf32>
    %67 = tpu.matmul %64, %66, %cst_61 {dimension_numbers = #tpu.dot_dimension_numbers<[1], [0], [0], [1], [0, 0, 1, 1], [], []>} : vector<32x384xbf16>, vector<384x128xbf16>, vector<32x128xf32> -> vector<32x128xf32>
    %c2_62 = arith.constant 2 : index
    %c0_63 = arith.constant 0 : index
    %c0_64 = arith.constant 0 : index
    %68 = vector.load %arg5[%c2_62, %c0_63, %c0_64] : memref<9x1x128xf32, #tpu.memory_space<vmem>>, vector<1x1x128xf32>
    %69 = vector.shape_cast %68 : vector<1x1x128xf32> to vector<1x128xf32>
    %70 = vector.broadcast %69 : vector<1x128xf32> to vector<32x128xf32>
    %71 = arith.mulf %67, %70 : vector<32x128xf32>
    %c2_65 = arith.constant 2 : index
    %c0_66 = arith.constant 0 : index
    %c0_67 = arith.constant 0 : index
    %72 = vector.load %arg6[%c2_65, %c0_66, %c0_67] : memref<9x1x128xf32, #tpu.memory_space<vmem>>, vector<1x1x128xf32>
    %73 = vector.shape_cast %72 : vector<1x1x128xf32> to vector<1x128xf32>
    %74 = vector.broadcast %73 : vector<1x128xf32> to vector<32x128xf32>
    %75 = arith.addf %71, %74 : vector<32x128xf32>
    %cst_68 = arith.constant 0.000000e+00 : f32
    %76 = vector.broadcast %cst_68 : f32 to vector<32x128xf32>
    %77 = arith.maximumf %75, %76 : vector<32x128xf32>
    %c14_i32 = arith.constant 14 : i32
    %78 = vector.broadcast %c14_i32 : i32 to vector<32x128xi32>
    %79 = arith.cmpi slt, %1, %78 : vector<32x128xi32>
    %cst_69 = arith.constant 0.000000e+00 : f32
    %80 = vector.broadcast %cst_69 : f32 to vector<32x128xf32>
    %81 = arith.select %79, %77, %80 : vector<32x128xi1>, vector<32x128xf32>
    %c0_70 = arith.constant 0 : index
    %c0_71 = arith.constant 0 : index
    %c0_72 = arith.constant 0 : index
    %82 = vector.load %arg7[%c0_70, %c0_71, %c0_72] : memref<3x1x128xf32, #tpu.memory_space<vmem>>, vector<1x1x128xf32>
    %83 = vector.shape_cast %82 : vector<1x1x128xf32> to vector<1x128xf32>
    %84 = vector.broadcast %83 : vector<1x128xf32> to vector<32x128xf32>
    %85 = arith.mulf %81, %84 : vector<32x128xf32>
    %c0_73 = arith.constant 0 : index
    %c0_74 = arith.constant 0 : index
    %c0_75 = arith.constant 0 : index
    %86 = vector.load %arg8[%c0_73, %c0_74, %c0_75] : memref<3x1x128xf32, #tpu.memory_space<vmem>>, vector<1x1x128xf32>
    %87 = vector.shape_cast %86 : vector<1x1x128xf32> to vector<1x128xf32>
    %88 = vector.broadcast %87 : vector<1x128xf32> to vector<32x128xf32>
    %89 = arith.addf %85, %88 : vector<32x128xf32>
    %90 = arith.addf %81, %89 : vector<32x128xf32>
    %cst_76 = arith.constant 0.000000e+00 : f32
    %91 = vector.broadcast %cst_76 : f32 to vector<32x128xf32>
    %92 = arith.maximumf %90, %91 : vector<32x128xf32>
    %93 = arith.truncf %92 : vector<32x128xf32> to vector<32x128xbf16>
    %c0_77 = arith.constant 0 : index
    %c0_78 = arith.constant 0 : index
    %94 = vector.load %arg12[%c0_77, %c0_78] : memref<39x128xbf16, #tpu.memory_space<vmem>>, vector<32x128xbf16>
    tpu.vector_store %arg12[%c0_77, %c0_78], %93 {strides = array<i32>} : memref<39x128xbf16, #tpu.memory_space<vmem>>, vector<32x128xbf16>,
    %c0_79 = arith.constant 0 : index
    %c0_80 = arith.constant 0 : index
    %95 = vector.load %arg12[%c0_79, %c0_80] : memref<39x128xbf16, #tpu.memory_space<vmem>>, vector<32x128xbf16>
    %c1_81 = arith.constant 1 : index
    %c0_82 = arith.constant 0 : index
    %96 = vector.load %arg12[%c1_81, %c0_82] : memref<39x128xbf16, #tpu.memory_space<vmem>>, vector<32x128xbf16>
    %c2_83 = arith.constant 2 : index
    %c0_84 = arith.constant 0 : index
    %97 = vector.load %arg12[%c2_83, %c0_84] : memref<39x128xbf16, #tpu.memory_space<vmem>>, vector<32x128xbf16>
    %c3_85 = arith.constant 3 : index
    %c0_86 = arith.constant 0 : index
    %98 = vector.load %arg12[%c3_85, %c0_86] : memref<39x128xbf16, #tpu.memory_space<vmem>>, vector<32x128xbf16>
    %c4_87 = arith.constant 4 : index
    %c0_88 = arith.constant 0 : index
    %99 = vector.load %arg12[%c4_87, %c0_88] : memref<39x128xbf16, #tpu.memory_space<vmem>>, vector<32x128xbf16>
    %c5_89 = arith.constant 5 : index
    %c0_90 = arith.constant 0 : index
    %100 = vector.load %arg12[%c5_89, %c0_90] : memref<39x128xbf16, #tpu.memory_space<vmem>>, vector<32x128xbf16>
    %c6_91 = arith.constant 6 : index
    %c0_92 = arith.constant 0 : index
    %101 = vector.load %arg12[%c6_91, %c0_92] : memref<39x128xbf16, #tpu.memory_space<vmem>>, vector<32x128xbf16>
    %c7_93 = arith.constant 7 : index
    %c0_94 = arith.constant 0 : index
    %102 = vector.load %arg12[%c7_93, %c0_94] : memref<39x128xbf16, #tpu.memory_space<vmem>>, vector<32x128xbf16>
    %103 = tpu.concatenate %95, %96, %97, %98, %99, %100, %101, %102 in 1 : vector<32x128xbf16>, vector<32x128xbf16>, vector<32x128xbf16>, vector<32x128xbf16>, vector<32x128xbf16>, vector<32x128xbf16>, vector<32x128xbf16>, vector<32x128xbf16> -> vector<32x1024xbf16>
    %c1_95 = arith.constant 1 : index
    %c0_96 = arith.constant 0 : index
    %c0_97 = arith.constant 0 : index
    %104 = vector.load %arg2[%c1_95, %c0_96, %c0_97] : memref<3x1024x128xbf16, #tpu.memory_space<vmem>>, vector<1x1024x128xbf16>
    %105 = vector.shape_cast %104 : vector<1x1024x128xbf16> to vector<1024x128xbf16>
    %cst_98 = arith.constant dense<0.000000e+00> : vector<32x128xf32>
    %106 = tpu.matmul %103, %105, %cst_98 {dimension_numbers = #tpu.dot_dimension_numbers<[1], [0], [0], [1], [0, 0, 1, 1], [], []>} : vector<32x1024xbf16>, vector<1024x128xbf16>, vector<32x128xf32> -> vector<32x128xf32>
    %c3_99 = arith.constant 3 : index
    %c0_100 = arith.constant 0 : index
    %c0_101 = arith.constant 0 : index
    %107 = vector.load %arg5[%c3_99, %c0_100, %c0_101] : memref<9x1x128xf32, #tpu.memory_space<vmem>>, vector<1x1x128xf32>
    %108 = vector.shape_cast %107 : vector<1x1x128xf32> to vector<1x128xf32>
    %109 = vector.broadcast %108 : vector<1x128xf32> to vector<32x128xf32>
    %110 = arith.mulf %106, %109 : vector<32x128xf32>
    %c3_102 = arith.constant 3 : index
    %c0_103 = arith.constant 0 : index
    %c0_104 = arith.constant 0 : index
    %111 = vector.load %arg6[%c3_102, %c0_103, %c0_104] : memref<9x1x128xf32, #tpu.memory_space<vmem>>, vector<1x1x128xf32>
    %112 = vector.shape_cast %111 : vector<1x1x128xf32> to vector<1x128xf32>
    %113 = vector.broadcast %112 : vector<1x128xf32> to vector<32x128xf32>
    %114 = arith.addf %110, %113 : vector<32x128xf32>
    %cst_105 = arith.constant 0.000000e+00 : f32
    %115 = vector.broadcast %cst_105 : f32 to vector<32x128xf32>
    %116 = arith.maximumf %114, %115 : vector<32x128xf32>
    %c9_i32_106 = arith.constant 9 : i32
    %117 = vector.broadcast %c9_i32_106 : i32 to vector<32x128xi32>
    %118 = arith.cmpi slt, %1, %117 : vector<32x128xi32>
    %cst_107 = arith.constant 0.000000e+00 : f32
    %119 = vector.broadcast %cst_107 : f32 to vector<32x128xf32>
    %120 = arith.select %118, %116, %119 : vector<32x128xi1>, vector<32x128xf32>
    %121 = arith.truncf %120 : vector<32x128xf32> to vector<32x128xbf16>
    %c0_108 = arith.constant 0 : index
    %c0_109 = arith.constant 0 : index
    %122 = vector.load %arg12[%c0_108, %c0_109] : memref<39x128xbf16, #tpu.memory_space<vmem>>, vector<32x128xbf16>
    tpu.vector_store %arg12[%c0_108, %c0_109], %121 {strides = array<i32>} : memref<39x128xbf16, #tpu.memory_space<vmem>>, vector<32x128xbf16>,
    %c0_110 = arith.constant 0 : index
    %c0_111 = arith.constant 0 : index
    %123 = vector.load %arg12[%c0_110, %c0_111] : memref<39x128xbf16, #tpu.memory_space<vmem>>, vector<32x128xbf16>
    %c1_112 = arith.constant 1 : index
    %c0_113 = arith.constant 0 : index
    %124 = vector.load %arg12[%c1_112, %c0_113] : memref<39x128xbf16, #tpu.memory_space<vmem>>, vector<32x128xbf16>
    %c2_114 = arith.constant 2 : index
    %c0_115 = arith.constant 0 : index
    %125 = vector.load %arg12[%c2_114, %c0_115] : memref<39x128xbf16, #tpu.memory_space<vmem>>, vector<32x128xbf16>
    %c3_116 = arith.constant 3 : index
    %c0_117 = arith.constant 0 : index
    %126 = vector.load %arg12[%c3_116, %c0_117] : memref<39x128xbf16, #tpu.memory_space<vmem>>, vector<32x128xbf16>
    %c4_118 = arith.constant 4 : index
    %c0_119 = arith.constant 0 : index
    %127 = vector.load %arg12[%c4_118, %c0_119] : memref<39x128xbf16, #tpu.memory_space<vmem>>, vector<32x128xbf16>
    %128 = tpu.concatenate %123, %124, %125, %126, %127 in 1 : vector<32x128xbf16>, vector<32x128xbf16>, vector<32x128xbf16>, vector<32x128xbf16>, vector<32x128xbf16> -> vector<32x640xbf16>
    %c1_120 = arith.constant 1 : index
    %c0_121 = arith.constant 0 : index
    %c0_122 = arith.constant 0 : index
    %129 = vector.load %arg3[%c1_120, %c0_121, %c0_122] : memref<3x640x128xbf16, #tpu.memory_space<vmem>>, vector<1x640x128xbf16>
    %130 = vector.shape_cast %129 : vector<1x640x128xbf16> to vector<640x128xbf16>
    %cst_123 = arith.constant dense<0.000000e+00> : vector<32x128xf32>
    %131 = tpu.matmul %128, %130, %cst_123 {dimension_numbers = #tpu.dot_dimension_numbers<[1], [0], [0], [1], [0, 0, 1, 1], [], []>} : vector<32x640xbf16>, vector<640x128xbf16>, vector<32x128xf32> -> vector<32x128xf32>
    %c4_124 = arith.constant 4 : index
    %c0_125 = arith.constant 0 : index
    %c0_126 = arith.constant 0 : index
    %132 = vector.load %arg5[%c4_124, %c0_125, %c0_126] : memref<9x1x128xf32, #tpu.memory_space<vmem>>, vector<1x1x128xf32>
    %133 = vector.shape_cast %132 : vector<1x1x128xf32> to vector<1x128xf32>
    %134 = vector.broadcast %133 : vector<1x128xf32> to vector<32x128xf32>
    %135 = arith.mulf %131, %134 : vector<32x128xf32>
    %c4_127 = arith.constant 4 : index
    %c0_128 = arith.constant 0 : index
    %c0_129 = arith.constant 0 : index
    %136 = vector.load %arg6[%c4_127, %c0_128, %c0_129] : memref<9x1x128xf32, #tpu.memory_space<vmem>>, vector<1x1x128xf32>
    %137 = vector.shape_cast %136 : vector<1x1x128xf32> to vector<1x128xf32>
    %138 = vector.broadcast %137 : vector<1x128xf32> to vector<32x128xf32>
    %139 = arith.addf %135, %138 : vector<32x128xf32>
    %cst_130 = arith.constant 0.000000e+00 : f32
    %140 = vector.broadcast %cst_130 : f32 to vector<32x128xf32>
    %141 = arith.maximumf %139, %140 : vector<32x128xf32>
    %c12_i32_131 = arith.constant 12 : i32
    %142 = vector.broadcast %c12_i32_131 : i32 to vector<32x128xi32>
    %143 = arith.cmpi slt, %1, %142 : vector<32x128xi32>
    %cst_132 = arith.constant 0.000000e+00 : f32
    %144 = vector.broadcast %cst_132 : f32 to vector<32x128xf32>
    %145 = arith.select %143, %141, %144 : vector<32x128xi1>, vector<32x128xf32>
    %146 = arith.truncf %145 : vector<32x128xf32> to vector<32x128xbf16>
    %c0_133 = arith.constant 0 : index
    %c0_134 = arith.constant 0 : index
    %147 = vector.load %arg12[%c0_133, %c0_134] : memref<39x128xbf16, #tpu.memory_space<vmem>>, vector<32x128xbf16>
    tpu.vector_store %arg12[%c0_133, %c0_134], %146 {strides = array<i32>} : memref<39x128xbf16, #tpu.memory_space<vmem>>, vector<32x128xbf16>,
    %c0_135 = arith.constant 0 : index
    %c0_136 = arith.constant 0 : index
    %148 = vector.load %arg12[%c0_135, %c0_136] : memref<39x128xbf16, #tpu.memory_space<vmem>>, vector<32x128xbf16>
    %c1_137 = arith.constant 1 : index
    %c0_138 = arith.constant 0 : index
    %149 = vector.load %arg12[%c1_137, %c0_138] : memref<39x128xbf16, #tpu.memory_space<vmem>>, vector<32x128xbf16>
    %c2_139 = arith.constant 2 : index
    %c0_140 = arith.constant 0 : index
    %150 = vector.load %arg12[%c2_139, %c0_140] : memref<39x128xbf16, #tpu.memory_space<vmem>>, vector<32x128xbf16>
    %151 = tpu.concatenate %148, %149, %150 in 1 : vector<32x128xbf16>, vector<32x128xbf16>, vector<32x128xbf16> -> vector<32x384xbf16>
    %c1_141 = arith.constant 1 : index
    %c0_142 = arith.constant 0 : index
    %c0_143 = arith.constant 0 : index
    %152 = vector.load %arg4[%c1_141, %c0_142, %c0_143] : memref<3x384x128xbf16, #tpu.memory_space<vmem>>, vector<1x384x128xbf16>
    %153 = vector.shape_cast %152 : vector<1x384x128xbf16> to vector<384x128xbf16>
    %cst_144 = arith.constant dense<0.000000e+00> : vector<32x128xf32>
    %154 = tpu.matmul %151, %153, %cst_144 {dimension_numbers = #tpu.dot_dimension_numbers<[1], [0], [0], [1], [0, 0, 1, 1], [], []>} : vector<32x384xbf16>, vector<384x128xbf16>, vector<32x128xf32> -> vector<32x128xf32>
    %c5_145 = arith.constant 5 : index
    %c0_146 = arith.constant 0 : index
    %c0_147 = arith.constant 0 : index
    %155 = vector.load %arg5[%c5_145, %c0_146, %c0_147] : memref<9x1x128xf32, #tpu.memory_space<vmem>>, vector<1x1x128xf32>
    %156 = vector.shape_cast %155 : vector<1x1x128xf32> to vector<1x128xf32>
    %157 = vector.broadcast %156 : vector<1x128xf32> to vector<32x128xf32>
    %158 = arith.mulf %154, %157 : vector<32x128xf32>
    %c5_148 = arith.constant 5 : index
    %c0_149 = arith.constant 0 : index
    %c0_150 = arith.constant 0 : index
    %159 = vector.load %arg6[%c5_148, %c0_149, %c0_150] : memref<9x1x128xf32, #tpu.memory_space<vmem>>, vector<1x1x128xf32>
    %160 = vector.shape_cast %159 : vector<1x1x128xf32> to vector<1x128xf32>
    %161 = vector.broadcast %160 : vector<1x128xf32> to vector<32x128xf32>
    %162 = arith.addf %158, %161 : vector<32x128xf32>
    %cst_151 = arith.constant 0.000000e+00 : f32
    %163 = vector.broadcast %cst_151 : f32 to vector<32x128xf32>
    %164 = arith.maximumf %162, %163 : vector<32x128xf32>
    %c14_i32_152 = arith.constant 14 : i32
    %165 = vector.broadcast %c14_i32_152 : i32 to vector<32x128xi32>
    %166 = arith.cmpi slt, %1, %165 : vector<32x128xi32>
    %cst_153 = arith.constant 0.000000e+00 : f32
    %167 = vector.broadcast %cst_153 : f32 to vector<32x128xf32>
    %168 = arith.select %166, %164, %167 : vector<32x128xi1>, vector<32x128xf32>
    %c1_154 = arith.constant 1 : index
    %c0_155 = arith.constant 0 : index
    %c0_156 = arith.constant 0 : index
    %169 = vector.load %arg7[%c1_154, %c0_155, %c0_156] : memref<3x1x128xf32, #tpu.memory_space<vmem>>, vector<1x1x128xf32>
    %170 = vector.shape_cast %169 : vector<1x1x128xf32> to vector<1x128xf32>
    %171 = vector.broadcast %170 : vector<1x128xf32> to vector<32x128xf32>
    %172 = arith.mulf %168, %171 : vector<32x128xf32>
    %c1_157 = arith.constant 1 : index
    %c0_158 = arith.constant 0 : index
    %c0_159 = arith.constant 0 : index
    %173 = vector.load %arg8[%c1_157, %c0_158, %c0_159] : memref<3x1x128xf32, #tpu.memory_space<vmem>>, vector<1x1x128xf32>
    %174 = vector.shape_cast %173 : vector<1x1x128xf32> to vector<1x128xf32>
    %175 = vector.broadcast %174 : vector<1x128xf32> to vector<32x128xf32>
    %176 = arith.addf %172, %175 : vector<32x128xf32>
    %177 = arith.addf %168, %176 : vector<32x128xf32>
    %cst_160 = arith.constant 0.000000e+00 : f32
    %178 = vector.broadcast %cst_160 : f32 to vector<32x128xf32>
    %179 = arith.maximumf %177, %178 : vector<32x128xf32>
    %c0_161 = arith.constant 0 : index
    %c0_162 = arith.constant 0 : index
    %180 = vector.load %arg13[%c0_161, %c0_162] : memref<32x128xf32, #tpu.memory_space<vmem>>, vector<32x128xf32>
    tpu.vector_store %arg13[%c0_161, %c0_162], %179 {strides = array<i32>} : memref<32x128xf32, #tpu.memory_space<vmem>>, vector<32x128xf32>,
    %181 = arith.truncf %179 : vector<32x128xf32> to vector<32x128xbf16>
    %c0_163 = arith.constant 0 : index
    %c0_164 = arith.constant 0 : index
    %182 = vector.load %arg12[%c0_163, %c0_164] : memref<39x128xbf16, #tpu.memory_space<vmem>>, vector<32x128xbf16>
    tpu.vector_store %arg12[%c0_163, %c0_164], %181 {strides = array<i32>} : memref<39x128xbf16, #tpu.memory_space<vmem>>, vector<32x128xbf16>,
    %c0_165 = arith.constant 0 : index
    %c0_166 = arith.constant 0 : index
    %183 = vector.load %arg12[%c0_165, %c0_166] : memref<39x128xbf16, #tpu.memory_space<vmem>>, vector<32x128xbf16>
    %c1_167 = arith.constant 1 : index
    %c0_168 = arith.constant 0 : index
    %184 = vector.load %arg12[%c1_167, %c0_168] : memref<39x128xbf16, #tpu.memory_space<vmem>>, vector<32x128xbf16>
    %c2_169 = arith.constant 2 : index
    %c0_170 = arith.constant 0 : index
    %185 = vector.load %arg12[%c2_169, %c0_170] : memref<39x128xbf16, #tpu.memory_space<vmem>>, vector<32x128xbf16>
    %c3_171 = arith.constant 3 : index
    %c0_172 = arith.constant 0 : index
    %186 = vector.load %arg12[%c3_171, %c0_172] : memref<39x128xbf16, #tpu.memory_space<vmem>>, vector<32x128xbf16>
    %c4_173 = arith.constant 4 : index
    %c0_174 = arith.constant 0 : index
    %187 = vector.load %arg12[%c4_173, %c0_174] : memref<39x128xbf16, #tpu.memory_space<vmem>>, vector<32x128xbf16>
    %c5_175 = arith.constant 5 : index
    %c0_176 = arith.constant 0 : index
    %188 = vector.load %arg12[%c5_175, %c0_176] : memref<39x128xbf16, #tpu.memory_space<vmem>>, vector<32x128xbf16>
    %c6_177 = arith.constant 6 : index
    %c0_178 = arith.constant 0 : index
    %189 = vector.load %arg12[%c6_177, %c0_178] : memref<39x128xbf16, #tpu.memory_space<vmem>>, vector<32x128xbf16>
    %c7_179 = arith.constant 7 : index
    %c0_180 = arith.constant 0 : index
    %190 = vector.load %arg12[%c7_179, %c0_180] : memref<39x128xbf16, #tpu.memory_space<vmem>>, vector<32x128xbf16>
    %191 = tpu.concatenate %183, %184, %185, %186, %187, %188, %189, %190 in 1 : vector<32x128xbf16>, vector<32x128xbf16>, vector<32x128xbf16>, vector<32x128xbf16>, vector<32x128xbf16>, vector<32x128xbf16>, vector<32x128xbf16>, vector<32x128xbf16> -> vector<32x1024xbf16>
    %c2_181 = arith.constant 2 : index
    %c0_182 = arith.constant 0 : index
    %c0_183 = arith.constant 0 : index
    %192 = vector.load %arg2[%c2_181, %c0_182, %c0_183] : memref<3x1024x128xbf16, #tpu.memory_space<vmem>>, vector<1x1024x128xbf16>
    %193 = vector.shape_cast %192 : vector<1x1024x128xbf16> to vector<1024x128xbf16>
    %cst_184 = arith.constant dense<0.000000e+00> : vector<32x128xf32>
    %194 = tpu.matmul %191, %193, %cst_184 {dimension_numbers = #tpu.dot_dimension_numbers<[1], [0], [0], [1], [0, 0, 1, 1], [], []>} : vector<32x1024xbf16>, vector<1024x128xbf16>, vector<32x128xf32> -> vector<32x128xf32>
    %c6_185 = arith.constant 6 : index
    %c0_186 = arith.constant 0 : index
    %c0_187 = arith.constant 0 : index
    %195 = vector.load %arg5[%c6_185, %c0_186, %c0_187] : memref<9x1x128xf32, #tpu.memory_space<vmem>>, vector<1x1x128xf32>
    %196 = vector.shape_cast %195 : vector<1x1x128xf32> to vector<1x128xf32>
    %197 = vector.broadcast %196 : vector<1x128xf32> to vector<32x128xf32>
    %198 = arith.mulf %194, %197 : vector<32x128xf32>
    %c6_188 = arith.constant 6 : index
    %c0_189 = arith.constant 0 : index
    %c0_190 = arith.constant 0 : index
    %199 = vector.load %arg6[%c6_188, %c0_189, %c0_190] : memref<9x1x128xf32, #tpu.memory_space<vmem>>, vector<1x1x128xf32>
    %200 = vector.shape_cast %199 : vector<1x1x128xf32> to vector<1x128xf32>
    %201 = vector.broadcast %200 : vector<1x128xf32> to vector<32x128xf32>
    %202 = arith.addf %198, %201 : vector<32x128xf32>
    %cst_191 = arith.constant 0.000000e+00 : f32
    %203 = vector.broadcast %cst_191 : f32 to vector<32x128xf32>
    %204 = arith.maximumf %202, %203 : vector<32x128xf32>
    %c9_i32_192 = arith.constant 9 : i32
    %205 = vector.broadcast %c9_i32_192 : i32 to vector<32x128xi32>
    %206 = arith.cmpi slt, %1, %205 : vector<32x128xi32>
    %cst_193 = arith.constant 0.000000e+00 : f32
    %207 = vector.broadcast %cst_193 : f32 to vector<32x128xf32>
    %208 = arith.select %206, %204, %207 : vector<32x128xi1>, vector<32x128xf32>
    %209 = arith.truncf %208 : vector<32x128xf32> to vector<32x128xbf16>
    %c0_194 = arith.constant 0 : index
    %c0_195 = arith.constant 0 : index
    %210 = vector.load %arg12[%c0_194, %c0_195] : memref<39x128xbf16, #tpu.memory_space<vmem>>, vector<32x128xbf16>
    tpu.vector_store %arg12[%c0_194, %c0_195], %209 {strides = array<i32>} : memref<39x128xbf16, #tpu.memory_space<vmem>>, vector<32x128xbf16>,
    %c0_196 = arith.constant 0 : index
    %c0_197 = arith.constant 0 : index
    %211 = vector.load %arg12[%c0_196, %c0_197] : memref<39x128xbf16, #tpu.memory_space<vmem>>, vector<32x128xbf16>
    %c1_198 = arith.constant 1 : index
    %c0_199 = arith.constant 0 : index
    %212 = vector.load %arg12[%c1_198, %c0_199] : memref<39x128xbf16, #tpu.memory_space<vmem>>, vector<32x128xbf16>
    %c2_200 = arith.constant 2 : index
    %c0_201 = arith.constant 0 : index
    %213 = vector.load %arg12[%c2_200, %c0_201] : memref<39x128xbf16, #tpu.memory_space<vmem>>, vector<32x128xbf16>
    %c3_202 = arith.constant 3 : index
    %c0_203 = arith.constant 0 : index
    %214 = vector.load %arg12[%c3_202, %c0_203] : memref<39x128xbf16, #tpu.memory_space<vmem>>, vector<32x128xbf16>
    %c4_204 = arith.constant 4 : index
    %c0_205 = arith.constant 0 : index
    %215 = vector.load %arg12[%c4_204, %c0_205] : memref<39x128xbf16, #tpu.memory_space<vmem>>, vector<32x128xbf16>
    %216 = tpu.concatenate %211, %212, %213, %214, %215 in 1 : vector<32x128xbf16>, vector<32x128xbf16>, vector<32x128xbf16>, vector<32x128xbf16>, vector<32x128xbf16> -> vector<32x640xbf16>
    %c2_206 = arith.constant 2 : index
    %c0_207 = arith.constant 0 : index
    %c0_208 = arith.constant 0 : index
    %217 = vector.load %arg3[%c2_206, %c0_207, %c0_208] : memref<3x640x128xbf16, #tpu.memory_space<vmem>>, vector<1x640x128xbf16>
    %218 = vector.shape_cast %217 : vector<1x640x128xbf16> to vector<640x128xbf16>
    %cst_209 = arith.constant dense<0.000000e+00> : vector<32x128xf32>
    %219 = tpu.matmul %216, %218, %cst_209 {dimension_numbers = #tpu.dot_dimension_numbers<[1], [0], [0], [1], [0, 0, 1, 1], [], []>} : vector<32x640xbf16>, vector<640x128xbf16>, vector<32x128xf32> -> vector<32x128xf32>
    %c7_210 = arith.constant 7 : index
    %c0_211 = arith.constant 0 : index
    %c0_212 = arith.constant 0 : index
    %220 = vector.load %arg5[%c7_210, %c0_211, %c0_212] : memref<9x1x128xf32, #tpu.memory_space<vmem>>, vector<1x1x128xf32>
    %221 = vector.shape_cast %220 : vector<1x1x128xf32> to vector<1x128xf32>
    %222 = vector.broadcast %221 : vector<1x128xf32> to vector<32x128xf32>
    %223 = arith.mulf %219, %222 : vector<32x128xf32>
    %c7_213 = arith.constant 7 : index
    %c0_214 = arith.constant 0 : index
    %c0_215 = arith.constant 0 : index
    %224 = vector.load %arg6[%c7_213, %c0_214, %c0_215] : memref<9x1x128xf32, #tpu.memory_space<vmem>>, vector<1x1x128xf32>
    %225 = vector.shape_cast %224 : vector<1x1x128xf32> to vector<1x128xf32>
    %226 = vector.broadcast %225 : vector<1x128xf32> to vector<32x128xf32>
    %227 = arith.addf %223, %226 : vector<32x128xf32>
    %cst_216 = arith.constant 0.000000e+00 : f32
    %228 = vector.broadcast %cst_216 : f32 to vector<32x128xf32>
    %229 = arith.maximumf %227, %228 : vector<32x128xf32>
    %c12_i32_217 = arith.constant 12 : i32
    %230 = vector.broadcast %c12_i32_217 : i32 to vector<32x128xi32>
    %231 = arith.cmpi slt, %1, %230 : vector<32x128xi32>
    %cst_218 = arith.constant 0.000000e+00 : f32
    %232 = vector.broadcast %cst_218 : f32 to vector<32x128xf32>
    %233 = arith.select %231, %229, %232 : vector<32x128xi1>, vector<32x128xf32>
    %234 = arith.truncf %233 : vector<32x128xf32> to vector<32x128xbf16>
    %c0_219 = arith.constant 0 : index
    %c0_220 = arith.constant 0 : index
    %235 = vector.load %arg12[%c0_219, %c0_220] : memref<39x128xbf16, #tpu.memory_space<vmem>>, vector<32x128xbf16>
    tpu.vector_store %arg12[%c0_219, %c0_220], %234 {strides = array<i32>} : memref<39x128xbf16, #tpu.memory_space<vmem>>, vector<32x128xbf16>,
    %c0_221 = arith.constant 0 : index
    %c0_222 = arith.constant 0 : index
    %236 = vector.load %arg12[%c0_221, %c0_222] : memref<39x128xbf16, #tpu.memory_space<vmem>>, vector<32x128xbf16>
    %c1_223 = arith.constant 1 : index
    %c0_224 = arith.constant 0 : index
    %237 = vector.load %arg12[%c1_223, %c0_224] : memref<39x128xbf16, #tpu.memory_space<vmem>>, vector<32x128xbf16>
    %c2_225 = arith.constant 2 : index
    %c0_226 = arith.constant 0 : index
    %238 = vector.load %arg12[%c2_225, %c0_226] : memref<39x128xbf16, #tpu.memory_space<vmem>>, vector<32x128xbf16>
    %239 = tpu.concatenate %236, %237, %238 in 1 : vector<32x128xbf16>, vector<32x128xbf16>, vector<32x128xbf16> -> vector<32x384xbf16>
    %c2_227 = arith.constant 2 : index
    %c0_228 = arith.constant 0 : index
    %c0_229 = arith.constant 0 : index
    %240 = vector.load %arg4[%c2_227, %c0_228, %c0_229] : memref<3x384x128xbf16, #tpu.memory_space<vmem>>, vector<1x384x128xbf16>
    %241 = vector.shape_cast %240 : vector<1x384x128xbf16> to vector<384x128xbf16>
    %cst_230 = arith.constant dense<0.000000e+00> : vector<32x128xf32>
    %242 = tpu.matmul %239, %241, %cst_230 {dimension_numbers = #tpu.dot_dimension_numbers<[1], [0], [0], [1], [0, 0, 1, 1], [], []>} : vector<32x384xbf16>, vector<384x128xbf16>, vector<32x128xf32> -> vector<32x128xf32>
    %c8 = arith.constant 8 : index
    %c0_231 = arith.constant 0 : index
    %c0_232 = arith.constant 0 : index
    %243 = vector.load %arg5[%c8, %c0_231, %c0_232] : memref<9x1x128xf32, #tpu.memory_space<vmem>>, vector<1x1x128xf32>
    %244 = vector.shape_cast %243 : vector<1x1x128xf32> to vector<1x128xf32>
    %245 = vector.broadcast %244 : vector<1x128xf32> to vector<32x128xf32>
    %246 = arith.mulf %242, %245 : vector<32x128xf32>
    %c8_233 = arith.constant 8 : index
    %c0_234 = arith.constant 0 : index
    %c0_235 = arith.constant 0 : index
    %247 = vector.load %arg6[%c8_233, %c0_234, %c0_235] : memref<9x1x128xf32, #tpu.memory_space<vmem>>, vector<1x1x128xf32>
    %248 = vector.shape_cast %247 : vector<1x1x128xf32> to vector<1x128xf32>
    %249 = vector.broadcast %248 : vector<1x128xf32> to vector<32x128xf32>
    %250 = arith.addf %246, %249 : vector<32x128xf32>
    %cst_236 = arith.constant 0.000000e+00 : f32
    %251 = vector.broadcast %cst_236 : f32 to vector<32x128xf32>
    %252 = arith.maximumf %250, %251 : vector<32x128xf32>
    %c14_i32_237 = arith.constant 14 : i32
    %253 = vector.broadcast %c14_i32_237 : i32 to vector<32x128xi32>
    %254 = arith.cmpi slt, %1, %253 : vector<32x128xi32>
    %cst_238 = arith.constant 0.000000e+00 : f32
    %255 = vector.broadcast %cst_238 : f32 to vector<32x128xf32>
    %256 = arith.select %254, %252, %255 : vector<32x128xi1>, vector<32x128xf32>
    %c0_239 = arith.constant 0 : index
    %c0_240 = arith.constant 0 : index
    %257 = vector.load %arg13[%c0_239, %c0_240] : memref<32x128xf32, #tpu.memory_space<vmem>>, vector<32x128xf32>
    %258 = arith.addf %256, %257 : vector<32x128xf32>
    %cst_241 = arith.constant 0.000000e+00 : f32
    %259 = vector.broadcast %cst_241 : f32 to vector<32x128xf32>
    %260 = arith.maximumf %258, %259 : vector<32x128xf32>
    %c127_i32 = arith.constant 127 : i32
    %261 = tpu.dynamic_rotate %260 by %c127_i32 dim 1 : vector<32x128xf32>, i32 -> vector<32x128xf32>
    %262 = arith.maximumf %260, %261 : vector<32x128xf32>
    %263 = arith.truncf %262 : vector<32x128xf32> to vector<32x128xbf16>
    %264 = vector.shape_cast %263 : vector<32x128xbf16> to vector<2x16x128xbf16>
    %cst_242 = arith.constant 0.000000e+00 : f32
    %265 = vector.broadcast %cst_242 : f32 to vector<2x128xf32>
    %266 = vector.extract_strided_slice %264 {offsets = [0, 0, 0], sizes = [2, 1, 128], strides = [1, 1, 1]} : vector<2x16x128xbf16> to vector<2x1x128xbf16>
    %267 = vector.shape_cast %266 : vector<2x1x128xbf16> to vector<2x128xbf16>
    %c0_243 = arith.constant 0 : index
    %c0_244 = arith.constant 0 : index
    %c0_245 = arith.constant 0 : index
    %268 = vector.load %arg9[%c0_243, %c0_244, %c0_245] : memref<16x128x128xbf16, #tpu.memory_space<vmem>>, vector<1x128x128xbf16>
    %269 = vector.shape_cast %268 : vector<1x128x128xbf16> to vector<128x128xbf16>
    %cst_246 = arith.constant dense<0.000000e+00> : vector<2x128xf32>
    %270 = tpu.matmul %267, %269, %cst_246 {dimension_numbers = #tpu.dot_dimension_numbers<[1], [0], [0], [1], [0, 0, 1, 1], [], []>} : vector<2x128xbf16>, vector<128x128xbf16>, vector<2x128xf32> -> vector<2x128xf32>
    %271 = arith.addf %265, %270 : vector<2x128xf32>
    %272 = vector.extract_strided_slice %264 {offsets = [0, 1, 0], sizes = [2, 1, 128], strides = [1, 1, 1]} : vector<2x16x128xbf16> to vector<2x1x128xbf16>
    %273 = vector.shape_cast %272 : vector<2x1x128xbf16> to vector<2x128xbf16>
    %c1_247 = arith.constant 1 : index
    %c0_248 = arith.constant 0 : index
    %c0_249 = arith.constant 0 : index
    %274 = vector.load %arg9[%c1_247, %c0_248, %c0_249] : memref<16x128x128xbf16, #tpu.memory_space<vmem>>, vector<1x128x128xbf16>
    %275 = vector.shape_cast %274 : vector<1x128x128xbf16> to vector<128x128xbf16>
    %cst_250 = arith.constant dense<0.000000e+00> : vector<2x128xf32>
    %276 = tpu.matmul %273, %275, %cst_250 {dimension_numbers = #tpu.dot_dimension_numbers<[1], [0], [0], [1], [0, 0, 1, 1], [], []>} : vector<2x128xbf16>, vector<128x128xbf16>, vector<2x128xf32> -> vector<2x128xf32>
    %277 = arith.addf %271, %276 : vector<2x128xf32>
    %278 = vector.extract_strided_slice %264 {offsets = [0, 2, 0], sizes = [2, 1, 128], strides = [1, 1, 1]} : vector<2x16x128xbf16> to vector<2x1x128xbf16>
    %279 = vector.shape_cast %278 : vector<2x1x128xbf16> to vector<2x128xbf16>
    %c2_251 = arith.constant 2 : index
    %c0_252 = arith.constant 0 : index
    %c0_253 = arith.constant 0 : index
    %280 = vector.load %arg9[%c2_251, %c0_252, %c0_253] : memref<16x128x128xbf16, #tpu.memory_space<vmem>>, vector<1x128x128xbf16>
    %281 = vector.shape_cast %280 : vector<1x128x128xbf16> to vector<128x128xbf16>
    %cst_254 = arith.constant dense<0.000000e+00> : vector<2x128xf32>
    %282 = tpu.matmul %279, %281, %cst_254 {dimension_numbers = #tpu.dot_dimension_numbers<[1], [0], [0], [1], [0, 0, 1, 1], [], []>} : vector<2x128xbf16>, vector<128x128xbf16>, vector<2x128xf32> -> vector<2x128xf32>
    %283 = arith.addf %277, %282 : vector<2x128xf32>
    %284 = vector.extract_strided_slice %264 {offsets = [0, 3, 0], sizes = [2, 1, 128], strides = [1, 1, 1]} : vector<2x16x128xbf16> to vector<2x1x128xbf16>
    %285 = vector.shape_cast %284 : vector<2x1x128xbf16> to vector<2x128xbf16>
    %c3_255 = arith.constant 3 : index
    %c0_256 = arith.constant 0 : index
    %c0_257 = arith.constant 0 : index
    %286 = vector.load %arg9[%c3_255, %c0_256, %c0_257] : memref<16x128x128xbf16, #tpu.memory_space<vmem>>, vector<1x128x128xbf16>
    %287 = vector.shape_cast %286 : vector<1x128x128xbf16> to vector<128x128xbf16>
    %cst_258 = arith.constant dense<0.000000e+00> : vector<2x128xf32>
    %288 = tpu.matmul %285, %287, %cst_258 {dimension_numbers = #tpu.dot_dimension_numbers<[1], [0], [0], [1], [0, 0, 1, 1], [], []>} : vector<2x128xbf16>, vector<128x128xbf16>, vector<2x128xf32> -> vector<2x128xf32>
    %289 = arith.addf %283, %288 : vector<2x128xf32>
    %290 = vector.extract_strided_slice %264 {offsets = [0, 4, 0], sizes = [2, 1, 128], strides = [1, 1, 1]} : vector<2x16x128xbf16> to vector<2x1x128xbf16>
    %291 = vector.shape_cast %290 : vector<2x1x128xbf16> to vector<2x128xbf16>
    %c4_259 = arith.constant 4 : index
    %c0_260 = arith.constant 0 : index
    %c0_261 = arith.constant 0 : index
    %292 = vector.load %arg9[%c4_259, %c0_260, %c0_261] : memref<16x128x128xbf16, #tpu.memory_space<vmem>>, vector<1x128x128xbf16>
    %293 = vector.shape_cast %292 : vector<1x128x128xbf16> to vector<128x128xbf16>
    %cst_262 = arith.constant dense<0.000000e+00> : vector<2x128xf32>
    %294 = tpu.matmul %291, %293, %cst_262 {dimension_numbers = #tpu.dot_dimension_numbers<[1], [0], [0], [1], [0, 0, 1, 1], [], []>} : vector<2x128xbf16>, vector<128x128xbf16>, vector<2x128xf32> -> vector<2x128xf32>
    %295 = arith.addf %289, %294 : vector<2x128xf32>
    %296 = vector.extract_strided_slice %264 {offsets = [0, 5, 0], sizes = [2, 1, 128], strides = [1, 1, 1]} : vector<2x16x128xbf16> to vector<2x1x128xbf16>
    %297 = vector.shape_cast %296 : vector<2x1x128xbf16> to vector<2x128xbf16>
    %c5_263 = arith.constant 5 : index
    %c0_264 = arith.constant 0 : index
    %c0_265 = arith.constant 0 : index
    %298 = vector.load %arg9[%c5_263, %c0_264, %c0_265] : memref<16x128x128xbf16, #tpu.memory_space<vmem>>, vector<1x128x128xbf16>
    %299 = vector.shape_cast %298 : vector<1x128x128xbf16> to vector<128x128xbf16>
    %cst_266 = arith.constant dense<0.000000e+00> : vector<2x128xf32>
    %300 = tpu.matmul %297, %299, %cst_266 {dimension_numbers = #tpu.dot_dimension_numbers<[1], [0], [0], [1], [0, 0, 1, 1], [], []>} : vector<2x128xbf16>, vector<128x128xbf16>, vector<2x128xf32> -> vector<2x128xf32>
    %301 = arith.addf %295, %300 : vector<2x128xf32>
    %302 = vector.extract_strided_slice %264 {offsets = [0, 6, 0], sizes = [2, 1, 128], strides = [1, 1, 1]} : vector<2x16x128xbf16> to vector<2x1x128xbf16>
    %303 = vector.shape_cast %302 : vector<2x1x128xbf16> to vector<2x128xbf16>
    %c6_267 = arith.constant 6 : index
    %c0_268 = arith.constant 0 : index
    %c0_269 = arith.constant 0 : index
    %304 = vector.load %arg9[%c6_267, %c0_268, %c0_269] : memref<16x128x128xbf16, #tpu.memory_space<vmem>>, vector<1x128x128xbf16>
    %305 = vector.shape_cast %304 : vector<1x128x128xbf16> to vector<128x128xbf16>
    %cst_270 = arith.constant dense<0.000000e+00> : vector<2x128xf32>
    %306 = tpu.matmul %303, %305, %cst_270 {dimension_numbers = #tpu.dot_dimension_numbers<[1], [0], [0], [1], [0, 0, 1, 1], [], []>} : vector<2x128xbf16>, vector<128x128xbf16>, vector<2x128xf32> -> vector<2x128xf32>
    %307 = arith.addf %301, %306 : vector<2x128xf32>
    %308 = vector.extract_strided_slice %264 {offsets = [0, 7, 0], sizes = [2, 1, 128], strides = [1, 1, 1]} : vector<2x16x128xbf16> to vector<2x1x128xbf16>
    %309 = vector.shape_cast %308 : vector<2x1x128xbf16> to vector<2x128xbf16>
    %c7_271 = arith.constant 7 : index
    %c0_272 = arith.constant 0 : index
    %c0_273 = arith.constant 0 : index
    %310 = vector.load %arg9[%c7_271, %c0_272, %c0_273] : memref<16x128x128xbf16, #tpu.memory_space<vmem>>, vector<1x128x128xbf16>
    %311 = vector.shape_cast %310 : vector<1x128x128xbf16> to vector<128x128xbf16>
    %cst_274 = arith.constant dense<0.000000e+00> : vector<2x128xf32>
    %312 = tpu.matmul %309, %311, %cst_274 {dimension_numbers = #tpu.dot_dimension_numbers<[1], [0], [0], [1], [0, 0, 1, 1], [], []>} : vector<2x128xbf16>, vector<128x128xbf16>, vector<2x128xf32> -> vector<2x128xf32>
    %313 = arith.addf %307, %312 : vector<2x128xf32>
    %314 = vector.extract_strided_slice %264 {offsets = [0, 8, 0], sizes = [2, 1, 128], strides = [1, 1, 1]} : vector<2x16x128xbf16> to vector<2x1x128xbf16>
    %315 = vector.shape_cast %314 : vector<2x1x128xbf16> to vector<2x128xbf16>
    %c8_275 = arith.constant 8 : index
    %c0_276 = arith.constant 0 : index
    %c0_277 = arith.constant 0 : index
    %316 = vector.load %arg9[%c8_275, %c0_276, %c0_277] : memref<16x128x128xbf16, #tpu.memory_space<vmem>>, vector<1x128x128xbf16>
    %317 = vector.shape_cast %316 : vector<1x128x128xbf16> to vector<128x128xbf16>
    %cst_278 = arith.constant dense<0.000000e+00> : vector<2x128xf32>
    %318 = tpu.matmul %315, %317, %cst_278 {dimension_numbers = #tpu.dot_dimension_numbers<[1], [0], [0], [1], [0, 0, 1, 1], [], []>} : vector<2x128xbf16>, vector<128x128xbf16>, vector<2x128xf32> -> vector<2x128xf32>
    %319 = arith.addf %313, %318 : vector<2x128xf32>
    %320 = vector.extract_strided_slice %264 {offsets = [0, 9, 0], sizes = [2, 1, 128], strides = [1, 1, 1]} : vector<2x16x128xbf16> to vector<2x1x128xbf16>
    %321 = vector.shape_cast %320 : vector<2x1x128xbf16> to vector<2x128xbf16>
    %c9 = arith.constant 9 : index
    %c0_279 = arith.constant 0 : index
    %c0_280 = arith.constant 0 : index
    %322 = vector.load %arg9[%c9, %c0_279, %c0_280] : memref<16x128x128xbf16, #tpu.memory_space<vmem>>, vector<1x128x128xbf16>
    %323 = vector.shape_cast %322 : vector<1x128x128xbf16> to vector<128x128xbf16>
    %cst_281 = arith.constant dense<0.000000e+00> : vector<2x128xf32>
    %324 = tpu.matmul %321, %323, %cst_281 {dimension_numbers = #tpu.dot_dimension_numbers<[1], [0], [0], [1], [0, 0, 1, 1], [], []>} : vector<2x128xbf16>, vector<128x128xbf16>, vector<2x128xf32> -> vector<2x128xf32>
    %325 = arith.addf %319, %324 : vector<2x128xf32>
    %326 = vector.extract_strided_slice %264 {offsets = [0, 10, 0], sizes = [2, 1, 128], strides = [1, 1, 1]} : vector<2x16x128xbf16> to vector<2x1x128xbf16>
    %327 = vector.shape_cast %326 : vector<2x1x128xbf16> to vector<2x128xbf16>
    %c10 = arith.constant 10 : index
    %c0_282 = arith.constant 0 : index
    %c0_283 = arith.constant 0 : index
    %328 = vector.load %arg9[%c10, %c0_282, %c0_283] : memref<16x128x128xbf16, #tpu.memory_space<vmem>>, vector<1x128x128xbf16>
    %329 = vector.shape_cast %328 : vector<1x128x128xbf16> to vector<128x128xbf16>
    %cst_284 = arith.constant dense<0.000000e+00> : vector<2x128xf32>
    %330 = tpu.matmul %327, %329, %cst_284 {dimension_numbers = #tpu.dot_dimension_numbers<[1], [0], [0], [1], [0, 0, 1, 1], [], []>} : vector<2x128xbf16>, vector<128x128xbf16>, vector<2x128xf32> -> vector<2x128xf32>
    %331 = arith.addf %325, %330 : vector<2x128xf32>
    %332 = vector.extract_strided_slice %264 {offsets = [0, 11, 0], sizes = [2, 1, 128], strides = [1, 1, 1]} : vector<2x16x128xbf16> to vector<2x1x128xbf16>
    %333 = vector.shape_cast %332 : vector<2x1x128xbf16> to vector<2x128xbf16>
    %c11 = arith.constant 11 : index
    %c0_285 = arith.constant 0 : index
    %c0_286 = arith.constant 0 : index
    %334 = vector.load %arg9[%c11, %c0_285, %c0_286] : memref<16x128x128xbf16, #tpu.memory_space<vmem>>, vector<1x128x128xbf16>
    %335 = vector.shape_cast %334 : vector<1x128x128xbf16> to vector<128x128xbf16>
    %cst_287 = arith.constant dense<0.000000e+00> : vector<2x128xf32>
    %336 = tpu.matmul %333, %335, %cst_287 {dimension_numbers = #tpu.dot_dimension_numbers<[1], [0], [0], [1], [0, 0, 1, 1], [], []>} : vector<2x128xbf16>, vector<128x128xbf16>, vector<2x128xf32> -> vector<2x128xf32>
    %337 = arith.addf %331, %336 : vector<2x128xf32>
    %338 = vector.extract_strided_slice %264 {offsets = [0, 12, 0], sizes = [2, 1, 128], strides = [1, 1, 1]} : vector<2x16x128xbf16> to vector<2x1x128xbf16>
    %339 = vector.shape_cast %338 : vector<2x1x128xbf16> to vector<2x128xbf16>
    %c12 = arith.constant 12 : index
    %c0_288 = arith.constant 0 : index
    %c0_289 = arith.constant 0 : index
    %340 = vector.load %arg9[%c12, %c0_288, %c0_289] : memref<16x128x128xbf16, #tpu.memory_space<vmem>>, vector<1x128x128xbf16>
    %341 = vector.shape_cast %340 : vector<1x128x128xbf16> to vector<128x128xbf16>
    %cst_290 = arith.constant dense<0.000000e+00> : vector<2x128xf32>
    %342 = tpu.matmul %339, %341, %cst_290 {dimension_numbers = #tpu.dot_dimension_numbers<[1], [0], [0], [1], [0, 0, 1, 1], [], []>} : vector<2x128xbf16>, vector<128x128xbf16>, vector<2x128xf32> -> vector<2x128xf32>
    %343 = arith.addf %337, %342 : vector<2x128xf32>
    %344 = vector.extract_strided_slice %264 {offsets = [0, 13, 0], sizes = [2, 1, 128], strides = [1, 1, 1]} : vector<2x16x128xbf16> to vector<2x1x128xbf16>
    %345 = vector.shape_cast %344 : vector<2x1x128xbf16> to vector<2x128xbf16>
    %c13 = arith.constant 13 : index
    %c0_291 = arith.constant 0 : index
    %c0_292 = arith.constant 0 : index
    %346 = vector.load %arg9[%c13, %c0_291, %c0_292] : memref<16x128x128xbf16, #tpu.memory_space<vmem>>, vector<1x128x128xbf16>
    %347 = vector.shape_cast %346 : vector<1x128x128xbf16> to vector<128x128xbf16>
    %cst_293 = arith.constant dense<0.000000e+00> : vector<2x128xf32>
    %348 = tpu.matmul %345, %347, %cst_293 {dimension_numbers = #tpu.dot_dimension_numbers<[1], [0], [0], [1], [0, 0, 1, 1], [], []>} : vector<2x128xbf16>, vector<128x128xbf16>, vector<2x128xf32> -> vector<2x128xf32>
    %349 = arith.addf %343, %348 : vector<2x128xf32>
    %350 = vector.extract_strided_slice %264 {offsets = [0, 14, 0], sizes = [2, 1, 128], strides = [1, 1, 1]} : vector<2x16x128xbf16> to vector<2x1x128xbf16>
    %351 = vector.shape_cast %350 : vector<2x1x128xbf16> to vector<2x128xbf16>
    %c14 = arith.constant 14 : index
    %c0_294 = arith.constant 0 : index
    %c0_295 = arith.constant 0 : index
    %352 = vector.load %arg9[%c14, %c0_294, %c0_295] : memref<16x128x128xbf16, #tpu.memory_space<vmem>>, vector<1x128x128xbf16>
    %353 = vector.shape_cast %352 : vector<1x128x128xbf16> to vector<128x128xbf16>
    %cst_296 = arith.constant dense<0.000000e+00> : vector<2x128xf32>
    %354 = tpu.matmul %351, %353, %cst_296 {dimension_numbers = #tpu.dot_dimension_numbers<[1], [0], [0], [1], [0, 0, 1, 1], [], []>} : vector<2x128xbf16>, vector<128x128xbf16>, vector<2x128xf32> -> vector<2x128xf32>
    %355 = arith.addf %349, %354 : vector<2x128xf32>
    %356 = vector.extract_strided_slice %264 {offsets = [0, 15, 0], sizes = [2, 1, 128], strides = [1, 1, 1]} : vector<2x16x128xbf16> to vector<2x1x128xbf16>
    %357 = vector.shape_cast %356 : vector<2x1x128xbf16> to vector<2x128xbf16>
    %c15 = arith.constant 15 : index
    %c0_297 = arith.constant 0 : index
    %c0_298 = arith.constant 0 : index
    %358 = vector.load %arg9[%c15, %c0_297, %c0_298] : memref<16x128x128xbf16, #tpu.memory_space<vmem>>, vector<1x128x128xbf16>
    %359 = vector.shape_cast %358 : vector<1x128x128xbf16> to vector<128x128xbf16>
    %cst_299 = arith.constant dense<0.000000e+00> : vector<2x128xf32>
    %360 = tpu.matmul %357, %359, %cst_299 {dimension_numbers = #tpu.dot_dimension_numbers<[1], [0], [0], [1], [0, 0, 1, 1], [], []>} : vector<2x128xbf16>, vector<128x128xbf16>, vector<2x128xf32> -> vector<2x128xf32>
    %361 = arith.addf %355, %360 : vector<2x128xf32>
    %c0_300 = arith.constant 0 : index
    %c0_301 = arith.constant 0 : index
    %362 = vector.load %arg10[%c0_300, %c0_301] : memref<1x128xf32, #tpu.memory_space<vmem>>, vector<1x128xf32>
    %363 = vector.broadcast %362 : vector<1x128xf32> to vector<2x128xf32>
    %364 = arith.addf %361, %363 : vector<2x128xf32>
    %c0_302 = arith.constant 0 : index
    %c0_303 = arith.constant 0 : index
    %c0_304 = arith.constant 0 : index
    %365 = vector.load %arg11[%c0_302, %c0_303, %c0_304] : memref<1x2x128xf32, #tpu.memory_space<vmem>>, vector<1x2x128xf32>
    %366 = vector.shape_cast %365 : vector<1x2x128xf32> to vector<2x128xf32>
    %367 = vector.shape_cast %364 : vector<2x128xf32> to vector<1x2x128xf32>
    tpu.vector_store %arg11[%c0_302, %c0_303, %c0_304], %367 {strides = array<i32>} : memref<1x2x128xf32, #tpu.memory_space<vmem>>, vector<1x2x128xf32>,
    return
  }
  func.func @transform_0(%arg0: i32) -> (i32, i32, i32) {
    %c0_i32 = arith.constant 0 : i32
    %c0_i32_0 = arith.constant 0 : i32
    %c0_i32_1 = arith.constant 0 : i32
    return %arg0, %c0_i32, %c0_i32_0 : i32, i32, i32
  }
  func.func @transform_1(%arg0: i32) -> (i32, i32, i32) {
    %c0_i32 = arith.constant 0 : i32
    %c0_i32_0 = arith.constant 0 : i32
    %c0_i32_1 = arith.constant 0 : i32
    %c0_i32_2 = arith.constant 0 : i32
    return %c0_i32, %c0_i32_0, %c0_i32_1 : i32, i32, i32
  }
  func.func @transform_2(%arg0: i32) -> (i32, i32, i32) {
    %c0_i32 = arith.constant 0 : i32
    %c0_i32_0 = arith.constant 0 : i32
    %c0_i32_1 = arith.constant 0 : i32
    %c0_i32_2 = arith.constant 0 : i32
    return %c0_i32, %c0_i32_0, %c0_i32_1 : i32, i32, i32
  }
  func.func @transform_3(%arg0: i32) -> (i32, i32, i32) {
    %c0_i32 = arith.constant 0 : i32
    %c0_i32_0 = arith.constant 0 : i32
    %c0_i32_1 = arith.constant 0 : i32
    %c0_i32_2 = arith.constant 0 : i32
    return %c0_i32, %c0_i32_0, %c0_i32_1 : i32, i32, i32
  }
  func.func @transform_4(%arg0: i32) -> (i32, i32, i32) {
    %c0_i32 = arith.constant 0 : i32
    %c0_i32_0 = arith.constant 0 : i32
    %c0_i32_1 = arith.constant 0 : i32
    %c0_i32_2 = arith.constant 0 : i32
    return %c0_i32, %c0_i32_0, %c0_i32_1 : i32, i32, i32
  }
  func.func @transform_5(%arg0: i32) -> (i32, i32, i32) {
    %c0_i32 = arith.constant 0 : i32
    %c0_i32_0 = arith.constant 0 : i32
    %c0_i32_1 = arith.constant 0 : i32
    %c0_i32_2 = arith.constant 0 : i32
    return %c0_i32, %c0_i32_0, %c0_i32_1 : i32, i32, i32
  }
  func.func @transform_6(%arg0: i32) -> (i32, i32, i32) {
    %c0_i32 = arith.constant 0 : i32
    %c0_i32_0 = arith.constant 0 : i32
    %c0_i32_1 = arith.constant 0 : i32
    %c0_i32_2 = arith.constant 0 : i32
    return %c0_i32, %c0_i32_0, %c0_i32_1 : i32, i32, i32
  }
  func.func @transform_7(%arg0: i32) -> (i32, i32, i32) {
    %c0_i32 = arith.constant 0 : i32
    %c0_i32_0 = arith.constant 0 : i32
    %c0_i32_1 = arith.constant 0 : i32
    %c0_i32_2 = arith.constant 0 : i32
    return %c0_i32, %c0_i32_0, %c0_i32_1 : i32, i32, i32
  }
  func.func @transform_8(%arg0: i32) -> (i32, i32, i32) {
    %c0_i32 = arith.constant 0 : i32
    %c0_i32_0 = arith.constant 0 : i32
    %c0_i32_1 = arith.constant 0 : i32
    %c0_i32_2 = arith.constant 0 : i32
    return %c0_i32, %c0_i32_0, %c0_i32_1 : i32, i32, i32
  }
  func.func @transform_9(%arg0: i32) -> (i32, i32) {
    %c0_i32 = arith.constant 0 : i32
    %c0_i32_0 = arith.constant 0 : i32
    %c0_i32_1 = arith.constant 0 : i32
    return %c0_i32, %c0_i32_0 : i32, i32
  }
  func.func @transform_10(%arg0: i32) -> (i32, i32, i32) {
    %c0_i32 = arith.constant 0 : i32
    %c0_i32_0 = arith.constant 0 : i32
    %c0_i32_1 = arith.constant 0 : i32
    return %arg0, %c0_i32, %c0_i32_0 : i32, i32, i32
  }
}

</mosaic_0001>

<llo_original>
// kernel: tpu_custom_call.1
$region0: #{tpu_custom_call.1}
  #allocation0 [shape = 'u32[]', space=smem, size = 0x4, offset = 0x4, fixed_abs, tag = 'smem constant byte address 0x4 - core index']
  #allocation1 [shape = 'u32[144,128]{1,0:T(1,128)}', space=vmem, size = 0x12000, scoped, tag = 'internal scratch']
  #allocation2 [shape = 'bf16[39,128]{1,0:T(8,128)(2,1)}', space=vmem, size = 0x2800, scoped, tag = 'scratch operand']
  #allocation3 [shape = 'f32[32,128]{1,0:T(8,128)}', space=vmem, size = 0x4000, scoped, tag = 'scratch operand']
  %s0 = inlined_call_operand.hbm [shape: f32[2,16,128], index: 0, kind: input, shape index: {}]
  %s1 = inlined_call_operand.hbm [shape: bf16[3,1024,128], index: 1, kind: input, shape index: {}]
  %s2 = inlined_call_operand.hbm [shape: bf16[3,640,128], index: 2, kind: input, shape index: {}]
  %s3 = inlined_call_operand.hbm [shape: bf16[3,384,128], index: 3, kind: input, shape index: {}]
  %s4 = inlined_call_operand.hbm [shape: f32[9,1,128], index: 4, kind: input, shape index: {}]
  %s5 = inlined_call_operand.vmem [shape: f32[9,1,128], index: 5, kind: input, shape index: {}]
  %s6 = inlined_call_operand.hbm [shape: f32[3,1,128], index: 6, kind: input, shape index: {}]
  %s7 = inlined_call_operand.vmem [shape: f32[3,1,128], index: 7, kind: input, shape index: {}]
  %s8 = inlined_call_operand.hbm [shape: bf16[16,128,128], index: 8, kind: input, shape index: {}]
  %s9 = inlined_call_operand.vmem [shape: f32[1,128], index: 9, kind: input, shape index: {}]
  %s10 = inlined_call_operand.hbm [shape: f32[1,2,128], index: 10, kind: output, shape index: {}]
  %s11 = sld [smem:[#allocation0]]
  $region78: #{tpu_custom_call.1} parent=0
    _
  %s13 = ssub.s32 1, %s11
  %s14 = scalar_select 0, %s13, %s11
  $region1: #{tpu_custom_call.1} parent=0
    #allocation4 [shape = 'u8[16384]{0}', space=vmem, size = 0x4000, scoped, tag = 'input window, operand 0, single buffered']
    #allocation5 [shape = 's32[1]{0}', space=sflag, size = 0x4, scoped, tag = 'scoped memory for tpu_custom_call.1']
    #allocation6 [shape = 's32[1]{0}', space=sflag, size = 0x4, scoped, tag = 'scoped memory for tpu_custom_call.1']
    #allocation7 [shape = 'u8[786432]{0}', space=vmem, size = 0xc0000, scoped, tag = 'input window, operand 1, single buffered']
    #allocation8 [shape = 's32[1]{0}', space=sflag, size = 0x4, scoped, tag = 'scoped memory for tpu_custom_call.1']
    #allocation9 [shape = 'u8[491520]{0}', space=vmem, size = 0x78000, scoped, tag = 'input window, operand 2, single buffered']
    #allocation10 [shape = 'u8[294912]{0}', space=vmem, size = 0x48000, scoped, tag = 'input window, operand 3, single buffered']
    #allocation11 [shape = 's32[1]{0}', space=sflag, size = 0x4, scoped, tag = 'scoped memory for tpu_custom_call.1']
    #allocation12 [shape = 'u8[4608]{0}', space=vmem, size = 0x1400, scoped, tag = 'input window, operand 4, single buffered']
    #allocation13 [shape = 'u8[1536]{0}', space=vmem, size = 0x800, scoped, tag = 'input window, operand 6, single buffered']
    #allocation14 [shape = 's32[1]{0}', space=sflag, size = 0x4, scoped, tag = 'scoped memory for tpu_custom_call.1']
    #allocation15 [shape = 'u8[524288]{0}', space=vmem, size = 0x80000, scoped, tag = 'input window, operand 8, single buffered']
    #allocation16 [shape = 'u8[1024]{0}', space=vmem, size = 0x400, scoped, tag = 'output window, operand 0, single buffered']
    %15 = vsyncpa [#allocation5], 0
    %16 = vsyncpa [#allocation8], 0
    %17 = vsyncpa [#allocation11], 0
    %18 = vsyncpa [#allocation14], 0
    %19 = vsyncpa [#allocation6], 0
    // Predicated region
    $region2: #{tpu_custom_call.1} parent=1 // pred_check
      _
    $region3: #{tpu_custom_call.1} parent=1 // pred_check_branch
      %21 = sbr.rel (0) target = $region5
    $region4: #{tpu_custom_call.1} parent=1 // pred_region
      %s23 = ssub.s32 512, 512
      %24 = vsyncadd [#allocation5], %s23
      %s25 = sshll.u32 [#allocation4], 4
      %s26 = int_to_ptr.vmem [resolvable:$true] %s25
      %31 = dma.hbm_to_vmem [thread:$0]  %s0, 512, %s26, [#allocation5], 128, 128, 8
    $region5: #{tpu_custom_call.1} parent=1 // pred_fallthru
      _
    // Predicated region
    $region6: #{tpu_custom_call.1} parent=1 // pred_check
      _
    $region7: #{tpu_custom_call.1} parent=1 // pred_check_branch
      %33 = sbr.rel (0) target = $region9
    $region8: #{tpu_custom_call.1} parent=1 // pred_region
      %s35 = ssub.s32 24576, 24576
      %36 = vsyncadd [#allocation8], %s35
      %s37 = sshll.u32 [#allocation7], 4
      %s38 = int_to_ptr.vmem [resolvable:$true] %s37
      %43 = dma.hbm_to_vmem [thread:$0]  %s1, 24576, %s38, [#allocation8], 64, 64, 4
    $region9: #{tpu_custom_call.1} parent=1 // pred_fallthru
      _
    // Predicated region
    $region10: #{tpu_custom_call.1} parent=1 // pred_check
      _
    $region11: #{tpu_custom_call.1} parent=1 // pred_check_branch
      %45 = sbr.rel (0) target = $region13
    $region12: #{tpu_custom_call.1} parent=1 // pred_region
      %s47 = ssub.s32 15360, 15360
      %48 = vsyncadd [#allocation8], %s47
      %s49 = sshll.u32 [#allocation9], 4
      %s50 = int_to_ptr.vmem [resolvable:$true] %s49
      %55 = dma.hbm_to_vmem [thread:$0]  %s2, 15360, %s50, [#allocation8], 64, 64, 4
    $region13: #{tpu_custom_call.1} parent=1 // pred_fallthru
      _
    // Predicated region
    $region14: #{tpu_custom_call.1} parent=1 // pred_check
      _
    $region15: #{tpu_custom_call.1} parent=1 // pred_check_branch
      %57 = sbr.rel (0) target = $region17
    $region16: #{tpu_custom_call.1} parent=1 // pred_region
      %s59 = ssub.s32 9216, 9216
      %60 = vsyncadd [#allocation11], %s59
      %s61 = sshll.u32 [#allocation10], 4
      %s62 = int_to_ptr.vmem [resolvable:$true] %s61
      %67 = dma.hbm_to_vmem [thread:$0]  %s3, 9216, %s62, [#allocation11], 64, 64, 4
    $region17: #{tpu_custom_call.1} parent=1 // pred_fallthru
      _
    // Predicated region
    $region18: #{tpu_custom_call.1} parent=1 // pred_check
      _
    $region19: #{tpu_custom_call.1} parent=1 // pred_check_branch
      %69 = sbr.rel (0) target = $region21
    $region20: #{tpu_custom_call.1} parent=1 // pred_region
      %s71 = ssub.s32 144, 144
      %72 = vsyncadd [#allocation11], %s71
      %s73 = sshll.u32 [#allocation12], 4
      %s74 = int_to_ptr.vmem [resolvable:$true] %s73
      %79 = dma.hbm_to_vmem [thread:$0]  %s4, 144, %s74, [#allocation11], 16, 16, 1
    $region21: #{tpu_custom_call.1} parent=1 // pred_fallthru
      _
    // Predicated region
    $region22: #{tpu_custom_call.1} parent=1 // pred_check
      _
    $region23: #{tpu_custom_call.1} parent=1 // pred_check_branch
      %81 = sbr.rel (0) target = $region25
    $region24: #{tpu_custom_call.1} parent=1 // pred_region
      _
    $region25: #{tpu_custom_call.1} parent=1 // pred_fallthru
      _
    // Predicated region
    $region26: #{tpu_custom_call.1} parent=1 // pred_check
      _
    $region27: #{tpu_custom_call.1} parent=1 // pred_check_branch
      %83 = sbr.rel (0) target = $region29
    $region28: #{tpu_custom_call.1} parent=1 // pred_region
      %s85 = ssub.s32 48, 48
      %86 = vsyncadd [#allocation14], %s85
      %s87 = sshll.u32 [#allocation13], 4
      %s88 = int_to_ptr.vmem [resolvable:$true] %s87
      %93 = dma.hbm_to_vmem [thread:$0]  %s6, 48, %s88, [#allocation14], 16, 16, 1
    $region29: #{tpu_custom_call.1} parent=1 // pred_fallthru
      _
    // Predicated region
    $region30: #{tpu_custom_call.1} parent=1 // pred_check
      _
    $region31: #{tpu_custom_call.1} parent=1 // pred_check_branch
      %95 = sbr.rel (0) target = $region33
    $region32: #{tpu_custom_call.1} parent=1 // pred_region
      _
    $region33: #{tpu_custom_call.1} parent=1 // pred_fallthru
      _
    // Predicated region
    $region34: #{tpu_custom_call.1} parent=1 // pred_check
      _
    $region35: #{tpu_custom_call.1} parent=1 // pred_check_branch
      %97 = sbr.rel (0) target = $region37
    $region36: #{tpu_custom_call.1} parent=1 // pred_region
      %s99 = ssub.s32 16384, 16384
      %100 = vsyncadd [#allocation14], %s99
      %s101 = sshll.u32 [#allocation15], 4
      %s102 = int_to_ptr.vmem [resolvable:$true] %s101
      %107 = dma.hbm_to_vmem [thread:$0]  %s8, 16384, %s102, [#allocation14], 64, 64, 4
    $region37: #{tpu_custom_call.1} parent=1 // pred_fallthru
      _
    // Predicated region
    $region38: #{tpu_custom_call.1} parent=1 // pred_check
      _
    $region39: #{tpu_custom_call.1} parent=1 // pred_check_branch
      %109 = sbr.rel (0) target = $region41
    $region40: #{tpu_custom_call.1} parent=1 // pred_region
      _
    $region41: #{tpu_custom_call.1} parent=1 // pred_fallthru
      _
    // Predicated region
    $region42: #{tpu_custom_call.1} parent=1 // pred_check
      _
    $region43: #{tpu_custom_call.1} parent=1 // pred_check_branch
      %111 = sbr.rel (0) target = $region45
    $region44: #{tpu_custom_call.1} parent=1 // pred_region
      %112 = dma.done [#allocation5], 512
    $region45: #{tpu_custom_call.1} parent=1 // pred_fallthru
      _
    // Predicated region
    $region46: #{tpu_custom_call.1} parent=1 // pred_check
      _
    $region47: #{tpu_custom_call.1} parent=1 // pred_check_branch
      %114 = sbr.rel (0) target = $region49
    $region48: #{tpu_custom_call.1} parent=1 // pred_region
      %115 = dma.done [#allocation8], 24576
    $region49: #{tpu_custom_call.1} parent=1 // pred_fallthru
      _
    // Predicated region
    $region50: #{tpu_custom_call.1} parent=1 // pred_check
      _
    $region51: #{tpu_custom_call.1} parent=1 // pred_check_branch
      %117 = sbr.rel (0) target = $region53
    $region52: #{tpu_custom_call.1} parent=1 // pred_region
      %118 = dma.done [#allocation8], 15360
    $region53: #{tpu_custom_call.1} parent=1 // pred_fallthru
      _
    // Predicated region
    $region54: #{tpu_custom_call.1} parent=1 // pred_check
      _
    $region55: #{tpu_custom_call.1} parent=1 // pred_check_branch
      %120 = sbr.rel (0) target = $region57
    $region56: #{tpu_custom_call.1} parent=1 // pred_region
      %121 = dma.done [#allocation11], 9216
    $region57: #{tpu_custom_call.1} parent=1 // pred_fallthru
      _
    // Predicated region
    $region58: #{tpu_custom_call.1} parent=1 // pred_check
      _
    $region59: #{tpu_custom_call.1} parent=1 // pred_check_branch
      %123 = sbr.rel (0) target = $region61
    $region60: #{tpu_custom_call.1} parent=1 // pred_region
      %124 = dma.done [#allocation11], 144
    $region61: #{tpu_custom_call.1} parent=1 // pred_fallthru
      _
    // Predicated region
    $region62: #{tpu_custom_call.1} parent=1 // pred_check
      _
    $region63: #{tpu_custom_call.1} parent=1 // pred_check_branch
      %126 = sbr.rel (0) target = $region65
    $region64: #{tpu_custom_call.1} parent=1 // pred_region
      %127 = dma.done [#allocation14], 48
    $region65: #{tpu_custom_call.1} parent=1 // pred_fallthru
      _
    // Predicated region
    $region66: #{tpu_custom_call.1} parent=1 // pred_check
      _
    $region67: #{tpu_custom_call.1} parent=1 // pred_check_branch
      %129 = sbr.rel (0) target = $region69
    $region68: #{tpu_custom_call.1} parent=1 // pred_region
      %130 = dma.done [#allocation14], 16384
    $region69: #{tpu_custom_call.1} parent=1 // pred_fallthru
      _
    %v132 = vlaneseq
    %v133 = vshrl.u32 %v132, 7
    %v134 = vadd.s32 %v133, 8
    %vm135 = vcmask 1043456
    %vm136 = vsmask.f32 3328
    %vm137 = vmand %vm135, %vm136
    %v138 = vld [vmem:[#allocation2 + $0x10] sm:$0xf]
    %v139 = vsel %vm137, 0, %v138
    %140 = vst [vmem:[#allocation2 + $0x10] sm:$0xf] %v139
    %v141 = vld [vmem:[#allocation4] sm:$0xff]
    %v142 = vld [vmem:[#allocation4 + $0x8] sm:$0xff]
    %v143 = vld [vmem:[#allocation4 + $0x10] sm:$0xff]
    %v144 = vld [vmem:[#allocation4 + $0x18] sm:$0xff]
    %v145 = vpack.c.bf16 %v142, %v141
    %v146 = vpack.c.bf16 %v144, %v143
    %v149 = vunpack.c.l.b16 %v145
    %v150 = vunpack.c.h.b16 %v145
    %v151 = vunpack.c.l.b16 %v146
    %v152 = vunpack.c.h.b16 %v146
    %v153 = vpack.c.b16 %v149, %v149
    %v154 = vpack.c.b16 %v150, %v150
    %v155 = vpack.c.b16 %v151, %v151
    %v156 = vpack.c.b16 %v152, %v152
    %161 = vst [vmem:[#allocation2] sm:$0xf] %v153
    %162 = vst [vmem:[#allocation2 + $0x4] sm:$0xf] %v154
    %163 = vst [vmem:[#allocation2 + $0x8] sm:$0xf] %v155
    %164 = vst [vmem:[#allocation2 + $0xc] sm:$0xf] %v156
    %v165 = vld [vmem:[#allocation2] sm:$0xf]
    %v166 = vld [vmem:[#allocation2 + $0x4] sm:$0xf]
    %v167 = vld [vmem:[#allocation2 + $0x8] sm:$0xf]
    %v168 = vld [vmem:[#allocation2 + $0xc] sm:$0xf]
    %v169 = vld [vmem:[#allocation2 + $0x10] sm:$0x1]
    %v170 = vld [vmem:[#allocation2] sm:$0xe]
    %v171 = vld [vmem:[#allocation2 + $0x10] sm:$0x3]
    %v172 = vld [vmem:[#allocation2] sm:$0xc]
    %v173 = vld [vmem:[#allocation2 + $0x10] sm:$0x7]
    %v174 = vld [vmem:[#allocation2] sm:$0x8]
    %v175 = vld [vmem:[#allocation2 + $0x10] sm:$0xf]
    %v180 = vunpack.c.l.b16 %v165
    %v181 = vunpack.c.l.b16 %v166
    %v182 = vunpack.c.l.b16 %v167
    %v183 = vunpack.c.l.b16 %v168
    %v184 = vpack.c.b16 %v181, %v180
    %v185 = vpack.c.b16 %v183, %v182
    %v189 = vunpack.c.l.b16 %v169
    %v190 = vpack.c.b16 %v189, %v189
    %vm191 = vsmask.f32 7424
    %v193 = vshrl.u32 %v184, 16
    %v195 = vshll.u32 %v184, 16
    %v197 = vrot.slane %v195, 1
    %v198 = vor.u32 %v193, %v197
    %v200 = vshll.u32 %v185, 16
    %v202 = vrot.slane %v200, 1
    %v203 = vsel %vm191, %v198, %v202
    %v204 = vshrl.u32 %v185, 16
    %v206 = vor.u32 %v204, %v202
    %v208 = vshll.u32 %v190, 16
    %v210 = vrot.slane %v208, 1
    %v211 = vsel %vm191, %v206, %v210
    %v215 = vunpack.c.l.b16 %v170
    %v216 = vpack.c.b16 %v181, %v215
    %vm217 = vcmask 1046528
    %v218 = vrot.slane %v216, 1
    %v219 = vrot.slane %v185, 1
    %v220 = vsel %vm217, %v218, %v219
    %v221 = vrot.slane %v190, 1
    %v222 = vsel %vm217, %v219, %v221
    %v226 = vunpack.c.l.b16 %v171
    %v227 = vpack.c.b16 %v226, %v226
    %vm228 = vsmask.f32 6400
    %v230 = vshrl.u32 %v216, 16
    %v232 = vrot.slane %v230, 1
    %v233 = vshll.u32 %v216, 16
    %v235 = vrot.slane %v233, 2
    %v236 = vor.u32 %v232, %v235
    %v237 = vrot.slane %v204, 1
    %v238 = vrot.slane %v200, 2
    %v239 = vor.u32 %v237, %v238
    %v240 = vsel %vm228, %v236, %v239
    %v242 = vshrl.u32 %v227, 16
    %v244 = vrot.slane %v242, 1
    %v245 = vshll.u32 %v227, 16
    %v247 = vrot.slane %v245, 2
    %v248 = vor.u32 %v244, %v247
    %v249 = vsel %vm228, %v239, %v248
    %v253 = vunpack.c.l.b16 %v172
    %v254 = vpack.c.b16 %v181, %v253
    %vm255 = vcmask 1045504
    %v256 = vrot.slane %v254, 2
    %v257 = vrot.slane %v185, 2
    %v258 = vsel %vm255, %v256, %v257
    %v259 = vrot.slane %v227, 2
    %v260 = vsel %vm255, %v257, %v259
    %v264 = vunpack.c.l.b16 %v173
    %v265 = vpack.c.b16 %v264, %v264
    %vm266 = vsmask.f32 5376
    %v268 = vshrl.u32 %v254, 16
    %v270 = vrot.slane %v268, 2
    %v271 = vshll.u32 %v254, 16
    %v273 = vrot.slane %v271, 3
    %v274 = vor.u32 %v270, %v273
    %v275 = vrot.slane %v204, 2
    %v276 = vrot.slane %v200, 3
    %v277 = vor.u32 %v275, %v276
    %v278 = vsel %vm266, %v274, %v277
    %v280 = vshrl.u32 %v265, 16
    %v282 = vrot.slane %v280, 2
    %v283 = vshll.u32 %v265, 16
    %v285 = vrot.slane %v283, 3
    %v286 = vor.u32 %v282, %v285
    %v287 = vsel %vm266, %v277, %v286
    %v291 = vunpack.c.l.b16 %v174
    %v292 = vpack.c.b16 %v181, %v291
    %vm293 = vcmask 1044480
    %v294 = vrot.slane %v292, 3
    %v295 = vrot.slane %v185, 3
    %v296 = vsel %vm293, %v294, %v295
    %v297 = vrot.slane %v265, 3
    %v298 = vsel %vm293, %v295, %v297
    %v302 = vunpack.c.l.b16 %v175
    %v303 = vpack.c.b16 %v302, %v302
    %vm304 = vsmask.f32 4352
    %v306 = vshrl.u32 %v292, 16
    %v308 = vrot.slane %v306, 3
    %v309 = vshll.u32 %v292, 16
    %v311 = vrot.slane %v309, 4
    %v312 = vor.u32 %v308, %v311
    %v313 = vrot.slane %v204, 3
    %v314 = vrot.slane %v200, 4
    %v315 = vor.u32 %v313, %v314
    %v316 = vsel %vm304, %v312, %v315
    %v318 = vshrl.u32 %v303, 16
    %v320 = vrot.slane %v318, 3
    %v321 = vshll.u32 %v303, 16
    %v323 = vrot.slane %v321, 4
    %v324 = vor.u32 %v320, %v323
    %v325 = vsel %vm304, %v315, %v324
    %v328 = vld [vmem:[#allocation7] sm:$0xf]
    %v329 = vld [vmem:[#allocation7 + $0x4] sm:$0xf]
    %v330 = vld [vmem:[#allocation7 + $0x8] sm:$0xf]
    %v331 = vld [vmem:[#allocation7 + $0xc] sm:$0xf]
    %v332 = vld [vmem:[#allocation7 + $0x10] sm:$0xf]
    %v333 = vld [vmem:[#allocation7 + $0x14] sm:$0xf]
    %v334 = vld [vmem:[#allocation7 + $0x18] sm:$0xf]
    %v335 = vld [vmem:[#allocation7 + $0x1c] sm:$0xf]
    %v336 = vld [vmem:[#allocation7 + $0x20] sm:$0xf]
    %v337 = vld [vmem:[#allocation7 + $0x24] sm:$0xf]
    %v338 = vld [vmem:[#allocation7 + $0x28] sm:$0xf]
    %v339 = vld [vmem:[#allocation7 + $0x2c] sm:$0xf]
    %v340 = vld [vmem:[#allocation7 + $0x30] sm:$0xf]
    %v341 = vld [vmem:[#allocation7 + $0x34] sm:$0xf]
    %v342 = vld [vmem:[#allocation7 + $0x38] sm:$0xf]
    %v343 = vld [vmem:[#allocation7 + $0x3c] sm:$0xf]
    %v344 = vld [vmem:[#allocation7 + $0x40] sm:$0xf]
    %v345 = vld [vmem:[#allocation7 + $0x44] sm:$0xf]
    %v346 = vld [vmem:[#allocation7 + $0x48] sm:$0xf]
    %v347 = vld [vmem:[#allocation7 + $0x4c] sm:$0xf]
    %v348 = vld [vmem:[#allocation7 + $0x50] sm:$0xf]
    %v349 = vld [vmem:[#allocation7 + $0x54] sm:$0xf]
    %v350 = vld [vmem:[#allocation7 + $0x58] sm:$0xf]
    %v351 = vld [vmem:[#allocation7 + $0x5c] sm:$0xf]
    %v352 = vld [vmem:[#allocation7 + $0x60] sm:$0xf]
    %v353 = vld [vmem:[#allocation7 + $0x64] sm:$0xf]
    %v354 = vld [vmem:[#allocation7 + $0x68] sm:$0xf]
    %v355 = vld [vmem:[#allocation7 + $0x6c] sm:$0xf]
    %v356 = vld [vmem:[#allocation7 + $0x70] sm:$0xf]
    %v357 = vld [vmem:[#allocation7 + $0x74] sm:$0xf]
    %v358 = vld [vmem:[#allocation7 + $0x78] sm:$0xf]
    %v359 = vld [vmem:[#allocation7 + $0x7c] sm:$0xf]
    %v360 = vld [vmem:[#allocation7 + $0x80] sm:$0xf]
    %v361 = vld [vmem:[#allocation7 + $0x84] sm:$0xf]
    %v362 = vld [vmem:[#allocation7 + $0x88] sm:$0xf]
    %v363 = vld [vmem:[#allocation7 + $0x8c] sm:$0xf]
    %v364 = vld [vmem:[#allocation7 + $0x90] sm:$0xf]
    %v365 = vld [vmem:[#allocation7 + $0x94] sm:$0xf]
    %v366 = vld [vmem:[#allocation7 + $0x98] sm:$0xf]
    %v367 = vld [vmem:[#allocation7 + $0x9c] sm:$0xf]
    %v368 = vld [vmem:[#allocation7 + $0xa0] sm:$0xf]
    %v369 = vld [vmem:[#allocation7 + $0xa4] sm:$0xf]
    %v370 = vld [vmem:[#allocation7 + $0xa8] sm:$0xf]
    %v371 = vld [vmem:[#allocation7 + $0xac] sm:$0xf]
    %v372 = vld [vmem:[#allocation7 + $0xb0] sm:$0xf]
    %v373 = vld [vmem:[#allocation7 + $0xb4] sm:$0xf]
    %v374 = vld [vmem:[#allocation7 + $0xb8] sm:$0xf]
    %v375 = vld [vmem:[#allocation7 + $0xbc] sm:$0xf]
    %v376 = vld [vmem:[#allocation7 + $0xc0] sm:$0xf]
    %v377 = vld [vmem:[#allocation7 + $0xc4] sm:$0xf]
    %v378 = vld [vmem:[#allocation7 + $0xc8] sm:$0xf]
    %v379 = vld [vmem:[#allocation7 + $0xcc] sm:$0xf]
    %v380 = vld [vmem:[#allocation7 + $0xd0] sm:$0xf]
    %v381 = vld [vmem:[#allocation7 + $0xd4] sm:$0xf]
    %v382 = vld [vmem:[#allocation7 + $0xd8] sm:$0xf]
    %v383 = vld [vmem:[#allocation7 + $0xdc] sm:$0xf]
    %v384 = vld [vmem:[#allocation7 + $0xe0] sm:$0xf]
    %v385 = vld [vmem:[#allocation7 + $0xe4] sm:$0xf]
    %v386 = vld [vmem:[#allocation7 + $0xe8] sm:$0xf]
    %v387 = vld [vmem:[#allocation7 + $0xec] sm:$0xf]
    %v388 = vld [vmem:[#allocation7 + $0xf0] sm:$0xf]
    %v389 = vld [vmem:[#allocation7 + $0xf4] sm:$0xf]
    %v390 = vld [vmem:[#allocation7 + $0xf8] sm:$0xf]
    %v391 = vld [vmem:[#allocation7 + $0xfc] sm:$0xf]
    %v392 = vld [vmem:[#allocation7 + $0x100] sm:$0xf]
    %v393 = vld [vmem:[#allocation7 + $0x104] sm:$0xf]
    %v394 = vld [vmem:[#allocation7 + $0x108] sm:$0xf]
    %v395 = vld [vmem:[#allocation7 + $0x10c] sm:$0xf]
    %v396 = vld [vmem:[#allocation7 + $0x110] sm:$0xf]
    %v397 = vld [vmem:[#allocation7 + $0x114] sm:$0xf]
    %v398 = vld [vmem:[#allocation7 + $0x118] sm:$0xf]
    %v399 = vld [vmem:[#allocation7 + $0x11c] sm:$0xf]
    %v400 = vld [vmem:[#allocation7 + $0x120] sm:$0xf]
    %v401 = vld [vmem:[#allocation7 + $0x124] sm:$0xf]
    %v402 = vld [vmem:[#allocation7 + $0x128] sm:$0xf]
    %v403 = vld [vmem:[#allocation7 + $0x12c] sm:$0xf]
    %v404 = vld [vmem:[#allocation7 + $0x130] sm:$0xf]
    %v405 = vld [vmem:[#allocation7 + $0x134] sm:$0xf]
    %v406 = vld [vmem:[#allocation7 + $0x138] sm:$0xf]
    %v407 = vld [vmem:[#allocation7 + $0x13c] sm:$0xf]
    %v408 = vld [vmem:[#allocation7 + $0x140] sm:$0xf]
    %v409 = vld [vmem:[#allocation7 + $0x144] sm:$0xf]
    %v410 = vld [vmem:[#allocation7 + $0x148] sm:$0xf]
    %v411 = vld [vmem:[#allocation7 + $0x14c] sm:$0xf]
    %v412 = vld [vmem:[#allocation7 + $0x150] sm:$0xf]
    %v413 = vld [vmem:[#allocation7 + $0x154] sm:$0xf]
    %v414 = vld [vmem:[#allocation7 + $0x158] sm:$0xf]
    %v415 = vld [vmem:[#allocation7 + $0x15c] sm:$0xf]
    %v416 = vld [vmem:[#allocation7 + $0x160] sm:$0xf]
    %v417 = vld [vmem:[#allocation7 + $0x164] sm:$0xf]
    %v418 = vld [vmem:[#allocation7 + $0x168] sm:$0xf]
    %v419 = vld [vmem:[#allocation7 + $0x16c] sm:$0xf]
    %v420 = vld [vmem:[#allocation7 + $0x170] sm:$0xf]
    %v421 = vld [vmem:[#allocation7 + $0x174] sm:$0xf]
    %v422 = vld [vmem:[#allocation7 + $0x178] sm:$0xf]
    %v423 = vld [vmem:[#allocation7 + $0x17c] sm:$0xf]
    %v424 = vld [vmem:[#allocation7 + $0x180] sm:$0xf]
    %v425 = vld [vmem:[#allocation7 + $0x184] sm:$0xf]
    %v426 = vld [vmem:[#allocation7 + $0x188] sm:$0xf]
    %v427 = vld [vmem:[#allocation7 + $0x18c] sm:$0xf]
    %v428 = vld [vmem:[#allocation7 + $0x190] sm:$0xf]
    %v429 = vld [vmem:[#allocation7 + $0x194] sm:$0xf]
    %v430 = vld [vmem:[#allocation7 + $0x198] sm:$0xf]
    %v431 = vld [vmem:[#allocation7 + $0x19c] sm:$0xf]
    %v432 = vld [vmem:[#allocation7 + $0x1a0] sm:$0xf]
    %v433 = vld [vmem:[#allocation7 + $0x1a4] sm:$0xf]
    %v434 = vld [vmem:[#allocation7 + $0x1a8] sm:$0xf]
    %v435 = vld [vmem:[#allocation7 + $0x1ac] sm:$0xf]
    %v436 = vld [vmem:[#allocation7 + $0x1b0] sm:$0xf]
    %v437 = vld [vmem:[#allocation7 + $0x1b4] sm:$0xf]
    %v438 = vld [vmem:[#allocation7 + $0x1b8] sm:$0xf]
    %v439 = vld [vmem:[#allocation7 + $0x1bc] sm:$0xf]
    %v440 = vld [vmem:[#allocation7 + $0x1c0] sm:$0xf]
    %v441 = vld [vmem:[#allocation7 + $0x1c4] sm:$0xf]
    %v442 = vld [vmem:[#allocation7 + $0x1c8] sm:$0xf]
    %v443 = vld [vmem:[#allocation7 + $0x1cc] sm:$0xf]
    %v444 = vld [vmem:[#allocation7 + $0x1d0] sm:$0xf]
    %v445 = vld [vmem:[#allocation7 + $0x1d4] sm:$0xf]
    %v446 = vld [vmem:[#allocation7 + $0x1d8] sm:$0xf]
    %v447 = vld [vmem:[#allocation7 + $0x1dc] sm:$0xf]
    %v448 = vld [vmem:[#allocation7 + $0x1e0] sm:$0xf]
    %v449 = vld [vmem:[#allocation7 + $0x1e4] sm:$0xf]
    %v450 = vld [vmem:[#allocation7 + $0x1e8] sm:$0xf]
    %v451 = vld [vmem:[#allocation7 + $0x1ec] sm:$0xf]
    %v452 = vld [vmem:[#allocation7 + $0x1f0] sm:$0xf]
    %v453 = vld [vmem:[#allocation7 + $0x1f4] sm:$0xf]
    %v454 = vld [vmem:[#allocation7 + $0x1f8] sm:$0xf]
    %v455 = vld [vmem:[#allocation7 + $0x1fc] sm:$0xf]
    %v584 = vunpack.c.l.b16 %v328
    %v585 = vunpack.c.l.b16 %v329
    %v586 = vunpack.c.l.b16 %v330
    %v587 = vunpack.c.l.b16 %v331
    %v588 = vunpack.c.l.b16 %v332
    %v589 = vunpack.c.l.b16 %v333
    %v590 = vunpack.c.l.b16 %v334
    %v591 = vunpack.c.l.b16 %v335
    %v592 = vunpack.c.l.b16 %v336
    %v593 = vunpack.c.l.b16 %v337
    %v594 = vunpack.c.l.b16 %v338
    %v595 = vunpack.c.l.b16 %v339
    %v596 = vunpack.c.l.b16 %v340
    %v597 = vunpack.c.l.b16 %v341
    %v598 = vunpack.c.l.b16 %v342
    %v599 = vunpack.c.l.b16 %v343
    %v600 = vunpack.c.l.b16 %v344
    %v601 = vunpack.c.l.b16 %v345
    %v602 = vunpack.c.l.b16 %v346
    %v603 = vunpack.c.l.b16 %v347
    %v604 = vunpack.c.l.b16 %v348
    %v605 = vunpack.c.l.b16 %v349
    %v606 = vunpack.c.l.b16 %v350
    %v607 = vunpack.c.l.b16 %v351
    %v608 = vunpack.c.l.b16 %v352
    %v609 = vunpack.c.l.b16 %v353
    %v610 = vunpack.c.l.b16 %v354
    %v611 = vunpack.c.l.b16 %v355
    %v612 = vunpack.c.l.b16 %v356
    %v613 = vunpack.c.l.b16 %v357
    %v614 = vunpack.c.l.b16 %v358
    %v615 = vunpack.c.l.b16 %v359
    %v616 = vunpack.c.l.b16 %v360
    %v617 = vunpack.c.l.b16 %v361
    %v618 = vunpack.c.l.b16 %v362
    %v619 = vunpack.c.l.b16 %v363
    %v620 = vunpack.c.l.b16 %v364
    %v621 = vunpack.c.l.b16 %v365
    %v622 = vunpack.c.l.b16 %v366
    %v623 = vunpack.c.l.b16 %v367
    %v624 = vunpack.c.l.b16 %v368
    %v625 = vunpack.c.l.b16 %v369
    %v626 = vunpack.c.l.b16 %v370
    %v627 = vunpack.c.l.b16 %v371
    %v628 = vunpack.c.l.b16 %v372
    %v629 = vunpack.c.l.b16 %v373
    %v630 = vunpack.c.l.b16 %v374
    %v631 = vunpack.c.l.b16 %v375
    %v632 = vunpack.c.l.b16 %v376
    %v633 = vunpack.c.l.b16 %v377
    %v634 = vunpack.c.l.b16 %v378
    %v635 = vunpack.c.l.b16 %v379
    %v636 = vunpack.c.l.b16 %v380
    %v637 = vunpack.c.l.b16 %v381
    %v638 = vunpack.c.l.b16 %v382
    %v639 = vunpack.c.l.b16 %v383
    %v640 = vunpack.c.l.b16 %v384
    %v641 = vunpack.c.l.b16 %v385
    %v642 = vunpack.c.l.b16 %v386
    %v643 = vunpack.c.l.b16 %v387
    %v644 = vunpack.c.l.b16 %v388
    %v645 = vunpack.c.l.b16 %v389
    %v646 = vunpack.c.l.b16 %v390
    %v647 = vunpack.c.l.b16 %v391
    %v648 = vunpack.c.l.b16 %v392
    %v649 = vunpack.c.l.b16 %v393
    %v650 = vunpack.c.l.b16 %v394
    %v651 = vunpack.c.l.b16 %v395
    %v652 = vunpack.c.l.b16 %v396
    %v653 = vunpack.c.l.b16 %v397
    %v654 = vunpack.c.l.b16 %v398
    %v655 = vunpack.c.l.b16 %v399
    %v656 = vunpack.c.l.b16 %v400
    %v657 = vunpack.c.l.b16 %v401
    %v658 = vunpack.c.l.b16 %v402
    %v659 = vunpack.c.l.b16 %v403
    %v660 = vunpack.c.l.b16 %v404
    %v661 = vunpack.c.l.b16 %v405
    %v662 = vunpack.c.l.b16 %v406
    %v663 = vunpack.c.l.b16 %v407
    %v664 = vunpack.c.l.b16 %v408
    %v665 = vunpack.c.l.b16 %v409
    %v666 = vunpack.c.l.b16 %v410
    %v667 = vunpack.c.l.b16 %v411
    %v668 = vunpack.c.l.b16 %v412
    %v669 = vunpack.c.l.b16 %v413
    %v670 = vunpack.c.l.b16 %v414
    %v671 = vunpack.c.l.b16 %v415
    %v672 = vunpack.c.l.b16 %v416
    %v673 = vunpack.c.l.b16 %v417
    %v674 = vunpack.c.l.b16 %v418
    %v675 = vunpack.c.l.b16 %v419
    %v676 = vunpack.c.l.b16 %v420
    %v677 = vunpack.c.l.b16 %v421
    %v678 = vunpack.c.l.b16 %v422
    %v679 = vunpack.c.l.b16 %v423
    %v680 = vunpack.c.l.b16 %v424
    %v681 = vunpack.c.l.b16 %v425
    %v682 = vunpack.c.l.b16 %v426
    %v683 = vunpack.c.l.b16 %v427
    %v684 = vunpack.c.l.b16 %v428
    %v685 = vunpack.c.l.b16 %v429
    %v686 = vunpack.c.l.b16 %v430
    %v687 = vunpack.c.l.b16 %v431
    %v688 = vunpack.c.l.b16 %v432
    %v689 = vunpack.c.l.b16 %v433
    %v690 = vunpack.c.l.b16 %v434
    %v691 = vunpack.c.l.b16 %v435
    %v692 = vunpack.c.l.b16 %v436
    %v693 = vunpack.c.l.b16 %v437
    %v694 = vunpack.c.l.b16 %v438
    %v695 = vunpack.c.l.b16 %v439
    %v696 = vunpack.c.l.b16 %v440
    %v697 = vunpack.c.l.b16 %v441
    %v698 = vunpack.c.l.b16 %v442
    %v699 = vunpack.c.l.b16 %v443
    %v700 = vunpack.c.l.b16 %v444
    %v701 = vunpack.c.l.b16 %v445
    %v702 = vunpack.c.l.b16 %v446
    %v703 = vunpack.c.l.b16 %v447
    %v704 = vunpack.c.l.b16 %v448
    %v705 = vunpack.c.l.b16 %v449
    %v706 = vunpack.c.l.b16 %v450
    %v707 = vunpack.c.l.b16 %v451
    %v708 = vunpack.c.l.b16 %v452
    %v709 = vunpack.c.l.b16 %v453
    %v710 = vunpack.c.l.b16 %v454
    %v711 = vunpack.c.l.b16 %v455
    %v712 = vpack.c.b16 %v585, %v584
    %v713 = vpack.c.b16 %v587, %v586
    %v714 = vpack.c.b16 %v589, %v588
    %v715 = vpack.c.b16 %v591, %v590
    %v716 = vpack.c.b16 %v593, %v592
    %v717 = vpack.c.b16 %v595, %v594
    %v718 = vpack.c.b16 %v597, %v596
    %v719 = vpack.c.b16 %v599, %v598
    %v720 = vpack.c.b16 %v601, %v600
    %v721 = vpack.c.b16 %v603, %v602
    %v722 = vpack.c.b16 %v605, %v604
    %v723 = vpack.c.b16 %v607, %v606
    %v724 = vpack.c.b16 %v609, %v608
    %v725 = vpack.c.b16 %v611, %v610
    %v726 = vpack.c.b16 %v613, %v612
    %v727 = vpack.c.b16 %v615, %v614
    %v728 = vpack.c.b16 %v617, %v616
    %v729 = vpack.c.b16 %v619, %v618
    %v730 = vpack.c.b16 %v621, %v620
    %v731 = vpack.c.b16 %v623, %v622
    %v732 = vpack.c.b16 %v625, %v624
    %v733 = vpack.c.b16 %v627, %v626
    %v734 = vpack.c.b16 %v629, %v628
    %v735 = vpack.c.b16 %v631, %v630
    %v736 = vpack.c.b16 %v633, %v632
    %v737 = vpack.c.b16 %v635, %v634
    %v738 = vpack.c.b16 %v637, %v636
    %v739 = vpack.c.b16 %v639, %v638
    %v740 = vpack.c.b16 %v641, %v640
    %v741 = vpack.c.b16 %v643, %v642
    %v742 = vpack.c.b16 %v645, %v644
    %v743 = vpack.c.b16 %v647, %v646
    %v744 = vpack.c.b16 %v649, %v648
    %v745 = vpack.c.b16 %v651, %v650
    %v746 = vpack.c.b16 %v653, %v652
    %v747 = vpack.c.b16 %v655, %v654
    %v748 = vpack.c.b16 %v657, %v656
    %v749 = vpack.c.b16 %v659, %v658
    %v750 = vpack.c.b16 %v661, %v660
    %v751 = vpack.c.b16 %v663, %v662
    %v752 = vpack.c.b16 %v665, %v664
    %v753 = vpack.c.b16 %v667, %v666
    %v754 = vpack.c.b16 %v669, %v668
    %v755 = vpack.c.b16 %v671, %v670
    %v756 = vpack.c.b16 %v673, %v672
    %v757 = vpack.c.b16 %v675, %v674
    %v758 = vpack.c.b16 %v677, %v676
    %v759 = vpack.c.b16 %v679, %v678
    %v760 = vpack.c.b16 %v681, %v680
    %v761 = vpack.c.b16 %v683, %v682
    %v762 = vpack.c.b16 %v685, %v684
    %v763 = vpack.c.b16 %v687, %v686
    %v764 = vpack.c.b16 %v689, %v688
    %v765 = vpack.c.b16 %v691, %v690
    %v766 = vpack.c.b16 %v693, %v692
    %v767 = vpack.c.b16 %v695, %v694
    %v768 = vpack.c.b16 %v697, %v696
    %v769 = vpack.c.b16 %v699, %v698
    %v770 = vpack.c.b16 %v701, %v700
    %v771 = vpack.c.b16 %v703, %v702
    %v772 = vpack.c.b16 %v705, %v704
    %v773 = vpack.c.b16 %v707, %v706
    %v774 = vpack.c.b16 %v709, %v708
    %v775 = vpack.c.b16 %v711, %v710
    %840 = vmatprep.subr.bf16.mxu0 0
    %841 = vmatpush1.bf16.msra.mxu0 %v719
    %842 = vmatprep.subr.bf16.mxu0 0
    %843 = vmatpush1.bf16.msra.mxu0 %v718
    %844 = vmatprep.subr.bf16.mxu0 0
    %845 = vmatpush1.bf16.msra.mxu0 %v717
    %846 = vmatprep.subr.bf16.mxu0 0
    %847 = vmatpush1.bf16.msra.mxu0 %v716
    %848 = vmatprep.subr.bf16.mxu0 0
    %849 = vmatpush1.bf16.msra.mxu0 %v715
    %850 = vmatprep.subr.bf16.mxu0 0
    %851 = vmatpush1.bf16.msra.mxu0 %v714
    %852 = vmatprep.subr.bf16.mxu0 0
    %853 = vmatpush1.bf16.msra.mxu0 %v713
    %854 = vmatprep.subr.bf16.mxu0 0
    %855 = vmatpush1.bf16.msra.mxu0 %v712
    %856 = vmatprep.subr.bf16.mxu0 0
    %857 = vmatpush2.bf16.msra.mxu0 %v727
    %858 = vmatprep.subr.bf16.mxu0 0
    %859 = vmatpush2.bf16.msra.mxu0 %v726
    %860 = vmatprep.subr.bf16.mxu0 0
    %861 = vmatpush2.bf16.msra.mxu0 %v725
    %862 = vmatprep.subr.bf16.mxu0 0
    %863 = vmatpush2.bf16.msra.mxu0 %v724
    %864 = vmatprep.subr.bf16.mxu0 0
    %865 = vmatpush2.bf16.msra.mxu0 %v723
    %866 = vmatprep.subr.bf16.mxu0 0
    %867 = vmatpush2.bf16.msra.mxu0 %v722
    %868 = vmatprep.subr.bf16.mxu0 0
    %869 = vmatpush2.bf16.msra.mxu0 %v721
    %870 = vmatprep.subr.bf16.mxu0 0
    %871 = vmatpush2.bf16.msra.mxu0 %v720
    %872 = vmatprep.mubr.bf16.mxu0 %v203
    %873 = vmatmul.mubr.bf16.gmra.mxu0 %v184
    %v874 = vpop.f32.mrf.mxu0
    %v875 = vadd.f32 0.0, %v874
    %v876 = vpop.f32.mrf.mxu0
    %v877 = vpop.f32.mrf.mxu0
    %v878 = vadd.f32 0.0, %v877
    %v879 = vpop.f32.mrf.mxu0
    %880 = vmatprep.mubr.bf16.mxu0 %v211
    %881 = vmatmul.mubr.bf16.gmra.mxu0 %v185
    %v882 = vpop.f32.mrf.mxu0
    %v883 = vadd.f32 0.0, %v882
    %v884 = vpop.f32.mrf.mxu0
    %v885 = vpop.f32.mrf.mxu0
    %v886 = vadd.f32 0.0, %v885
    %v887 = vpop.f32.mrf.mxu0
    %888 = vdwg.mxu0
    %889 = vmatprep.subr.bf16.mxu0 0
    %890 = vmatpush1.bf16.msra.mxu0 %v735
    %891 = vmatprep.subr.bf16.mxu0 0
    %892 = vmatpush1.bf16.msra.mxu0 %v734
    %893 = vmatprep.subr.bf16.mxu0 0
    %894 = vmatpush1.bf16.msra.mxu0 %v733
    %895 = vmatprep.subr.bf16.mxu0 0
    %896 = vmatpush1.bf16.msra.mxu0 %v732
    %897 = vmatprep.subr.bf16.mxu0 0
    %898 = vmatpush1.bf16.msra.mxu0 %v731
    %899 = vmatprep.subr.bf16.mxu0 0
    %900 = vmatpush1.bf16.msra.mxu0 %v730
    %901 = vmatprep.subr.bf16.mxu0 0
    %902 = vmatpush1.bf16.msra.mxu0 %v729
    %903 = vmatprep.subr.bf16.mxu0 0
    %904 = vmatpush1.bf16.msra.mxu0 %v728
    %905 = vmatprep.subr.bf16.mxu0 0
    %906 = vmatpush2.bf16.msra.mxu0 %v743
    %907 = vmatprep.subr.bf16.mxu0 0
    %908 = vmatpush2.bf16.msra.mxu0 %v742
    %909 = vmatprep.subr.bf16.mxu0 0
    %910 = vmatpush2.bf16.msra.mxu0 %v741
    %911 = vmatprep.subr.bf16.mxu0 0
    %912 = vmatpush2.bf16.msra.mxu0 %v740
    %913 = vmatprep.subr.bf16.mxu0 0
    %914 = vmatpush2.bf16.msra.mxu0 %v739
    %915 = vmatprep.subr.bf16.mxu0 0
    %916 = vmatpush2.bf16.msra.mxu0 %v738
    %917 = vmatprep.subr.bf16.mxu0 0
    %918 = vmatpush2.bf16.msra.mxu0 %v737
    %919 = vmatprep.subr.bf16.mxu0 0
    %920 = vmatpush2.bf16.msra.mxu0 %v736
    %921 = vmatprep.mubr.bf16.mxu0 %v240
    %922 = vmatmul.mubr.bf16.gmra.mxu0 %v220
    %v923 = vpop.f32.mrf.mxu0
    %v924 = vadd.f32 %v875, %v923
    %v925 = vpop.f32.mrf.mxu0
    %v926 = vpop.f32.mrf.mxu0
    %v927 = vadd.f32 %v878, %v926
    %v928 = vpop.f32.mrf.mxu0
    %929 = vmatprep.mubr.bf16.mxu0 %v249
    %930 = vmatmul.mubr.bf16.gmra.mxu0 %v222
    %v931 = vpop.f32.mrf.mxu0
    %v932 = vadd.f32 %v883, %v931
    %v933 = vpop.f32.mrf.mxu0
    %v934 = vpop.f32.mrf.mxu0
    %v935 = vadd.f32 %v886, %v934
    %v936 = vpop.f32.mrf.mxu0
    %937 = vdwg.mxu0
    %938 = vmatprep.subr.bf16.mxu0 0
    %939 = vmatpush1.bf16.msra.mxu0 %v751
    %940 = vmatprep.subr.bf16.mxu0 0
    %941 = vmatpush1.bf16.msra.mxu0 %v750
    %942 = vmatprep.subr.bf16.mxu0 0
    %943 = vmatpush1.bf16.msra.mxu0 %v749
    %944 = vmatprep.subr.bf16.mxu0 0
    %945 = vmatpush1.bf16.msra.mxu0 %v748
    %946 = vmatprep.subr.bf16.mxu0 0
    %947 = vmatpush1.bf16.msra.mxu0 %v747
    %948 = vmatprep.subr.bf16.mxu0 0
    %949 = vmatpush1.bf16.msra.mxu0 %v746
    %950 = vmatprep.subr.bf16.mxu0 0
    %951 = vmatpush1.bf16.msra.mxu0 %v745
    %952 = vmatprep.subr.bf16.mxu0 0
    %953 = vmatpush1.bf16.msra.mxu0 %v744
    %954 = vmatprep.subr.bf16.mxu0 0
    %955 = vmatpush2.bf16.msra.mxu0 %v759
    %956 = vmatprep.subr.bf16.mxu0 0
    %957 = vmatpush2.bf16.msra.mxu0 %v758
    %958 = vmatprep.subr.bf16.mxu0 0
    %959 = vmatpush2.bf16.msra.mxu0 %v757
    %960 = vmatprep.subr.bf16.mxu0 0
    %961 = vmatpush2.bf16.msra.mxu0 %v756
    %962 = vmatprep.subr.bf16.mxu0 0
    %963 = vmatpush2.bf16.msra.mxu0 %v755
    %964 = vmatprep.subr.bf16.mxu0 0
    %965 = vmatpush2.bf16.msra.mxu0 %v754
    %966 = vmatprep.subr.bf16.mxu0 0
    %967 = vmatpush2.bf16.msra.mxu0 %v753
    %968 = vmatprep.subr.bf16.mxu0 0
    %969 = vmatpush2.bf16.msra.mxu0 %v752
    %970 = vmatprep.mubr.bf16.mxu0 %v278
    %971 = vmatmul.mubr.bf16.gmra.mxu0 %v258
    %v972 = vpop.f32.mrf.mxu0
    %v973 = vadd.f32 %v924, %v972
    %v974 = vpop.f32.mrf.mxu0
    %v975 = vpop.f32.mrf.mxu0
    %v976 = vadd.f32 %v927, %v975
    %v977 = vpop.f32.mrf.mxu0
    %978 = vmatprep.mubr.bf16.mxu0 %v287
    %979 = vmatmul.mubr.bf16.gmra.mxu0 %v260
    %v980 = vpop.f32.mrf.mxu0
    %v981 = vadd.f32 %v932, %v980
    %v982 = vpop.f32.mrf.mxu0
    %v983 = vpop.f32.mrf.mxu0
    %v984 = vadd.f32 %v935, %v983
    %v985 = vpop.f32.mrf.mxu0
    %986 = vdwg.mxu0
    %987 = vmatprep.subr.bf16.mxu0 0
    %988 = vmatpush1.bf16.msra.mxu0 %v767
    %989 = vmatprep.subr.bf16.mxu0 0
    %990 = vmatpush1.bf16.msra.mxu0 %v766
    %991 = vmatprep.subr.bf16.mxu0 0
    %992 = vmatpush1.bf16.msra.mxu0 %v765
    %993 = vmatprep.subr.bf16.mxu0 0
    %994 = vmatpush1.bf16.msra.mxu0 %v764
    %995 = vmatprep.subr.bf16.mxu0 0
    %996 = vmatpush1.bf16.msra.mxu0 %v763
    %997 = vmatprep.subr.bf16.mxu0 0
    %998 = vmatpush1.bf16.msra.mxu0 %v762
    %999 = vmatprep.subr.bf16.mxu0 0
    %1000 = vmatpush1.bf16.msra.mxu0 %v761
    %1001 = vmatprep.subr.bf16.mxu0 0
    %1002 = vmatpush1.bf16.msra.mxu0 %v760
    %1003 = vmatprep.subr.bf16.mxu0 0
    %1004 = vmatpush2.bf16.msra.mxu0 %v775
    %1005 = vmatprep.subr.bf16.mxu0 0
    %1006 = vmatpush2.bf16.msra.mxu0 %v774
    %1007 = vmatprep.subr.bf16.mxu0 0
    %1008 = vmatpush2.bf16.msra.mxu0 %v773
    %1009 = vmatprep.subr.bf16.mxu0 0
    %1010 = vmatpush2.bf16.msra.mxu0 %v772
    %1011 = vmatprep.subr.bf16.mxu0 0
    %1012 = vmatpush2.bf16.msra.mxu0 %v771
    %1013 = vmatprep.subr.bf16.mxu0 0
    %1014 = vmatpush2.bf16.msra.mxu0 %v770
    %1015 = vmatprep.subr.bf16.mxu0 0
    %1016 = vmatpush2.bf16.msra.mxu0 %v769
    %1017 = vmatprep.subr.bf16.mxu0 0
    %1018 = vmatpush2.bf16.msra.mxu0 %v768
    %1019 = vmatprep.mubr.bf16.mxu0 %v316
    %1020 = vmatmul.mubr.bf16.gmra.mxu0 %v296
    %v1021 = vpop.f32.mrf.mxu0
    %v1022 = vadd.f32 %v973, %v1021
    %v1023 = vpop.f32.mrf.mxu0
    %v1024 = vpop.f32.mrf.mxu0
    %v1025 = vadd.f32 %v976, %v1024
    %v1026 = vpop.f32.mrf.mxu0
    %1027 = vmatprep.mubr.bf16.mxu0 %v325
    %1028 = vmatmul.mubr.bf16.gmra.mxu0 %v298
    %v1029 = vpop.f32.mrf.mxu0
    %v1030 = vadd.f32 %v981, %v1029
    %v1031 = vpop.f32.mrf.mxu0
    %v1032 = vpop.f32.mrf.mxu0
    %v1033 = vadd.f32 %v984, %v1032
    %v1034 = vpop.f32.mrf.mxu0
    %1035 = vdwg.mxu0
    %v1036 = vld [vmem:[#allocation12] sm:$0x1]
    %v1038 = vlaneseq
    %v1039 = vshrl.u32 %v1038, 7
    %v1040 = vsub.s32 0, %v1039
    %v1041 = vrot.slane %v1036, %v1040
    %v1043 = vmul.f32 %v1022, %v1041
    %v1044 = vmul.f32 %v1025, %v1041
    %v1045 = vmul.f32 %v1030, %v1041
    %v1046 = vmul.f32 %v1033, %v1041
    %v1047 = vld [vmem:[%s5] sm:$0x1]
    %v1049 = vlaneseq
    %v1050 = vshrl.u32 %v1049, 7
    %v1051 = vsub.s32 0, %v1050
    %v1052 = vrot.slane %v1047, %v1051
    %v1054 = vadd.f32 %v1043, %v1052
    %v1055 = vadd.f32 %v1044, %v1052
    %v1056 = vadd.f32 %v1045, %v1052
    %v1057 = vadd.f32 %v1046, %v1052
    %v1058 = vmax.f32 %v1054, 0.0
    %v1059 = vmax.f32 %v1055, 0.0
    %v1060 = vmax.f32 %v1056, 0.0
    %v1061 = vmax.f32 %v1057, 0.0
    %vm1062 = vcmp.lt.s32.totalorder %v133, 9
    %vm1063 = vcmp.lt.s32.totalorder %v134, 9
    %v1064 = vsel %vm1062, %v1058, 0.0
    %v1065 = vsel %vm1063, %v1059, 0.0
    %v1066 = vsel %vm1062, %v1060, 0.0
    %v1067 = vsel %vm1063, %v1061, 0.0
    %v1068 = vpack.c.bf16 %v1065, %v1064
    %v1069 = vpack.c.bf16 %v1067, %v1066
    %v1072 = vunpack.c.l.b16 %v1068
    %v1073 = vunpack.c.h.b16 %v1068
    %v1074 = vunpack.c.l.b16 %v1069
    %v1075 = vunpack.c.h.b16 %v1069
    %v1076 = vpack.c.b16 %v1072, %v1072
    %v1077 = vpack.c.b16 %v1073, %v1073
    %v1078 = vpack.c.b16 %v1074, %v1074
    %v1079 = vpack.c.b16 %v1075, %v1075
    %1084 = vst [vmem:[#allocation2] sm:$0xf] %v1076
    %1085 = vst [vmem:[#allocation2 + $0x4] sm:$0xf] %v1077
    %1086 = vst [vmem:[#allocation2 + $0x8] sm:$0xf] %v1078
    %1087 = vst [vmem:[#allocation2 + $0xc] sm:$0xf] %v1079
    %v1088 = vld [vmem:[#allocation2] sm:$0xf]
    %v1089 = vld [vmem:[#allocation2 + $0x4] sm:$0xf]
    %v1090 = vld [vmem:[#allocation2 + $0x8] sm:$0xf]
    %v1091 = vld [vmem:[#allocation2 + $0xc] sm:$0xf]
    %v1092 = vld [vmem:[#allocation2 + $0x10] sm:$0x1]
    %v1093 = vld [vmem:[#allocation2] sm:$0xe]
    %v1094 = vld [vmem:[#allocation2 + $0x10] sm:$0x3]
    %v1095 = vld [vmem:[#allocation2] sm:$0xc]
    %v1100 = vunpack.c.l.b16 %v1088
    %v1101 = vunpack.c.l.b16 %v1089
    %v1102 = vunpack.c.l.b16 %v1090
    %v1103 = vunpack.c.l.b16 %v1091
    %v1104 = vpack.c.b16 %v1101, %v1100
    %v1105 = vpack.c.b16 %v1103, %v1102
    %v1109 = vunpack.c.l.b16 %v1092
    %v1110 = vpack.c.b16 %v1109, %v1109
    %v1112 = vshrl.u32 %v1104, 16
    %v1114 = vshll.u32 %v1104, 16
    %v1116 = vrot.slane %v1114, 1
    %v1117 = vor.u32 %v1112, %v1116
    %v1119 = vshll.u32 %v1105, 16
    %v1121 = vrot.slane %v1119, 1
    %v1122 = vsel %vm191, %v1117, %v1121
    %v1123 = vshrl.u32 %v1105, 16
    %v1125 = vor.u32 %v1123, %v1121
    %v1127 = vshll.u32 %v1110, 16
    %v1129 = vrot.slane %v1127, 1
    %v1130 = vsel %vm191, %v1125, %v1129
    %v1134 = vunpack.c.l.b16 %v1093
    %v1135 = vpack.c.b16 %v1101, %v1134
    %v1136 = vrot.slane %v1135, 1
    %v1137 = vrot.slane %v1105, 1
    %v1138 = vsel %vm217, %v1136, %v1137
    %v1139 = vrot.slane %v1110, 1
    %v1140 = vsel %vm217, %v1137, %v1139
    %v1144 = vunpack.c.l.b16 %v1094
    %v1145 = vpack.c.b16 %v1144, %v1144
    %v1147 = vshrl.u32 %v1135, 16
    %v1149 = vrot.slane %v1147, 1
    %v1150 = vshll.u32 %v1135, 16
    %v1152 = vrot.slane %v1150, 2
    %v1153 = vor.u32 %v1149, %v1152
    %v1154 = vrot.slane %v1123, 1
    %v1155 = vrot.slane %v1119, 2
    %v1156 = vor.u32 %v1154, %v1155
    %v1157 = vsel %vm228, %v1153, %v1156
    %v1159 = vshrl.u32 %v1145, 16
    %v1161 = vrot.slane %v1159, 1
    %v1162 = vshll.u32 %v1145, 16
    %v1164 = vrot.slane %v1162, 2
    %v1165 = vor.u32 %v1161, %v1164
    %v1166 = vsel %vm228, %v1156, %v1165
    %v1170 = vunpack.c.l.b16 %v1095
    %v1171 = vpack.c.b16 %v1101, %v1170
    %v1172 = vrot.slane %v1171, 2
    %v1173 = vrot.slane %v1105, 2
    %v1174 = vsel %vm255, %v1172, %v1173
    %v1175 = vrot.slane %v1145, 2
    %v1176 = vsel %vm255, %v1173, %v1175
    %v1179 = vld [vmem:[#allocation9] sm:$0xf]
    %v1180 = vld [vmem:[#allocation9 + $0x4] sm:$0xf]
    %v1181 = vld [vmem:[#allocation9 + $0x8] sm:$0xf]
    %v1182 = vld [vmem:[#allocation9 + $0xc] sm:$0xf]
    %v1183 = vld [vmem:[#allocation9 + $0x10] sm:$0xf]
    %v1184 = vld [vmem:[#allocation9 + $0x14] sm:$0xf]
    %v1185 = vld [vmem:[#allocation9 + $0x18] sm:$0xf]
    %v1186 = vld [vmem:[#allocation9 + $0x1c] sm:$0xf]
    %v1187 = vld [vmem:[#allocation9 + $0x20] sm:$0xf]
    %v1188 = vld [vmem:[#allocation9 + $0x24] sm:$0xf]
    %v1189 = vld [vmem:[#allocation9 + $0x28] sm:$0xf]
    %v1190 = vld [vmem:[#allocation9 + $0x2c] sm:$0xf]
    %v1191 = vld [vmem:[#allocation9 + $0x30] sm:$0xf]
    %v1192 = vld [vmem:[#allocation9 + $0x34] sm:$0xf]
    %v1193 = vld [vmem:[#allocation9 + $0x38] sm:$0xf]
    %v1194 = vld [vmem:[#allocation9 + $0x3c] sm:$0xf]
    %v1195 = vld [vmem:[#allocation9 + $0x40] sm:$0xf]
    %v1196 = vld [vmem:[#allocation9 + $0x44] sm:$0xf]
    %v1197 = vld [vmem:[#allocation9 + $0x48] sm:$0xf]
    %v1198 = vld [vmem:[#allocation9 + $0x4c] sm:$0xf]
    %v1199 = vld [vmem:[#allocation9 + $0x50] sm:$0xf]
    %v1200 = vld [vmem:[#allocation9 + $0x54] sm:$0xf]
    %v1201 = vld [vmem:[#allocation9 + $0x58] sm:$0xf]
    %v1202 = vld [vmem:[#allocation9 + $0x5c] sm:$0xf]
    %v1203 = vld [vmem:[#allocation9 + $0x60] sm:$0xf]
    %v1204 = vld [vmem:[#allocation9 + $0x64] sm:$0xf]
    %v1205 = vld [vmem:[#allocation9 + $0x68] sm:$0xf]
    %v1206 = vld [vmem:[#allocation9 + $0x6c] sm:$0xf]
    %v1207 = vld [vmem:[#allocation9 + $0x70] sm:$0xf]
    %v1208 = vld [vmem:[#allocation9 + $0x74] sm:$0xf]
    %v1209 = vld [vmem:[#allocation9 + $0x78] sm:$0xf]
    %v1210 = vld [vmem:[#allocation9 + $0x7c] sm:$0xf]
    %v1211 = vld [vmem:[#allocation9 + $0x80] sm:$0xf]
    %v1212 = vld [vmem:[#allocation9 + $0x84] sm:$0xf]
    %v1213 = vld [vmem:[#allocation9 + $0x88] sm:$0xf]
    %v1214 = vld [vmem:[#allocation9 + $0x8c] sm:$0xf]
    %v1215 = vld [vmem:[#allocation9 + $0x90] sm:$0xf]
    %v1216 = vld [vmem:[#allocation9 + $0x94] sm:$0xf]
    %v1217 = vld [vmem:[#allocation9 + $0x98] sm:$0xf]
    %v1218 = vld [vmem:[#allocation9 + $0x9c] sm:$0xf]
    %v1219 = vld [vmem:[#allocation9 + $0xa0] sm:$0xf]
    %v1220 = vld [vmem:[#allocation9 + $0xa4] sm:$0xf]
    %v1221 = vld [vmem:[#allocation9 + $0xa8] sm:$0xf]
    %v1222 = vld [vmem:[#allocation9 + $0xac] sm:$0xf]
    %v1223 = vld [vmem:[#allocation9 + $0xb0] sm:$0xf]
    %v1224 = vld [vmem:[#allocation9 + $0xb4] sm:$0xf]
    %v1225 = vld [vmem:[#allocation9 + $0xb8] sm:$0xf]
    %v1226 = vld [vmem:[#allocation9 + $0xbc] sm:$0xf]
    %v1227 = vld [vmem:[#allocation9 + $0xc0] sm:$0xf]
    %v1228 = vld [vmem:[#allocation9 + $0xc4] sm:$0xf]
    %v1229 = vld [vmem:[#allocation9 + $0xc8] sm:$0xf]
    %v1230 = vld [vmem:[#allocation9 + $0xcc] sm:$0xf]
    %v1231 = vld [vmem:[#allocation9 + $0xd0] sm:$0xf]
    %v1232 = vld [vmem:[#allocation9 + $0xd4] sm:$0xf]
    %v1233 = vld [vmem:[#allocation9 + $0xd8] sm:$0xf]
    %v1234 = vld [vmem:[#allocation9 + $0xdc] sm:$0xf]
    %v1235 = vld [vmem:[#allocation9 + $0xe0] sm:$0xf]
    %v1236 = vld [vmem:[#allocation9 + $0xe4] sm:$0xf]
    %v1237 = vld [vmem:[#allocation9 + $0xe8] sm:$0xf]
    %v1238 = vld [vmem:[#allocation9 + $0xec] sm:$0xf]
    %v1239 = vld [vmem:[#allocation9 + $0xf0] sm:$0xf]
    %v1240 = vld [vmem:[#allocation9 + $0xf4] sm:$0xf]
    %v1241 = vld [vmem:[#allocation9 + $0xf8] sm:$0xf]
    %v1242 = vld [vmem:[#allocation9 + $0xfc] sm:$0xf]
    %v1243 = vld [vmem:[#allocation9 + $0x100] sm:$0xf]
    %v1244 = vld [vmem:[#allocation9 + $0x104] sm:$0xf]
    %v1245 = vld [vmem:[#allocation9 + $0x108] sm:$0xf]
    %v1246 = vld [vmem:[#allocation9 + $0x10c] sm:$0xf]
    %v1247 = vld [vmem:[#allocation9 + $0x110] sm:$0xf]
    %v1248 = vld [vmem:[#allocation9 + $0x114] sm:$0xf]
    %v1249 = vld [vmem:[#allocation9 + $0x118] sm:$0xf]
    %v1250 = vld [vmem:[#allocation9 + $0x11c] sm:$0xf]
    %v1251 = vld [vmem:[#allocation9 + $0x120] sm:$0xf]
    %v1252 = vld [vmem:[#allocation9 + $0x124] sm:$0xf]
    %v1253 = vld [vmem:[#allocation9 + $0x128] sm:$0xf]
    %v1254 = vld [vmem:[#allocation9 + $0x12c] sm:$0xf]
    %v1255 = vld [vmem:[#allocation9 + $0x130] sm:$0xf]
    %v1256 = vld [vmem:[#allocation9 + $0x134] sm:$0xf]
    %v1257 = vld [vmem:[#allocation9 + $0x138] sm:$0xf]
    %v1258 = vld [vmem:[#allocation9 + $0x13c] sm:$0xf]
    %v1339 = vunpack.c.l.b16 %v1179
    %v1340 = vunpack.c.l.b16 %v1180
    %v1341 = vunpack.c.l.b16 %v1181
    %v1342 = vunpack.c.l.b16 %v1182
    %v1343 = vunpack.c.l.b16 %v1183
    %v1344 = vunpack.c.l.b16 %v1184
    %v1345 = vunpack.c.l.b16 %v1185
    %v1346 = vunpack.c.l.b16 %v1186
    %v1347 = vunpack.c.l.b16 %v1187
    %v1348 = vunpack.c.l.b16 %v1188
    %v1349 = vunpack.c.l.b16 %v1189
    %v1350 = vunpack.c.l.b16 %v1190
    %v1351 = vunpack.c.l.b16 %v1191
    %v1352 = vunpack.c.l.b16 %v1192
    %v1353 = vunpack.c.l.b16 %v1193
    %v1354 = vunpack.c.l.b16 %v1194
    %v1355 = vunpack.c.l.b16 %v1195
    %v1356 = vunpack.c.l.b16 %v1196
    %v1357 = vunpack.c.l.b16 %v1197
    %v1358 = vunpack.c.l.b16 %v1198
    %v1359 = vunpack.c.l.b16 %v1199
    %v1360 = vunpack.c.l.b16 %v1200
    %v1361 = vunpack.c.l.b16 %v1201
    %v1362 = vunpack.c.l.b16 %v1202
    %v1363 = vunpack.c.l.b16 %v1203
    %v1364 = vunpack.c.l.b16 %v1204
    %v1365 = vunpack.c.l.b16 %v1205
    %v1366 = vunpack.c.l.b16 %v1206
    %v1367 = vunpack.c.l.b16 %v1207
    %v1368 = vunpack.c.l.b16 %v1208
    %v1369 = vunpack.c.l.b16 %v1209
    %v1370 = vunpack.c.l.b16 %v1210
    %v1371 = vunpack.c.l.b16 %v1211
    %v1372 = vunpack.c.l.b16 %v1212
    %v1373 = vunpack.c.l.b16 %v1213
    %v1374 = vunpack.c.l.b16 %v1214
    %v1375 = vunpack.c.l.b16 %v1215
    %v1376 = vunpack.c.l.b16 %v1216
    %v1377 = vunpack.c.l.b16 %v1217
    %v1378 = vunpack.c.l.b16 %v1218
    %v1379 = vunpack.c.l.b16 %v1219
    %v1380 = vunpack.c.l.b16 %v1220
    %v1381 = vunpack.c.l.b16 %v1221
    %v1382 = vunpack.c.l.b16 %v1222
    %v1383 = vunpack.c.l.b16 %v1223
    %v1384 = vunpack.c.l.b16 %v1224
    %v1385 = vunpack.c.l.b16 %v1225
    %v1386 = vunpack.c.l.b16 %v1226
    %v1387 = vunpack.c.l.b16 %v1227
    %v1388 = vunpack.c.l.b16 %v1228
    %v1389 = vunpack.c.l.b16 %v1229
    %v1390 = vunpack.c.l.b16 %v1230
    %v1391 = vunpack.c.l.b16 %v1231
    %v1392 = vunpack.c.l.b16 %v1232
    %v1393 = vunpack.c.l.b16 %v1233
    %v1394 = vunpack.c.l.b16 %v1234
    %v1395 = vunpack.c.l.b16 %v1235
    %v1396 = vunpack.c.l.b16 %v1236
    %v1397 = vunpack.c.l.b16 %v1237
    %v1398 = vunpack.c.l.b16 %v1238
    %v1399 = vunpack.c.l.b16 %v1239
    %v1400 = vunpack.c.l.b16 %v1240
    %v1401 = vunpack.c.l.b16 %v1241
    %v1402 = vunpack.c.l.b16 %v1242
    %v1403 = vunpack.c.l.b16 %v1243
    %v1404 = vunpack.c.l.b16 %v1244
    %v1405 = vunpack.c.l.b16 %v1245
    %v1406 = vunpack.c.l.b16 %v1246
    %v1407 = vunpack.c.l.b16 %v1247
    %v1408 = vunpack.c.l.b16 %v1248
    %v1409 = vunpack.c.l.b16 %v1249
    %v1410 = vunpack.c.l.b16 %v1250
    %v1411 = vunpack.c.l.b16 %v1251
    %v1412 = vunpack.c.l.b16 %v1252
    %v1413 = vunpack.c.l.b16 %v1253
    %v1414 = vunpack.c.l.b16 %v1254
    %v1415 = vunpack.c.l.b16 %v1255
    %v1416 = vunpack.c.l.b16 %v1256
    %v1417 = vunpack.c.l.b16 %v1257
    %v1418 = vunpack.c.l.b16 %v1258
    %v1419 = vpack.c.b16 %v1340, %v1339
    %v1420 = vpack.c.b16 %v1342, %v1341
    %v1421 = vpack.c.b16 %v1344, %v1343
    %v1422 = vpack.c.b16 %v1346, %v1345
    %v1423 = vpack.c.b16 %v1348, %v1347
    %v1424 = vpack.c.b16 %v1350, %v1349
    %v1425 = vpack.c.b16 %v1352, %v1351
    %v1426 = vpack.c.b16 %v1354, %v1353
    %v1427 = vpack.c.b16 %v1356, %v1355
    %v1428 = vpack.c.b16 %v1358, %v1357
    %v1429 = vpack.c.b16 %v1360, %v1359
    %v1430 = vpack.c.b16 %v1362, %v1361
    %v1431 = vpack.c.b16 %v1364, %v1363
    %v1432 = vpack.c.b16 %v1366, %v1365
    %v1433 = vpack.c.b16 %v1368, %v1367
    %v1434 = vpack.c.b16 %v1370, %v1369
    %v1435 = vpack.c.b16 %v1372, %v1371
    %v1436 = vpack.c.b16 %v1374, %v1373
    %v1437 = vpack.c.b16 %v1376, %v1375
    %v1438 = vpack.c.b16 %v1378, %v1377
    %v1439 = vpack.c.b16 %v1380, %v1379
    %v1440 = vpack.c.b16 %v1382, %v1381
    %v1441 = vpack.c.b16 %v1384, %v1383
    %v1442 = vpack.c.b16 %v1386, %v1385
    %v1443 = vpack.c.b16 %v1388, %v1387
    %v1444 = vpack.c.b16 %v1390, %v1389
    %v1445 = vpack.c.b16 %v1392, %v1391
    %v1446 = vpack.c.b16 %v1394, %v1393
    %v1447 = vpack.c.b16 %v1396, %v1395
    %v1448 = vpack.c.b16 %v1398, %v1397
    %v1449 = vpack.c.b16 %v1400, %v1399
    %v1450 = vpack.c.b16 %v1402, %v1401
    %v1451 = vpack.c.b16 %v1404, %v1403
    %v1452 = vpack.c.b16 %v1406, %v1405
    %v1453 = vpack.c.b16 %v1408, %v1407
    %v1454 = vpack.c.b16 %v1410, %v1409
    %v1455 = vpack.c.b16 %v1412, %v1411
    %v1456 = vpack.c.b16 %v1414, %v1413
    %v1457 = vpack.c.b16 %v1416, %v1415
    %v1458 = vpack.c.b16 %v1418, %v1417
    %1499 = vmatprep.subr.bf16.mxu0 0
    %1500 = vmatpush1.bf16.msra.mxu0 %v1426
    %1501 = vmatprep.subr.bf16.mxu0 0
    %1502 = vmatpush1.bf16.msra.mxu0 %v1425
    %1503 = vmatprep.subr.bf16.mxu0 0
    %1504 = vmatpush1.bf16.msra.mxu0 %v1424
    %1505 = vmatprep.subr.bf16.mxu0 0
    %1506 = vmatpush1.bf16.msra.mxu0 %v1423
    %1507 = vmatprep.subr.bf16.mxu0 0
    %1508 = vmatpush1.bf16.msra.mxu0 %v1422
    %1509 = vmatprep.subr.bf16.mxu0 0
    %1510 = vmatpush1.bf16.msra.mxu0 %v1421
    %1511 = vmatprep.subr.bf16.mxu0 0
    %1512 = vmatpush1.bf16.msra.mxu0 %v1420
    %1513 = vmatprep.subr.bf16.mxu0 0
    %1514 = vmatpush1.bf16.msra.mxu0 %v1419
    %1515 = vmatprep.subr.bf16.mxu0 0
    %1516 = vmatpush2.bf16.msra.mxu0 %v1434
    %1517 = vmatprep.subr.bf16.mxu0 0
    %1518 = vmatpush2.bf16.msra.mxu0 %v1433
    %1519 = vmatprep.subr.bf16.mxu0 0
    %1520 = vmatpush2.bf16.msra.mxu0 %v1432
    %1521 = vmatprep.subr.bf16.mxu0 0
    %1522 = vmatpush2.bf16.msra.mxu0 %v1431
    %1523 = vmatprep.subr.bf16.mxu0 0
    %1524 = vmatpush2.bf16.msra.mxu0 %v1430
    %1525 = vmatprep.subr.bf16.mxu0 0
    %1526 = vmatpush2.bf16.msra.mxu0 %v1429
    %1527 = vmatprep.subr.bf16.mxu0 0
    %1528 = vmatpush2.bf16.msra.mxu0 %v1428
    %1529 = vmatprep.subr.bf16.mxu0 0
    %1530 = vmatpush2.bf16.msra.mxu0 %v1427
    %1531 = vmatprep.mubr.bf16.mxu0 %v1122
    %1532 = vmatmul.mubr.bf16.gmra.mxu0 %v1104
    %v1533 = vpop.f32.mrf.mxu0
    %v1534 = vadd.f32 0.0, %v1533
    %v1535 = vpop.f32.mrf.mxu0
    %v1536 = vpop.f32.mrf.mxu0
    %v1537 = vadd.f32 0.0, %v1536
    %v1538 = vpop.f32.mrf.mxu0
    %1539 = vmatprep.mubr.bf16.mxu0 %v1130
    %1540 = vmatmul.mubr.bf16.gmra.mxu0 %v1105
    %v1541 = vpop.f32.mrf.mxu0
    %v1542 = vadd.f32 0.0, %v1541
    %v1543 = vpop.f32.mrf.mxu0
    %v1544 = vpop.f32.mrf.mxu0
    %v1545 = vadd.f32 0.0, %v1544
    %v1546 = vpop.f32.mrf.mxu0
    %1547 = vdwg.mxu0
    %1548 = vmatprep.subr.bf16.mxu0 0
    %1549 = vmatpush1.bf16.msra.mxu0 %v1442
    %1550 = vmatprep.subr.bf16.mxu0 0
    %1551 = vmatpush1.bf16.msra.mxu0 %v1441
    %1552 = vmatprep.subr.bf16.mxu0 0
    %1553 = vmatpush1.bf16.msra.mxu0 %v1440
    %1554 = vmatprep.subr.bf16.mxu0 0
    %1555 = vmatpush1.bf16.msra.mxu0 %v1439
    %1556 = vmatprep.subr.bf16.mxu0 0
    %1557 = vmatpush1.bf16.msra.mxu0 %v1438
    %1558 = vmatprep.subr.bf16.mxu0 0
    %1559 = vmatpush1.bf16.msra.mxu0 %v1437
    %1560 = vmatprep.subr.bf16.mxu0 0
    %1561 = vmatpush1.bf16.msra.mxu0 %v1436
    %1562 = vmatprep.subr.bf16.mxu0 0
    %1563 = vmatpush1.bf16.msra.mxu0 %v1435
    %1564 = vmatprep.subr.bf16.mxu0 0
    %1565 = vmatpush2.bf16.msra.mxu0 %v1450
    %1566 = vmatprep.subr.bf16.mxu0 0
    %1567 = vmatpush2.bf16.msra.mxu0 %v1449
    %1568 = vmatprep.subr.bf16.mxu0 0
    %1569 = vmatpush2.bf16.msra.mxu0 %v1448
    %1570 = vmatprep.subr.bf16.mxu0 0
    %1571 = vmatpush2.bf16.msra.mxu0 %v1447
    %1572 = vmatprep.subr.bf16.mxu0 0
    %1573 = vmatpush2.bf16.msra.mxu0 %v1446
    %1574 = vmatprep.subr.bf16.mxu0 0
    %1575 = vmatpush2.bf16.msra.mxu0 %v1445
    %1576 = vmatprep.subr.bf16.mxu0 0
    %1577 = vmatpush2.bf16.msra.mxu0 %v1444
    %1578 = vmatprep.subr.bf16.mxu0 0
    %1579 = vmatpush2.bf16.msra.mxu0 %v1443
    %1580 = vmatprep.mubr.bf16.mxu0 %v1157
    %1581 = vmatmul.mubr.bf16.gmra.mxu0 %v1138
    %v1582 = vpop.f32.mrf.mxu0
    %v1583 = vadd.f32 %v1534, %v1582
    %v1584 = vpop.f32.mrf.mxu0
    %v1585 = vpop.f32.mrf.mxu0
    %v1586 = vadd.f32 %v1537, %v1585
    %v1587 = vpop.f32.mrf.mxu0
    %1588 = vmatprep.mubr.bf16.mxu0 %v1166
    %1589 = vmatmul.mubr.bf16.gmra.mxu0 %v1140
    %v1590 = vpop.f32.mrf.mxu0
    %v1591 = vadd.f32 %v1542, %v1590
    %v1592 = vpop.f32.mrf.mxu0
    %v1593 = vpop.f32.mrf.mxu0
    %v1594 = vadd.f32 %v1545, %v1593
    %v1595 = vpop.f32.mrf.mxu0
    %1596 = vdwg.mxu0
    %1597 = vmatprep.subr.bf16.mxu0 0
    %1598 = vmatpush1.bf16.msra.mxu0 %v1458
    %1599 = vmatprep.subr.bf16.mxu0 0
    %1600 = vmatpush1.bf16.msra.mxu0 %v1457
    %1601 = vmatprep.subr.bf16.mxu0 0
    %1602 = vmatpush1.bf16.msra.mxu0 %v1456
    %1603 = vmatprep.subr.bf16.mxu0 0
    %1604 = vmatpush1.bf16.msra.mxu0 %v1455
    %1605 = vmatprep.subr.bf16.mxu0 0
    %1606 = vmatpush1.bf16.msra.mxu0 %v1454
    %1607 = vmatprep.subr.bf16.mxu0 0
    %1608 = vmatpush1.bf16.msra.mxu0 %v1453
    %1609 = vmatprep.subr.bf16.mxu0 0
    %1610 = vmatpush1.bf16.msra.mxu0 %v1452
    %1611 = vmatprep.subr.bf16.mxu0 0
    %1612 = vmatpush1.bf16.msra.mxu0 %v1451
    %1613 = vmatprep.subr.bf16.mxu0 0
    %1614 = vmatpush2.bf16.msra.mxu0 0
    %1615 = vmatprep.subr.bf16.mxu0 0
    %1616 = vmatpush2.bf16.msra.mxu0 0
    %1617 = vmatprep.subr.bf16.mxu0 0
    %1618 = vmatpush2.bf16.msra.mxu0 0
    %1619 = vmatprep.subr.bf16.mxu0 0
    %1620 = vmatpush2.bf16.msra.mxu0 0
    %1621 = vmatprep.subr.bf16.mxu0 0
    %1622 = vmatpush2.bf16.msra.mxu0 0
    %1623 = vmatprep.subr.bf16.mxu0 0
    %1624 = vmatpush2.bf16.msra.mxu0 0
    %1625 = vmatprep.subr.bf16.mxu0 0
    %1626 = vmatpush2.bf16.msra.mxu0 0
    %1627 = vmatprep.subr.bf16.mxu0 0
    %1628 = vmatpush2.bf16.msra.mxu0 0
    %1629 = vmatprep.mubr.bf16.mxu0 0
    %1630 = vmatmul.mubr.bf16.gmra.mxu0 %v1174
    %v1631 = vpop.f32.mrf.mxu0
    %v1632 = vadd.f32 %v1583, %v1631
    %v1633 = vpop.f32.mrf.mxu0
    %v1634 = vpop.f32.mrf.mxu0
    %v1635 = vadd.f32 %v1586, %v1634
    %v1636 = vpop.f32.mrf.mxu0
    %1637 = vmatprep.mubr.bf16.mxu0 0
    %1638 = vmatmul.mubr.bf16.gmra.mxu0 %v1176
    %v1639 = vpop.f32.mrf.mxu0
    %v1640 = vadd.f32 %v1591, %v1639
    %v1641 = vpop.f32.mrf.mxu0
    %v1642 = vpop.f32.mrf.mxu0
    %v1643 = vadd.f32 %v1594, %v1642
    %v1644 = vpop.f32.mrf.mxu0
    %1645 = vdwg.mxu0
    %s1646 = scalar_lea.vmem [#allocation12], 1
    %v1647 = vld [vmem:[%s1646] sm:$0x1]
    %v1649 = vlaneseq
    %v1650 = vshrl.u32 %v1649, 7
    %v1651 = vsub.s32 0, %v1650
    %v1652 = vrot.slane %v1647, %v1651
    %v1654 = vmul.f32 %v1632, %v1652
    %v1655 = vmul.f32 %v1635, %v1652
    %v1656 = vmul.f32 %v1640, %v1652
    %v1657 = vmul.f32 %v1643, %v1652
    %s1658 = scalar_lea.vmem %s5, 1
    %v1659 = vld [vmem:[%s1658] sm:$0x1]
    %v1661 = vlaneseq
    %v1662 = vshrl.u32 %v1661, 7
    %v1663 = vsub.s32 0, %v1662
    %v1664 = vrot.slane %v1659, %v1663
    %v1666 = vadd.f32 %v1654, %v1664
    %v1667 = vadd.f32 %v1655, %v1664
    %v1668 = vadd.f32 %v1656, %v1664
    %v1669 = vadd.f32 %v1657, %v1664
    %v1670 = vmax.f32 %v1666, 0.0
    %v1671 = vmax.f32 %v1667, 0.0
    %v1672 = vmax.f32 %v1668, 0.0
    %v1673 = vmax.f32 %v1669, 0.0
    %vm1674 = vcmp.lt.s32.totalorder %v133, 12
    %vm1675 = vcmp.lt.s32.totalorder %v134, 12
    %v1676 = vsel %vm1674, %v1670, 0.0
    %v1677 = vsel %vm1675, %v1671, 0.0
    %v1678 = vsel %vm1674, %v1672, 0.0
    %v1679 = vsel %vm1675, %v1673, 0.0
    %v1680 = vpack.c.bf16 %v1677, %v1676
    %v1681 = vpack.c.bf16 %v1679, %v1678
    %v1684 = vunpack.c.l.b16 %v1680
    %v1685 = vunpack.c.h.b16 %v1680
    %v1686 = vunpack.c.l.b16 %v1681
    %v1687 = vunpack.c.h.b16 %v1681
    %v1688 = vpack.c.b16 %v1684, %v1684
    %v1689 = vpack.c.b16 %v1685, %v1685
    %v1690 = vpack.c.b16 %v1686, %v1686
    %v1691 = vpack.c.b16 %v1687, %v1687
    %1696 = vst [vmem:[#allocation2] sm:$0xf] %v1688
    %1697 = vst [vmem:[#allocation2 + $0x4] sm:$0xf] %v1689
    %1698 = vst [vmem:[#allocation2 + $0x8] sm:$0xf] %v1690
    %1699 = vst [vmem:[#allocation2 + $0xc] sm:$0xf] %v1691
    %v1700 = vld [vmem:[#allocation2] sm:$0xf]
    %v1701 = vld [vmem:[#allocation2 + $0x4] sm:$0xf]
    %v1702 = vld [vmem:[#allocation2 + $0x8] sm:$0xf]
    %v1703 = vld [vmem:[#allocation2 + $0xc] sm:$0xf]
    %v1704 = vld [vmem:[#allocation2 + $0x10] sm:$0x1]
    %v1705 = vld [vmem:[#allocation2] sm:$0xe]
    %v1710 = vunpack.c.l.b16 %v1700
    %v1711 = vunpack.c.l.b16 %v1701
    %v1712 = vunpack.c.l.b16 %v1702
    %v1713 = vunpack.c.l.b16 %v1703
    %v1714 = vpack.c.b16 %v1711, %v1710
    %v1715 = vpack.c.b16 %v1713, %v1712
    %v1719 = vunpack.c.l.b16 %v1704
    %v1720 = vpack.c.b16 %v1719, %v1719
    %v1722 = vshrl.u32 %v1714, 16
    %v1724 = vshll.u32 %v1714, 16
    %v1726 = vrot.slane %v1724, 1
    %v1727 = vor.u32 %v1722, %v1726
    %v1729 = vshll.u32 %v1715, 16
    %v1731 = vrot.slane %v1729, 1
    %v1732 = vsel %vm191, %v1727, %v1731
    %v1733 = vshrl.u32 %v1715, 16
    %v1735 = vor.u32 %v1733, %v1731
    %v1737 = vshll.u32 %v1720, 16
    %v1739 = vrot.slane %v1737, 1
    %v1740 = vsel %vm191, %v1735, %v1739
    %v1744 = vunpack.c.l.b16 %v1705
    %v1745 = vpack.c.b16 %v1711, %v1744
    %v1746 = vrot.slane %v1745, 1
    %v1747 = vrot.slane %v1715, 1
    %v1748 = vsel %vm217, %v1746, %v1747
    %v1749 = vrot.slane %v1720, 1
    %v1750 = vsel %vm217, %v1747, %v1749
    %v1753 = vld [vmem:[#allocation10] sm:$0xf]
    %v1754 = vld [vmem:[#allocation10 + $0x4] sm:$0xf]
    %v1755 = vld [vmem:[#allocation10 + $0x8] sm:$0xf]
    %v1756 = vld [vmem:[#allocation10 + $0xc] sm:$0xf]
    %v1757 = vld [vmem:[#allocation10 + $0x10] sm:$0xf]
    %v1758 = vld [vmem:[#allocation10 + $0x14] sm:$0xf]
    %v1759 = vld [vmem:[#allocation10 + $0x18] sm:$0xf]
    %v1760 = vld [vmem:[#allocation10 + $0x1c] sm:$0xf]
    %v1761 = vld [vmem:[#allocation10 + $0x20] sm:$0xf]
    %v1762 = vld [vmem:[#allocation10 + $0x24] sm:$0xf]
    %v1763 = vld [vmem:[#allocation10 + $0x28] sm:$0xf]
    %v1764 = vld [vmem:[#allocation10 + $0x2c] sm:$0xf]
    %v1765 = vld [vmem:[#allocation10 + $0x30] sm:$0xf]
    %v1766 = vld [vmem:[#allocation10 + $0x34] sm:$0xf]
    %v1767 = vld [vmem:[#allocation10 + $0x38] sm:$0xf]
    %v1768 = vld [vmem:[#allocation10 + $0x3c] sm:$0xf]
    %v1769 = vld [vmem:[#allocation10 + $0x40] sm:$0xf]
    %v1770 = vld [vmem:[#allocation10 + $0x44] sm:$0xf]
    %v1771 = vld [vmem:[#allocation10 + $0x48] sm:$0xf]
    %v1772 = vld [vmem:[#allocation10 + $0x4c] sm:$0xf]
    %v1773 = vld [vmem:[#allocation10 + $0x50] sm:$0xf]
    %v1774 = vld [vmem:[#allocation10 + $0x54] sm:$0xf]
    %v1775 = vld [vmem:[#allocation10 + $0x58] sm:$0xf]
    %v1776 = vld [vmem:[#allocation10 + $0x5c] sm:$0xf]
    %v1777 = vld [vmem:[#allocation10 + $0x60] sm:$0xf]
    %v1778 = vld [vmem:[#allocation10 + $0x64] sm:$0xf]
    %v1779 = vld [vmem:[#allocation10 + $0x68] sm:$0xf]
    %v1780 = vld [vmem:[#allocation10 + $0x6c] sm:$0xf]
    %v1781 = vld [vmem:[#allocation10 + $0x70] sm:$0xf]
    %v1782 = vld [vmem:[#allocation10 + $0x74] sm:$0xf]
    %v1783 = vld [vmem:[#allocation10 + $0x78] sm:$0xf]
    %v1784 = vld [vmem:[#allocation10 + $0x7c] sm:$0xf]
    %v1785 = vld [vmem:[#allocation10 + $0x80] sm:$0xf]
    %v1786 = vld [vmem:[#allocation10 + $0x84] sm:$0xf]
    %v1787 = vld [vmem:[#allocation10 + $0x88] sm:$0xf]
    %v1788 = vld [vmem:[#allocation10 + $0x8c] sm:$0xf]
    %v1789 = vld [vmem:[#allocation10 + $0x90] sm:$0xf]
    %v1790 = vld [vmem:[#allocation10 + $0x94] sm:$0xf]
    %v1791 = vld [vmem:[#allocation10 + $0x98] sm:$0xf]
    %v1792 = vld [vmem:[#allocation10 + $0x9c] sm:$0xf]
    %v1793 = vld [vmem:[#allocation10 + $0xa0] sm:$0xf]
    %v1794 = vld [vmem:[#allocation10 + $0xa4] sm:$0xf]
    %v1795 = vld [vmem:[#allocation10 + $0xa8] sm:$0xf]
    %v1796 = vld [vmem:[#allocation10 + $0xac] sm:$0xf]
    %v1797 = vld [vmem:[#allocation10 + $0xb0] sm:$0xf]
    %v1798 = vld [vmem:[#allocation10 + $0xb4] sm:$0xf]
    %v1799 = vld [vmem:[#allocation10 + $0xb8] sm:$0xf]
    %v1800 = vld [vmem:[#allocation10 + $0xbc] sm:$0xf]
    %v1849 = vunpack.c.l.b16 %v1753
    %v1850 = vunpack.c.l.b16 %v1754
    %v1851 = vunpack.c.l.b16 %v1755
    %v1852 = vunpack.c.l.b16 %v1756
    %v1853 = vunpack.c.l.b16 %v1757
    %v1854 = vunpack.c.l.b16 %v1758
    %v1855 = vunpack.c.l.b16 %v1759
    %v1856 = vunpack.c.l.b16 %v1760
    %v1857 = vunpack.c.l.b16 %v1761
    %v1858 = vunpack.c.l.b16 %v1762
    %v1859 = vunpack.c.l.b16 %v1763
    %v1860 = vunpack.c.l.b16 %v1764
    %v1861 = vunpack.c.l.b16 %v1765
    %v1862 = vunpack.c.l.b16 %v1766
    %v1863 = vunpack.c.l.b16 %v1767
    %v1864 = vunpack.c.l.b16 %v1768
    %v1865 = vunpack.c.l.b16 %v1769
    %v1866 = vunpack.c.l.b16 %v1770
    %v1867 = vunpack.c.l.b16 %v1771
    %v1868 = vunpack.c.l.b16 %v1772
    %v1869 = vunpack.c.l.b16 %v1773
    %v1870 = vunpack.c.l.b16 %v1774
    %v1871 = vunpack.c.l.b16 %v1775
    %v1872 = vunpack.c.l.b16 %v1776
    %v1873 = vunpack.c.l.b16 %v1777
    %v1874 = vunpack.c.l.b16 %v1778
    %v1875 = vunpack.c.l.b16 %v1779
    %v1876 = vunpack.c.l.b16 %v1780
    %v1877 = vunpack.c.l.b16 %v1781
    %v1878 = vunpack.c.l.b16 %v1782
    %v1879 = vunpack.c.l.b16 %v1783
    %v1880 = vunpack.c.l.b16 %v1784
    %v1881 = vunpack.c.l.b16 %v1785
    %v1882 = vunpack.c.l.b16 %v1786
    %v1883 = vunpack.c.l.b16 %v1787
    %v1884 = vunpack.c.l.b16 %v1788
    %v1885 = vunpack.c.l.b16 %v1789
    %v1886 = vunpack.c.l.b16 %v1790
    %v1887 = vunpack.c.l.b16 %v1791
    %v1888 = vunpack.c.l.b16 %v1792
    %v1889 = vunpack.c.l.b16 %v1793
    %v1890 = vunpack.c.l.b16 %v1794
    %v1891 = vunpack.c.l.b16 %v1795
    %v1892 = vunpack.c.l.b16 %v1796
    %v1893 = vunpack.c.l.b16 %v1797
    %v1894 = vunpack.c.l.b16 %v1798
    %v1895 = vunpack.c.l.b16 %v1799
    %v1896 = vunpack.c.l.b16 %v1800
    %v1897 = vpack.c.b16 %v1850, %v1849
    %v1898 = vpack.c.b16 %v1852, %v1851
    %v1899 = vpack.c.b16 %v1854, %v1853
    %v1900 = vpack.c.b16 %v1856, %v1855
    %v1901 = vpack.c.b16 %v1858, %v1857
    %v1902 = vpack.c.b16 %v1860, %v1859
    %v1903 = vpack.c.b16 %v1862, %v1861
    %v1904 = vpack.c.b16 %v1864, %v1863
    %v1905 = vpack.c.b16 %v1866, %v1865
    %v1906 = vpack.c.b16 %v1868, %v1867
    %v1907 = vpack.c.b16 %v1870, %v1869
    %v1908 = vpack.c.b16 %v1872, %v1871
    %v1909 = vpack.c.b16 %v1874, %v1873
    %v1910 = vpack.c.b16 %v1876, %v1875
    %v1911 = vpack.c.b16 %v1878, %v1877
    %v1912 = vpack.c.b16 %v1880, %v1879
    %v1913 = vpack.c.b16 %v1882, %v1881
    %v1914 = vpack.c.b16 %v1884, %v1883
    %v1915 = vpack.c.b16 %v1886, %v1885
    %v1916 = vpack.c.b16 %v1888, %v1887
    %v1917 = vpack.c.b16 %v1890, %v1889
    %v1918 = vpack.c.b16 %v1892, %v1891
    %v1919 = vpack.c.b16 %v1894, %v1893
    %v1920 = vpack.c.b16 %v1896, %v1895
    %1945 = vmatprep.subr.bf16.mxu0 0
    %1946 = vmatpush1.bf16.msra.mxu0 %v1904
    %1947 = vmatprep.subr.bf16.mxu0 0
    %1948 = vmatpush1.bf16.msra.mxu0 %v1903
    %1949 = vmatprep.subr.bf16.mxu0 0
    %1950 = vmatpush1.bf16.msra.mxu0 %v1902
    %1951 = vmatprep.subr.bf16.mxu0 0
    %1952 = vmatpush1.bf16.msra.mxu0 %v1901
    %1953 = vmatprep.subr.bf16.mxu0 0
    %1954 = vmatpush1.bf16.msra.mxu0 %v1900
    %1955 = vmatprep.subr.bf16.mxu0 0
    %1956 = vmatpush1.bf16.msra.mxu0 %v1899
    %1957 = vmatprep.subr.bf16.mxu0 0
    %1958 = vmatpush1.bf16.msra.mxu0 %v1898
    %1959 = vmatprep.subr.bf16.mxu0 0
    %1960 = vmatpush1.bf16.msra.mxu0 %v1897
    %1961 = vmatprep.subr.bf16.mxu0 0
    %1962 = vmatpush2.bf16.msra.mxu0 %v1912
    %1963 = vmatprep.subr.bf16.mxu0 0
    %1964 = vmatpush2.bf16.msra.mxu0 %v1911
    %1965 = vmatprep.subr.bf16.mxu0 0
    %1966 = vmatpush2.bf16.msra.mxu0 %v1910
    %1967 = vmatprep.subr.bf16.mxu0 0
    %1968 = vmatpush2.bf16.msra.mxu0 %v1909
    %1969 = vmatprep.subr.bf16.mxu0 0
    %1970 = vmatpush2.bf16.msra.mxu0 %v1908
    %1971 = vmatprep.subr.bf16.mxu0 0
    %1972 = vmatpush2.bf16.msra.mxu0 %v1907
    %1973 = vmatprep.subr.bf16.mxu0 0
    %1974 = vmatpush2.bf16.msra.mxu0 %v1906
    %1975 = vmatprep.subr.bf16.mxu0 0
    %1976 = vmatpush2.bf16.msra.mxu0 %v1905
    %1977 = vmatprep.mubr.bf16.mxu0 %v1732
    %1978 = vmatmul.mubr.bf16.gmra.mxu0 %v1714
    %v1979 = vpop.f32.mrf.mxu0
    %v1980 = vadd.f32 0.0, %v1979
    %v1981 = vpop.f32.mrf.mxu0
    %v1982 = vpop.f32.mrf.mxu0
    %v1983 = vadd.f32 0.0, %v1982
    %v1984 = vpop.f32.mrf.mxu0
    %1985 = vmatprep.mubr.bf16.mxu0 %v1740
    %1986 = vmatmul.mubr.bf16.gmra.mxu0 %v1715
    %v1987 = vpop.f32.mrf.mxu0
    %v1988 = vadd.f32 0.0, %v1987
    %v1989 = vpop.f32.mrf.mxu0
    %v1990 = vpop.f32.mrf.mxu0
    %v1991 = vadd.f32 0.0, %v1990
    %v1992 = vpop.f32.mrf.mxu0
    %1993 = vdwg.mxu0
    %1994 = vmatprep.subr.bf16.mxu0 0
    %1995 = vmatpush1.bf16.msra.mxu0 %v1920
    %1996 = vmatprep.subr.bf16.mxu0 0
    %1997 = vmatpush1.bf16.msra.mxu0 %v1919
    %1998 = vmatprep.subr.bf16.mxu0 0
    %1999 = vmatpush1.bf16.msra.mxu0 %v1918
    %2000 = vmatprep.subr.bf16.mxu0 0
    %2001 = vmatpush1.bf16.msra.mxu0 %v1917
    %2002 = vmatprep.subr.bf16.mxu0 0
    %2003 = vmatpush1.bf16.msra.mxu0 %v1916
    %2004 = vmatprep.subr.bf16.mxu0 0
    %2005 = vmatpush1.bf16.msra.mxu0 %v1915
    %2006 = vmatprep.subr.bf16.mxu0 0
    %2007 = vmatpush1.bf16.msra.mxu0 %v1914
    %2008 = vmatprep.subr.bf16.mxu0 0
    %2009 = vmatpush1.bf16.msra.mxu0 %v1913
    %2010 = vmatprep.subr.bf16.mxu0 0
    %2011 = vmatpush2.bf16.msra.mxu0 0
    %2012 = vmatprep.subr.bf16.mxu0 0
    %2013 = vmatpush2.bf16.msra.mxu0 0
    %2014 = vmatprep.subr.bf16.mxu0 0
    %2015 = vmatpush2.bf16.msra.mxu0 0
    %2016 = vmatprep.subr.bf16.mxu0 0
    %2017 = vmatpush2.bf16.msra.mxu0 0
    %2018 = vmatprep.subr.bf16.mxu0 0
    %2019 = vmatpush2.bf16.msra.mxu0 0
    %2020 = vmatprep.subr.bf16.mxu0 0
    %2021 = vmatpush2.bf16.msra.mxu0 0
    %2022 = vmatprep.subr.bf16.mxu0 0
    %2023 = vmatpush2.bf16.msra.mxu0 0
    %2024 = vmatprep.subr.bf16.mxu0 0
    %2025 = vmatpush2.bf16.msra.mxu0 0
    %2026 = vmatprep.mubr.bf16.mxu0 0
    %2027 = vmatmul.mubr.bf16.gmra.mxu0 %v1748
    %v2028 = vpop.f32.mrf.mxu0
    %v2029 = vadd.f32 %v1980, %v2028
    %v2030 = vpop.f32.mrf.mxu0
    %v2031 = vpop.f32.mrf.mxu0
    %v2032 = vadd.f32 %v1983, %v2031
    %v2033 = vpop.f32.mrf.mxu0
    %2034 = vmatprep.mubr.bf16.mxu0 0
    %2035 = vmatmul.mubr.bf16.gmra.mxu0 %v1750
    %v2036 = vpop.f32.mrf.mxu0
    %v2037 = vadd.f32 %v1988, %v2036
    %v2038 = vpop.f32.mrf.mxu0
    %v2039 = vpop.f32.mrf.mxu0
    %v2040 = vadd.f32 %v1991, %v2039
    %v2041 = vpop.f32.mrf.mxu0
    %2042 = vdwg.mxu0
    %s2043 = scalar_lea.vmem [#allocation12], 2
    %v2044 = vld [vmem:[%s2043] sm:$0x1]
    %v2046 = vlaneseq
    %v2047 = vshrl.u32 %v2046, 7
    %v2048 = vsub.s32 0, %v2047
    %v2049 = vrot.slane %v2044, %v2048
    %v2051 = vmul.f32 %v2029, %v2049
    %v2052 = vmul.f32 %v2032, %v2049
    %v2053 = vmul.f32 %v2037, %v2049
    %v2054 = vmul.f32 %v2040, %v2049
    %s2055 = scalar_lea.vmem %s5, 2
    %v2056 = vld [vmem:[%s2055] sm:$0x1]
    %v2058 = vlaneseq
    %v2059 = vshrl.u32 %v2058, 7
    %v2060 = vsub.s32 0, %v2059
    %v2061 = vrot.slane %v2056, %v2060
    %v2063 = vadd.f32 %v2051, %v2061
    %v2064 = vadd.f32 %v2052, %v2061
    %v2065 = vadd.f32 %v2053, %v2061
    %v2066 = vadd.f32 %v2054, %v2061
    %v2067 = vmax.f32 %v2063, 0.0
    %v2068 = vmax.f32 %v2064, 0.0
    %v2069 = vmax.f32 %v2065, 0.0
    %v2070 = vmax.f32 %v2066, 0.0
    %vm2071 = vcmp.lt.s32.totalorder %v133, 14
    %vm2072 = vcmp.lt.s32.totalorder %v134, 14
    %v2073 = vsel %vm2071, %v2067, 0.0
    %v2074 = vsel %vm2072, %v2068, 0.0
    %v2075 = vsel %vm2071, %v2069, 0.0
    %v2076 = vsel %vm2072, %v2070, 0.0
    %v2077 = vld [vmem:[#allocation13] sm:$0x1]
    %v2079 = vlaneseq
    %v2080 = vshrl.u32 %v2079, 7
    %v2081 = vsub.s32 0, %v2080
    %v2082 = vrot.slane %v2077, %v2081
    %v2084 = vmul.f32 %v2073, %v2082
    %v2085 = vmul.f32 %v2074, %v2082
    %v2086 = vmul.f32 %v2075, %v2082
    %v2087 = vmul.f32 %v2076, %v2082
    %v2088 = vld [vmem:[%s7] sm:$0x1]
    %v2090 = vlaneseq
    %v2091 = vshrl.u32 %v2090, 7
    %v2092 = vsub.s32 0, %v2091
    %v2093 = vrot.slane %v2088, %v2092
    %v2095 = vadd.f32 %v2084, %v2093
    %v2096 = vadd.f32 %v2085, %v2093
    %v2097 = vadd.f32 %v2086, %v2093
    %v2098 = vadd.f32 %v2087, %v2093
    %v2099 = vadd.f32 %v2073, %v2095
    %v2100 = vadd.f32 %v2074, %v2096
    %v2101 = vadd.f32 %v2075, %v2097
    %v2102 = vadd.f32 %v2076, %v2098
    %v2103 = vmax.f32 %v2099, 0.0
    %v2104 = vmax.f32 %v2100, 0.0
    %v2105 = vmax.f32 %v2101, 0.0
    %v2106 = vmax.f32 %v2102, 0.0
    %v2107 = vpack.c.bf16 %v2104, %v2103
    %v2108 = vpack.c.bf16 %v2106, %v2105
    %v2111 = vunpack.c.l.b16 %v2107
    %v2112 = vunpack.c.h.b16 %v2107
    %v2113 = vunpack.c.l.b16 %v2108
    %v2114 = vunpack.c.h.b16 %v2108
    %v2115 = vpack.c.b16 %v2111, %v2111
    %v2116 = vpack.c.b16 %v2112, %v2112
    %v2117 = vpack.c.b16 %v2113, %v2113
    %v2118 = vpack.c.b16 %v2114, %v2114
    %2123 = vst [vmem:[#allocation2] sm:$0xf] %v2115
    %2124 = vst [vmem:[#allocation2 + $0x4] sm:$0xf] %v2116
    %2125 = vst [vmem:[#allocation2 + $0x8] sm:$0xf] %v2117
    %2126 = vst [vmem:[#allocation2 + $0xc] sm:$0xf] %v2118
    %v2127 = vld [vmem:[#allocation2] sm:$0xf]
    %v2128 = vld [vmem:[#allocation2 + $0x4] sm:$0xf]
    %v2129 = vld [vmem:[#allocation2 + $0x8] sm:$0xf]
    %v2130 = vld [vmem:[#allocation2 + $0xc] sm:$0xf]
    %v2131 = vld [vmem:[#allocation2 + $0x10] sm:$0x1]
    %v2132 = vld [vmem:[#allocation2] sm:$0xe]
    %v2133 = vld [vmem:[#allocation2 + $0x10] sm:$0x3]
    %v2134 = vld [vmem:[#allocation2] sm:$0xc]
    %v2135 = vld [vmem:[#allocation2 + $0x10] sm:$0x7]
    %v2136 = vld [vmem:[#allocation2] sm:$0x8]
    %v2137 = vld [vmem:[#allocation2 + $0x10] sm:$0xf]
    %v2142 = vunpack.c.l.b16 %v2127
    %v2143 = vunpack.c.l.b16 %v2128
    %v2144 = vunpack.c.l.b16 %v2129
    %v2145 = vunpack.c.l.b16 %v2130
    %v2146 = vpack.c.b16 %v2143, %v2142
    %v2147 = vpack.c.b16 %v2145, %v2144
    %v2151 = vunpack.c.l.b16 %v2131
    %v2152 = vpack.c.b16 %v2151, %v2151
    %v2154 = vshrl.u32 %v2146, 16
    %v2156 = vshll.u32 %v2146, 16
    %v2158 = vrot.slane %v2156, 1
    %v2159 = vor.u32 %v2154, %v2158
    %v2161 = vshll.u32 %v2147, 16
    %v2163 = vrot.slane %v2161, 1
    %v2164 = vsel %vm191, %v2159, %v2163
    %v2165 = vshrl.u32 %v2147, 16
    %v2167 = vor.u32 %v2165, %v2163
    %v2169 = vshll.u32 %v2152, 16
    %v2171 = vrot.slane %v2169, 1
    %v2172 = vsel %vm191, %v2167, %v2171
    %v2176 = vunpack.c.l.b16 %v2132
    %v2177 = vpack.c.b16 %v2143, %v2176
    %v2178 = vrot.slane %v2177, 1
    %v2179 = vrot.slane %v2147, 1
    %v2180 = vsel %vm217, %v2178, %v2179
    %v2181 = vrot.slane %v2152, 1
    %v2182 = vsel %vm217, %v2179, %v2181
    %v2186 = vunpack.c.l.b16 %v2133
    %v2187 = vpack.c.b16 %v2186, %v2186
    %v2189 = vshrl.u32 %v2177, 16
    %v2191 = vrot.slane %v2189, 1
    %v2192 = vshll.u32 %v2177, 16
    %v2194 = vrot.slane %v2192, 2
    %v2195 = vor.u32 %v2191, %v2194
    %v2196 = vrot.slane %v2165, 1
    %v2197 = vrot.slane %v2161, 2
    %v2198 = vor.u32 %v2196, %v2197
    %v2199 = vsel %vm228, %v2195, %v2198
    %v2201 = vshrl.u32 %v2187, 16
    %v2203 = vrot.slane %v2201, 1
    %v2204 = vshll.u32 %v2187, 16
    %v2206 = vrot.slane %v2204, 2
    %v2207 = vor.u32 %v2203, %v2206
    %v2208 = vsel %vm228, %v2198, %v2207
    %v2212 = vunpack.c.l.b16 %v2134
    %v2213 = vpack.c.b16 %v2143, %v2212
    %v2214 = vrot.slane %v2213, 2
    %v2215 = vrot.slane %v2147, 2
    %v2216 = vsel %vm255, %v2214, %v2215
    %v2217 = vrot.slane %v2187, 2
    %v2218 = vsel %vm255, %v2215, %v2217
    %v2222 = vunpack.c.l.b16 %v2135
    %v2223 = vpack.c.b16 %v2222, %v2222
    %v2225 = vshrl.u32 %v2213, 16
    %v2227 = vrot.slane %v2225, 2
    %v2228 = vshll.u32 %v2213, 16
    %v2230 = vrot.slane %v2228, 3
    %v2231 = vor.u32 %v2227, %v2230
    %v2232 = vrot.slane %v2165, 2
    %v2233 = vrot.slane %v2161, 3
    %v2234 = vor.u32 %v2232, %v2233
    %v2235 = vsel %vm266, %v2231, %v2234
    %v2237 = vshrl.u32 %v2223, 16
    %v2239 = vrot.slane %v2237, 2
    %v2240 = vshll.u32 %v2223, 16
    %v2242 = vrot.slane %v2240, 3
    %v2243 = vor.u32 %v2239, %v2242
    %v2244 = vsel %vm266, %v2234, %v2243
    %v2248 = vunpack.c.l.b16 %v2136
    %v2249 = vpack.c.b16 %v2143, %v2248
    %v2250 = vrot.slane %v2249, 3
    %v2251 = vrot.slane %v2147, 3
    %v2252 = vsel %vm293, %v2250, %v2251
    %v2253 = vrot.slane %v2223, 3
    %v2254 = vsel %vm293, %v2251, %v2253
    %v2258 = vunpack.c.l.b16 %v2137
    %v2259 = vpack.c.b16 %v2258, %v2258
    %v2261 = vshrl.u32 %v2249, 16
    %v2263 = vrot.slane %v2261, 3
    %v2264 = vshll.u32 %v2249, 16
    %v2266 = vrot.slane %v2264, 4
    %v2267 = vor.u32 %v2263, %v2266
    %v2268 = vrot.slane %v2165, 3
    %v2269 = vrot.slane %v2161, 4
    %v2270 = vor.u32 %v2268, %v2269
    %v2271 = vsel %vm304, %v2267, %v2270
    %v2273 = vshrl.u32 %v2259, 16
    %v2275 = vrot.slane %v2273, 3
    %v2276 = vshll.u32 %v2259, 16
    %v2278 = vrot.slane %v2276, 4
    %v2279 = vor.u32 %v2275, %v2278
    %v2280 = vsel %vm304, %v2270, %v2279
    %s2283 = scalar_lea.vmem [#allocation7], 512
    %v2284 = vld [vmem:[%s2283] sm:$0xf]
    %v2285 = vld [vmem:[%s2283 + $0x4] sm:$0xf]
    %v2286 = vld [vmem:[%s2283 + $0x8] sm:$0xf]
    %v2287 = vld [vmem:[%s2283 + $0xc] sm:$0xf]
    %v2288 = vld [vmem:[%s2283 + $0x10] sm:$0xf]
    %v2289 = vld [vmem:[%s2283 + $0x14] sm:$0xf]
    %v2290 = vld [vmem:[%s2283 + $0x18] sm:$0xf]
    %v2291 = vld [vmem:[%s2283 + $0x1c] sm:$0xf]
    %v2292 = vld [vmem:[%s2283 + $0x20] sm:$0xf]
    %v2293 = vld [vmem:[%s2283 + $0x24] sm:$0xf]
    %v2294 = vld [vmem:[%s2283 + $0x28] sm:$0xf]
    %v2295 = vld [vmem:[%s2283 + $0x2c] sm:$0xf]
    %v2296 = vld [vmem:[%s2283 + $0x30] sm:$0xf]
    %v2297 = vld [vmem:[%s2283 + $0x34] sm:$0xf]
    %v2298 = vld [vmem:[%s2283 + $0x38] sm:$0xf]
    %v2299 = vld [vmem:[%s2283 + $0x3c] sm:$0xf]
    %v2300 = vld [vmem:[%s2283 + $0x40] sm:$0xf]
    %v2301 = vld [vmem:[%s2283 + $0x44] sm:$0xf]
    %v2302 = vld [vmem:[%s2283 + $0x48] sm:$0xf]
    %v2303 = vld [vmem:[%s2283 + $0x4c] sm:$0xf]
    %v2304 = vld [vmem:[%s2283 + $0x50] sm:$0xf]
    %v2305 = vld [vmem:[%s2283 + $0x54] sm:$0xf]
    %v2306 = vld [vmem:[%s2283 + $0x58] sm:$0xf]
    %v2307 = vld [vmem:[%s2283 + $0x5c] sm:$0xf]
    %v2308 = vld [vmem:[%s2283 + $0x60] sm:$0xf]
    %v2309 = vld [vmem:[%s2283 + $0x64] sm:$0xf]
    %v2310 = vld [vmem:[%s2283 + $0x68] sm:$0xf]
    %v2311 = vld [vmem:[%s2283 + $0x6c] sm:$0xf]
    %v2312 = vld [vmem:[%s2283 + $0x70] sm:$0xf]
    %v2313 = vld [vmem:[%s2283 + $0x74] sm:$0xf]
    %v2314 = vld [vmem:[%s2283 + $0x78] sm:$0xf]
    %v2315 = vld [vmem:[%s2283 + $0x7c] sm:$0xf]
    %v2316 = vld [vmem:[%s2283 + $0x80] sm:$0xf]
    %v2317 = vld [vmem:[%s2283 + $0x84] sm:$0xf]
    %v2318 = vld [vmem:[%s2283 + $0x88] sm:$0xf]
    %v2319 = vld [vmem:[%s2283 + $0x8c] sm:$0xf]
    %v2320 = vld [vmem:[%s2283 + $0x90] sm:$0xf]
    %v2321 = vld [vmem:[%s2283 + $0x94] sm:$0xf]
    %v2322 = vld [vmem:[%s2283 + $0x98] sm:$0xf]
    %v2323 = vld [vmem:[%s2283 + $0x9c] sm:$0xf]
    %v2324 = vld [vmem:[%s2283 + $0xa0] sm:$0xf]
    %v2325 = vld [vmem:[%s2283 + $0xa4] sm:$0xf]
    %v2326 = vld [vmem:[%s2283 + $0xa8] sm:$0xf]
    %v2327 = vld [vmem:[%s2283 + $0xac] sm:$0xf]
    %v2328 = vld [vmem:[%s2283 + $0xb0] sm:$0xf]
    %v2329 = vld [vmem:[%s2283 + $0xb4] sm:$0xf]
    %v2330 = vld [vmem:[%s2283 + $0xb8] sm:$0xf]
    %v2331 = vld [vmem:[%s2283 + $0xbc] sm:$0xf]
    %v2332 = vld [vmem:[%s2283 + $0xc0] sm:$0xf]
    %v2333 = vld [vmem:[%s2283 + $0xc4] sm:$0xf]
    %v2334 = vld [vmem:[%s2283 + $0xc8] sm:$0xf]
    %v2335 = vld [vmem:[%s2283 + $0xcc] sm:$0xf]
    %v2336 = vld [vmem:[%s2283 + $0xd0] sm:$0xf]
    %v2337 = vld [vmem:[%s2283 + $0xd4] sm:$0xf]
    %v2338 = vld [vmem:[%s2283 + $0xd8] sm:$0xf]
    %v2339 = vld [vmem:[%s2283 + $0xdc] sm:$0xf]
    %v2340 = vld [vmem:[%s2283 + $0xe0] sm:$0xf]
    %v2341 = vld [vmem:[%s2283 + $0xe4] sm:$0xf]
    %v2342 = vld [vmem:[%s2283 + $0xe8] sm:$0xf]
    %v2343 = vld [vmem:[%s2283 + $0xec] sm:$0xf]
    %v2344 = vld [vmem:[%s2283 + $0xf0] sm:$0xf]
    %v2345 = vld [vmem:[%s2283 + $0xf4] sm:$0xf]
    %v2346 = vld [vmem:[%s2283 + $0xf8] sm:$0xf]
    %v2347 = vld [vmem:[%s2283 + $0xfc] sm:$0xf]
    %v2348 = vld [vmem:[%s2283 + $0x100] sm:$0xf]
    %v2349 = vld [vmem:[%s2283 + $0x104] sm:$0xf]
    %v2350 = vld [vmem:[%s2283 + $0x108] sm:$0xf]
    %v2351 = vld [vmem:[%s2283 + $0x10c] sm:$0xf]
    %v2352 = vld [vmem:[%s2283 + $0x110] sm:$0xf]
    %v2353 = vld [vmem:[%s2283 + $0x114] sm:$0xf]
    %v2354 = vld [vmem:[%s2283 + $0x118] sm:$0xf]
    %v2355 = vld [vmem:[%s2283 + $0x11c] sm:$0xf]
    %v2356 = vld [vmem:[%s2283 + $0x120] sm:$0xf]
    %v2357 = vld [vmem:[%s2283 + $0x124] sm:$0xf]
    %v2358 = vld [vmem:[%s2283 + $0x128] sm:$0xf]
    %v2359 = vld [vmem:[%s2283 + $0x12c] sm:$0xf]
    %v2360 = vld [vmem:[%s2283 + $0x130] sm:$0xf]
    %v2361 = vld [vmem:[%s2283 + $0x134] sm:$0xf]
    %v2362 = vld [vmem:[%s2283 + $0x138] sm:$0xf]
    %v2363 = vld [vmem:[%s2283 + $0x13c] sm:$0xf]
    %v2364 = vld [vmem:[%s2283 + $0x140] sm:$0xf]
    %v2365 = vld [vmem:[%s2283 + $0x144] sm:$0xf]
    %v2366 = vld [vmem:[%s2283 + $0x148] sm:$0xf]
    %v2367 = vld [vmem:[%s2283 + $0x14c] sm:$0xf]
    %v2368 = vld [vmem:[%s2283 + $0x150] sm:$0xf]
    %v2369 = vld [vmem:[%s2283 + $0x154] sm:$0xf]
    %v2370 = vld [vmem:[%s2283 + $0x158] sm:$0xf]
    %v2371 = vld [vmem:[%s2283 + $0x15c] sm:$0xf]
    %v2372 = vld [vmem:[%s2283 + $0x160] sm:$0xf]
    %v2373 = vld [vmem:[%s2283 + $0x164] sm:$0xf]
    %v2374 = vld [vmem:[%s2283 + $0x168] sm:$0xf]
    %v2375 = vld [vmem:[%s2283 + $0x16c] sm:$0xf]
    %v2376 = vld [vmem:[%s2283 + $0x170] sm:$0xf]
    %v2377 = vld [vmem:[%s2283 + $0x174] sm:$0xf]
    %v2378 = vld [vmem:[%s2283 + $0x178] sm:$0xf]
    %v2379 = vld [vmem:[%s2283 + $0x17c] sm:$0xf]
    %v2380 = vld [vmem:[%s2283 + $0x180] sm:$0xf]
    %v2381 = vld [vmem:[%s2283 + $0x184] sm:$0xf]
    %v2382 = vld [vmem:[%s2283 + $0x188] sm:$0xf]
    %v2383 = vld [vmem:[%s2283 + $0x18c] sm:$0xf]
    %v2384 = vld [vmem:[%s2283 + $0x190] sm:$0xf]
    %v2385 = vld [vmem:[%s2283 + $0x194] sm:$0xf]
    %v2386 = vld [vmem:[%s2283 + $0x198] sm:$0xf]
    %v2387 = vld [vmem:[%s2283 + $0x19c] sm:$0xf]
    %v2388 = vld [vmem:[%s2283 + $0x1a0] sm:$0xf]
    %v2389 = vld [vmem:[%s2283 + $0x1a4] sm:$0xf]
    %v2390 = vld [vmem:[%s2283 + $0x1a8] sm:$0xf]
    %v2391 = vld [vmem:[%s2283 + $0x1ac] sm:$0xf]
    %v2392 = vld [vmem:[%s2283 + $0x1b0] sm:$0xf]
    %v2393 = vld [vmem:[%s2283 + $0x1b4] sm:$0xf]
    %v2394 = vld [vmem:[%s2283 + $0x1b8] sm:$0xf]
    %v2395 = vld [vmem:[%s2283 + $0x1bc] sm:$0xf]
    %v2396 = vld [vmem:[%s2283 + $0x1c0] sm:$0xf]
    %v2397 = vld [vmem:[%s2283 + $0x1c4] sm:$0xf]
    %v2398 = vld [vmem:[%s2283 + $0x1c8] sm:$0xf]
    %v2399 = vld [vmem:[%s2283 + $0x1cc] sm:$0xf]
    %v2400 = vld [vmem:[%s2283 + $0x1d0] sm:$0xf]
    %v2401 = vld [vmem:[%s2283 + $0x1d4] sm:$0xf]
    %v2402 = vld [vmem:[%s2283 + $0x1d8] sm:$0xf]
    %v2403 = vld [vmem:[%s2283 + $0x1dc] sm:$0xf]
    %v2404 = vld [vmem:[%s2283 + $0x1e0] sm:$0xf]
    %v2405 = vld [vmem:[%s2283 + $0x1e4] sm:$0xf]
    %v2406 = vld [vmem:[%s2283 + $0x1e8] sm:$0xf]
    %v2407 = vld [vmem:[%s2283 + $0x1ec] sm:$0xf]
    %v2408 = vld [vmem:[%s2283 + $0x1f0] sm:$0xf]
    %v2409 = vld [vmem:[%s2283 + $0x1f4] sm:$0xf]
    %v2410 = vld [vmem:[%s2283 + $0x1f8] sm:$0xf]
    %v2411 = vld [vmem:[%s2283 + $0x1fc] sm:$0xf]
    %v2540 = vunpack.c.l.b16 %v2284
    %v2541 = vunpack.c.l.b16 %v2285
    %v2542 = vunpack.c.l.b16 %v2286
    %v2543 = vunpack.c.l.b16 %v2287
    %v2544 = vunpack.c.l.b16 %v2288
    %v2545 = vunpack.c.l.b16 %v2289
    %v2546 = vunpack.c.l.b16 %v2290
    %v2547 = vunpack.c.l.b16 %v2291
    %v2548 = vunpack.c.l.b16 %v2292
    %v2549 = vunpack.c.l.b16 %v2293
    %v2550 = vunpack.c.l.b16 %v2294
    %v2551 = vunpack.c.l.b16 %v2295
    %v2552 = vunpack.c.l.b16 %v2296
    %v2553 = vunpack.c.l.b16 %v2297
    %v2554 = vunpack.c.l.b16 %v2298
    %v2555 = vunpack.c.l.b16 %v2299
    %v2556 = vunpack.c.l.b16 %v2300
    %v2557 = vunpack.c.l.b16 %v2301
    %v2558 = vunpack.c.l.b16 %v2302
    %v2559 = vunpack.c.l.b16 %v2303
    %v2560 = vunpack.c.l.b16 %v2304
    %v2561 = vunpack.c.l.b16 %v2305
    %v2562 = vunpack.c.l.b16 %v2306
    %v2563 = vunpack.c.l.b16 %v2307
    %v2564 = vunpack.c.l.b16 %v2308
    %v2565 = vunpack.c.l.b16 %v2309
    %v2566 = vunpack.c.l.b16 %v2310
    %v2567 = vunpack.c.l.b16 %v2311
    %v2568 = vunpack.c.l.b16 %v2312
    %v2569 = vunpack.c.l.b16 %v2313
    %v2570 = vunpack.c.l.b16 %v2314
    %v2571 = vunpack.c.l.b16 %v2315
    %v2572 = vunpack.c.l.b16 %v2316
    %v2573 = vunpack.c.l.b16 %v2317
    %v2574 = vunpack.c.l.b16 %v2318
    %v2575 = vunpack.c.l.b16 %v2319
    %v2576 = vunpack.c.l.b16 %v2320
    %v2577 = vunpack.c.l.b16 %v2321
    %v2578 = vunpack.c.l.b16 %v2322
    %v2579 = vunpack.c.l.b16 %v2323
    %v2580 = vunpack.c.l.b16 %v2324
    %v2581 = vunpack.c.l.b16 %v2325
    %v2582 = vunpack.c.l.b16 %v2326
    %v2583 = vunpack.c.l.b16 %v2327
    %v2584 = vunpack.c.l.b16 %v2328
    %v2585 = vunpack.c.l.b16 %v2329
    %v2586 = vunpack.c.l.b16 %v2330
    %v2587 = vunpack.c.l.b16 %v2331
    %v2588 = vunpack.c.l.b16 %v2332
    %v2589 = vunpack.c.l.b16 %v2333
    %v2590 = vunpack.c.l.b16 %v2334
    %v2591 = vunpack.c.l.b16 %v2335
    %v2592 = vunpack.c.l.b16 %v2336
    %v2593 = vunpack.c.l.b16 %v2337
    %v2594 = vunpack.c.l.b16 %v2338
    %v2595 = vunpack.c.l.b16 %v2339
    %v2596 = vunpack.c.l.b16 %v2340
    %v2597 = vunpack.c.l.b16 %v2341
    %v2598 = vunpack.c.l.b16 %v2342
    %v2599 = vunpack.c.l.b16 %v2343
    %v2600 = vunpack.c.l.b16 %v2344
    %v2601 = vunpack.c.l.b16 %v2345
    %v2602 = vunpack.c.l.b16 %v2346
    %v2603 = vunpack.c.l.b16 %v2347
    %v2604 = vunpack.c.l.b16 %v2348
    %v2605 = vunpack.c.l.b16 %v2349
    %v2606 = vunpack.c.l.b16 %v2350
    %v2607 = vunpack.c.l.b16 %v2351
    %v2608 = vunpack.c.l.b16 %v2352
    %v2609 = vunpack.c.l.b16 %v2353
    %v2610 = vunpack.c.l.b16 %v2354
    %v2611 = vunpack.c.l.b16 %v2355
    %v2612 = vunpack.c.l.b16 %v2356
    %v2613 = vunpack.c.l.b16 %v2357
    %v2614 = vunpack.c.l.b16 %v2358
    %v2615 = vunpack.c.l.b16 %v2359
    %v2616 = vunpack.c.l.b16 %v2360
    %v2617 = vunpack.c.l.b16 %v2361
    %v2618 = vunpack.c.l.b16 %v2362
    %v2619 = vunpack.c.l.b16 %v2363
    %v2620 = vunpack.c.l.b16 %v2364
    %v2621 = vunpack.c.l.b16 %v2365
    %v2622 = vunpack.c.l.b16 %v2366
    %v2623 = vunpack.c.l.b16 %v2367
    %v2624 = vunpack.c.l.b16 %v2368
    %v2625 = vunpack.c.l.b16 %v2369
    %v2626 = vunpack.c.l.b16 %v2370
    %v2627 = vunpack.c.l.b16 %v2371
    %v2628 = vunpack.c.l.b16 %v2372
    %v2629 = vunpack.c.l.b16 %v2373
    %v2630 = vunpack.c.l.b16 %v2374
    %v2631 = vunpack.c.l.b16 %v2375
    %v2632 = vunpack.c.l.b16 %v2376
    %v2633 = vunpack.c.l.b16 %v2377
    %v2634 = vunpack.c.l.b16 %v2378
    %v2635 = vunpack.c.l.b16 %v2379
    %v2636 = vunpack.c.l.b16 %v2380
    %v2637 = vunpack.c.l.b16 %v2381
    %v2638 = vunpack.c.l.b16 %v2382
    %v2639 = vunpack.c.l.b16 %v2383
    %v2640 = vunpack.c.l.b16 %v2384
    %v2641 = vunpack.c.l.b16 %v2385
    %v2642 = vunpack.c.l.b16 %v2386
    %v2643 = vunpack.c.l.b16 %v2387
    %v2644 = vunpack.c.l.b16 %v2388
    %v2645 = vunpack.c.l.b16 %v2389
    %v2646 = vunpack.c.l.b16 %v2390
    %v2647 = vunpack.c.l.b16 %v2391
    %v2648 = vunpack.c.l.b16 %v2392
    %v2649 = vunpack.c.l.b16 %v2393
    %v2650 = vunpack.c.l.b16 %v2394
    %v2651 = vunpack.c.l.b16 %v2395
    %v2652 = vunpack.c.l.b16 %v2396
    %v2653 = vunpack.c.l.b16 %v2397
    %v2654 = vunpack.c.l.b16 %v2398
    %v2655 = vunpack.c.l.b16 %v2399
    %v2656 = vunpack.c.l.b16 %v2400
    %v2657 = vunpack.c.l.b16 %v2401
    %v2658 = vunpack.c.l.b16 %v2402
    %v2659 = vunpack.c.l.b16 %v2403
    %v2660 = vunpack.c.l.b16 %v2404
    %v2661 = vunpack.c.l.b16 %v2405
    %v2662 = vunpack.c.l.b16 %v2406
    %v2663 = vunpack.c.l.b16 %v2407
    %v2664 = vunpack.c.l.b16 %v2408
    %v2665 = vunpack.c.l.b16 %v2409
    %v2666 = vunpack.c.l.b16 %v2410
    %v2667 = vunpack.c.l.b16 %v2411
    %v2668 = vpack.c.b16 %v2541, %v2540
    %v2669 = vpack.c.b16 %v2543, %v2542
    %v2670 = vpack.c.b16 %v2545, %v2544
    %v2671 = vpack.c.b16 %v2547, %v2546
    %v2672 = vpack.c.b16 %v2549, %v2548
    %v2673 = vpack.c.b16 %v2551, %v2550
    %v2674 = vpack.c.b16 %v2553, %v2552
    %v2675 = vpack.c.b16 %v2555, %v2554
    %v2676 = vpack.c.b16 %v2557, %v2556
    %v2677 = vpack.c.b16 %v2559, %v2558
    %v2678 = vpack.c.b16 %v2561, %v2560
    %v2679 = vpack.c.b16 %v2563, %v2562
    %v2680 = vpack.c.b16 %v2565, %v2564
    %v2681 = vpack.c.b16 %v2567, %v2566
    %v2682 = vpack.c.b16 %v2569, %v2568
    %v2683 = vpack.c.b16 %v2571, %v2570
    %v2684 = vpack.c.b16 %v2573, %v2572
    %v2685 = vpack.c.b16 %v2575, %v2574
    %v2686 = vpack.c.b16 %v2577, %v2576
    %v2687 = vpack.c.b16 %v2579, %v2578
    %v2688 = vpack.c.b16 %v2581, %v2580
    %v2689 = vpack.c.b16 %v2583, %v2582
    %v2690 = vpack.c.b16 %v2585, %v2584
    %v2691 = vpack.c.b16 %v2587, %v2586
    %v2692 = vpack.c.b16 %v2589, %v2588
    %v2693 = vpack.c.b16 %v2591, %v2590
    %v2694 = vpack.c.b16 %v2593, %v2592
    %v2695 = vpack.c.b16 %v2595, %v2594
    %v2696 = vpack.c.b16 %v2597, %v2596
    %v2697 = vpack.c.b16 %v2599, %v2598
    %v2698 = vpack.c.b16 %v2601, %v2600
    %v2699 = vpack.c.b16 %v2603, %v2602
    %v2700 = vpack.c.b16 %v2605, %v2604
    %v2701 = vpack.c.b16 %v2607, %v2606
    %v2702 = vpack.c.b16 %v2609, %v2608
    %v2703 = vpack.c.b16 %v2611, %v2610
    %v2704 = vpack.c.b16 %v2613, %v2612
    %v2705 = vpack.c.b16 %v2615, %v2614
    %v2706 = vpack.c.b16 %v2617, %v2616
    %v2707 = vpack.c.b16 %v2619, %v2618
    %v2708 = vpack.c.b16 %v2621, %v2620
    %v2709 = vpack.c.b16 %v2623, %v2622
    %v2710 = vpack.c.b16 %v2625, %v2624
    %v2711 = vpack.c.b16 %v2627, %v2626
    %v2712 = vpack.c.b16 %v2629, %v2628
    %v2713 = vpack.c.b16 %v2631, %v2630
    %v2714 = vpack.c.b16 %v2633, %v2632
    %v2715 = vpack.c.b16 %v2635, %v2634
    %v2716 = vpack.c.b16 %v2637, %v2636
    %v2717 = vpack.c.b16 %v2639, %v2638
    %v2718 = vpack.c.b16 %v2641, %v2640
    %v2719 = vpack.c.b16 %v2643, %v2642
    %v2720 = vpack.c.b16 %v2645, %v2644
    %v2721 = vpack.c.b16 %v2647, %v2646
    %v2722 = vpack.c.b16 %v2649, %v2648
    %v2723 = vpack.c.b16 %v2651, %v2650
    %v2724 = vpack.c.b16 %v2653, %v2652
    %v2725 = vpack.c.b16 %v2655, %v2654
    %v2726 = vpack.c.b16 %v2657, %v2656
    %v2727 = vpack.c.b16 %v2659, %v2658
    %v2728 = vpack.c.b16 %v2661, %v2660
    %v2729 = vpack.c.b16 %v2663, %v2662
    %v2730 = vpack.c.b16 %v2665, %v2664
    %v2731 = vpack.c.b16 %v2667, %v2666
    %2796 = vmatprep.subr.bf16.mxu0 0
    %2797 = vmatpush1.bf16.msra.mxu0 %v2675
    %2798 = vmatprep.subr.bf16.mxu0 0
    %2799 = vmatpush1.bf16.msra.mxu0 %v2674
    %2800 = vmatprep.subr.bf16.mxu0 0
    %2801 = vmatpush1.bf16.msra.mxu0 %v2673
    %2802 = vmatprep.subr.bf16.mxu0 0
    %2803 = vmatpush1.bf16.msra.mxu0 %v2672
    %2804 = vmatprep.subr.bf16.mxu0 0
    %2805 = vmatpush1.bf16.msra.mxu0 %v2671
    %2806 = vmatprep.subr.bf16.mxu0 0
    %2807 = vmatpush1.bf16.msra.mxu0 %v2670
    %2808 = vmatprep.subr.bf16.mxu0 0
    %2809 = vmatpush1.bf16.msra.mxu0 %v2669
    %2810 = vmatprep.subr.bf16.mxu0 0
    %2811 = vmatpush1.bf16.msra.mxu0 %v2668
    %2812 = vmatprep.subr.bf16.mxu0 0
    %2813 = vmatpush2.bf16.msra.mxu0 %v2683
    %2814 = vmatprep.subr.bf16.mxu0 0
    %2815 = vmatpush2.bf16.msra.mxu0 %v2682
    %2816 = vmatprep.subr.bf16.mxu0 0
    %2817 = vmatpush2.bf16.msra.mxu0 %v2681
    %2818 = vmatprep.subr.bf16.mxu0 0
    %2819 = vmatpush2.bf16.msra.mxu0 %v2680
    %2820 = vmatprep.subr.bf16.mxu0 0
    %2821 = vmatpush2.bf16.msra.mxu0 %v2679
    %2822 = vmatprep.subr.bf16.mxu0 0
    %2823 = vmatpush2.bf16.msra.mxu0 %v2678
    %2824 = vmatprep.subr.bf16.mxu0 0
    %2825 = vmatpush2.bf16.msra.mxu0 %v2677
    %2826 = vmatprep.subr.bf16.mxu0 0
    %2827 = vmatpush2.bf16.msra.mxu0 %v2676
    %2828 = vmatprep.mubr.bf16.mxu0 %v2164
    %2829 = vmatmul.mubr.bf16.gmra.mxu0 %v2146
    %v2830 = vpop.f32.mrf.mxu0
    %v2831 = vadd.f32 0.0, %v2830
    %v2832 = vpop.f32.mrf.mxu0
    %v2833 = vpop.f32.mrf.mxu0
    %v2834 = vadd.f32 0.0, %v2833
    %v2835 = vpop.f32.mrf.mxu0
    %2836 = vmatprep.mubr.bf16.mxu0 %v2172
    %2837 = vmatmul.mubr.bf16.gmra.mxu0 %v2147
    %v2838 = vpop.f32.mrf.mxu0
    %v2839 = vadd.f32 0.0, %v2838
    %v2840 = vpop.f32.mrf.mxu0
    %v2841 = vpop.f32.mrf.mxu0
    %v2842 = vadd.f32 0.0, %v2841
    %v2843 = vpop.f32.mrf.mxu0
    %2844 = vdwg.mxu0
    %2845 = vmatprep.subr.bf16.mxu0 0
    %2846 = vmatpush1.bf16.msra.mxu0 %v2691
    %2847 = vmatprep.subr.bf16.mxu0 0
    %2848 = vmatpush1.bf16.msra.mxu0 %v2690
    %2849 = vmatprep.subr.bf16.mxu0 0
    %2850 = vmatpush1.bf16.msra.mxu0 %v2689
    %2851 = vmatprep.subr.bf16.mxu0 0
    %2852 = vmatpush1.bf16.msra.mxu0 %v2688
    %2853 = vmatprep.subr.bf16.mxu0 0
    %2854 = vmatpush1.bf16.msra.mxu0 %v2687
    %2855 = vmatprep.subr.bf16.mxu0 0
    %2856 = vmatpush1.bf16.msra.mxu0 %v2686
    %2857 = vmatprep.subr.bf16.mxu0 0
    %2858 = vmatpush1.bf16.msra.mxu0 %v2685
    %2859 = vmatprep.subr.bf16.mxu0 0
    %2860 = vmatpush1.bf16.msra.mxu0 %v2684
    %2861 = vmatprep.subr.bf16.mxu0 0
    %2862 = vmatpush2.bf16.msra.mxu0 %v2699
    %2863 = vmatprep.subr.bf16.mxu0 0
    %2864 = vmatpush2.bf16.msra.mxu0 %v2698
    %2865 = vmatprep.subr.bf16.mxu0 0
    %2866 = vmatpush2.bf16.msra.mxu0 %v2697
    %2867 = vmatprep.subr.bf16.mxu0 0
    %2868 = vmatpush2.bf16.msra.mxu0 %v2696
    %2869 = vmatprep.subr.bf16.mxu0 0
    %2870 = vmatpush2.bf16.msra.mxu0 %v2695
    %2871 = vmatprep.subr.bf16.mxu0 0
    %2872 = vmatpush2.bf16.msra.mxu0 %v2694
    %2873 = vmatprep.subr.bf16.mxu0 0
    %2874 = vmatpush2.bf16.msra.mxu0 %v2693
    %2875 = vmatprep.subr.bf16.mxu0 0
    %2876 = vmatpush2.bf16.msra.mxu0 %v2692
    %2877 = vmatprep.mubr.bf16.mxu0 %v2199
    %2878 = vmatmul.mubr.bf16.gmra.mxu0 %v2180
    %v2879 = vpop.f32.mrf.mxu0
    %v2880 = vadd.f32 %v2831, %v2879
    %v2881 = vpop.f32.mrf.mxu0
    %v2882 = vpop.f32.mrf.mxu0
    %v2883 = vadd.f32 %v2834, %v2882
    %v2884 = vpop.f32.mrf.mxu0
    %2885 = vmatprep.mubr.bf16.mxu0 %v2208
    %2886 = vmatmul.mubr.bf16.gmra.mxu0 %v2182
    %v2887 = vpop.f32.mrf.mxu0
    %v2888 = vadd.f32 %v2839, %v2887
    %v2889 = vpop.f32.mrf.mxu0
    %v2890 = vpop.f32.mrf.mxu0
    %v2891 = vadd.f32 %v2842, %v2890
    %v2892 = vpop.f32.mrf.mxu0
    %2893 = vdwg.mxu0
    %2894 = vmatprep.subr.bf16.mxu0 0
    %2895 = vmatpush1.bf16.msra.mxu0 %v2707
    %2896 = vmatprep.subr.bf16.mxu0 0
    %2897 = vmatpush1.bf16.msra.mxu0 %v2706
    %2898 = vmatprep.subr.bf16.mxu0 0
    %2899 = vmatpush1.bf16.msra.mxu0 %v2705
    %2900 = vmatprep.subr.bf16.mxu0 0
    %2901 = vmatpush1.bf16.msra.mxu0 %v2704
    %2902 = vmatprep.subr.bf16.mxu0 0
    %2903 = vmatpush1.bf16.msra.mxu0 %v2703
    %2904 = vmatprep.subr.bf16.mxu0 0
    %2905 = vmatpush1.bf16.msra.mxu0 %v2702
    %2906 = vmatprep.subr.bf16.mxu0 0
    %2907 = vmatpush1.bf16.msra.mxu0 %v2701
    %2908 = vmatprep.subr.bf16.mxu0 0
    %2909 = vmatpush1.bf16.msra.mxu0 %v2700
    %2910 = vmatprep.subr.bf16.mxu0 0
    %2911 = vmatpush2.bf16.msra.mxu0 %v2715
    %2912 = vmatprep.subr.bf16.mxu0 0
    %2913 = vmatpush2.bf16.msra.mxu0 %v2714
    %2914 = vmatprep.subr.bf16.mxu0 0
    %2915 = vmatpush2.bf16.msra.mxu0 %v2713
    %2916 = vmatprep.subr.bf16.mxu0 0
    %2917 = vmatpush2.bf16.msra.mxu0 %v2712
    %2918 = vmatprep.subr.bf16.mxu0 0
    %2919 = vmatpush2.bf16.msra.mxu0 %v2711
    %2920 = vmatprep.subr.bf16.mxu0 0
    %2921 = vmatpush2.bf16.msra.mxu0 %v2710
    %2922 = vmatprep.subr.bf16.mxu0 0
    %2923 = vmatpush2.bf16.msra.mxu0 %v2709
    %2924 = vmatprep.subr.bf16.mxu0 0
    %2925 = vmatpush2.bf16.msra.mxu0 %v2708
    %2926 = vmatprep.mubr.bf16.mxu0 %v2235
    %2927 = vmatmul.mubr.bf16.gmra.mxu0 %v2216
    %v2928 = vpop.f32.mrf.mxu0
    %v2929 = vadd.f32 %v2880, %v2928
    %v2930 = vpop.f32.mrf.mxu0
    %v2931 = vpop.f32.mrf.mxu0
    %v2932 = vadd.f32 %v2883, %v2931
    %v2933 = vpop.f32.mrf.mxu0
    %2934 = vmatprep.mubr.bf16.mxu0 %v2244
    %2935 = vmatmul.mubr.bf16.gmra.mxu0 %v2218
    %v2936 = vpop.f32.mrf.mxu0
    %v2937 = vadd.f32 %v2888, %v2936
    %v2938 = vpop.f32.mrf.mxu0
    %v2939 = vpop.f32.mrf.mxu0
    %v2940 = vadd.f32 %v2891, %v2939
    %v2941 = vpop.f32.mrf.mxu0
    %2942 = vdwg.mxu0
    %2943 = vmatprep.subr.bf16.mxu0 0
    %2944 = vmatpush1.bf16.msra.mxu0 %v2723
    %2945 = vmatprep.subr.bf16.mxu0 0
    %2946 = vmatpush1.bf16.msra.mxu0 %v2722
    %2947 = vmatprep.subr.bf16.mxu0 0
    %2948 = vmatpush1.bf16.msra.mxu0 %v2721
    %2949 = vmatprep.subr.bf16.mxu0 0
    %2950 = vmatpush1.bf16.msra.mxu0 %v2720
    %2951 = vmatprep.subr.bf16.mxu0 0
    %2952 = vmatpush1.bf16.msra.mxu0 %v2719
    %2953 = vmatprep.subr.bf16.mxu0 0
    %2954 = vmatpush1.bf16.msra.mxu0 %v2718
    %2955 = vmatprep.subr.bf16.mxu0 0
    %2956 = vmatpush1.bf16.msra.mxu0 %v2717
    %2957 = vmatprep.subr.bf16.mxu0 0
    %2958 = vmatpush1.bf16.msra.mxu0 %v2716
    %2959 = vmatprep.subr.bf16.mxu0 0
    %2960 = vmatpush2.bf16.msra.mxu0 %v2731
    %2961 = vmatprep.subr.bf16.mxu0 0
    %2962 = vmatpush2.bf16.msra.mxu0 %v2730
    %2963 = vmatprep.subr.bf16.mxu0 0
    %2964 = vmatpush2.bf16.msra.mxu0 %v2729
    %2965 = vmatprep.subr.bf16.mxu0 0
    %2966 = vmatpush2.bf16.msra.mxu0 %v2728
    %2967 = vmatprep.subr.bf16.mxu0 0
    %2968 = vmatpush2.bf16.msra.mxu0 %v2727
    %2969 = vmatprep.subr.bf16.mxu0 0
    %2970 = vmatpush2.bf16.msra.mxu0 %v2726
    %2971 = vmatprep.subr.bf16.mxu0 0
    %2972 = vmatpush2.bf16.msra.mxu0 %v2725
    %2973 = vmatprep.subr.bf16.mxu0 0
    %2974 = vmatpush2.bf16.msra.mxu0 %v2724
    %2975 = vmatprep.mubr.bf16.mxu0 %v2271
    %2976 = vmatmul.mubr.bf16.gmra.mxu0 %v2252
    %v2977 = vpop.f32.mrf.mxu0
    %v2978 = vadd.f32 %v2929, %v2977
    %v2979 = vpop.f32.mrf.mxu0
    %v2980 = vpop.f32.mrf.mxu0
    %v2981 = vadd.f32 %v2932, %v2980
    %v2982 = vpop.f32.mrf.mxu0
    %2983 = vmatprep.mubr.bf16.mxu0 %v2280
    %2984 = vmatmul.mubr.bf16.gmra.mxu0 %v2254
    %v2985 = vpop.f32.mrf.mxu0
    %v2986 = vadd.f32 %v2937, %v2985
    %v2987 = vpop.f32.mrf.mxu0
    %v2988 = vpop.f32.mrf.mxu0
    %v2989 = vadd.f32 %v2940, %v2988
    %v2990 = vpop.f32.mrf.mxu0
    %2991 = vdwg.mxu0
    %s2992 = scalar_lea.vmem [#allocation12], 3
    %v2993 = vld [vmem:[%s2992] sm:$0x1]
    %v2995 = vlaneseq
    %v2996 = vshrl.u32 %v2995, 7
    %v2997 = vsub.s32 0, %v2996
    %v2998 = vrot.slane %v2993, %v2997
    %v3000 = vmul.f32 %v2978, %v2998
    %v3001 = vmul.f32 %v2981, %v2998
    %v3002 = vmul.f32 %v2986, %v2998
    %v3003 = vmul.f32 %v2989, %v2998
    %s3004 = scalar_lea.vmem %s5, 3
    %v3005 = vld [vmem:[%s3004] sm:$0x1]
    %v3007 = vlaneseq
    %v3008 = vshrl.u32 %v3007, 7
    %v3009 = vsub.s32 0, %v3008
    %v3010 = vrot.slane %v3005, %v3009
    %v3012 = vadd.f32 %v3000, %v3010
    %v3013 = vadd.f32 %v3001, %v3010
    %v3014 = vadd.f32 %v3002, %v3010
    %v3015 = vadd.f32 %v3003, %v3010
    %v3016 = vmax.f32 %v3012, 0.0
    %v3017 = vmax.f32 %v3013, 0.0
    %v3018 = vmax.f32 %v3014, 0.0
    %v3019 = vmax.f32 %v3015, 0.0
    %v3020 = vsel %vm1062, %v3016, 0.0
    %v3021 = vsel %vm1063, %v3017, 0.0
    %v3022 = vsel %vm1062, %v3018, 0.0
    %v3023 = vsel %vm1063, %v3019, 0.0
    %v3024 = vpack.c.bf16 %v3021, %v3020
    %v3025 = vpack.c.bf16 %v3023, %v3022
    %v3028 = vunpack.c.l.b16 %v3024
    %v3029 = vunpack.c.h.b16 %v3024
    %v3030 = vunpack.c.l.b16 %v3025
    %v3031 = vunpack.c.h.b16 %v3025
    %v3032 = vpack.c.b16 %v3028, %v3028
    %v3033 = vpack.c.b16 %v3029, %v3029
    %v3034 = vpack.c.b16 %v3030, %v3030
    %v3035 = vpack.c.b16 %v3031, %v3031
    %3040 = vst [vmem:[#allocation2] sm:$0xf] %v3032
    %3041 = vst [vmem:[#allocation2 + $0x4] sm:$0xf] %v3033
    %3042 = vst [vmem:[#allocation2 + $0x8] sm:$0xf] %v3034
    %3043 = vst [vmem:[#allocation2 + $0xc] sm:$0xf] %v3035
    %v3044 = vld [vmem:[#allocation2] sm:$0xf]
    %v3045 = vld [vmem:[#allocation2 + $0x4] sm:$0xf]
    %v3046 = vld [vmem:[#allocation2 + $0x8] sm:$0xf]
    %v3047 = vld [vmem:[#allocation2 + $0xc] sm:$0xf]
    %v3048 = vld [vmem:[#allocation2 + $0x10] sm:$0x1]
    %v3049 = vld [vmem:[#allocation2] sm:$0xe]
    %v3050 = vld [vmem:[#allocation2 + $0x10] sm:$0x3]
    %v3051 = vld [vmem:[#allocation2] sm:$0xc]
    %v3056 = vunpack.c.l.b16 %v3044
    %v3057 = vunpack.c.l.b16 %v3045
    %v3058 = vunpack.c.l.b16 %v3046
    %v3059 = vunpack.c.l.b16 %v3047
    %v3060 = vpack.c.b16 %v3057, %v3056
    %v3061 = vpack.c.b16 %v3059, %v3058
    %v3065 = vunpack.c.l.b16 %v3048
    %v3066 = vpack.c.b16 %v3065, %v3065
    %v3068 = vshrl.u32 %v3060, 16
    %v3070 = vshll.u32 %v3060, 16
    %v3072 = vrot.slane %v3070, 1
    %v3073 = vor.u32 %v3068, %v3072
    %v3075 = vshll.u32 %v3061, 16
    %v3077 = vrot.slane %v3075, 1
    %v3078 = vsel %vm191, %v3073, %v3077
    %v3079 = vshrl.u32 %v3061, 16
    %v3081 = vor.u32 %v3079, %v3077
    %v3083 = vshll.u32 %v3066, 16
    %v3085 = vrot.slane %v3083, 1
    %v3086 = vsel %vm191, %v3081, %v3085
    %v3090 = vunpack.c.l.b16 %v3049
    %v3091 = vpack.c.b16 %v3057, %v3090
    %v3092 = vrot.slane %v3091, 1
    %v3093 = vrot.slane %v3061, 1
    %v3094 = vsel %vm217, %v3092, %v3093
    %v3095 = vrot.slane %v3066, 1
    %v3096 = vsel %vm217, %v3093, %v3095
    %v3100 = vunpack.c.l.b16 %v3050
    %v3101 = vpack.c.b16 %v3100, %v3100
    %v3103 = vshrl.u32 %v3091, 16
    %v3105 = vrot.slane %v3103, 1
    %v3106 = vshll.u32 %v3091, 16
    %v3108 = vrot.slane %v3106, 2
    %v3109 = vor.u32 %v3105, %v3108
    %v3110 = vrot.slane %v3079, 1
    %v3111 = vrot.slane %v3075, 2
    %v3112 = vor.u32 %v3110, %v3111
    %v3113 = vsel %vm228, %v3109, %v3112
    %v3115 = vshrl.u32 %v3101, 16
    %v3117 = vrot.slane %v3115, 1
    %v3118 = vshll.u32 %v3101, 16
    %v3120 = vrot.slane %v3118, 2
    %v3121 = vor.u32 %v3117, %v3120
    %v3122 = vsel %vm228, %v3112, %v3121
    %v3126 = vunpack.c.l.b16 %v3051
    %v3127 = vpack.c.b16 %v3057, %v3126
    %v3128 = vrot.slane %v3127, 2
    %v3129 = vrot.slane %v3061, 2
    %v3130 = vsel %vm255, %v3128, %v3129
    %v3131 = vrot.slane %v3101, 2
    %v3132 = vsel %vm255, %v3129, %v3131
    %s3135 = scalar_lea.vmem [#allocation9], 320
    %v3136 = vld [vmem:[%s3135] sm:$0xf]
    %v3137 = vld [vmem:[%s3135 + $0x4] sm:$0xf]
    %v3138 = vld [vmem:[%s3135 + $0x8] sm:$0xf]
    %v3139 = vld [vmem:[%s3135 + $0xc] sm:$0xf]
    %v3140 = vld [vmem:[%s3135 + $0x10] sm:$0xf]
    %v3141 = vld [vmem:[%s3135 + $0x14] sm:$0xf]
    %v3142 = vld [vmem:[%s3135 + $0x18] sm:$0xf]
    %v3143 = vld [vmem:[%s3135 + $0x1c] sm:$0xf]
    %v3144 = vld [vmem:[%s3135 + $0x20] sm:$0xf]
    %v3145 = vld [vmem:[%s3135 + $0x24] sm:$0xf]
    %v3146 = vld [vmem:[%s3135 + $0x28] sm:$0xf]
    %v3147 = vld [vmem:[%s3135 + $0x2c] sm:$0xf]
    %v3148 = vld [vmem:[%s3135 + $0x30] sm:$0xf]
    %v3149 = vld [vmem:[%s3135 + $0x34] sm:$0xf]
    %v3150 = vld [vmem:[%s3135 + $0x38] sm:$0xf]
    %v3151 = vld [vmem:[%s3135 + $0x3c] sm:$0xf]
    %v3152 = vld [vmem:[%s3135 + $0x40] sm:$0xf]
    %v3153 = vld [vmem:[%s3135 + $0x44] sm:$0xf]
    %v3154 = vld [vmem:[%s3135 + $0x48] sm:$0xf]
    %v3155 = vld [vmem:[%s3135 + $0x4c] sm:$0xf]
    %v3156 = vld [vmem:[%s3135 + $0x50] sm:$0xf]
    %v3157 = vld [vmem:[%s3135 + $0x54] sm:$0xf]
    %v3158 = vld [vmem:[%s3135 + $0x58] sm:$0xf]
    %v3159 = vld [vmem:[%s3135 + $0x5c] sm:$0xf]
    %v3160 = vld [vmem:[%s3135 + $0x60] sm:$0xf]
    %v3161 = vld [vmem:[%s3135 + $0x64] sm:$0xf]
    %v3162 = vld [vmem:[%s3135 + $0x68] sm:$0xf]
    %v3163 = vld [vmem:[%s3135 + $0x6c] sm:$0xf]
    %v3164 = vld [vmem:[%s3135 + $0x70] sm:$0xf]
    %v3165 = vld [vmem:[%s3135 + $0x74] sm:$0xf]
    %v3166 = vld [vmem:[%s3135 + $0x78] sm:$0xf]
    %v3167 = vld [vmem:[%s3135 + $0x7c] sm:$0xf]
    %v3168 = vld [vmem:[%s3135 + $0x80] sm:$0xf]
    %v3169 = vld [vmem:[%s3135 + $0x84] sm:$0xf]
    %v3170 = vld [vmem:[%s3135 + $0x88] sm:$0xf]
    %v3171 = vld [vmem:[%s3135 + $0x8c] sm:$0xf]
    %v3172 = vld [vmem:[%s3135 + $0x90] sm:$0xf]
    %v3173 = vld [vmem:[%s3135 + $0x94] sm:$0xf]
    %v3174 = vld [vmem:[%s3135 + $0x98] sm:$0xf]
    %v3175 = vld [vmem:[%s3135 + $0x9c] sm:$0xf]
    %v3176 = vld [vmem:[%s3135 + $0xa0] sm:$0xf]
    %v3177 = vld [vmem:[%s3135 + $0xa4] sm:$0xf]
    %v3178 = vld [vmem:[%s3135 + $0xa8] sm:$0xf]
    %v3179 = vld [vmem:[%s3135 + $0xac] sm:$0xf]
    %v3180 = vld [vmem:[%s3135 + $0xb0] sm:$0xf]
    %v3181 = vld [vmem:[%s3135 + $0xb4] sm:$0xf]
    %v3182 = vld [vmem:[%s3135 + $0xb8] sm:$0xf]
    %v3183 = vld [vmem:[%s3135 + $0xbc] sm:$0xf]
    %v3184 = vld [vmem:[%s3135 + $0xc0] sm:$0xf]
    %v3185 = vld [vmem:[%s3135 + $0xc4] sm:$0xf]
    %v3186 = vld [vmem:[%s3135 + $0xc8] sm:$0xf]
    %v3187 = vld [vmem:[%s3135 + $0xcc] sm:$0xf]
    %v3188 = vld [vmem:[%s3135 + $0xd0] sm:$0xf]
    %v3189 = vld [vmem:[%s3135 + $0xd4] sm:$0xf]
    %v3190 = vld [vmem:[%s3135 + $0xd8] sm:$0xf]
    %v3191 = vld [vmem:[%s3135 + $0xdc] sm:$0xf]
    %v3192 = vld [vmem:[%s3135 + $0xe0] sm:$0xf]
    %v3193 = vld [vmem:[%s3135 + $0xe4] sm:$0xf]
    %v3194 = vld [vmem:[%s3135 + $0xe8] sm:$0xf]
    %v3195 = vld [vmem:[%s3135 + $0xec] sm:$0xf]
    %v3196 = vld [vmem:[%s3135 + $0xf0] sm:$0xf]
    %v3197 = vld [vmem:[%s3135 + $0xf4] sm:$0xf]
    %v3198 = vld [vmem:[%s3135 + $0xf8] sm:$0xf]
    %v3199 = vld [vmem:[%s3135 + $0xfc] sm:$0xf]
    %v3200 = vld [vmem:[%s3135 + $0x100] sm:$0xf]
    %v3201 = vld [vmem:[%s3135 + $0x104] sm:$0xf]
    %v3202 = vld [vmem:[%s3135 + $0x108] sm:$0xf]
    %v3203 = vld [vmem:[%s3135 + $0x10c] sm:$0xf]
    %v3204 = vld [vmem:[%s3135 + $0x110] sm:$0xf]
    %v3205 = vld [vmem:[%s3135 + $0x114] sm:$0xf]
    %v3206 = vld [vmem:[%s3135 + $0x118] sm:$0xf]
    %v3207 = vld [vmem:[%s3135 + $0x11c] sm:$0xf]
    %v3208 = vld [vmem:[%s3135 + $0x120] sm:$0xf]
    %v3209 = vld [vmem:[%s3135 + $0x124] sm:$0xf]
    %v3210 = vld [vmem:[%s3135 + $0x128] sm:$0xf]
    %v3211 = vld [vmem:[%s3135 + $0x12c] sm:$0xf]
    %v3212 = vld [vmem:[%s3135 + $0x130] sm:$0xf]
    %v3213 = vld [vmem:[%s3135 + $0x134] sm:$0xf]
    %v3214 = vld [vmem:[%s3135 + $0x138] sm:$0xf]
    %v3215 = vld [vmem:[%s3135 + $0x13c] sm:$0xf]
    %v3296 = vunpack.c.l.b16 %v3136
    %v3297 = vunpack.c.l.b16 %v3137
    %v3298 = vunpack.c.l.b16 %v3138
    %v3299 = vunpack.c.l.b16 %v3139
    %v3300 = vunpack.c.l.b16 %v3140
    %v3301 = vunpack.c.l.b16 %v3141
    %v3302 = vunpack.c.l.b16 %v3142
    %v3303 = vunpack.c.l.b16 %v3143
    %v3304 = vunpack.c.l.b16 %v3144
    %v3305 = vunpack.c.l.b16 %v3145
    %v3306 = vunpack.c.l.b16 %v3146
    %v3307 = vunpack.c.l.b16 %v3147
    %v3308 = vunpack.c.l.b16 %v3148
    %v3309 = vunpack.c.l.b16 %v3149
    %v3310 = vunpack.c.l.b16 %v3150
    %v3311 = vunpack.c.l.b16 %v3151
    %v3312 = vunpack.c.l.b16 %v3152
    %v3313 = vunpack.c.l.b16 %v3153
    %v3314 = vunpack.c.l.b16 %v3154
    %v3315 = vunpack.c.l.b16 %v3155
    %v3316 = vunpack.c.l.b16 %v3156
    %v3317 = vunpack.c.l.b16 %v3157
    %v3318 = vunpack.c.l.b16 %v3158
    %v3319 = vunpack.c.l.b16 %v3159
    %v3320 = vunpack.c.l.b16 %v3160
    %v3321 = vunpack.c.l.b16 %v3161
    %v3322 = vunpack.c.l.b16 %v3162
    %v3323 = vunpack.c.l.b16 %v3163
    %v3324 = vunpack.c.l.b16 %v3164
    %v3325 = vunpack.c.l.b16 %v3165
    %v3326 = vunpack.c.l.b16 %v3166
    %v3327 = vunpack.c.l.b16 %v3167
    %v3328 = vunpack.c.l.b16 %v3168
    %v3329 = vunpack.c.l.b16 %v3169
    %v3330 = vunpack.c.l.b16 %v3170
    %v3331 = vunpack.c.l.b16 %v3171
    %v3332 = vunpack.c.l.b16 %v3172
    %v3333 = vunpack.c.l.b16 %v3173
    %v3334 = vunpack.c.l.b16 %v3174
    %v3335 = vunpack.c.l.b16 %v3175
    %v3336 = vunpack.c.l.b16 %v3176
    %v3337 = vunpack.c.l.b16 %v3177
    %v3338 = vunpack.c.l.b16 %v3178
    %v3339 = vunpack.c.l.b16 %v3179
    %v3340 = vunpack.c.l.b16 %v3180
    %v3341 = vunpack.c.l.b16 %v3181
    %v3342 = vunpack.c.l.b16 %v3182
    %v3343 = vunpack.c.l.b16 %v3183
    %v3344 = vunpack.c.l.b16 %v3184
    %v3345 = vunpack.c.l.b16 %v3185
    %v3346 = vunpack.c.l.b16 %v3186
    %v3347 = vunpack.c.l.b16 %v3187
    %v3348 = vunpack.c.l.b16 %v3188
    %v3349 = vunpack.c.l.b16 %v3189
    %v3350 = vunpack.c.l.b16 %v3190
    %v3351 = vunpack.c.l.b16 %v3191
    %v3352 = vunpack.c.l.b16 %v3192
    %v3353 = vunpack.c.l.b16 %v3193
    %v3354 = vunpack.c.l.b16 %v3194
    %v3355 = vunpack.c.l.b16 %v3195
    %v3356 = vunpack.c.l.b16 %v3196
    %v3357 = vunpack.c.l.b16 %v3197
    %v3358 = vunpack.c.l.b16 %v3198
    %v3359 = vunpack.c.l.b16 %v3199
    %v3360 = vunpack.c.l.b16 %v3200
    %v3361 = vunpack.c.l.b16 %v3201
    %v3362 = vunpack.c.l.b16 %v3202
    %v3363 = vunpack.c.l.b16 %v3203
    %v3364 = vunpack.c.l.b16 %v3204
    %v3365 = vunpack.c.l.b16 %v3205
    %v3366 = vunpack.c.l.b16 %v3206
    %v3367 = vunpack.c.l.b16 %v3207
    %v3368 = vunpack.c.l.b16 %v3208
    %v3369 = vunpack.c.l.b16 %v3209
    %v3370 = vunpack.c.l.b16 %v3210
    %v3371 = vunpack.c.l.b16 %v3211
    %v3372 = vunpack.c.l.b16 %v3212
    %v3373 = vunpack.c.l.b16 %v3213
    %v3374 = vunpack.c.l.b16 %v3214
    %v3375 = vunpack.c.l.b16 %v3215
    %v3376 = vpack.c.b16 %v3297, %v3296
    %v3377 = vpack.c.b16 %v3299, %v3298
    %v3378 = vpack.c.b16 %v3301, %v3300
    %v3379 = vpack.c.b16 %v3303, %v3302
    %v3380 = vpack.c.b16 %v3305, %v3304
    %v3381 = vpack.c.b16 %v3307, %v3306
    %v3382 = vpack.c.b16 %v3309, %v3308
    %v3383 = vpack.c.b16 %v3311, %v3310
    %v3384 = vpack.c.b16 %v3313, %v3312
    %v3385 = vpack.c.b16 %v3315, %v3314
    %v3386 = vpack.c.b16 %v3317, %v3316
    %v3387 = vpack.c.b16 %v3319, %v3318
    %v3388 = vpack.c.b16 %v3321, %v3320
    %v3389 = vpack.c.b16 %v3323, %v3322
    %v3390 = vpack.c.b16 %v3325, %v3324
    %v3391 = vpack.c.b16 %v3327, %v3326
    %v3392 = vpack.c.b16 %v3329, %v3328
    %v3393 = vpack.c.b16 %v3331, %v3330
    %v3394 = vpack.c.b16 %v3333, %v3332
    %v3395 = vpack.c.b16 %v3335, %v3334
    %v3396 = vpack.c.b16 %v3337, %v3336
    %v3397 = vpack.c.b16 %v3339, %v3338
    %v3398 = vpack.c.b16 %v3341, %v3340
    %v3399 = vpack.c.b16 %v3343, %v3342
    %v3400 = vpack.c.b16 %v3345, %v3344
    %v3401 = vpack.c.b16 %v3347, %v3346
    %v3402 = vpack.c.b16 %v3349, %v3348
    %v3403 = vpack.c.b16 %v3351, %v3350
    %v3404 = vpack.c.b16 %v3353, %v3352
    %v3405 = vpack.c.b16 %v3355, %v3354
    %v3406 = vpack.c.b16 %v3357, %v3356
    %v3407 = vpack.c.b16 %v3359, %v3358
    %v3408 = vpack.c.b16 %v3361, %v3360
    %v3409 = vpack.c.b16 %v3363, %v3362
    %v3410 = vpack.c.b16 %v3365, %v3364
    %v3411 = vpack.c.b16 %v3367, %v3366
    %v3412 = vpack.c.b16 %v3369, %v3368
    %v3413 = vpack.c.b16 %v3371, %v3370
    %v3414 = vpack.c.b16 %v3373, %v3372
    %v3415 = vpack.c.b16 %v3375, %v3374
    %3456 = vmatprep.subr.bf16.mxu0 0
    %3457 = vmatpush1.bf16.msra.mxu0 %v3383
    %3458 = vmatprep.subr.bf16.mxu0 0
    %3459 = vmatpush1.bf16.msra.mxu0 %v3382
    %3460 = vmatprep.subr.bf16.mxu0 0
    %3461 = vmatpush1.bf16.msra.mxu0 %v3381
    %3462 = vmatprep.subr.bf16.mxu0 0
    %3463 = vmatpush1.bf16.msra.mxu0 %v3380
    %3464 = vmatprep.subr.bf16.mxu0 0
    %3465 = vmatpush1.bf16.msra.mxu0 %v3379
    %3466 = vmatprep.subr.bf16.mxu0 0
    %3467 = vmatpush1.bf16.msra.mxu0 %v3378
    %3468 = vmatprep.subr.bf16.mxu0 0
    %3469 = vmatpush1.bf16.msra.mxu0 %v3377
    %3470 = vmatprep.subr.bf16.mxu0 0
    %3471 = vmatpush1.bf16.msra.mxu0 %v3376
    %3472 = vmatprep.subr.bf16.mxu0 0
    %3473 = vmatpush2.bf16.msra.mxu0 %v3391
    %3474 = vmatprep.subr.bf16.mxu0 0
    %3475 = vmatpush2.bf16.msra.mxu0 %v3390
    %3476 = vmatprep.subr.bf16.mxu0 0
    %3477 = vmatpush2.bf16.msra.mxu0 %v3389
    %3478 = vmatprep.subr.bf16.mxu0 0
    %3479 = vmatpush2.bf16.msra.mxu0 %v3388
    %3480 = vmatprep.subr.bf16.mxu0 0
    %3481 = vmatpush2.bf16.msra.mxu0 %v3387
    %3482 = vmatprep.subr.bf16.mxu0 0
    %3483 = vmatpush2.bf16.msra.mxu0 %v3386
    %3484 = vmatprep.subr.bf16.mxu0 0
    %3485 = vmatpush2.bf16.msra.mxu0 %v3385
    %3486 = vmatprep.subr.bf16.mxu0 0
    %3487 = vmatpush2.bf16.msra.mxu0 %v3384
    %3488 = vmatprep.mubr.bf16.mxu0 %v3078
    %3489 = vmatmul.mubr.bf16.gmra.mxu0 %v3060
    %v3490 = vpop.f32.mrf.mxu0
    %v3491 = vadd.f32 0.0, %v3490
    %v3492 = vpop.f32.mrf.mxu0
    %v3493 = vpop.f32.mrf.mxu0
    %v3494 = vadd.f32 0.0, %v3493
    %v3495 = vpop.f32.mrf.mxu0
    %3496 = vmatprep.mubr.bf16.mxu0 %v3086
    %3497 = vmatmul.mubr.bf16.gmra.mxu0 %v3061
    %v3498 = vpop.f32.mrf.mxu0
    %v3499 = vadd.f32 0.0, %v3498
    %v3500 = vpop.f32.mrf.mxu0
    %v3501 = vpop.f32.mrf.mxu0
    %v3502 = vadd.f32 0.0, %v3501
    %v3503 = vpop.f32.mrf.mxu0
    %3504 = vdwg.mxu0
    %3505 = vmatprep.subr.bf16.mxu0 0
    %3506 = vmatpush1.bf16.msra.mxu0 %v3399
    %3507 = vmatprep.subr.bf16.mxu0 0
    %3508 = vmatpush1.bf16.msra.mxu0 %v3398
    %3509 = vmatprep.subr.bf16.mxu0 0
    %3510 = vmatpush1.bf16.msra.mxu0 %v3397
    %3511 = vmatprep.subr.bf16.mxu0 0
    %3512 = vmatpush1.bf16.msra.mxu0 %v3396
    %3513 = vmatprep.subr.bf16.mxu0 0
    %3514 = vmatpush1.bf16.msra.mxu0 %v3395
    %3515 = vmatprep.subr.bf16.mxu0 0
    %3516 = vmatpush1.bf16.msra.mxu0 %v3394
    %3517 = vmatprep.subr.bf16.mxu0 0
    %3518 = vmatpush1.bf16.msra.mxu0 %v3393
    %3519 = vmatprep.subr.bf16.mxu0 0
    %3520 = vmatpush1.bf16.msra.mxu0 %v3392
    %3521 = vmatprep.subr.bf16.mxu0 0
    %3522 = vmatpush2.bf16.msra.mxu0 %v3407
    %3523 = vmatprep.subr.bf16.mxu0 0
    %3524 = vmatpush2.bf16.msra.mxu0 %v3406
    %3525 = vmatprep.subr.bf16.mxu0 0
    %3526 = vmatpush2.bf16.msra.mxu0 %v3405
    %3527 = vmatprep.subr.bf16.mxu0 0
    %3528 = vmatpush2.bf16.msra.mxu0 %v3404
    %3529 = vmatprep.subr.bf16.mxu0 0
    %3530 = vmatpush2.bf16.msra.mxu0 %v3403
    %3531 = vmatprep.subr.bf16.mxu0 0
    %3532 = vmatpush2.bf16.msra.mxu0 %v3402
    %3533 = vmatprep.subr.bf16.mxu0 0
    %3534 = vmatpush2.bf16.msra.mxu0 %v3401
    %3535 = vmatprep.subr.bf16.mxu0 0
    %3536 = vmatpush2.bf16.msra.mxu0 %v3400
    %3537 = vmatprep.mubr.bf16.mxu0 %v3113
    %3538 = vmatmul.mubr.bf16.gmra.mxu0 %v3094
    %v3539 = vpop.f32.mrf.mxu0
    %v3540 = vadd.f32 %v3491, %v3539
    %v3541 = vpop.f32.mrf.mxu0
    %v3542 = vpop.f32.mrf.mxu0
    %v3543 = vadd.f32 %v3494, %v3542
    %v3544 = vpop.f32.mrf.mxu0
    %3545 = vmatprep.mubr.bf16.mxu0 %v3122
    %3546 = vmatmul.mubr.bf16.gmra.mxu0 %v3096
    %v3547 = vpop.f32.mrf.mxu0
    %v3548 = vadd.f32 %v3499, %v3547
    %v3549 = vpop.f32.mrf.mxu0
    %v3550 = vpop.f32.mrf.mxu0
    %v3551 = vadd.f32 %v3502, %v3550
    %v3552 = vpop.f32.mrf.mxu0
    %3553 = vdwg.mxu0
    %3554 = vmatprep.subr.bf16.mxu0 0
    %3555 = vmatpush1.bf16.msra.mxu0 %v3415
    %3556 = vmatprep.subr.bf16.mxu0 0
    %3557 = vmatpush1.bf16.msra.mxu0 %v3414
    %3558 = vmatprep.subr.bf16.mxu0 0
    %3559 = vmatpush1.bf16.msra.mxu0 %v3413
    %3560 = vmatprep.subr.bf16.mxu0 0
    %3561 = vmatpush1.bf16.msra.mxu0 %v3412
    %3562 = vmatprep.subr.bf16.mxu0 0
    %3563 = vmatpush1.bf16.msra.mxu0 %v3411
    %3564 = vmatprep.subr.bf16.mxu0 0
    %3565 = vmatpush1.bf16.msra.mxu0 %v3410
    %3566 = vmatprep.subr.bf16.mxu0 0
    %3567 = vmatpush1.bf16.msra.mxu0 %v3409
    %3568 = vmatprep.subr.bf16.mxu0 0
    %3569 = vmatpush1.bf16.msra.mxu0 %v3408
    %3570 = vmatprep.subr.bf16.mxu0 0
    %3571 = vmatpush2.bf16.msra.mxu0 0
    %3572 = vmatprep.subr.bf16.mxu0 0
    %3573 = vmatpush2.bf16.msra.mxu0 0
    %3574 = vmatprep.subr.bf16.mxu0 0
    %3575 = vmatpush2.bf16.msra.mxu0 0
    %3576 = vmatprep.subr.bf16.mxu0 0
    %3577 = vmatpush2.bf16.msra.mxu0 0
    %3578 = vmatprep.subr.bf16.mxu0 0
    %3579 = vmatpush2.bf16.msra.mxu0 0
    %3580 = vmatprep.subr.bf16.mxu0 0
    %3581 = vmatpush2.bf16.msra.mxu0 0
    %3582 = vmatprep.subr.bf16.mxu0 0
    %3583 = vmatpush2.bf16.msra.mxu0 0
    %3584 = vmatprep.subr.bf16.mxu0 0
    %3585 = vmatpush2.bf16.msra.mxu0 0
    %3586 = vmatprep.mubr.bf16.mxu0 0
    %3587 = vmatmul.mubr.bf16.gmra.mxu0 %v3130
    %v3588 = vpop.f32.mrf.mxu0
    %v3589 = vadd.f32 %v3540, %v3588
    %v3590 = vpop.f32.mrf.mxu0
    %v3591 = vpop.f32.mrf.mxu0
    %v3592 = vadd.f32 %v3543, %v3591
    %v3593 = vpop.f32.mrf.mxu0
    %3594 = vmatprep.mubr.bf16.mxu0 0
    %3595 = vmatmul.mubr.bf16.gmra.mxu0 %v3132
    %v3596 = vpop.f32.mrf.mxu0
    %v3597 = vadd.f32 %v3548, %v3596
    %v3598 = vpop.f32.mrf.mxu0
    %v3599 = vpop.f32.mrf.mxu0
    %v3600 = vadd.f32 %v3551, %v3599
    %v3601 = vpop.f32.mrf.mxu0
    %3602 = vdwg.mxu0
    %s3603 = scalar_lea.vmem [#allocation12], 4
    %v3604 = vld [vmem:[%s3603] sm:$0x1]
    %v3606 = vlaneseq
    %v3607 = vshrl.u32 %v3606, 7
    %v3608 = vsub.s32 0, %v3607
    %v3609 = vrot.slane %v3604, %v3608
    %v3611 = vmul.f32 %v3589, %v3609
    %v3612 = vmul.f32 %v3592, %v3609
    %v3613 = vmul.f32 %v3597, %v3609
    %v3614 = vmul.f32 %v3600, %v3609
    %s3615 = scalar_lea.vmem %s5, 4
    %v3616 = vld [vmem:[%s3615] sm:$0x1]
    %v3618 = vlaneseq
    %v3619 = vshrl.u32 %v3618, 7
    %v3620 = vsub.s32 0, %v3619
    %v3621 = vrot.slane %v3616, %v3620
    %v3623 = vadd.f32 %v3611, %v3621
    %v3624 = vadd.f32 %v3612, %v3621
    %v3625 = vadd.f32 %v3613, %v3621
    %v3626 = vadd.f32 %v3614, %v3621
    %v3627 = vmax.f32 %v3623, 0.0
    %v3628 = vmax.f32 %v3624, 0.0
    %v3629 = vmax.f32 %v3625, 0.0
    %v3630 = vmax.f32 %v3626, 0.0
    %v3631 = vsel %vm1674, %v3627, 0.0
    %v3632 = vsel %vm1675, %v3628, 0.0
    %v3633 = vsel %vm1674, %v3629, 0.0
    %v3634 = vsel %vm1675, %v3630, 0.0
    %v3635 = vpack.c.bf16 %v3632, %v3631
    %v3636 = vpack.c.bf16 %v3634, %v3633
    %v3639 = vunpack.c.l.b16 %v3635
    %v3640 = vunpack.c.h.b16 %v3635
    %v3641 = vunpack.c.l.b16 %v3636
    %v3642 = vunpack.c.h.b16 %v3636
    %v3643 = vpack.c.b16 %v3639, %v3639
    %v3644 = vpack.c.b16 %v3640, %v3640
    %v3645 = vpack.c.b16 %v3641, %v3641
    %v3646 = vpack.c.b16 %v3642, %v3642
    %3651 = vst [vmem:[#allocation2] sm:$0xf] %v3643
    %3652 = vst [vmem:[#allocation2 + $0x4] sm:$0xf] %v3644
    %3653 = vst [vmem:[#allocation2 + $0x8] sm:$0xf] %v3645
    %3654 = vst [vmem:[#allocation2 + $0xc] sm:$0xf] %v3646
    %v3655 = vld [vmem:[#allocation2] sm:$0xf]
    %v3656 = vld [vmem:[#allocation2 + $0x4] sm:$0xf]
    %v3657 = vld [vmem:[#allocation2 + $0x8] sm:$0xf]
    %v3658 = vld [vmem:[#allocation2 + $0xc] sm:$0xf]
    %v3659 = vld [vmem:[#allocation2 + $0x10] sm:$0x1]
    %v3660 = vld [vmem:[#allocation2] sm:$0xe]
    %v3665 = vunpack.c.l.b16 %v3655
    %v3666 = vunpack.c.l.b16 %v3656
    %v3667 = vunpack.c.l.b16 %v3657
    %v3668 = vunpack.c.l.b16 %v3658
    %v3669 = vpack.c.b16 %v3666, %v3665
    %v3670 = vpack.c.b16 %v3668, %v3667
    %v3674 = vunpack.c.l.b16 %v3659
    %v3675 = vpack.c.b16 %v3674, %v3674
    %v3677 = vshrl.u32 %v3669, 16
    %v3679 = vshll.u32 %v3669, 16
    %v3681 = vrot.slane %v3679, 1
    %v3682 = vor.u32 %v3677, %v3681
    %v3684 = vshll.u32 %v3670, 16
    %v3686 = vrot.slane %v3684, 1
    %v3687 = vsel %vm191, %v3682, %v3686
    %v3688 = vshrl.u32 %v3670, 16
    %v3690 = vor.u32 %v3688, %v3686
    %v3692 = vshll.u32 %v3675, 16
    %v3694 = vrot.slane %v3692, 1
    %v3695 = vsel %vm191, %v3690, %v3694
    %v3699 = vunpack.c.l.b16 %v3660
    %v3700 = vpack.c.b16 %v3666, %v3699
    %v3701 = vrot.slane %v3700, 1
    %v3702 = vrot.slane %v3670, 1
    %v3703 = vsel %vm217, %v3701, %v3702
    %v3704 = vrot.slane %v3675, 1
    %v3705 = vsel %vm217, %v3702, %v3704
    %s3708 = scalar_lea.vmem [#allocation10], 192
    %v3709 = vld [vmem:[%s3708] sm:$0xf]
    %v3710 = vld [vmem:[%s3708 + $0x4] sm:$0xf]
    %v3711 = vld [vmem:[%s3708 + $0x8] sm:$0xf]
    %v3712 = vld [vmem:[%s3708 + $0xc] sm:$0xf]
    %v3713 = vld [vmem:[%s3708 + $0x10] sm:$0xf]
    %v3714 = vld [vmem:[%s3708 + $0x14] sm:$0xf]
    %v3715 = vld [vmem:[%s3708 + $0x18] sm:$0xf]
    %v3716 = vld [vmem:[%s3708 + $0x1c] sm:$0xf]
    %v3717 = vld [vmem:[%s3708 + $0x20] sm:$0xf]
    %v3718 = vld [vmem:[%s3708 + $0x24] sm:$0xf]
    %v3719 = vld [vmem:[%s3708 + $0x28] sm:$0xf]
    %v3720 = vld [vmem:[%s3708 + $0x2c] sm:$0xf]
    %v3721 = vld [vmem:[%s3708 + $0x30] sm:$0xf]
    %v3722 = vld [vmem:[%s3708 + $0x34] sm:$0xf]
    %v3723 = vld [vmem:[%s3708 + $0x38] sm:$0xf]
    %v3724 = vld [vmem:[%s3708 + $0x3c] sm:$0xf]
    %v3725 = vld [vmem:[%s3708 + $0x40] sm:$0xf]
    %v3726 = vld [vmem:[%s3708 + $0x44] sm:$0xf]
    %v3727 = vld [vmem:[%s3708 + $0x48] sm:$0xf]
    %v3728 = vld [vmem:[%s3708 + $0x4c] sm:$0xf]
    %v3729 = vld [vmem:[%s3708 + $0x50] sm:$0xf]
    %v3730 = vld [vmem:[%s3708 + $0x54] sm:$0xf]
    %v3731 = vld [vmem:[%s3708 + $0x58] sm:$0xf]
    %v3732 = vld [vmem:[%s3708 + $0x5c] sm:$0xf]
    %v3733 = vld [vmem:[%s3708 + $0x60] sm:$0xf]
    %v3734 = vld [vmem:[%s3708 + $0x64] sm:$0xf]
    %v3735 = vld [vmem:[%s3708 + $0x68] sm:$0xf]
    %v3736 = vld [vmem:[%s3708 + $0x6c] sm:$0xf]
    %v3737 = vld [vmem:[%s3708 + $0x70] sm:$0xf]
    %v3738 = vld [vmem:[%s3708 + $0x74] sm:$0xf]
    %v3739 = vld [vmem:[%s3708 + $0x78] sm:$0xf]
    %v3740 = vld [vmem:[%s3708 + $0x7c] sm:$0xf]
    %v3741 = vld [vmem:[%s3708 + $0x80] sm:$0xf]
    %v3742 = vld [vmem:[%s3708 + $0x84] sm:$0xf]
    %v3743 = vld [vmem:[%s3708 + $0x88] sm:$0xf]
    %v3744 = vld [vmem:[%s3708 + $0x8c] sm:$0xf]
    %v3745 = vld [vmem:[%s3708 + $0x90] sm:$0xf]
    %v3746 = vld [vmem:[%s3708 + $0x94] sm:$0xf]
    %v3747 = vld [vmem:[%s3708 + $0x98] sm:$0xf]
    %v3748 = vld [vmem:[%s3708 + $0x9c] sm:$0xf]
    %v3749 = vld [vmem:[%s3708 + $0xa0] sm:$0xf]
    %v3750 = vld [vmem:[%s3708 + $0xa4] sm:$0xf]
    %v3751 = vld [vmem:[%s3708 + $0xa8] sm:$0xf]
    %v3752 = vld [vmem:[%s3708 + $0xac] sm:$0xf]
    %v3753 = vld [vmem:[%s3708 + $0xb0] sm:$0xf]
    %v3754 = vld [vmem:[%s3708 + $0xb4] sm:$0xf]
    %v3755 = vld [vmem:[%s3708 + $0xb8] sm:$0xf]
    %v3756 = vld [vmem:[%s3708 + $0xbc] sm:$0xf]
    %v3805 = vunpack.c.l.b16 %v3709
    %v3806 = vunpack.c.l.b16 %v3710
    %v3807 = vunpack.c.l.b16 %v3711
    %v3808 = vunpack.c.l.b16 %v3712
    %v3809 = vunpack.c.l.b16 %v3713
    %v3810 = vunpack.c.l.b16 %v3714
    %v3811 = vunpack.c.l.b16 %v3715
    %v3812 = vunpack.c.l.b16 %v3716
    %v3813 = vunpack.c.l.b16 %v3717
    %v3814 = vunpack.c.l.b16 %v3718
    %v3815 = vunpack.c.l.b16 %v3719
    %v3816 = vunpack.c.l.b16 %v3720
    %v3817 = vunpack.c.l.b16 %v3721
    %v3818 = vunpack.c.l.b16 %v3722
    %v3819 = vunpack.c.l.b16 %v3723
    %v3820 = vunpack.c.l.b16 %v3724
    %v3821 = vunpack.c.l.b16 %v3725
    %v3822 = vunpack.c.l.b16 %v3726
    %v3823 = vunpack.c.l.b16 %v3727
    %v3824 = vunpack.c.l.b16 %v3728
    %v3825 = vunpack.c.l.b16 %v3729
    %v3826 = vunpack.c.l.b16 %v3730
    %v3827 = vunpack.c.l.b16 %v3731
    %v3828 = vunpack.c.l.b16 %v3732
    %v3829 = vunpack.c.l.b16 %v3733
    %v3830 = vunpack.c.l.b16 %v3734
    %v3831 = vunpack.c.l.b16 %v3735
    %v3832 = vunpack.c.l.b16 %v3736
    %v3833 = vunpack.c.l.b16 %v3737
    %v3834 = vunpack.c.l.b16 %v3738
    %v3835 = vunpack.c.l.b16 %v3739
    %v3836 = vunpack.c.l.b16 %v3740
    %v3837 = vunpack.c.l.b16 %v3741
    %v3838 = vunpack.c.l.b16 %v3742
    %v3839 = vunpack.c.l.b16 %v3743
    %v3840 = vunpack.c.l.b16 %v3744
    %v3841 = vunpack.c.l.b16 %v3745
    %v3842 = vunpack.c.l.b16 %v3746
    %v3843 = vunpack.c.l.b16 %v3747
    %v3844 = vunpack.c.l.b16 %v3748
    %v3845 = vunpack.c.l.b16 %v3749
    %v3846 = vunpack.c.l.b16 %v3750
    %v3847 = vunpack.c.l.b16 %v3751
    %v3848 = vunpack.c.l.b16 %v3752
    %v3849 = vunpack.c.l.b16 %v3753
    %v3850 = vunpack.c.l.b16 %v3754
    %v3851 = vunpack.c.l.b16 %v3755
    %v3852 = vunpack.c.l.b16 %v3756
    %v3853 = vpack.c.b16 %v3806, %v3805
    %v3854 = vpack.c.b16 %v3808, %v3807
    %v3855 = vpack.c.b16 %v3810, %v3809
    %v3856 = vpack.c.b16 %v3812, %v3811
    %v3857 = vpack.c.b16 %v3814, %v3813
    %v3858 = vpack.c.b16 %v3816, %v3815
    %v3859 = vpack.c.b16 %v3818, %v3817
    %v3860 = vpack.c.b16 %v3820, %v3819
    %v3861 = vpack.c.b16 %v3822, %v3821
    %v3862 = vpack.c.b16 %v3824, %v3823
    %v3863 = vpack.c.b16 %v3826, %v3825
    %v3864 = vpack.c.b16 %v3828, %v3827
    %v3865 = vpack.c.b16 %v3830, %v3829
    %v3866 = vpack.c.b16 %v3832, %v3831
    %v3867 = vpack.c.b16 %v3834, %v3833
    %v3868 = vpack.c.b16 %v3836, %v3835
    %v3869 = vpack.c.b16 %v3838, %v3837
    %v3870 = vpack.c.b16 %v3840, %v3839
    %v3871 = vpack.c.b16 %v3842, %v3841
    %v3872 = vpack.c.b16 %v3844, %v3843
    %v3873 = vpack.c.b16 %v3846, %v3845
    %v3874 = vpack.c.b16 %v3848, %v3847
    %v3875 = vpack.c.b16 %v3850, %v3849
    %v3876 = vpack.c.b16 %v3852, %v3851
    %3901 = vmatprep.subr.bf16.mxu0 0
    %3902 = vmatpush1.bf16.msra.mxu0 %v3860
    %3903 = vmatprep.subr.bf16.mxu0 0
    %3904 = vmatpush1.bf16.msra.mxu0 %v3859
    %3905 = vmatprep.subr.bf16.mxu0 0
    %3906 = vmatpush1.bf16.msra.mxu0 %v3858
    %3907 = vmatprep.subr.bf16.mxu0 0
    %3908 = vmatpush1.bf16.msra.mxu0 %v3857
    %3909 = vmatprep.subr.bf16.mxu0 0
    %3910 = vmatpush1.bf16.msra.mxu0 %v3856
    %3911 = vmatprep.subr.bf16.mxu0 0
    %3912 = vmatpush1.bf16.msra.mxu0 %v3855
    %3913 = vmatprep.subr.bf16.mxu0 0
    %3914 = vmatpush1.bf16.msra.mxu0 %v3854
    %3915 = vmatprep.subr.bf16.mxu0 0
    %3916 = vmatpush1.bf16.msra.mxu0 %v3853
    %3917 = vmatprep.subr.bf16.mxu0 0
    %3918 = vmatpush2.bf16.msra.mxu0 %v3868
    %3919 = vmatprep.subr.bf16.mxu0 0
    %3920 = vmatpush2.bf16.msra.mxu0 %v3867
    %3921 = vmatprep.subr.bf16.mxu0 0
    %3922 = vmatpush2.bf16.msra.mxu0 %v3866
    %3923 = vmatprep.subr.bf16.mxu0 0
    %3924 = vmatpush2.bf16.msra.mxu0 %v3865
    %3925 = vmatprep.subr.bf16.mxu0 0
    %3926 = vmatpush2.bf16.msra.mxu0 %v3864
    %3927 = vmatprep.subr.bf16.mxu0 0
    %3928 = vmatpush2.bf16.msra.mxu0 %v3863
    %3929 = vmatprep.subr.bf16.mxu0 0
    %3930 = vmatpush2.bf16.msra.mxu0 %v3862
    %3931 = vmatprep.subr.bf16.mxu0 0
    %3932 = vmatpush2.bf16.msra.mxu0 %v3861
    %3933 = vmatprep.mubr.bf16.mxu0 %v3687
    %3934 = vmatmul.mubr.bf16.gmra.mxu0 %v3669
    %v3935 = vpop.f32.mrf.mxu0
    %v3936 = vadd.f32 0.0, %v3935
    %v3937 = vpop.f32.mrf.mxu0
    %v3938 = vpop.f32.mrf.mxu0
    %v3939 = vadd.f32 0.0, %v3938
    %v3940 = vpop.f32.mrf.mxu0
    %3941 = vmatprep.mubr.bf16.mxu0 %v3695
    %3942 = vmatmul.mubr.bf16.gmra.mxu0 %v3670
    %v3943 = vpop.f32.mrf.mxu0
    %v3944 = vadd.f32 0.0, %v3943
    %v3945 = vpop.f32.mrf.mxu0
    %v3946 = vpop.f32.mrf.mxu0
    %v3947 = vadd.f32 0.0, %v3946
    %v3948 = vpop.f32.mrf.mxu0
    %3949 = vdwg.mxu0
    %3950 = vmatprep.subr.bf16.mxu0 0
    %3951 = vmatpush1.bf16.msra.mxu0 %v3876
    %3952 = vmatprep.subr.bf16.mxu0 0
    %3953 = vmatpush1.bf16.msra.mxu0 %v3875
    %3954 = vmatprep.subr.bf16.mxu0 0
    %3955 = vmatpush1.bf16.msra.mxu0 %v3874
    %3956 = vmatprep.subr.bf16.mxu0 0
    %3957 = vmatpush1.bf16.msra.mxu0 %v3873
    %3958 = vmatprep.subr.bf16.mxu0 0
    %3959 = vmatpush1.bf16.msra.mxu0 %v3872
    %3960 = vmatprep.subr.bf16.mxu0 0
    %3961 = vmatpush1.bf16.msra.mxu0 %v3871
    %3962 = vmatprep.subr.bf16.mxu0 0
    %3963 = vmatpush1.bf16.msra.mxu0 %v3870
    %3964 = vmatprep.subr.bf16.mxu0 0
    %3965 = vmatpush1.bf16.msra.mxu0 %v3869
    %3966 = vmatprep.subr.bf16.mxu0 0
    %3967 = vmatpush2.bf16.msra.mxu0 0
    %3968 = vmatprep.subr.bf16.mxu0 0
    %3969 = vmatpush2.bf16.msra.mxu0 0
    %3970 = vmatprep.subr.bf16.mxu0 0
    %3971 = vmatpush2.bf16.msra.mxu0 0
    %3972 = vmatprep.subr.bf16.mxu0 0
    %3973 = vmatpush2.bf16.msra.mxu0 0
    %3974 = vmatprep.subr.bf16.mxu0 0
    %3975 = vmatpush2.bf16.msra.mxu0 0
    %3976 = vmatprep.subr.bf16.mxu0 0
    %3977 = vmatpush2.bf16.msra.mxu0 0
    %3978 = vmatprep.subr.bf16.mxu0 0
    %3979 = vmatpush2.bf16.msra.mxu0 0
    %3980 = vmatprep.subr.bf16.mxu0 0
    %3981 = vmatpush2.bf16.msra.mxu0 0
    %3982 = vmatprep.mubr.bf16.mxu0 0
    %3983 = vmatmul.mubr.bf16.gmra.mxu0 %v3703
    %v3984 = vpop.f32.mrf.mxu0
    %v3985 = vadd.f32 %v3936, %v3984
    %v3986 = vpop.f32.mrf.mxu0
    %v3987 = vpop.f32.mrf.mxu0
    %v3988 = vadd.f32 %v3939, %v3987
    %v3989 = vpop.f32.mrf.mxu0
    %3990 = vmatprep.mubr.bf16.mxu0 0
    %3991 = vmatmul.mubr.bf16.gmra.mxu0 %v3705
    %v3992 = vpop.f32.mrf.mxu0
    %v3993 = vadd.f32 %v3944, %v3992
    %v3994 = vpop.f32.mrf.mxu0
    %v3995 = vpop.f32.mrf.mxu0
    %v3996 = vadd.f32 %v3947, %v3995
    %v3997 = vpop.f32.mrf.mxu0
    %3998 = vdwg.mxu0
    %s3999 = scalar_lea.vmem [#allocation12], 5
    %v4000 = vld [vmem:[%s3999] sm:$0x1]
    %v4002 = vlaneseq
    %v4003 = vshrl.u32 %v4002, 7
    %v4004 = vsub.s32 0, %v4003
    %v4005 = vrot.slane %v4000, %v4004
    %v4007 = vmul.f32 %v3985, %v4005
    %v4008 = vmul.f32 %v3988, %v4005
    %v4009 = vmul.f32 %v3993, %v4005
    %v4010 = vmul.f32 %v3996, %v4005
    %s4011 = scalar_lea.vmem %s5, 5
    %v4012 = vld [vmem:[%s4011] sm:$0x1]
    %v4014 = vlaneseq
    %v4015 = vshrl.u32 %v4014, 7
    %v4016 = vsub.s32 0, %v4015
    %v4017 = vrot.slane %v4012, %v4016
    %v4019 = vadd.f32 %v4007, %v4017
    %v4020 = vadd.f32 %v4008, %v4017
    %v4021 = vadd.f32 %v4009, %v4017
    %v4022 = vadd.f32 %v4010, %v4017
    %v4023 = vmax.f32 %v4019, 0.0
    %v4024 = vmax.f32 %v4020, 0.0
    %v4025 = vmax.f32 %v4021, 0.0
    %v4026 = vmax.f32 %v4022, 0.0
    %v4027 = vsel %vm2071, %v4023, 0.0
    %v4028 = vsel %vm2072, %v4024, 0.0
    %v4029 = vsel %vm2071, %v4025, 0.0
    %v4030 = vsel %vm2072, %v4026, 0.0
    %s4031 = scalar_lea.vmem [#allocation13], 1
    %v4032 = vld [vmem:[%s4031] sm:$0x1]
    %v4034 = vlaneseq
    %v4035 = vshrl.u32 %v4034, 7
    %v4036 = vsub.s32 0, %v4035
    %v4037 = vrot.slane %v4032, %v4036
    %v4039 = vmul.f32 %v4027, %v4037
    %v4040 = vmul.f32 %v4028, %v4037
    %v4041 = vmul.f32 %v4029, %v4037
    %v4042 = vmul.f32 %v4030, %v4037
    %s4043 = scalar_lea.vmem %s7, 1
    %v4044 = vld [vmem:[%s4043] sm:$0x1]
    %v4046 = vlaneseq
    %v4047 = vshrl.u32 %v4046, 7
    %v4048 = vsub.s32 0, %v4047
    %v4049 = vrot.slane %v4044, %v4048
    %v4051 = vadd.f32 %v4039, %v4049
    %v4052 = vadd.f32 %v4040, %v4049
    %v4053 = vadd.f32 %v4041, %v4049
    %v4054 = vadd.f32 %v4042, %v4049
    %v4055 = vadd.f32 %v4027, %v4051
    %v4056 = vadd.f32 %v4028, %v4052
    %v4057 = vadd.f32 %v4029, %v4053
    %v4058 = vadd.f32 %v4030, %v4054
    %v4059 = vmax.f32 %v4055, 0.0
    %v4060 = vmax.f32 %v4056, 0.0
    %v4061 = vmax.f32 %v4057, 0.0
    %v4062 = vmax.f32 %v4058, 0.0
    %4063 = vst [vmem:[#allocation3] sm:$0xff] %v4059
    %4064 = vst [vmem:[#allocation3 + $0x8] sm:$0xff] %v4060
    %4065 = vst [vmem:[#allocation3 + $0x10] sm:$0xff] %v4061
    %4066 = vst [vmem:[#allocation3 + $0x18] sm:$0xff] %v4062
    %v4067 = vpack.c.bf16 %v4060, %v4059
    %v4068 = vpack.c.bf16 %v4062, %v4061
    %v4071 = vunpack.c.l.b16 %v4067
    %v4072 = vunpack.c.h.b16 %v4067
    %v4073 = vunpack.c.l.b16 %v4068
    %v4074 = vunpack.c.h.b16 %v4068
    %v4075 = vpack.c.b16 %v4071, %v4071
    %v4076 = vpack.c.b16 %v4072, %v4072
    %v4077 = vpack.c.b16 %v4073, %v4073
    %v4078 = vpack.c.b16 %v4074, %v4074
    %4083 = vst [vmem:[#allocation2] sm:$0xf] %v4075
    %4084 = vst [vmem:[#allocation2 + $0x4] sm:$0xf] %v4076
    %4085 = vst [vmem:[#allocation2 + $0x8] sm:$0xf] %v4077
    %4086 = vst [vmem:[#allocation2 + $0xc] sm:$0xf] %v4078
    %v4087 = vld [vmem:[#allocation2] sm:$0xf]
    %v4088 = vld [vmem:[#allocation2 + $0x4] sm:$0xf]
    %v4089 = vld [vmem:[#allocation2 + $0x8] sm:$0xf]
    %v4090 = vld [vmem:[#allocation2 + $0xc] sm:$0xf]
    %v4091 = vld [vmem:[#allocation2 + $0x10] sm:$0x1]
    %v4092 = vld [vmem:[#allocation2] sm:$0xe]
    %v4093 = vld [vmem:[#allocation2 + $0x10] sm:$0x3]
    %v4094 = vld [vmem:[#allocation2] sm:$0xc]
    %v4095 = vld [vmem:[#allocation2 + $0x10] sm:$0x7]
    %v4096 = vld [vmem:[#allocation2] sm:$0x8]
    %v4097 = vld [vmem:[#allocation2 + $0x10] sm:$0xf]
    %v4102 = vunpack.c.l.b16 %v4087
    %v4103 = vunpack.c.l.b16 %v4088
    %v4104 = vunpack.c.l.b16 %v4089
    %v4105 = vunpack.c.l.b16 %v4090
    %v4106 = vpack.c.b16 %v4103, %v4102
    %v4107 = vpack.c.b16 %v4105, %v4104
    %v4111 = vunpack.c.l.b16 %v4091
    %v4112 = vpack.c.b16 %v4111, %v4111
    %v4114 = vshrl.u32 %v4106, 16
    %v4116 = vshll.u32 %v4106, 16
    %v4118 = vrot.slane %v4116, 1
    %v4119 = vor.u32 %v4114, %v4118
    %v4121 = vshll.u32 %v4107, 16
    %v4123 = vrot.slane %v4121, 1
    %v4124 = vsel %vm191, %v4119, %v4123
    %v4125 = vshrl.u32 %v4107, 16
    %v4127 = vor.u32 %v4125, %v4123
    %v4129 = vshll.u32 %v4112, 16
    %v4131 = vrot.slane %v4129, 1
    %v4132 = vsel %vm191, %v4127, %v4131
    %v4136 = vunpack.c.l.b16 %v4092
    %v4137 = vpack.c.b16 %v4103, %v4136
    %v4138 = vrot.slane %v4137, 1
    %v4139 = vrot.slane %v4107, 1
    %v4140 = vsel %vm217, %v4138, %v4139
    %v4141 = vrot.slane %v4112, 1
    %v4142 = vsel %vm217, %v4139, %v4141
    %v4146 = vunpack.c.l.b16 %v4093
    %v4147 = vpack.c.b16 %v4146, %v4146
    %v4149 = vshrl.u32 %v4137, 16
    %v4151 = vrot.slane %v4149, 1
    %v4152 = vshll.u32 %v4137, 16
    %v4154 = vrot.slane %v4152, 2
    %v4155 = vor.u32 %v4151, %v4154
    %v4156 = vrot.slane %v4125, 1
    %v4157 = vrot.slane %v4121, 2
    %v4158 = vor.u32 %v4156, %v4157
    %v4159 = vsel %vm228, %v4155, %v4158
    %v4161 = vshrl.u32 %v4147, 16
    %v4163 = vrot.slane %v4161, 1
    %v4164 = vshll.u32 %v4147, 16
    %v4166 = vrot.slane %v4164, 2
    %v4167 = vor.u32 %v4163, %v4166
    %v4168 = vsel %vm228, %v4158, %v4167
    %v4172 = vunpack.c.l.b16 %v4094
    %v4173 = vpack.c.b16 %v4103, %v4172
    %v4174 = vrot.slane %v4173, 2
    %v4175 = vrot.slane %v4107, 2
    %v4176 = vsel %vm255, %v4174, %v4175
    %v4177 = vrot.slane %v4147, 2
    %v4178 = vsel %vm255, %v4175, %v4177
    %v4182 = vunpack.c.l.b16 %v4095
    %v4183 = vpack.c.b16 %v4182, %v4182
    %v4185 = vshrl.u32 %v4173, 16
    %v4187 = vrot.slane %v4185, 2
    %v4188 = vshll.u32 %v4173, 16
    %v4190 = vrot.slane %v4188, 3
    %v4191 = vor.u32 %v4187, %v4190
    %v4192 = vrot.slane %v4125, 2
    %v4193 = vrot.slane %v4121, 3
    %v4194 = vor.u32 %v4192, %v4193
    %v4195 = vsel %vm266, %v4191, %v4194
    %v4197 = vshrl.u32 %v4183, 16
    %v4199 = vrot.slane %v4197, 2
    %v4200 = vshll.u32 %v4183, 16
    %v4202 = vrot.slane %v4200, 3
    %v4203 = vor.u32 %v4199, %v4202
    %v4204 = vsel %vm266, %v4194, %v4203
    %v4208 = vunpack.c.l.b16 %v4096
    %v4209 = vpack.c.b16 %v4103, %v4208
    %v4210 = vrot.slane %v4209, 3
    %v4211 = vrot.slane %v4107, 3
    %v4212 = vsel %vm293, %v4210, %v4211
    %v4213 = vrot.slane %v4183, 3
    %v4214 = vsel %vm293, %v4211, %v4213
    %v4218 = vunpack.c.l.b16 %v4097
    %v4219 = vpack.c.b16 %v4218, %v4218
    %v4221 = vshrl.u32 %v4209, 16
    %v4223 = vrot.slane %v4221, 3
    %v4224 = vshll.u32 %v4209, 16
    %v4226 = vrot.slane %v4224, 4
    %v4227 = vor.u32 %v4223, %v4226
    %v4228 = vrot.slane %v4125, 3
    %v4229 = vrot.slane %v4121, 4
    %v4230 = vor.u32 %v4228, %v4229
    %v4231 = vsel %vm304, %v4227, %v4230
    %v4233 = vshrl.u32 %v4219, 16
    %v4235 = vrot.slane %v4233, 3
    %v4236 = vshll.u32 %v4219, 16
    %v4238 = vrot.slane %v4236, 4
    %v4239 = vor.u32 %v4235, %v4238
    %v4240 = vsel %vm304, %v4230, %v4239
    %s4243 = scalar_lea.vmem [#allocation7], 1024
    %v4244 = vld [vmem:[%s4243] sm:$0xf]
    %v4245 = vld [vmem:[%s4243 + $0x4] sm:$0xf]
    %v4246 = vld [vmem:[%s4243 + $0x8] sm:$0xf]
    %v4247 = vld [vmem:[%s4243 + $0xc] sm:$0xf]
    %v4248 = vld [vmem:[%s4243 + $0x10] sm:$0xf]
    %v4249 = vld [vmem:[%s4243 + $0x14] sm:$0xf]
    %v4250 = vld [vmem:[%s4243 + $0x18] sm:$0xf]
    %v4251 = vld [vmem:[%s4243 + $0x1c] sm:$0xf]
    %v4252 = vld [vmem:[%s4243 + $0x20] sm:$0xf]
    %v4253 = vld [vmem:[%s4243 + $0x24] sm:$0xf]
    %v4254 = vld [vmem:[%s4243 + $0x28] sm:$0xf]
    %v4255 = vld [vmem:[%s4243 + $0x2c] sm:$0xf]
    %v4256 = vld [vmem:[%s4243 + $0x30] sm:$0xf]
    %v4257 = vld [vmem:[%s4243 + $0x34] sm:$0xf]
    %v4258 = vld [vmem:[%s4243 + $0x38] sm:$0xf]
    %v4259 = vld [vmem:[%s4243 + $0x3c] sm:$0xf]
    %v4260 = vld [vmem:[%s4243 + $0x40] sm:$0xf]
    %v4261 = vld [vmem:[%s4243 + $0x44] sm:$0xf]
    %v4262 = vld [vmem:[%s4243 + $0x48] sm:$0xf]
    %v4263 = vld [vmem:[%s4243 + $0x4c] sm:$0xf]
    %v4264 = vld [vmem:[%s4243 + $0x50] sm:$0xf]
    %v4265 = vld [vmem:[%s4243 + $0x54] sm:$0xf]
    %v4266 = vld [vmem:[%s4243 + $0x58] sm:$0xf]
    %v4267 = vld [vmem:[%s4243 + $0x5c] sm:$0xf]
    %v4268 = vld [vmem:[%s4243 + $0x60] sm:$0xf]
    %v4269 = vld [vmem:[%s4243 + $0x64] sm:$0xf]
    %v4270 = vld [vmem:[%s4243 + $0x68] sm:$0xf]
    %v4271 = vld [vmem:[%s4243 + $0x6c] sm:$0xf]
    %v4272 = vld [vmem:[%s4243 + $0x70] sm:$0xf]
    %v4273 = vld [vmem:[%s4243 + $0x74] sm:$0xf]
    %v4274 = vld [vmem:[%s4243 + $0x78] sm:$0xf]
    %v4275 = vld [vmem:[%s4243 + $0x7c] sm:$0xf]
    %v4276 = vld [vmem:[%s4243 + $0x80] sm:$0xf]
    %v4277 = vld [vmem:[%s4243 + $0x84] sm:$0xf]
    %v4278 = vld [vmem:[%s4243 + $0x88] sm:$0xf]
    %v4279 = vld [vmem:[%s4243 + $0x8c] sm:$0xf]
    %v4280 = vld [vmem:[%s4243 + $0x90] sm:$0xf]
    %v4281 = vld [vmem:[%s4243 + $0x94] sm:$0xf]
    %v4282 = vld [vmem:[%s4243 + $0x98] sm:$0xf]
    %v4283 = vld [vmem:[%s4243 + $0x9c] sm:$0xf]
    %v4284 = vld [vmem:[%s4243 + $0xa0] sm:$0xf]
    %v4285 = vld [vmem:[%s4243 + $0xa4] sm:$0xf]
    %v4286 = vld [vmem:[%s4243 + $0xa8] sm:$0xf]
    %v4287 = vld [vmem:[%s4243 + $0xac] sm:$0xf]
    %v4288 = vld [vmem:[%s4243 + $0xb0] sm:$0xf]
    %v4289 = vld [vmem:[%s4243 + $0xb4] sm:$0xf]
    %v4290 = vld [vmem:[%s4243 + $0xb8] sm:$0xf]
    %v4291 = vld [vmem:[%s4243 + $0xbc] sm:$0xf]
    %v4292 = vld [vmem:[%s4243 + $0xc0] sm:$0xf]
    %v4293 = vld [vmem:[%s4243 + $0xc4] sm:$0xf]
    %v4294 = vld [vmem:[%s4243 + $0xc8] sm:$0xf]
    %v4295 = vld [vmem:[%s4243 + $0xcc] sm:$0xf]
    %v4296 = vld [vmem:[%s4243 + $0xd0] sm:$0xf]
    %v4297 = vld [vmem:[%s4243 + $0xd4] sm:$0xf]
    %v4298 = vld [vmem:[%s4243 + $0xd8] sm:$0xf]
    %v4299 = vld [vmem:[%s4243 + $0xdc] sm:$0xf]
    %v4300 = vld [vmem:[%s4243 + $0xe0] sm:$0xf]
    %v4301 = vld [vmem:[%s4243 + $0xe4] sm:$0xf]
    %v4302 = vld [vmem:[%s4243 + $0xe8] sm:$0xf]
    %v4303 = vld [vmem:[%s4243 + $0xec] sm:$0xf]
    %v4304 = vld [vmem:[%s4243 + $0xf0] sm:$0xf]
    %v4305 = vld [vmem:[%s4243 + $0xf4] sm:$0xf]
    %v4306 = vld [vmem:[%s4243 + $0xf8] sm:$0xf]
    %v4307 = vld [vmem:[%s4243 + $0xfc] sm:$0xf]
    %v4308 = vld [vmem:[%s4243 + $0x100] sm:$0xf]
    %v4309 = vld [vmem:[%s4243 + $0x104] sm:$0xf]
    %v4310 = vld [vmem:[%s4243 + $0x108] sm:$0xf]
    %v4311 = vld [vmem:[%s4243 + $0x10c] sm:$0xf]
    %v4312 = vld [vmem:[%s4243 + $0x110] sm:$0xf]
    %v4313 = vld [vmem:[%s4243 + $0x114] sm:$0xf]
    %v4314 = vld [vmem:[%s4243 + $0x118] sm:$0xf]
    %v4315 = vld [vmem:[%s4243 + $0x11c] sm:$0xf]
    %v4316 = vld [vmem:[%s4243 + $0x120] sm:$0xf]
    %v4317 = vld [vmem:[%s4243 + $0x124] sm:$0xf]
    %v4318 = vld [vmem:[%s4243 + $0x128] sm:$0xf]
    %v4319 = vld [vmem:[%s4243 + $0x12c] sm:$0xf]
    %v4320 = vld [vmem:[%s4243 + $0x130] sm:$0xf]
    %v4321 = vld [vmem:[%s4243 + $0x134] sm:$0xf]
    %v4322 = vld [vmem:[%s4243 + $0x138] sm:$0xf]
    %v4323 = vld [vmem:[%s4243 + $0x13c] sm:$0xf]
    %v4324 = vld [vmem:[%s4243 + $0x140] sm:$0xf]
    %v4325 = vld [vmem:[%s4243 + $0x144] sm:$0xf]
    %v4326 = vld [vmem:[%s4243 + $0x148] sm:$0xf]
    %v4327 = vld [vmem:[%s4243 + $0x14c] sm:$0xf]
    %v4328 = vld [vmem:[%s4243 + $0x150] sm:$0xf]
    %v4329 = vld [vmem:[%s4243 + $0x154] sm:$0xf]
    %v4330 = vld [vmem:[%s4243 + $0x158] sm:$0xf]
    %v4331 = vld [vmem:[%s4243 + $0x15c] sm:$0xf]
    %v4332 = vld [vmem:[%s4243 + $0x160] sm:$0xf]
    %v4333 = vld [vmem:[%s4243 + $0x164] sm:$0xf]
    %v4334 = vld [vmem:[%s4243 + $0x168] sm:$0xf]
    %v4335 = vld [vmem:[%s4243 + $0x16c] sm:$0xf]
    %v4336 = vld [vmem:[%s4243 + $0x170] sm:$0xf]
    %v4337 = vld [vmem:[%s4243 + $0x174] sm:$0xf]
    %v4338 = vld [vmem:[%s4243 + $0x178] sm:$0xf]
    %v4339 = vld [vmem:[%s4243 + $0x17c] sm:$0xf]
    %v4340 = vld [vmem:[%s4243 + $0x180] sm:$0xf]
    %v4341 = vld [vmem:[%s4243 + $0x184] sm:$0xf]
    %v4342 = vld [vmem:[%s4243 + $0x188] sm:$0xf]
    %v4343 = vld [vmem:[%s4243 + $0x18c] sm:$0xf]
    %v4344 = vld [vmem:[%s4243 + $0x190] sm:$0xf]
    %v4345 = vld [vmem:[%s4243 + $0x194] sm:$0xf]
    %v4346 = vld [vmem:[%s4243 + $0x198] sm:$0xf]
    %v4347 = vld [vmem:[%s4243 + $0x19c] sm:$0xf]
    %v4348 = vld [vmem:[%s4243 + $0x1a0] sm:$0xf]
    %v4349 = vld [vmem:[%s4243 + $0x1a4] sm:$0xf]
    %v4350 = vld [vmem:[%s4243 + $0x1a8] sm:$0xf]
    %v4351 = vld [vmem:[%s4243 + $0x1ac] sm:$0xf]
    %v4352 = vld [vmem:[%s4243 + $0x1b0] sm:$0xf]
    %v4353 = vld [vmem:[%s4243 + $0x1b4] sm:$0xf]
    %v4354 = vld [vmem:[%s4243 + $0x1b8] sm:$0xf]
    %v4355 = vld [vmem:[%s4243 + $0x1bc] sm:$0xf]
    %v4356 = vld [vmem:[%s4243 + $0x1c0] sm:$0xf]
    %v4357 = vld [vmem:[%s4243 + $0x1c4] sm:$0xf]
    %v4358 = vld [vmem:[%s4243 + $0x1c8] sm:$0xf]
    %v4359 = vld [vmem:[%s4243 + $0x1cc] sm:$0xf]
    %v4360 = vld [vmem:[%s4243 + $0x1d0] sm:$0xf]
    %v4361 = vld [vmem:[%s4243 + $0x1d4] sm:$0xf]
    %v4362 = vld [vmem:[%s4243 + $0x1d8] sm:$0xf]
    %v4363 = vld [vmem:[%s4243 + $0x1dc] sm:$0xf]
    %v4364 = vld [vmem:[%s4243 + $0x1e0] sm:$0xf]
    %v4365 = vld [vmem:[%s4243 + $0x1e4] sm:$0xf]
    %v4366 = vld [vmem:[%s4243 + $0x1e8] sm:$0xf]
    %v4367 = vld [vmem:[%s4243 + $0x1ec] sm:$0xf]
    %v4368 = vld [vmem:[%s4243 + $0x1f0] sm:$0xf]
    %v4369 = vld [vmem:[%s4243 + $0x1f4] sm:$0xf]
    %v4370 = vld [vmem:[%s4243 + $0x1f8] sm:$0xf]
    %v4371 = vld [vmem:[%s4243 + $0x1fc] sm:$0xf]
    %v4500 = vunpack.c.l.b16 %v4244
    %v4501 = vunpack.c.l.b16 %v4245
    %v4502 = vunpack.c.l.b16 %v4246
    %v4503 = vunpack.c.l.b16 %v4247
    %v4504 = vunpack.c.l.b16 %v4248
    %v4505 = vunpack.c.l.b16 %v4249
    %v4506 = vunpack.c.l.b16 %v4250
    %v4507 = vunpack.c.l.b16 %v4251
    %v4508 = vunpack.c.l.b16 %v4252
    %v4509 = vunpack.c.l.b16 %v4253
    %v4510 = vunpack.c.l.b16 %v4254
    %v4511 = vunpack.c.l.b16 %v4255
    %v4512 = vunpack.c.l.b16 %v4256
    %v4513 = vunpack.c.l.b16 %v4257
    %v4514 = vunpack.c.l.b16 %v4258
    %v4515 = vunpack.c.l.b16 %v4259
    %v4516 = vunpack.c.l.b16 %v4260
    %v4517 = vunpack.c.l.b16 %v4261
    %v4518 = vunpack.c.l.b16 %v4262
    %v4519 = vunpack.c.l.b16 %v4263
    %v4520 = vunpack.c.l.b16 %v4264
    %v4521 = vunpack.c.l.b16 %v4265
    %v4522 = vunpack.c.l.b16 %v4266
    %v4523 = vunpack.c.l.b16 %v4267
    %v4524 = vunpack.c.l.b16 %v4268
    %v4525 = vunpack.c.l.b16 %v4269
    %v4526 = vunpack.c.l.b16 %v4270
    %v4527 = vunpack.c.l.b16 %v4271
    %v4528 = vunpack.c.l.b16 %v4272
    %v4529 = vunpack.c.l.b16 %v4273
    %v4530 = vunpack.c.l.b16 %v4274
    %v4531 = vunpack.c.l.b16 %v4275
    %v4532 = vunpack.c.l.b16 %v4276
    %v4533 = vunpack.c.l.b16 %v4277
    %v4534 = vunpack.c.l.b16 %v4278
    %v4535 = vunpack.c.l.b16 %v4279
    %v4536 = vunpack.c.l.b16 %v4280
    %v4537 = vunpack.c.l.b16 %v4281
    %v4538 = vunpack.c.l.b16 %v4282
    %v4539 = vunpack.c.l.b16 %v4283
    %v4540 = vunpack.c.l.b16 %v4284
    %v4541 = vunpack.c.l.b16 %v4285
    %v4542 = vunpack.c.l.b16 %v4286
    %v4543 = vunpack.c.l.b16 %v4287
    %v4544 = vunpack.c.l.b16 %v4288
    %v4545 = vunpack.c.l.b16 %v4289
    %v4546 = vunpack.c.l.b16 %v4290
    %v4547 = vunpack.c.l.b16 %v4291
    %v4548 = vunpack.c.l.b16 %v4292
    %v4549 = vunpack.c.l.b16 %v4293
    %v4550 = vunpack.c.l.b16 %v4294
    %v4551 = vunpack.c.l.b16 %v4295
    %v4552 = vunpack.c.l.b16 %v4296
    %v4553 = vunpack.c.l.b16 %v4297
    %v4554 = vunpack.c.l.b16 %v4298
    %v4555 = vunpack.c.l.b16 %v4299
    %v4556 = vunpack.c.l.b16 %v4300
    %v4557 = vunpack.c.l.b16 %v4301
    %v4558 = vunpack.c.l.b16 %v4302
    %v4559 = vunpack.c.l.b16 %v4303
    %v4560 = vunpack.c.l.b16 %v4304
    %v4561 = vunpack.c.l.b16 %v4305
    %v4562 = vunpack.c.l.b16 %v4306
    %v4563 = vunpack.c.l.b16 %v4307
    %v4564 = vunpack.c.l.b16 %v4308
    %v4565 = vunpack.c.l.b16 %v4309
    %v4566 = vunpack.c.l.b16 %v4310
    %v4567 = vunpack.c.l.b16 %v4311
    %v4568 = vunpack.c.l.b16 %v4312
    %v4569 = vunpack.c.l.b16 %v4313
    %v4570 = vunpack.c.l.b16 %v4314
    %v4571 = vunpack.c.l.b16 %v4315
    %v4572 = vunpack.c.l.b16 %v4316
    %v4573 = vunpack.c.l.b16 %v4317
    %v4574 = vunpack.c.l.b16 %v4318
    %v4575 = vunpack.c.l.b16 %v4319
    %v4576 = vunpack.c.l.b16 %v4320
    %v4577 = vunpack.c.l.b16 %v4321
    %v4578 = vunpack.c.l.b16 %v4322
    %v4579 = vunpack.c.l.b16 %v4323
    %v4580 = vunpack.c.l.b16 %v4324
    %v4581 = vunpack.c.l.b16 %v4325
    %v4582 = vunpack.c.l.b16 %v4326
    %v4583 = vunpack.c.l.b16 %v4327
    %v4584 = vunpack.c.l.b16 %v4328
    %v4585 = vunpack.c.l.b16 %v4329
    %v4586 = vunpack.c.l.b16 %v4330
    %v4587 = vunpack.c.l.b16 %v4331
    %v4588 = vunpack.c.l.b16 %v4332
    %v4589 = vunpack.c.l.b16 %v4333
    %v4590 = vunpack.c.l.b16 %v4334
    %v4591 = vunpack.c.l.b16 %v4335
    %v4592 = vunpack.c.l.b16 %v4336
    %v4593 = vunpack.c.l.b16 %v4337
    %v4594 = vunpack.c.l.b16 %v4338
    %v4595 = vunpack.c.l.b16 %v4339
    %v4596 = vunpack.c.l.b16 %v4340
    %v4597 = vunpack.c.l.b16 %v4341
    %v4598 = vunpack.c.l.b16 %v4342
    %v4599 = vunpack.c.l.b16 %v4343
    %v4600 = vunpack.c.l.b16 %v4344
    %v4601 = vunpack.c.l.b16 %v4345
    %v4602 = vunpack.c.l.b16 %v4346
    %v4603 = vunpack.c.l.b16 %v4347
    %v4604 = vunpack.c.l.b16 %v4348
    %v4605 = vunpack.c.l.b16 %v4349
    %v4606 = vunpack.c.l.b16 %v4350
    %v4607 = vunpack.c.l.b16 %v4351
    %v4608 = vunpack.c.l.b16 %v4352
    %v4609 = vunpack.c.l.b16 %v4353
    %v4610 = vunpack.c.l.b16 %v4354
    %v4611 = vunpack.c.l.b16 %v4355
    %v4612 = vunpack.c.l.b16 %v4356
    %v4613 = vunpack.c.l.b16 %v4357
    %v4614 = vunpack.c.l.b16 %v4358
    %v4615 = vunpack.c.l.b16 %v4359
    %v4616 = vunpack.c.l.b16 %v4360
    %v4617 = vunpack.c.l.b16 %v4361
    %v4618 = vunpack.c.l.b16 %v4362
    %v4619 = vunpack.c.l.b16 %v4363
    %v4620 = vunpack.c.l.b16 %v4364
    %v4621 = vunpack.c.l.b16 %v4365
    %v4622 = vunpack.c.l.b16 %v4366
    %v4623 = vunpack.c.l.b16 %v4367
    %v4624 = vunpack.c.l.b16 %v4368
    %v4625 = vunpack.c.l.b16 %v4369
    %v4626 = vunpack.c.l.b16 %v4370
    %v4627 = vunpack.c.l.b16 %v4371
    %v4628 = vpack.c.b16 %v4501, %v4500
    %v4629 = vpack.c.b16 %v4503, %v4502
    %v4630 = vpack.c.b16 %v4505, %v4504
    %v4631 = vpack.c.b16 %v4507, %v4506
    %v4632 = vpack.c.b16 %v4509, %v4508
    %v4633 = vpack.c.b16 %v4511, %v4510
    %v4634 = vpack.c.b16 %v4513, %v4512
    %v4635 = vpack.c.b16 %v4515, %v4514
    %v4636 = vpack.c.b16 %v4517, %v4516
    %v4637 = vpack.c.b16 %v4519, %v4518
    %v4638 = vpack.c.b16 %v4521, %v4520
    %v4639 = vpack.c.b16 %v4523, %v4522
    %v4640 = vpack.c.b16 %v4525, %v4524
    %v4641 = vpack.c.b16 %v4527, %v4526
    %v4642 = vpack.c.b16 %v4529, %v4528
    %v4643 = vpack.c.b16 %v4531, %v4530
    %v4644 = vpack.c.b16 %v4533, %v4532
    %v4645 = vpack.c.b16 %v4535, %v4534
    %v4646 = vpack.c.b16 %v4537, %v4536
    %v4647 = vpack.c.b16 %v4539, %v4538
    %v4648 = vpack.c.b16 %v4541, %v4540
    %v4649 = vpack.c.b16 %v4543, %v4542
    %v4650 = vpack.c.b16 %v4545, %v4544
    %v4651 = vpack.c.b16 %v4547, %v4546
    %v4652 = vpack.c.b16 %v4549, %v4548
    %v4653 = vpack.c.b16 %v4551, %v4550
    %v4654 = vpack.c.b16 %v4553, %v4552
    %v4655 = vpack.c.b16 %v4555, %v4554
    %v4656 = vpack.c.b16 %v4557, %v4556
    %v4657 = vpack.c.b16 %v4559, %v4558
    %v4658 = vpack.c.b16 %v4561, %v4560
    %v4659 = vpack.c.b16 %v4563, %v4562
    %v4660 = vpack.c.b16 %v4565, %v4564
    %v4661 = vpack.c.b16 %v4567, %v4566
    %v4662 = vpack.c.b16 %v4569, %v4568
    %v4663 = vpack.c.b16 %v4571, %v4570
    %v4664 = vpack.c.b16 %v4573, %v4572
    %v4665 = vpack.c.b16 %v4575, %v4574
    %v4666 = vpack.c.b16 %v4577, %v4576
    %v4667 = vpack.c.b16 %v4579, %v4578
    %v4668 = vpack.c.b16 %v4581, %v4580
    %v4669 = vpack.c.b16 %v4583, %v4582
    %v4670 = vpack.c.b16 %v4585, %v4584
    %v4671 = vpack.c.b16 %v4587, %v4586
    %v4672 = vpack.c.b16 %v4589, %v4588
    %v4673 = vpack.c.b16 %v4591, %v4590
    %v4674 = vpack.c.b16 %v4593, %v4592
    %v4675 = vpack.c.b16 %v4595, %v4594
    %v4676 = vpack.c.b16 %v4597, %v4596
    %v4677 = vpack.c.b16 %v4599, %v4598
    %v4678 = vpack.c.b16 %v4601, %v4600
    %v4679 = vpack.c.b16 %v4603, %v4602
    %v4680 = vpack.c.b16 %v4605, %v4604
    %v4681 = vpack.c.b16 %v4607, %v4606
    %v4682 = vpack.c.b16 %v4609, %v4608
    %v4683 = vpack.c.b16 %v4611, %v4610
    %v4684 = vpack.c.b16 %v4613, %v4612
    %v4685 = vpack.c.b16 %v4615, %v4614
    %v4686 = vpack.c.b16 %v4617, %v4616
    %v4687 = vpack.c.b16 %v4619, %v4618
    %v4688 = vpack.c.b16 %v4621, %v4620
    %v4689 = vpack.c.b16 %v4623, %v4622
    %v4690 = vpack.c.b16 %v4625, %v4624
    %v4691 = vpack.c.b16 %v4627, %v4626
    %4756 = vmatprep.subr.bf16.mxu0 0
    %4757 = vmatpush1.bf16.msra.mxu0 %v4635
    %4758 = vmatprep.subr.bf16.mxu0 0
    %4759 = vmatpush1.bf16.msra.mxu0 %v4634
    %4760 = vmatprep.subr.bf16.mxu0 0
    %4761 = vmatpush1.bf16.msra.mxu0 %v4633
    %4762 = vmatprep.subr.bf16.mxu0 0
    %4763 = vmatpush1.bf16.msra.mxu0 %v4632
    %4764 = vmatprep.subr.bf16.mxu0 0
    %4765 = vmatpush1.bf16.msra.mxu0 %v4631
    %4766 = vmatprep.subr.bf16.mxu0 0
    %4767 = vmatpush1.bf16.msra.mxu0 %v4630
    %4768 = vmatprep.subr.bf16.mxu0 0
    %4769 = vmatpush1.bf16.msra.mxu0 %v4629
    %4770 = vmatprep.subr.bf16.mxu0 0
    %4771 = vmatpush1.bf16.msra.mxu0 %v4628
    %4772 = vmatprep.subr.bf16.mxu0 0
    %4773 = vmatpush2.bf16.msra.mxu0 %v4643
    %4774 = vmatprep.subr.bf16.mxu0 0
    %4775 = vmatpush2.bf16.msra.mxu0 %v4642
    %4776 = vmatprep.subr.bf16.mxu0 0
    %4777 = vmatpush2.bf16.msra.mxu0 %v4641
    %4778 = vmatprep.subr.bf16.mxu0 0
    %4779 = vmatpush2.bf16.msra.mxu0 %v4640
    %4780 = vmatprep.subr.bf16.mxu0 0
    %4781 = vmatpush2.bf16.msra.mxu0 %v4639
    %4782 = vmatprep.subr.bf16.mxu0 0
    %4783 = vmatpush2.bf16.msra.mxu0 %v4638
    %4784 = vmatprep.subr.bf16.mxu0 0
    %4785 = vmatpush2.bf16.msra.mxu0 %v4637
    %4786 = vmatprep.subr.bf16.mxu0 0
    %4787 = vmatpush2.bf16.msra.mxu0 %v4636
    %4788 = vmatprep.mubr.bf16.mxu0 %v4124
    %4789 = vmatmul.mubr.bf16.gmra.mxu0 %v4106
    %v4790 = vpop.f32.mrf.mxu0
    %v4791 = vadd.f32 0.0, %v4790
    %v4792 = vpop.f32.mrf.mxu0
    %v4793 = vpop.f32.mrf.mxu0
    %v4794 = vadd.f32 0.0, %v4793
    %v4795 = vpop.f32.mrf.mxu0
    %4796 = vmatprep.mubr.bf16.mxu0 %v4132
    %4797 = vmatmul.mubr.bf16.gmra.mxu0 %v4107
    %v4798 = vpop.f32.mrf.mxu0
    %v4799 = vadd.f32 0.0, %v4798
    %v4800 = vpop.f32.mrf.mxu0
    %v4801 = vpop.f32.mrf.mxu0
    %v4802 = vadd.f32 0.0, %v4801
    %v4803 = vpop.f32.mrf.mxu0
    %4804 = vdwg.mxu0
    %4805 = vmatprep.subr.bf16.mxu0 0
    %4806 = vmatpush1.bf16.msra.mxu0 %v4651
    %4807 = vmatprep.subr.bf16.mxu0 0
    %4808 = vmatpush1.bf16.msra.mxu0 %v4650
    %4809 = vmatprep.subr.bf16.mxu0 0
    %4810 = vmatpush1.bf16.msra.mxu0 %v4649
    %4811 = vmatprep.subr.bf16.mxu0 0
    %4812 = vmatpush1.bf16.msra.mxu0 %v4648
    %4813 = vmatprep.subr.bf16.mxu0 0
    %4814 = vmatpush1.bf16.msra.mxu0 %v4647
    %4815 = vmatprep.subr.bf16.mxu0 0
    %4816 = vmatpush1.bf16.msra.mxu0 %v4646
    %4817 = vmatprep.subr.bf16.mxu0 0
    %4818 = vmatpush1.bf16.msra.mxu0 %v4645
    %4819 = vmatprep.subr.bf16.mxu0 0
    %4820 = vmatpush1.bf16.msra.mxu0 %v4644
    %4821 = vmatprep.subr.bf16.mxu0 0
    %4822 = vmatpush2.bf16.msra.mxu0 %v4659
    %4823 = vmatprep.subr.bf16.mxu0 0
    %4824 = vmatpush2.bf16.msra.mxu0 %v4658
    %4825 = vmatprep.subr.bf16.mxu0 0
    %4826 = vmatpush2.bf16.msra.mxu0 %v4657
    %4827 = vmatprep.subr.bf16.mxu0 0
    %4828 = vmatpush2.bf16.msra.mxu0 %v4656
    %4829 = vmatprep.subr.bf16.mxu0 0
    %4830 = vmatpush2.bf16.msra.mxu0 %v4655
    %4831 = vmatprep.subr.bf16.mxu0 0
    %4832 = vmatpush2.bf16.msra.mxu0 %v4654
    %4833 = vmatprep.subr.bf16.mxu0 0
    %4834 = vmatpush2.bf16.msra.mxu0 %v4653
    %4835 = vmatprep.subr.bf16.mxu0 0
    %4836 = vmatpush2.bf16.msra.mxu0 %v4652
    %4837 = vmatprep.mubr.bf16.mxu0 %v4159
    %4838 = vmatmul.mubr.bf16.gmra.mxu0 %v4140
    %v4839 = vpop.f32.mrf.mxu0
    %v4840 = vadd.f32 %v4791, %v4839
    %v4841 = vpop.f32.mrf.mxu0
    %v4842 = vpop.f32.mrf.mxu0
    %v4843 = vadd.f32 %v4794, %v4842
    %v4844 = vpop.f32.mrf.mxu0
    %4845 = vmatprep.mubr.bf16.mxu0 %v4168
    %4846 = vmatmul.mubr.bf16.gmra.mxu0 %v4142
    %v4847 = vpop.f32.mrf.mxu0
    %v4848 = vadd.f32 %v4799, %v4847
    %v4849 = vpop.f32.mrf.mxu0
    %v4850 = vpop.f32.mrf.mxu0
    %v4851 = vadd.f32 %v4802, %v4850
    %v4852 = vpop.f32.mrf.mxu0
    %4853 = vdwg.mxu0
    %4854 = vmatprep.subr.bf16.mxu0 0
    %4855 = vmatpush1.bf16.msra.mxu0 %v4667
    %4856 = vmatprep.subr.bf16.mxu0 0
    %4857 = vmatpush1.bf16.msra.mxu0 %v4666
    %4858 = vmatprep.subr.bf16.mxu0 0
    %4859 = vmatpush1.bf16.msra.mxu0 %v4665
    %4860 = vmatprep.subr.bf16.mxu0 0
    %4861 = vmatpush1.bf16.msra.mxu0 %v4664
    %4862 = vmatprep.subr.bf16.mxu0 0
    %4863 = vmatpush1.bf16.msra.mxu0 %v4663
    %4864 = vmatprep.subr.bf16.mxu0 0
    %4865 = vmatpush1.bf16.msra.mxu0 %v4662
    %4866 = vmatprep.subr.bf16.mxu0 0
    %4867 = vmatpush1.bf16.msra.mxu0 %v4661
    %4868 = vmatprep.subr.bf16.mxu0 0
    %4869 = vmatpush1.bf16.msra.mxu0 %v4660
    %4870 = vmatprep.subr.bf16.mxu0 0
    %4871 = vmatpush2.bf16.msra.mxu0 %v4675
    %4872 = vmatprep.subr.bf16.mxu0 0
    %4873 = vmatpush2.bf16.msra.mxu0 %v4674
    %4874 = vmatprep.subr.bf16.mxu0 0
    %4875 = vmatpush2.bf16.msra.mxu0 %v4673
    %4876 = vmatprep.subr.bf16.mxu0 0
    %4877 = vmatpush2.bf16.msra.mxu0 %v4672
    %4878 = vmatprep.subr.bf16.mxu0 0
    %4879 = vmatpush2.bf16.msra.mxu0 %v4671
    %4880 = vmatprep.subr.bf16.mxu0 0
    %4881 = vmatpush2.bf16.msra.mxu0 %v4670
    %4882 = vmatprep.subr.bf16.mxu0 0
    %4883 = vmatpush2.bf16.msra.mxu0 %v4669
    %4884 = vmatprep.subr.bf16.mxu0 0
    %4885 = vmatpush2.bf16.msra.mxu0 %v4668
    %4886 = vmatprep.mubr.bf16.mxu0 %v4195
    %4887 = vmatmul.mubr.bf16.gmra.mxu0 %v4176
    %v4888 = vpop.f32.mrf.mxu0
    %v4889 = vadd.f32 %v4840, %v4888
    %v4890 = vpop.f32.mrf.mxu0
    %v4891 = vpop.f32.mrf.mxu0
    %v4892 = vadd.f32 %v4843, %v4891
    %v4893 = vpop.f32.mrf.mxu0
    %4894 = vmatprep.mubr.bf16.mxu0 %v4204
    %4895 = vmatmul.mubr.bf16.gmra.mxu0 %v4178
    %v4896 = vpop.f32.mrf.mxu0
    %v4897 = vadd.f32 %v4848, %v4896
    %v4898 = vpop.f32.mrf.mxu0
    %v4899 = vpop.f32.mrf.mxu0
    %v4900 = vadd.f32 %v4851, %v4899
    %v4901 = vpop.f32.mrf.mxu0
    %4902 = vdwg.mxu0
    %4903 = vmatprep.subr.bf16.mxu0 0
    %4904 = vmatpush1.bf16.msra.mxu0 %v4683
    %4905 = vmatprep.subr.bf16.mxu0 0
    %4906 = vmatpush1.bf16.msra.mxu0 %v4682
    %4907 = vmatprep.subr.bf16.mxu0 0
    %4908 = vmatpush1.bf16.msra.mxu0 %v4681
    %4909 = vmatprep.subr.bf16.mxu0 0
    %4910 = vmatpush1.bf16.msra.mxu0 %v4680
    %4911 = vmatprep.subr.bf16.mxu0 0
    %4912 = vmatpush1.bf16.msra.mxu0 %v4679
    %4913 = vmatprep.subr.bf16.mxu0 0
    %4914 = vmatpush1.bf16.msra.mxu0 %v4678
    %4915 = vmatprep.subr.bf16.mxu0 0
    %4916 = vmatpush1.bf16.msra.mxu0 %v4677
    %4917 = vmatprep.subr.bf16.mxu0 0
    %4918 = vmatpush1.bf16.msra.mxu0 %v4676
    %4919 = vmatprep.subr.bf16.mxu0 0
    %4920 = vmatpush2.bf16.msra.mxu0 %v4691
    %4921 = vmatprep.subr.bf16.mxu0 0
    %4922 = vmatpush2.bf16.msra.mxu0 %v4690
    %4923 = vmatprep.subr.bf16.mxu0 0
    %4924 = vmatpush2.bf16.msra.mxu0 %v4689
    %4925 = vmatprep.subr.bf16.mxu0 0
    %4926 = vmatpush2.bf16.msra.mxu0 %v4688
    %4927 = vmatprep.subr.bf16.mxu0 0
    %4928 = vmatpush2.bf16.msra.mxu0 %v4687
    %4929 = vmatprep.subr.bf16.mxu0 0
    %4930 = vmatpush2.bf16.msra.mxu0 %v4686
    %4931 = vmatprep.subr.bf16.mxu0 0
    %4932 = vmatpush2.bf16.msra.mxu0 %v4685
    %4933 = vmatprep.subr.bf16.mxu0 0
    %4934 = vmatpush2.bf16.msra.mxu0 %v4684
    %4935 = vmatprep.mubr.bf16.mxu0 %v4231
    %4936 = vmatmul.mubr.bf16.gmra.mxu0 %v4212
    %v4937 = vpop.f32.mrf.mxu0
    %v4938 = vadd.f32 %v4889, %v4937
    %v4939 = vpop.f32.mrf.mxu0
    %v4940 = vpop.f32.mrf.mxu0
    %v4941 = vadd.f32 %v4892, %v4940
    %v4942 = vpop.f32.mrf.mxu0
    %4943 = vmatprep.mubr.bf16.mxu0 %v4240
    %4944 = vmatmul.mubr.bf16.gmra.mxu0 %v4214
    %v4945 = vpop.f32.mrf.mxu0
    %v4946 = vadd.f32 %v4897, %v4945
    %v4947 = vpop.f32.mrf.mxu0
    %v4948 = vpop.f32.mrf.mxu0
    %v4949 = vadd.f32 %v4900, %v4948
    %v4950 = vpop.f32.mrf.mxu0
    %4951 = vdwg.mxu0
    %s4952 = scalar_lea.vmem [#allocation12], 6
    %v4953 = vld [vmem:[%s4952] sm:$0x1]
    %v4955 = vlaneseq
    %v4956 = vshrl.u32 %v4955, 7
    %v4957 = vsub.s32 0, %v4956
    %v4958 = vrot.slane %v4953, %v4957
    %v4960 = vmul.f32 %v4938, %v4958
    %v4961 = vmul.f32 %v4941, %v4958
    %v4962 = vmul.f32 %v4946, %v4958
    %v4963 = vmul.f32 %v4949, %v4958
    %s4964 = scalar_lea.vmem %s5, 6
    %v4965 = vld [vmem:[%s4964] sm:$0x1]
    %v4967 = vlaneseq
    %v4968 = vshrl.u32 %v4967, 7
    %v4969 = vsub.s32 0, %v4968
    %v4970 = vrot.slane %v4965, %v4969
    %v4972 = vadd.f32 %v4960, %v4970
    %v4973 = vadd.f32 %v4961, %v4970
    %v4974 = vadd.f32 %v4962, %v4970
    %v4975 = vadd.f32 %v4963, %v4970
    %v4976 = vmax.f32 %v4972, 0.0
    %v4977 = vmax.f32 %v4973, 0.0
    %v4978 = vmax.f32 %v4974, 0.0
    %v4979 = vmax.f32 %v4975, 0.0
    %v4980 = vsel %vm1062, %v4976, 0.0
    %v4981 = vsel %vm1063, %v4977, 0.0
    %v4982 = vsel %vm1062, %v4978, 0.0
    %v4983 = vsel %vm1063, %v4979, 0.0
    %v4984 = vpack.c.bf16 %v4981, %v4980
    %v4985 = vpack.c.bf16 %v4983, %v4982
    %v4988 = vunpack.c.l.b16 %v4984
    %v4989 = vunpack.c.h.b16 %v4984
    %v4990 = vunpack.c.l.b16 %v4985
    %v4991 = vunpack.c.h.b16 %v4985
    %v4992 = vpack.c.b16 %v4988, %v4988
    %v4993 = vpack.c.b16 %v4989, %v4989
    %v4994 = vpack.c.b16 %v4990, %v4990
    %v4995 = vpack.c.b16 %v4991, %v4991
    %5000 = vst [vmem:[#allocation2] sm:$0xf] %v4992
    %5001 = vst [vmem:[#allocation2 + $0x4] sm:$0xf] %v4993
    %5002 = vst [vmem:[#allocation2 + $0x8] sm:$0xf] %v4994
    %5003 = vst [vmem:[#allocation2 + $0xc] sm:$0xf] %v4995
    %v5004 = vld [vmem:[#allocation2] sm:$0xf]
    %v5005 = vld [vmem:[#allocation2 + $0x4] sm:$0xf]
    %v5006 = vld [vmem:[#allocation2 + $0x8] sm:$0xf]
    %v5007 = vld [vmem:[#allocation2 + $0xc] sm:$0xf]
    %v5008 = vld [vmem:[#allocation2 + $0x10] sm:$0x1]
    %v5009 = vld [vmem:[#allocation2] sm:$0xe]
    %v5010 = vld [vmem:[#allocation2 + $0x10] sm:$0x3]
    %v5011 = vld [vmem:[#allocation2] sm:$0xc]
    %v5016 = vunpack.c.l.b16 %v5004
    %v5017 = vunpack.c.l.b16 %v5005
    %v5018 = vunpack.c.l.b16 %v5006
    %v5019 = vunpack.c.l.b16 %v5007
    %v5020 = vpack.c.b16 %v5017, %v5016
    %v5021 = vpack.c.b16 %v5019, %v5018
    %v5025 = vunpack.c.l.b16 %v5008
    %v5026 = vpack.c.b16 %v5025, %v5025
    %v5028 = vshrl.u32 %v5020, 16
    %v5030 = vshll.u32 %v5020, 16
    %v5032 = vrot.slane %v5030, 1
    %v5033 = vor.u32 %v5028, %v5032
    %v5035 = vshll.u32 %v5021, 16
    %v5037 = vrot.slane %v5035, 1
    %v5038 = vsel %vm191, %v5033, %v5037
    %v5039 = vshrl.u32 %v5021, 16
    %v5041 = vor.u32 %v5039, %v5037
    %v5043 = vshll.u32 %v5026, 16
    %v5045 = vrot.slane %v5043, 1
    %v5046 = vsel %vm191, %v5041, %v5045
    %v5050 = vunpack.c.l.b16 %v5009
    %v5051 = vpack.c.b16 %v5017, %v5050
    %v5052 = vrot.slane %v5051, 1
    %v5053 = vrot.slane %v5021, 1
    %v5054 = vsel %vm217, %v5052, %v5053
    %v5055 = vrot.slane %v5026, 1
    %v5056 = vsel %vm217, %v5053, %v5055
    %v5060 = vunpack.c.l.b16 %v5010
    %v5061 = vpack.c.b16 %v5060, %v5060
    %v5063 = vshrl.u32 %v5051, 16
    %v5065 = vrot.slane %v5063, 1
    %v5066 = vshll.u32 %v5051, 16
    %v5068 = vrot.slane %v5066, 2
    %v5069 = vor.u32 %v5065, %v5068
    %v5070 = vrot.slane %v5039, 1
    %v5071 = vrot.slane %v5035, 2
    %v5072 = vor.u32 %v5070, %v5071
    %v5073 = vsel %vm228, %v5069, %v5072
    %v5075 = vshrl.u32 %v5061, 16
    %v5077 = vrot.slane %v5075, 1
    %v5078 = vshll.u32 %v5061, 16
    %v5080 = vrot.slane %v5078, 2
    %v5081 = vor.u32 %v5077, %v5080
    %v5082 = vsel %vm228, %v5072, %v5081
    %v5086 = vunpack.c.l.b16 %v5011
    %v5087 = vpack.c.b16 %v5017, %v5086
    %v5088 = vrot.slane %v5087, 2
    %v5089 = vrot.slane %v5021, 2
    %v5090 = vsel %vm255, %v5088, %v5089
    %v5091 = vrot.slane %v5061, 2
    %v5092 = vsel %vm255, %v5089, %v5091
    %s5095 = scalar_lea.vmem [#allocation9], 640
    %v5096 = vld [vmem:[%s5095] sm:$0xf]
    %v5097 = vld [vmem:[%s5095 + $0x4] sm:$0xf]
    %v5098 = vld [vmem:[%s5095 + $0x8] sm:$0xf]
    %v5099 = vld [vmem:[%s5095 + $0xc] sm:$0xf]
    %v5100 = vld [vmem:[%s5095 + $0x10] sm:$0xf]
    %v5101 = vld [vmem:[%s5095 + $0x14] sm:$0xf]
    %v5102 = vld [vmem:[%s5095 + $0x18] sm:$0xf]
    %v5103 = vld [vmem:[%s5095 + $0x1c] sm:$0xf]
    %v5104 = vld [vmem:[%s5095 + $0x20] sm:$0xf]
    %v5105 = vld [vmem:[%s5095 + $0x24] sm:$0xf]
    %v5106 = vld [vmem:[%s5095 + $0x28] sm:$0xf]
    %v5107 = vld [vmem:[%s5095 + $0x2c] sm:$0xf]
    %v5108 = vld [vmem:[%s5095 + $0x30] sm:$0xf]
    %v5109 = vld [vmem:[%s5095 + $0x34] sm:$0xf]
    %v5110 = vld [vmem:[%s5095 + $0x38] sm:$0xf]
    %v5111 = vld [vmem:[%s5095 + $0x3c] sm:$0xf]
    %v5112 = vld [vmem:[%s5095 + $0x40] sm:$0xf]
    %v5113 = vld [vmem:[%s5095 + $0x44] sm:$0xf]
    %v5114 = vld [vmem:[%s5095 + $0x48] sm:$0xf]
    %v5115 = vld [vmem:[%s5095 + $0x4c] sm:$0xf]
    %v5116 = vld [vmem:[%s5095 + $0x50] sm:$0xf]
    %v5117 = vld [vmem:[%s5095 + $0x54] sm:$0xf]
    %v5118 = vld [vmem:[%s5095 + $0x58] sm:$0xf]
    %v5119 = vld [vmem:[%s5095 + $0x5c] sm:$0xf]
    %v5120 = vld [vmem:[%s5095 + $0x60] sm:$0xf]
    %v5121 = vld [vmem:[%s5095 + $0x64] sm:$0xf]
    %v5122 = vld [vmem:[%s5095 + $0x68] sm:$0xf]
    %v5123 = vld [vmem:[%s5095 + $0x6c] sm:$0xf]
    %v5124 = vld [vmem:[%s5095 + $0x70] sm:$0xf]
    %v5125 = vld [vmem:[%s5095 + $0x74] sm:$0xf]
    %v5126 = vld [vmem:[%s5095 + $0x78] sm:$0xf]
    %v5127 = vld [vmem:[%s5095 + $0x7c] sm:$0xf]
    %v5128 = vld [vmem:[%s5095 + $0x80] sm:$0xf]
    %v5129 = vld [vmem:[%s5095 + $0x84] sm:$0xf]
    %v5130 = vld [vmem:[%s5095 + $0x88] sm:$0xf]
    %v5131 = vld [vmem:[%s5095 + $0x8c] sm:$0xf]
    %v5132 = vld [vmem:[%s5095 + $0x90] sm:$0xf]
    %v5133 = vld [vmem:[%s5095 + $0x94] sm:$0xf]
    %v5134 = vld [vmem:[%s5095 + $0x98] sm:$0xf]
    %v5135 = vld [vmem:[%s5095 + $0x9c] sm:$0xf]
    %v5136 = vld [vmem:[%s5095 + $0xa0] sm:$0xf]
    %v5137 = vld [vmem:[%s5095 + $0xa4] sm:$0xf]
    %v5138 = vld [vmem:[%s5095 + $0xa8] sm:$0xf]
    %v5139 = vld [vmem:[%s5095 + $0xac] sm:$0xf]
    %v5140 = vld [vmem:[%s5095 + $0xb0] sm:$0xf]
    %v5141 = vld [vmem:[%s5095 + $0xb4] sm:$0xf]
    %v5142 = vld [vmem:[%s5095 + $0xb8] sm:$0xf]
    %v5143 = vld [vmem:[%s5095 + $0xbc] sm:$0xf]
    %v5144 = vld [vmem:[%s5095 + $0xc0] sm:$0xf]
    %v5145 = vld [vmem:[%s5095 + $0xc4] sm:$0xf]
    %v5146 = vld [vmem:[%s5095 + $0xc8] sm:$0xf]
    %v5147 = vld [vmem:[%s5095 + $0xcc] sm:$0xf]
    %v5148 = vld [vmem:[%s5095 + $0xd0] sm:$0xf]
    %v5149 = vld [vmem:[%s5095 + $0xd4] sm:$0xf]
    %v5150 = vld [vmem:[%s5095 + $0xd8] sm:$0xf]
    %v5151 = vld [vmem:[%s5095 + $0xdc] sm:$0xf]
    %v5152 = vld [vmem:[%s5095 + $0xe0] sm:$0xf]
    %v5153 = vld [vmem:[%s5095 + $0xe4] sm:$0xf]
    %v5154 = vld [vmem:[%s5095 + $0xe8] sm:$0xf]
    %v5155 = vld [vmem:[%s5095 + $0xec] sm:$0xf]
    %v5156 = vld [vmem:[%s5095 + $0xf0] sm:$0xf]
    %v5157 = vld [vmem:[%s5095 + $0xf4] sm:$0xf]
    %v5158 = vld [vmem:[%s5095 + $0xf8] sm:$0xf]
    %v5159 = vld [vmem:[%s5095 + $0xfc] sm:$0xf]
    %v5160 = vld [vmem:[%s5095 + $0x100] sm:$0xf]
    %v5161 = vld [vmem:[%s5095 + $0x104] sm:$0xf]
    %v5162 = vld [vmem:[%s5095 + $0x108] sm:$0xf]
    %v5163 = vld [vmem:[%s5095 + $0x10c] sm:$0xf]
    %v5164 = vld [vmem:[%s5095 + $0x110] sm:$0xf]
    %v5165 = vld [vmem:[%s5095 + $0x114] sm:$0xf]
    %v5166 = vld [vmem:[%s5095 + $0x118] sm:$0xf]
    %v5167 = vld [vmem:[%s5095 + $0x11c] sm:$0xf]
    %v5168 = vld [vmem:[%s5095 + $0x120] sm:$0xf]
    %v5169 = vld [vmem:[%s5095 + $0x124] sm:$0xf]
    %v5170 = vld [vmem:[%s5095 + $0x128] sm:$0xf]
    %v5171 = vld [vmem:[%s5095 + $0x12c] sm:$0xf]
    %v5172 = vld [vmem:[%s5095 + $0x130] sm:$0xf]
    %v5173 = vld [vmem:[%s5095 + $0x134] sm:$0xf]
    %v5174 = vld [vmem:[%s5095 + $0x138] sm:$0xf]
    %v5175 = vld [vmem:[%s5095 + $0x13c] sm:$0xf]
    %v5256 = vunpack.c.l.b16 %v5096
    %v5257 = vunpack.c.l.b16 %v5097
    %v5258 = vunpack.c.l.b16 %v5098
    %v5259 = vunpack.c.l.b16 %v5099
    %v5260 = vunpack.c.l.b16 %v5100
    %v5261 = vunpack.c.l.b16 %v5101
    %v5262 = vunpack.c.l.b16 %v5102
    %v5263 = vunpack.c.l.b16 %v5103
    %v5264 = vunpack.c.l.b16 %v5104
    %v5265 = vunpack.c.l.b16 %v5105
    %v5266 = vunpack.c.l.b16 %v5106
    %v5267 = vunpack.c.l.b16 %v5107
    %v5268 = vunpack.c.l.b16 %v5108
    %v5269 = vunpack.c.l.b16 %v5109
    %v5270 = vunpack.c.l.b16 %v5110
    %v5271 = vunpack.c.l.b16 %v5111
    %v5272 = vunpack.c.l.b16 %v5112
    %v5273 = vunpack.c.l.b16 %v5113
    %v5274 = vunpack.c.l.b16 %v5114
    %v5275 = vunpack.c.l.b16 %v5115
    %v5276 = vunpack.c.l.b16 %v5116
    %v5277 = vunpack.c.l.b16 %v5117
    %v5278 = vunpack.c.l.b16 %v5118
    %v5279 = vunpack.c.l.b16 %v5119
    %v5280 = vunpack.c.l.b16 %v5120
    %v5281 = vunpack.c.l.b16 %v5121
    %v5282 = vunpack.c.l.b16 %v5122
    %v5283 = vunpack.c.l.b16 %v5123
    %v5284 = vunpack.c.l.b16 %v5124
    %v5285 = vunpack.c.l.b16 %v5125
    %v5286 = vunpack.c.l.b16 %v5126
    %v5287 = vunpack.c.l.b16 %v5127
    %v5288 = vunpack.c.l.b16 %v5128
    %v5289 = vunpack.c.l.b16 %v5129
    %v5290 = vunpack.c.l.b16 %v5130
    %v5291 = vunpack.c.l.b16 %v5131
    %v5292 = vunpack.c.l.b16 %v5132
    %v5293 = vunpack.c.l.b16 %v5133
    %v5294 = vunpack.c.l.b16 %v5134
    %v5295 = vunpack.c.l.b16 %v5135
    %v5296 = vunpack.c.l.b16 %v5136
    %v5297 = vunpack.c.l.b16 %v5137
    %v5298 = vunpack.c.l.b16 %v5138
    %v5299 = vunpack.c.l.b16 %v5139
    %v5300 = vunpack.c.l.b16 %v5140
    %v5301 = vunpack.c.l.b16 %v5141
    %v5302 = vunpack.c.l.b16 %v5142
    %v5303 = vunpack.c.l.b16 %v5143
    %v5304 = vunpack.c.l.b16 %v5144
    %v5305 = vunpack.c.l.b16 %v5145
    %v5306 = vunpack.c.l.b16 %v5146
    %v5307 = vunpack.c.l.b16 %v5147
    %v5308 = vunpack.c.l.b16 %v5148
    %v5309 = vunpack.c.l.b16 %v5149
    %v5310 = vunpack.c.l.b16 %v5150
    %v5311 = vunpack.c.l.b16 %v5151
    %v5312 = vunpack.c.l.b16 %v5152
    %v5313 = vunpack.c.l.b16 %v5153
    %v5314 = vunpack.c.l.b16 %v5154
    %v5315 = vunpack.c.l.b16 %v5155
    %v5316 = vunpack.c.l.b16 %v5156
    %v5317 = vunpack.c.l.b16 %v5157
    %v5318 = vunpack.c.l.b16 %v5158
    %v5319 = vunpack.c.l.b16 %v5159
    %v5320 = vunpack.c.l.b16 %v5160
    %v5321 = vunpack.c.l.b16 %v5161
    %v5322 = vunpack.c.l.b16 %v5162
    %v5323 = vunpack.c.l.b16 %v5163
    %v5324 = vunpack.c.l.b16 %v5164
    %v5325 = vunpack.c.l.b16 %v5165
    %v5326 = vunpack.c.l.b16 %v5166
    %v5327 = vunpack.c.l.b16 %v5167
    %v5328 = vunpack.c.l.b16 %v5168
    %v5329 = vunpack.c.l.b16 %v5169
    %v5330 = vunpack.c.l.b16 %v5170
    %v5331 = vunpack.c.l.b16 %v5171
    %v5332 = vunpack.c.l.b16 %v5172
    %v5333 = vunpack.c.l.b16 %v5173
    %v5334 = vunpack.c.l.b16 %v5174
    %v5335 = vunpack.c.l.b16 %v5175
    %v5336 = vpack.c.b16 %v5257, %v5256
    %v5337 = vpack.c.b16 %v5259, %v5258
    %v5338 = vpack.c.b16 %v5261, %v5260
    %v5339 = vpack.c.b16 %v5263, %v5262
    %v5340 = vpack.c.b16 %v5265, %v5264
    %v5341 = vpack.c.b16 %v5267, %v5266
    %v5342 = vpack.c.b16 %v5269, %v5268
    %v5343 = vpack.c.b16 %v5271, %v5270
    %v5344 = vpack.c.b16 %v5273, %v5272
    %v5345 = vpack.c.b16 %v5275, %v5274
    %v5346 = vpack.c.b16 %v5277, %v5276
    %v5347 = vpack.c.b16 %v5279, %v5278
    %v5348 = vpack.c.b16 %v5281, %v5280
    %v5349 = vpack.c.b16 %v5283, %v5282
    %v5350 = vpack.c.b16 %v5285, %v5284
    %v5351 = vpack.c.b16 %v5287, %v5286
    %v5352 = vpack.c.b16 %v5289, %v5288
    %v5353 = vpack.c.b16 %v5291, %v5290
    %v5354 = vpack.c.b16 %v5293, %v5292
    %v5355 = vpack.c.b16 %v5295, %v5294
    %v5356 = vpack.c.b16 %v5297, %v5296
    %v5357 = vpack.c.b16 %v5299, %v5298
    %v5358 = vpack.c.b16 %v5301, %v5300
    %v5359 = vpack.c.b16 %v5303, %v5302
    %v5360 = vpack.c.b16 %v5305, %v5304
    %v5361 = vpack.c.b16 %v5307, %v5306
    %v5362 = vpack.c.b16 %v5309, %v5308
    %v5363 = vpack.c.b16 %v5311, %v5310
    %v5364 = vpack.c.b16 %v5313, %v5312
    %v5365 = vpack.c.b16 %v5315, %v5314
    %v5366 = vpack.c.b16 %v5317, %v5316
    %v5367 = vpack.c.b16 %v5319, %v5318
    %v5368 = vpack.c.b16 %v5321, %v5320
    %v5369 = vpack.c.b16 %v5323, %v5322
    %v5370 = vpack.c.b16 %v5325, %v5324
    %v5371 = vpack.c.b16 %v5327, %v5326
    %v5372 = vpack.c.b16 %v5329, %v5328
    %v5373 = vpack.c.b16 %v5331, %v5330
    %v5374 = vpack.c.b16 %v5333, %v5332
    %v5375 = vpack.c.b16 %v5335, %v5334
    %5416 = vmatprep.subr.bf16.mxu0 0
    %5417 = vmatpush1.bf16.msra.mxu0 %v5343
    %5418 = vmatprep.subr.bf16.mxu0 0
    %5419 = vmatpush1.bf16.msra.mxu0 %v5342
    %5420 = vmatprep.subr.bf16.mxu0 0
    %5421 = vmatpush1.bf16.msra.mxu0 %v5341
    %5422 = vmatprep.subr.bf16.mxu0 0
    %5423 = vmatpush1.bf16.msra.mxu0 %v5340
    %5424 = vmatprep.subr.bf16.mxu0 0
    %5425 = vmatpush1.bf16.msra.mxu0 %v5339
    %5426 = vmatprep.subr.bf16.mxu0 0
    %5427 = vmatpush1.bf16.msra.mxu0 %v5338
    %5428 = vmatprep.subr.bf16.mxu0 0
    %5429 = vmatpush1.bf16.msra.mxu0 %v5337
    %5430 = vmatprep.subr.bf16.mxu0 0
    %5431 = vmatpush1.bf16.msra.mxu0 %v5336
    %5432 = vmatprep.subr.bf16.mxu0 0
    %5433 = vmatpush2.bf16.msra.mxu0 %v5351
    %5434 = vmatprep.subr.bf16.mxu0 0
    %5435 = vmatpush2.bf16.msra.mxu0 %v5350
    %5436 = vmatprep.subr.bf16.mxu0 0
    %5437 = vmatpush2.bf16.msra.mxu0 %v5349
    %5438 = vmatprep.subr.bf16.mxu0 0
    %5439 = vmatpush2.bf16.msra.mxu0 %v5348
    %5440 = vmatprep.subr.bf16.mxu0 0
    %5441 = vmatpush2.bf16.msra.mxu0 %v5347
    %5442 = vmatprep.subr.bf16.mxu0 0
    %5443 = vmatpush2.bf16.msra.mxu0 %v5346
    %5444 = vmatprep.subr.bf16.mxu0 0
    %5445 = vmatpush2.bf16.msra.mxu0 %v5345
    %5446 = vmatprep.subr.bf16.mxu0 0
    %5447 = vmatpush2.bf16.msra.mxu0 %v5344
    %5448 = vmatprep.mubr.bf16.mxu0 %v5038
    %5449 = vmatmul.mubr.bf16.gmra.mxu0 %v5020
    %v5450 = vpop.f32.mrf.mxu0
    %v5451 = vadd.f32 0.0, %v5450
    %v5452 = vpop.f32.mrf.mxu0
    %v5453 = vpop.f32.mrf.mxu0
    %v5454 = vadd.f32 0.0, %v5453
    %v5455 = vpop.f32.mrf.mxu0
    %5456 = vmatprep.mubr.bf16.mxu0 %v5046
    %5457 = vmatmul.mubr.bf16.gmra.mxu0 %v5021
    %v5458 = vpop.f32.mrf.mxu0
    %v5459 = vadd.f32 0.0, %v5458
    %v5460 = vpop.f32.mrf.mxu0
    %v5461 = vpop.f32.mrf.mxu0
    %v5462 = vadd.f32 0.0, %v5461
    %v5463 = vpop.f32.mrf.mxu0
    %5464 = vdwg.mxu0
    %5465 = vmatprep.subr.bf16.mxu0 0
    %5466 = vmatpush1.bf16.msra.mxu0 %v5359
    %5467 = vmatprep.subr.bf16.mxu0 0
    %5468 = vmatpush1.bf16.msra.mxu0 %v5358
    %5469 = vmatprep.subr.bf16.mxu0 0
    %5470 = vmatpush1.bf16.msra.mxu0 %v5357
    %5471 = vmatprep.subr.bf16.mxu0 0
    %5472 = vmatpush1.bf16.msra.mxu0 %v5356
    %5473 = vmatprep.subr.bf16.mxu0 0
    %5474 = vmatpush1.bf16.msra.mxu0 %v5355
    %5475 = vmatprep.subr.bf16.mxu0 0
    %5476 = vmatpush1.bf16.msra.mxu0 %v5354
    %5477 = vmatprep.subr.bf16.mxu0 0
    %5478 = vmatpush1.bf16.msra.mxu0 %v5353
    %5479 = vmatprep.subr.bf16.mxu0 0
    %5480 = vmatpush1.bf16.msra.mxu0 %v5352
    %5481 = vmatprep.subr.bf16.mxu0 0
    %5482 = vmatpush2.bf16.msra.mxu0 %v5367
    %5483 = vmatprep.subr.bf16.mxu0 0
    %5484 = vmatpush2.bf16.msra.mxu0 %v5366
    %5485 = vmatprep.subr.bf16.mxu0 0
    %5486 = vmatpush2.bf16.msra.mxu0 %v5365
    %5487 = vmatprep.subr.bf16.mxu0 0
    %5488 = vmatpush2.bf16.msra.mxu0 %v5364
    %5489 = vmatprep.subr.bf16.mxu0 0
    %5490 = vmatpush2.bf16.msra.mxu0 %v5363
    %5491 = vmatprep.subr.bf16.mxu0 0
    %5492 = vmatpush2.bf16.msra.mxu0 %v5362
    %5493 = vmatprep.subr.bf16.mxu0 0
    %5494 = vmatpush2.bf16.msra.mxu0 %v5361
    %5495 = vmatprep.subr.bf16.mxu0 0
    %5496 = vmatpush2.bf16.msra.mxu0 %v5360
    %5497 = vmatprep.mubr.bf16.mxu0 %v5073
    %5498 = vmatmul.mubr.bf16.gmra.mxu0 %v5054
    %v5499 = vpop.f32.mrf.mxu0
    %v5500 = vadd.f32 %v5451, %v5499
    %v5501 = vpop.f32.mrf.mxu0
    %v5502 = vpop.f32.mrf.mxu0
    %v5503 = vadd.f32 %v5454, %v5502
    %v5504 = vpop.f32.mrf.mxu0
    %5505 = vmatprep.mubr.bf16.mxu0 %v5082
    %5506 = vmatmul.mubr.bf16.gmra.mxu0 %v5056
    %v5507 = vpop.f32.mrf.mxu0
    %v5508 = vadd.f32 %v5459, %v5507
    %v5509 = vpop.f32.mrf.mxu0
    %v5510 = vpop.f32.mrf.mxu0
    %v5511 = vadd.f32 %v5462, %v5510
    %v5512 = vpop.f32.mrf.mxu0
    %5513 = vdwg.mxu0
    %5514 = vmatprep.subr.bf16.mxu0 0
    %5515 = vmatpush1.bf16.msra.mxu0 %v5375
    %5516 = vmatprep.subr.bf16.mxu0 0
    %5517 = vmatpush1.bf16.msra.mxu0 %v5374
    %5518 = vmatprep.subr.bf16.mxu0 0
    %5519 = vmatpush1.bf16.msra.mxu0 %v5373
    %5520 = vmatprep.subr.bf16.mxu0 0
    %5521 = vmatpush1.bf16.msra.mxu0 %v5372
    %5522 = vmatprep.subr.bf16.mxu0 0
    %5523 = vmatpush1.bf16.msra.mxu0 %v5371
    %5524 = vmatprep.subr.bf16.mxu0 0
    %5525 = vmatpush1.bf16.msra.mxu0 %v5370
    %5526 = vmatprep.subr.bf16.mxu0 0
    %5527 = vmatpush1.bf16.msra.mxu0 %v5369
    %5528 = vmatprep.subr.bf16.mxu0 0
    %5529 = vmatpush1.bf16.msra.mxu0 %v5368
    %5530 = vmatprep.subr.bf16.mxu0 0
    %5531 = vmatpush2.bf16.msra.mxu0 0
    %5532 = vmatprep.subr.bf16.mxu0 0
    %5533 = vmatpush2.bf16.msra.mxu0 0
    %5534 = vmatprep.subr.bf16.mxu0 0
    %5535 = vmatpush2.bf16.msra.mxu0 0
    %5536 = vmatprep.subr.bf16.mxu0 0
    %5537 = vmatpush2.bf16.msra.mxu0 0
    %5538 = vmatprep.subr.bf16.mxu0 0
    %5539 = vmatpush2.bf16.msra.mxu0 0
    %5540 = vmatprep.subr.bf16.mxu0 0
    %5541 = vmatpush2.bf16.msra.mxu0 0
    %5542 = vmatprep.subr.bf16.mxu0 0
    %5543 = vmatpush2.bf16.msra.mxu0 0
    %5544 = vmatprep.subr.bf16.mxu0 0
    %5545 = vmatpush2.bf16.msra.mxu0 0
    %5546 = vmatprep.mubr.bf16.mxu0 0
    %5547 = vmatmul.mubr.bf16.gmra.mxu0 %v5090
    %v5548 = vpop.f32.mrf.mxu0
    %v5549 = vadd.f32 %v5500, %v5548
    %v5550 = vpop.f32.mrf.mxu0
    %v5551 = vpop.f32.mrf.mxu0
    %v5552 = vadd.f32 %v5503, %v5551
    %v5553 = vpop.f32.mrf.mxu0
    %5554 = vmatprep.mubr.bf16.mxu0 0
    %5555 = vmatmul.mubr.bf16.gmra.mxu0 %v5092
    %v5556 = vpop.f32.mrf.mxu0
    %v5557 = vadd.f32 %v5508, %v5556
    %v5558 = vpop.f32.mrf.mxu0
    %v5559 = vpop.f32.mrf.mxu0
    %v5560 = vadd.f32 %v5511, %v5559
    %v5561 = vpop.f32.mrf.mxu0
    %5562 = vdwg.mxu0
    %s5563 = scalar_lea.vmem [#allocation12], 7
    %v5564 = vld [vmem:[%s5563] sm:$0x1]
    %v5566 = vlaneseq
    %v5567 = vshrl.u32 %v5566, 7
    %v5568 = vsub.s32 0, %v5567
    %v5569 = vrot.slane %v5564, %v5568
    %v5571 = vmul.f32 %v5549, %v5569
    %v5572 = vmul.f32 %v5552, %v5569
    %v5573 = vmul.f32 %v5557, %v5569
    %v5574 = vmul.f32 %v5560, %v5569
    %s5575 = scalar_lea.vmem %s5, 7
    %v5576 = vld [vmem:[%s5575] sm:$0x1]
    %v5578 = vlaneseq
    %v5579 = vshrl.u32 %v5578, 7
    %v5580 = vsub.s32 0, %v5579
    %v5581 = vrot.slane %v5576, %v5580
    %v5583 = vadd.f32 %v5571, %v5581
    %v5584 = vadd.f32 %v5572, %v5581
    %v5585 = vadd.f32 %v5573, %v5581
    %v5586 = vadd.f32 %v5574, %v5581
    %v5587 = vmax.f32 %v5583, 0.0
    %v5588 = vmax.f32 %v5584, 0.0
    %v5589 = vmax.f32 %v5585, 0.0
    %v5590 = vmax.f32 %v5586, 0.0
    %v5591 = vsel %vm1674, %v5587, 0.0
    %v5592 = vsel %vm1675, %v5588, 0.0
    %v5593 = vsel %vm1674, %v5589, 0.0
    %v5594 = vsel %vm1675, %v5590, 0.0
    %v5595 = vpack.c.bf16 %v5592, %v5591
    %v5596 = vpack.c.bf16 %v5594, %v5593
    %v5599 = vunpack.c.l.b16 %v5595
    %v5600 = vunpack.c.h.b16 %v5595
    %v5601 = vunpack.c.l.b16 %v5596
    %v5602 = vunpack.c.h.b16 %v5596
    %v5603 = vpack.c.b16 %v5599, %v5599
    %v5604 = vpack.c.b16 %v5600, %v5600
    %v5605 = vpack.c.b16 %v5601, %v5601
    %v5606 = vpack.c.b16 %v5602, %v5602
    %5611 = vst [vmem:[#allocation2] sm:$0xf] %v5603
    %5612 = vst [vmem:[#allocation2 + $0x4] sm:$0xf] %v5604
    %5613 = vst [vmem:[#allocation2 + $0x8] sm:$0xf] %v5605
    %5614 = vst [vmem:[#allocation2 + $0xc] sm:$0xf] %v5606
    %v5615 = vld [vmem:[#allocation2] sm:$0xf]
    %v5616 = vld [vmem:[#allocation2 + $0x4] sm:$0xf]
    %v5617 = vld [vmem:[#allocation2 + $0x8] sm:$0xf]
    %v5618 = vld [vmem:[#allocation2 + $0xc] sm:$0xf]
    %v5619 = vld [vmem:[#allocation2 + $0x10] sm:$0x1]
    %v5620 = vld [vmem:[#allocation2] sm:$0xe]
    %v5625 = vunpack.c.l.b16 %v5615
    %v5626 = vunpack.c.l.b16 %v5616
    %v5627 = vunpack.c.l.b16 %v5617
    %v5628 = vunpack.c.l.b16 %v5618
    %v5629 = vpack.c.b16 %v5626, %v5625
    %v5630 = vpack.c.b16 %v5628, %v5627
    %v5634 = vunpack.c.l.b16 %v5619
    %v5635 = vpack.c.b16 %v5634, %v5634
    %v5637 = vshrl.u32 %v5629, 16
    %v5639 = vshll.u32 %v5629, 16
    %v5641 = vrot.slane %v5639, 1
    %v5642 = vor.u32 %v5637, %v5641
    %v5644 = vshll.u32 %v5630, 16
    %v5646 = vrot.slane %v5644, 1
    %v5647 = vsel %vm191, %v5642, %v5646
    %v5648 = vshrl.u32 %v5630, 16
    %v5650 = vor.u32 %v5648, %v5646
    %v5652 = vshll.u32 %v5635, 16
    %v5654 = vrot.slane %v5652, 1
    %v5655 = vsel %vm191, %v5650, %v5654
    %v5659 = vunpack.c.l.b16 %v5620
    %v5660 = vpack.c.b16 %v5626, %v5659
    %v5661 = vrot.slane %v5660, 1
    %v5662 = vrot.slane %v5630, 1
    %v5663 = vsel %vm217, %v5661, %v5662
    %v5664 = vrot.slane %v5635, 1
    %v5665 = vsel %vm217, %v5662, %v5664
    %s5668 = scalar_lea.vmem [#allocation10], 384
    %v5669 = vld [vmem:[%s5668] sm:$0xf]
    %v5670 = vld [vmem:[%s5668 + $0x4] sm:$0xf]
    %v5671 = vld [vmem:[%s5668 + $0x8] sm:$0xf]
    %v5672 = vld [vmem:[%s5668 + $0xc] sm:$0xf]
    %v5673 = vld [vmem:[%s5668 + $0x10] sm:$0xf]
    %v5674 = vld [vmem:[%s5668 + $0x14] sm:$0xf]
    %v5675 = vld [vmem:[%s5668 + $0x18] sm:$0xf]
    %v5676 = vld [vmem:[%s5668 + $0x1c] sm:$0xf]
    %v5677 = vld [vmem:[%s5668 + $0x20] sm:$0xf]
    %v5678 = vld [vmem:[%s5668 + $0x24] sm:$0xf]
    %v5679 = vld [vmem:[%s5668 + $0x28] sm:$0xf]
    %v5680 = vld [vmem:[%s5668 + $0x2c] sm:$0xf]
    %v5681 = vld [vmem:[%s5668 + $0x30] sm:$0xf]
    %v5682 = vld [vmem:[%s5668 + $0x34] sm:$0xf]
    %v5683 = vld [vmem:[%s5668 + $0x38] sm:$0xf]
    %v5684 = vld [vmem:[%s5668 + $0x3c] sm:$0xf]
    %v5685 = vld [vmem:[%s5668 + $0x40] sm:$0xf]
    %v5686 = vld [vmem:[%s5668 + $0x44] sm:$0xf]
    %v5687 = vld [vmem:[%s5668 + $0x48] sm:$0xf]
    %v5688 = vld [vmem:[%s5668 + $0x4c] sm:$0xf]
    %v5689 = vld [vmem:[%s5668 + $0x50] sm:$0xf]
    %v5690 = vld [vmem:[%s5668 + $0x54] sm:$0xf]
    %v5691 = vld [vmem:[%s5668 + $0x58] sm:$0xf]
    %v5692 = vld [vmem:[%s5668 + $0x5c] sm:$0xf]
    %v5693 = vld [vmem:[%s5668 + $0x60] sm:$0xf]
    %v5694 = vld [vmem:[%s5668 + $0x64] sm:$0xf]
    %v5695 = vld [vmem:[%s5668 + $0x68] sm:$0xf]
    %v5696 = vld [vmem:[%s5668 + $0x6c] sm:$0xf]
    %v5697 = vld [vmem:[%s5668 + $0x70] sm:$0xf]
    %v5698 = vld [vmem:[%s5668 + $0x74] sm:$0xf]
    %v5699 = vld [vmem:[%s5668 + $0x78] sm:$0xf]
    %v5700 = vld [vmem:[%s5668 + $0x7c] sm:$0xf]
    %v5701 = vld [vmem:[%s5668 + $0x80] sm:$0xf]
    %v5702 = vld [vmem:[%s5668 + $0x84] sm:$0xf]
    %v5703 = vld [vmem:[%s5668 + $0x88] sm:$0xf]
    %v5704 = vld [vmem:[%s5668 + $0x8c] sm:$0xf]
    %v5705 = vld [vmem:[%s5668 + $0x90] sm:$0xf]
    %v5706 = vld [vmem:[%s5668 + $0x94] sm:$0xf]
    %v5707 = vld [vmem:[%s5668 + $0x98] sm:$0xf]
    %v5708 = vld [vmem:[%s5668 + $0x9c] sm:$0xf]
    %v5709 = vld [vmem:[%s5668 + $0xa0] sm:$0xf]
    %v5710 = vld [vmem:[%s5668 + $0xa4] sm:$0xf]
    %v5711 = vld [vmem:[%s5668 + $0xa8] sm:$0xf]
    %v5712 = vld [vmem:[%s5668 + $0xac] sm:$0xf]
    %v5713 = vld [vmem:[%s5668 + $0xb0] sm:$0xf]
    %v5714 = vld [vmem:[%s5668 + $0xb4] sm:$0xf]
    %v5715 = vld [vmem:[%s5668 + $0xb8] sm:$0xf]
    %v5716 = vld [vmem:[%s5668 + $0xbc] sm:$0xf]
    %v5765 = vunpack.c.l.b16 %v5669
    %v5766 = vunpack.c.l.b16 %v5670
    %v5767 = vunpack.c.l.b16 %v5671
    %v5768 = vunpack.c.l.b16 %v5672
    %v5769 = vunpack.c.l.b16 %v5673
    %v5770 = vunpack.c.l.b16 %v5674
    %v5771 = vunpack.c.l.b16 %v5675
    %v5772 = vunpack.c.l.b16 %v5676
    %v5773 = vunpack.c.l.b16 %v5677
    %v5774 = vunpack.c.l.b16 %v5678
    %v5775 = vunpack.c.l.b16 %v5679
    %v5776 = vunpack.c.l.b16 %v5680
    %v5777 = vunpack.c.l.b16 %v5681
    %v5778 = vunpack.c.l.b16 %v5682
    %v5779 = vunpack.c.l.b16 %v5683
    %v5780 = vunpack.c.l.b16 %v5684
    %v5781 = vunpack.c.l.b16 %v5685
    %v5782 = vunpack.c.l.b16 %v5686
    %v5783 = vunpack.c.l.b16 %v5687
    %v5784 = vunpack.c.l.b16 %v5688
    %v5785 = vunpack.c.l.b16 %v5689
    %v5786 = vunpack.c.l.b16 %v5690
    %v5787 = vunpack.c.l.b16 %v5691
    %v5788 = vunpack.c.l.b16 %v5692
    %v5789 = vunpack.c.l.b16 %v5693
    %v5790 = vunpack.c.l.b16 %v5694
    %v5791 = vunpack.c.l.b16 %v5695
    %v5792 = vunpack.c.l.b16 %v5696
    %v5793 = vunpack.c.l.b16 %v5697
    %v5794 = vunpack.c.l.b16 %v5698
    %v5795 = vunpack.c.l.b16 %v5699
    %v5796 = vunpack.c.l.b16 %v5700
    %v5797 = vunpack.c.l.b16 %v5701
    %v5798 = vunpack.c.l.b16 %v5702
    %v5799 = vunpack.c.l.b16 %v5703
    %v5800 = vunpack.c.l.b16 %v5704
    %v5801 = vunpack.c.l.b16 %v5705
    %v5802 = vunpack.c.l.b16 %v5706
    %v5803 = vunpack.c.l.b16 %v5707
    %v5804 = vunpack.c.l.b16 %v5708
    %v5805 = vunpack.c.l.b16 %v5709
    %v5806 = vunpack.c.l.b16 %v5710
    %v5807 = vunpack.c.l.b16 %v5711
    %v5808 = vunpack.c.l.b16 %v5712
    %v5809 = vunpack.c.l.b16 %v5713
    %v5810 = vunpack.c.l.b16 %v5714
    %v5811 = vunpack.c.l.b16 %v5715
    %v5812 = vunpack.c.l.b16 %v5716
    %v5813 = vpack.c.b16 %v5766, %v5765
    %v5814 = vpack.c.b16 %v5768, %v5767
    %v5815 = vpack.c.b16 %v5770, %v5769
    %v5816 = vpack.c.b16 %v5772, %v5771
    %v5817 = vpack.c.b16 %v5774, %v5773
    %v5818 = vpack.c.b16 %v5776, %v5775
    %v5819 = vpack.c.b16 %v5778, %v5777
    %v5820 = vpack.c.b16 %v5780, %v5779
    %v5821 = vpack.c.b16 %v5782, %v5781
    %v5822 = vpack.c.b16 %v5784, %v5783
    %v5823 = vpack.c.b16 %v5786, %v5785
    %v5824 = vpack.c.b16 %v5788, %v5787
    %v5825 = vpack.c.b16 %v5790, %v5789
    %v5826 = vpack.c.b16 %v5792, %v5791
    %v5827 = vpack.c.b16 %v5794, %v5793
    %v5828 = vpack.c.b16 %v5796, %v5795
    %v5829 = vpack.c.b16 %v5798, %v5797
    %v5830 = vpack.c.b16 %v5800, %v5799
    %v5831 = vpack.c.b16 %v5802, %v5801
    %v5832 = vpack.c.b16 %v5804, %v5803
    %v5833 = vpack.c.b16 %v5806, %v5805
    %v5834 = vpack.c.b16 %v5808, %v5807
    %v5835 = vpack.c.b16 %v5810, %v5809
    %v5836 = vpack.c.b16 %v5812, %v5811
    %5861 = vmatprep.subr.bf16.mxu0 0
    %5862 = vmatpush1.bf16.msra.mxu0 %v5820
    %5863 = vmatprep.subr.bf16.mxu0 0
    %5864 = vmatpush1.bf16.msra.mxu0 %v5819
    %5865 = vmatprep.subr.bf16.mxu0 0
    %5866 = vmatpush1.bf16.msra.mxu0 %v5818
    %5867 = vmatprep.subr.bf16.mxu0 0
    %5868 = vmatpush1.bf16.msra.mxu0 %v5817
    %5869 = vmatprep.subr.bf16.mxu0 0
    %5870 = vmatpush1.bf16.msra.mxu0 %v5816
    %5871 = vmatprep.subr.bf16.mxu0 0
    %5872 = vmatpush1.bf16.msra.mxu0 %v5815
    %5873 = vmatprep.subr.bf16.mxu0 0
    %5874 = vmatpush1.bf16.msra.mxu0 %v5814
    %5875 = vmatprep.subr.bf16.mxu0 0
    %5876 = vmatpush1.bf16.msra.mxu0 %v5813
    %5877 = vmatprep.subr.bf16.mxu0 0
    %5878 = vmatpush2.bf16.msra.mxu0 %v5828
    %5879 = vmatprep.subr.bf16.mxu0 0
    %5880 = vmatpush2.bf16.msra.mxu0 %v5827
    %5881 = vmatprep.subr.bf16.mxu0 0
    %5882 = vmatpush2.bf16.msra.mxu0 %v5826
    %5883 = vmatprep.subr.bf16.mxu0 0
    %5884 = vmatpush2.bf16.msra.mxu0 %v5825
    %5885 = vmatprep.subr.bf16.mxu0 0
    %5886 = vmatpush2.bf16.msra.mxu0 %v5824
    %5887 = vmatprep.subr.bf16.mxu0 0
    %5888 = vmatpush2.bf16.msra.mxu0 %v5823
    %5889 = vmatprep.subr.bf16.mxu0 0
    %5890 = vmatpush2.bf16.msra.mxu0 %v5822
    %5891 = vmatprep.subr.bf16.mxu0 0
    %5892 = vmatpush2.bf16.msra.mxu0 %v5821
    %5893 = vmatprep.mubr.bf16.mxu0 %v5647
    %5894 = vmatmul.mubr.bf16.gmra.mxu0 %v5629
    %v5895 = vpop.f32.mrf.mxu0
    %v5896 = vadd.f32 0.0, %v5895
    %v5897 = vpop.f32.mrf.mxu0
    %v5898 = vpop.f32.mrf.mxu0
    %v5899 = vadd.f32 0.0, %v5898
    %v5900 = vpop.f32.mrf.mxu0
    %5901 = vmatprep.mubr.bf16.mxu0 %v5655
    %5902 = vmatmul.mubr.bf16.gmra.mxu0 %v5630
    %v5903 = vpop.f32.mrf.mxu0
    %v5904 = vadd.f32 0.0, %v5903
    %v5905 = vpop.f32.mrf.mxu0
    %v5906 = vpop.f32.mrf.mxu0
    %v5907 = vadd.f32 0.0, %v5906
    %v5908 = vpop.f32.mrf.mxu0
    %5909 = vdwg.mxu0
    %5910 = vmatprep.subr.bf16.mxu0 0
    %5911 = vmatpush1.bf16.msra.mxu0 %v5836
    %5912 = vmatprep.subr.bf16.mxu0 0
    %5913 = vmatpush1.bf16.msra.mxu0 %v5835
    %5914 = vmatprep.subr.bf16.mxu0 0
    %5915 = vmatpush1.bf16.msra.mxu0 %v5834
    %5916 = vmatprep.subr.bf16.mxu0 0
    %5917 = vmatpush1.bf16.msra.mxu0 %v5833
    %5918 = vmatprep.subr.bf16.mxu0 0
    %5919 = vmatpush1.bf16.msra.mxu0 %v5832
    %5920 = vmatprep.subr.bf16.mxu0 0
    %5921 = vmatpush1.bf16.msra.mxu0 %v5831
    %5922 = vmatprep.subr.bf16.mxu0 0
    %5923 = vmatpush1.bf16.msra.mxu0 %v5830
    %5924 = vmatprep.subr.bf16.mxu0 0
    %5925 = vmatpush1.bf16.msra.mxu0 %v5829
    %5926 = vmatprep.subr.bf16.mxu0 0
    %5927 = vmatpush2.bf16.msra.mxu0 0
    %5928 = vmatprep.subr.bf16.mxu0 0
    %5929 = vmatpush2.bf16.msra.mxu0 0
    %5930 = vmatprep.subr.bf16.mxu0 0
    %5931 = vmatpush2.bf16.msra.mxu0 0
    %5932 = vmatprep.subr.bf16.mxu0 0
    %5933 = vmatpush2.bf16.msra.mxu0 0
    %5934 = vmatprep.subr.bf16.mxu0 0
    %5935 = vmatpush2.bf16.msra.mxu0 0
    %5936 = vmatprep.subr.bf16.mxu0 0
    %5937 = vmatpush2.bf16.msra.mxu0 0
    %5938 = vmatprep.subr.bf16.mxu0 0
    %5939 = vmatpush2.bf16.msra.mxu0 0
    %5940 = vmatprep.subr.bf16.mxu0 0
    %5941 = vmatpush2.bf16.msra.mxu0 0
    %5942 = vmatprep.mubr.bf16.mxu0 0
    %5943 = vmatmul.mubr.bf16.gmra.mxu0 %v5663
    %v5944 = vpop.f32.mrf.mxu0
    %v5945 = vadd.f32 %v5896, %v5944
    %v5946 = vpop.f32.mrf.mxu0
    %v5947 = vpop.f32.mrf.mxu0
    %v5948 = vadd.f32 %v5899, %v5947
    %v5949 = vpop.f32.mrf.mxu0
    %5950 = vmatprep.mubr.bf16.mxu0 0
    %5951 = vmatmul.mubr.bf16.gmra.mxu0 %v5665
    %v5952 = vpop.f32.mrf.mxu0
    %v5953 = vadd.f32 %v5904, %v5952
    %v5954 = vpop.f32.mrf.mxu0
    %v5955 = vpop.f32.mrf.mxu0
    %v5956 = vadd.f32 %v5907, %v5955
    %v5957 = vpop.f32.mrf.mxu0
    %5958 = vdwg.mxu0
    %s5959 = scalar_lea.vmem [#allocation12], 8
    %v5960 = vld [vmem:[%s5959] sm:$0x1]
    %v5962 = vlaneseq
    %v5963 = vshrl.u32 %v5962, 7
    %v5964 = vsub.s32 0, %v5963
    %v5965 = vrot.slane %v5960, %v5964
    %v5967 = vmul.f32 %v5945, %v5965
    %v5968 = vmul.f32 %v5948, %v5965
    %v5969 = vmul.f32 %v5953, %v5965
    %v5970 = vmul.f32 %v5956, %v5965
    %s5971 = scalar_lea.vmem %s5, 8
    %v5972 = vld [vmem:[%s5971] sm:$0x1]
    %v5974 = vlaneseq
    %v5975 = vshrl.u32 %v5974, 7
    %v5976 = vsub.s32 0, %v5975
    %v5977 = vrot.slane %v5972, %v5976
    %v5979 = vadd.f32 %v5967, %v5977
    %v5980 = vadd.f32 %v5968, %v5977
    %v5981 = vadd.f32 %v5969, %v5977
    %v5982 = vadd.f32 %v5970, %v5977
    %v5983 = vmax.f32 %v5979, 0.0
    %v5984 = vmax.f32 %v5980, 0.0
    %v5985 = vmax.f32 %v5981, 0.0
    %v5986 = vmax.f32 %v5982, 0.0
    %v5987 = vsel %vm2071, %v5983, 0.0
    %v5988 = vsel %vm2072, %v5984, 0.0
    %v5989 = vsel %vm2071, %v5985, 0.0
    %v5990 = vsel %vm2072, %v5986, 0.0
    %v5991 = vld [vmem:[#allocation3] sm:$0xff]
    %v5992 = vld [vmem:[#allocation3 + $0x8] sm:$0xff]
    %v5993 = vld [vmem:[#allocation3 + $0x10] sm:$0xff]
    %v5994 = vld [vmem:[#allocation3 + $0x18] sm:$0xff]
    %v5995 = vadd.f32 %v5987, %v5991
    %v5996 = vadd.f32 %v5988, %v5992
    %v5997 = vadd.f32 %v5989, %v5993
    %v5998 = vadd.f32 %v5990, %v5994
    %v5999 = vmax.f32 %v5995, 0.0
    %v6000 = vmax.f32 %v5996, 0.0
    %v6001 = vmax.f32 %v5997, 0.0
    %v6002 = vmax.f32 %v5998, 0.0
    %6003 = vrot.lane.b32.xlu0 %v5999, 127
    %v6004 = vpop.permute.xlu0 %6003
    %6005 = vrot.lane.b32.xlu0 %v6000, 127
    %v6006 = vpop.permute.xlu0 %6005
    %6007 = vrot.lane.b32.xlu0 %v6001, 127
    %v6008 = vpop.permute.xlu0 %6007
    %6009 = vrot.lane.b32.xlu0 %v6002, 127
    %v6010 = vpop.permute.xlu0 %6009
    %v6011 = vmax.f32 %v5999, %v6004
    %v6012 = vmax.f32 %v6000, %v6006
    %v6013 = vmax.f32 %v6001, %v6008
    %v6014 = vmax.f32 %v6002, %v6010
    %v6015 = vpack.c.bf16 %v6012, %v6011
    %v6016 = vpack.c.bf16 %v6014, %v6013
    %v6017 = vld [vmem:[#allocation15] sm:$0xf]
    %v6018 = vld [vmem:[#allocation15 + $0x4] sm:$0xf]
    %v6019 = vld [vmem:[#allocation15 + $0x8] sm:$0xf]
    %v6020 = vld [vmem:[#allocation15 + $0xc] sm:$0xf]
    %v6021 = vld [vmem:[#allocation15 + $0x10] sm:$0xf]
    %v6022 = vld [vmem:[#allocation15 + $0x14] sm:$0xf]
    %v6023 = vld [vmem:[#allocation15 + $0x18] sm:$0xf]
    %v6024 = vld [vmem:[#allocation15 + $0x1c] sm:$0xf]
    %v6025 = vld [vmem:[#allocation15 + $0x20] sm:$0xf]
    %v6026 = vld [vmem:[#allocation15 + $0x24] sm:$0xf]
    %v6027 = vld [vmem:[#allocation15 + $0x28] sm:$0xf]
    %v6028 = vld [vmem:[#allocation15 + $0x2c] sm:$0xf]
    %v6029 = vld [vmem:[#allocation15 + $0x30] sm:$0xf]
    %v6030 = vld [vmem:[#allocation15 + $0x34] sm:$0xf]
    %v6031 = vld [vmem:[#allocation15 + $0x38] sm:$0xf]
    %v6032 = vld [vmem:[#allocation15 + $0x3c] sm:$0xf]
    %s6033 = scalar_lea.vmem [#allocation15], 64
    %v6034 = vld [vmem:[%s6033] sm:$0xf]
    %v6035 = vld [vmem:[%s6033 + $0x4] sm:$0xf]
    %v6036 = vld [vmem:[%s6033 + $0x8] sm:$0xf]
    %v6037 = vld [vmem:[%s6033 + $0xc] sm:$0xf]
    %v6038 = vld [vmem:[%s6033 + $0x10] sm:$0xf]
    %v6039 = vld [vmem:[%s6033 + $0x14] sm:$0xf]
    %v6040 = vld [vmem:[%s6033 + $0x18] sm:$0xf]
    %v6041 = vld [vmem:[%s6033 + $0x1c] sm:$0xf]
    %v6042 = vld [vmem:[%s6033 + $0x20] sm:$0xf]
    %v6043 = vld [vmem:[%s6033 + $0x24] sm:$0xf]
    %v6044 = vld [vmem:[%s6033 + $0x28] sm:$0xf]
    %v6045 = vld [vmem:[%s6033 + $0x2c] sm:$0xf]
    %v6046 = vld [vmem:[%s6033 + $0x30] sm:$0xf]
    %v6047 = vld [vmem:[%s6033 + $0x34] sm:$0xf]
    %v6048 = vld [vmem:[%s6033 + $0x38] sm:$0xf]
    %v6049 = vld [vmem:[%s6033 + $0x3c] sm:$0xf]
    %v6052 = vunpack.c.l.b16 %v6015
    %v6053 = vunpack.c.l.b16 %v6016
    %v6054 = vrot.slane %v6052, 1
    %vm6055 = vcmask 1041409
    %v6056 = vsel %vm6055, %v6053, %v6054
    %v6057 = vpack.c.b16 %v6056, %v6056
    %v6075 = vunpack.c.l.b16 %v6034
    %v6076 = vunpack.c.l.b16 %v6035
    %v6077 = vunpack.c.l.b16 %v6036
    %v6078 = vunpack.c.l.b16 %v6037
    %v6079 = vunpack.c.l.b16 %v6038
    %v6080 = vunpack.c.l.b16 %v6039
    %v6081 = vunpack.c.l.b16 %v6040
    %v6082 = vunpack.c.l.b16 %v6041
    %v6083 = vunpack.c.l.b16 %v6042
    %v6084 = vunpack.c.l.b16 %v6043
    %v6085 = vunpack.c.l.b16 %v6044
    %v6086 = vunpack.c.l.b16 %v6045
    %v6087 = vunpack.c.l.b16 %v6046
    %v6088 = vunpack.c.l.b16 %v6047
    %v6089 = vunpack.c.l.b16 %v6048
    %v6090 = vunpack.c.l.b16 %v6049
    %v6091 = vpack.c.b16 %v6076, %v6075
    %v6092 = vpack.c.b16 %v6078, %v6077
    %v6093 = vpack.c.b16 %v6080, %v6079
    %v6094 = vpack.c.b16 %v6082, %v6081
    %v6095 = vpack.c.b16 %v6084, %v6083
    %v6096 = vpack.c.b16 %v6086, %v6085
    %v6097 = vpack.c.b16 %v6088, %v6087
    %v6098 = vpack.c.b16 %v6090, %v6089
    %6107 = vmatprep.subr.bf16.mxu0 0
    %6108 = vmatpush1.bf16.msra.mxu0 %v6098
    %6109 = vmatprep.subr.bf16.mxu0 0
    %6110 = vmatpush1.bf16.msra.mxu0 %v6097
    %6111 = vmatprep.subr.bf16.mxu0 0
    %6112 = vmatpush1.bf16.msra.mxu0 %v6096
    %6113 = vmatprep.subr.bf16.mxu0 0
    %6114 = vmatpush1.bf16.msra.mxu0 %v6095
    %6115 = vmatprep.subr.bf16.mxu0 0
    %6116 = vmatpush1.bf16.msra.mxu0 %v6094
    %6117 = vmatprep.subr.bf16.mxu0 0
    %6118 = vmatpush1.bf16.msra.mxu0 %v6093
    %6119 = vmatprep.subr.bf16.mxu0 0
    %6120 = vmatpush1.bf16.msra.mxu0 %v6092
    %6121 = vmatprep.subr.bf16.mxu0 0
    %6122 = vmatpush1.bf16.msra.mxu0 %v6091
    %6123 = vmatprep.subr.bf16.mxu0 0
    %6124 = vmatpush2.bf16.msra.mxu0 0
    %6125 = vmatprep.subr.bf16.mxu0 0
    %6126 = vmatpush2.bf16.msra.mxu0 0
    %6127 = vmatprep.subr.bf16.mxu0 0
    %6128 = vmatpush2.bf16.msra.mxu0 0
    %6129 = vmatprep.subr.bf16.mxu0 0
    %6130 = vmatpush2.bf16.msra.mxu0 0
    %6131 = vmatprep.subr.bf16.mxu0 0
    %6132 = vmatpush2.bf16.msra.mxu0 0
    %6133 = vmatprep.subr.bf16.mxu0 0
    %6134 = vmatpush2.bf16.msra.mxu0 0
    %6135 = vmatprep.subr.bf16.mxu0 0
    %6136 = vmatpush2.bf16.msra.mxu0 0
    %6137 = vmatprep.subr.bf16.mxu0 0
    %6138 = vmatpush2.bf16.msra.mxu0 0
    %6139 = vmatprep.mubr.bf16.mxu0 0
    %6140 = vmatmul.mubr.bf16.gmra.mxu0 %v6057
    %v6141 = vpop.f32.mrf.mxu0
    %v6142 = vadd.f32 0.0, %v6141
    %v6143 = vpop.f32.mrf.mxu0
    %v6144 = vpop.f32.mrf.mxu0
    %v6145 = vpop.f32.mrf.mxu0
    %6146 = vdwg.mxu0
    %v6147 = vrot.slane %v6053, 7
    %v6148 = vsel %vm6055, %v6147, %v6052
    %v6149 = vpack.c.b16 %v6148, %v6148
    %v6167 = vunpack.c.l.b16 %v6017
    %v6168 = vunpack.c.l.b16 %v6018
    %v6169 = vunpack.c.l.b16 %v6019
    %v6170 = vunpack.c.l.b16 %v6020
    %v6171 = vunpack.c.l.b16 %v6021
    %v6172 = vunpack.c.l.b16 %v6022
    %v6173 = vunpack.c.l.b16 %v6023
    %v6174 = vunpack.c.l.b16 %v6024
    %v6175 = vunpack.c.l.b16 %v6025
    %v6176 = vunpack.c.l.b16 %v6026
    %v6177 = vunpack.c.l.b16 %v6027
    %v6178 = vunpack.c.l.b16 %v6028
    %v6179 = vunpack.c.l.b16 %v6029
    %v6180 = vunpack.c.l.b16 %v6030
    %v6181 = vunpack.c.l.b16 %v6031
    %v6182 = vunpack.c.l.b16 %v6032
    %v6183 = vpack.c.b16 %v6168, %v6167
    %v6184 = vpack.c.b16 %v6170, %v6169
    %v6185 = vpack.c.b16 %v6172, %v6171
    %v6186 = vpack.c.b16 %v6174, %v6173
    %v6187 = vpack.c.b16 %v6176, %v6175
    %v6188 = vpack.c.b16 %v6178, %v6177
    %v6189 = vpack.c.b16 %v6180, %v6179
    %v6190 = vpack.c.b16 %v6182, %v6181
    %6199 = vmatprep.subr.bf16.mxu0 0
    %6200 = vmatpush1.bf16.msra.mxu0 %v6190
    %6201 = vmatprep.subr.bf16.mxu0 0
    %6202 = vmatpush1.bf16.msra.mxu0 %v6189
    %6203 = vmatprep.subr.bf16.mxu0 0
    %6204 = vmatpush1.bf16.msra.mxu0 %v6188
    %6205 = vmatprep.subr.bf16.mxu0 0
    %6206 = vmatpush1.bf16.msra.mxu0 %v6187
    %6207 = vmatprep.subr.bf16.mxu0 0
    %6208 = vmatpush1.bf16.msra.mxu0 %v6186
    %6209 = vmatprep.subr.bf16.mxu0 0
    %6210 = vmatpush1.bf16.msra.mxu0 %v6185
    %6211 = vmatprep.subr.bf16.mxu0 0
    %6212 = vmatpush1.bf16.msra.mxu0 %v6184
    %6213 = vmatprep.subr.bf16.mxu0 0
    %6214 = vmatpush1.bf16.msra.mxu0 %v6183
    %6215 = vmatprep.subr.bf16.mxu0 0
    %6216 = vmatpush2.bf16.msra.mxu0 0
    %6217 = vmatprep.subr.bf16.mxu0 0
    %6218 = vmatpush2.bf16.msra.mxu0 0
    %6219 = vmatprep.subr.bf16.mxu0 0
    %6220 = vmatpush2.bf16.msra.mxu0 0
    %6221 = vmatprep.subr.bf16.mxu0 0
    %6222 = vmatpush2.bf16.msra.mxu0 0
    %6223 = vmatprep.subr.bf16.mxu0 0
    %6224 = vmatpush2.bf16.msra.mxu0 0
    %6225 = vmatprep.subr.bf16.mxu0 0
    %6226 = vmatpush2.bf16.msra.mxu0 0
    %6227 = vmatprep.subr.bf16.mxu0 0
    %6228 = vmatpush2.bf16.msra.mxu0 0
    %6229 = vmatprep.subr.bf16.mxu0 0
    %6230 = vmatpush2.bf16.msra.mxu0 0
    %6231 = vmatprep.mubr.bf16.mxu0 0
    %6232 = vmatmul.mubr.bf16.gmra.mxu0 %v6149
    %v6233 = vpop.f32.mrf.mxu0
    %v6234 = vadd.f32 %v6142, %v6233
    %v6235 = vpop.f32.mrf.mxu0
    %v6236 = vpop.f32.mrf.mxu0
    %v6237 = vpop.f32.mrf.mxu0
    %6238 = vdwg.mxu0
    %s6239 = scalar_lea.vmem [#allocation15], 128
    %v6240 = vld [vmem:[%s6239] sm:$0xf]
    %v6241 = vld [vmem:[%s6239 + $0x4] sm:$0xf]
    %v6242 = vld [vmem:[%s6239 + $0x8] sm:$0xf]
    %v6243 = vld [vmem:[%s6239 + $0xc] sm:$0xf]
    %v6244 = vld [vmem:[%s6239 + $0x10] sm:$0xf]
    %v6245 = vld [vmem:[%s6239 + $0x14] sm:$0xf]
    %v6246 = vld [vmem:[%s6239 + $0x18] sm:$0xf]
    %v6247 = vld [vmem:[%s6239 + $0x1c] sm:$0xf]
    %v6248 = vld [vmem:[%s6239 + $0x20] sm:$0xf]
    %v6249 = vld [vmem:[%s6239 + $0x24] sm:$0xf]
    %v6250 = vld [vmem:[%s6239 + $0x28] sm:$0xf]
    %v6251 = vld [vmem:[%s6239 + $0x2c] sm:$0xf]
    %v6252 = vld [vmem:[%s6239 + $0x30] sm:$0xf]
    %v6253 = vld [vmem:[%s6239 + $0x34] sm:$0xf]
    %v6254 = vld [vmem:[%s6239 + $0x38] sm:$0xf]
    %v6255 = vld [vmem:[%s6239 + $0x3c] sm:$0xf]
    %v6256 = vrot.slane %v6052, 2
    %v6257 = vrot.slane %v6053, 1
    %v6258 = vsel %vm6055, %v6257, %v6256
    %v6259 = vpack.c.b16 %v6258, %v6258
    %v6277 = vunpack.c.l.b16 %v6240
    %v6278 = vunpack.c.l.b16 %v6241
    %v6279 = vunpack.c.l.b16 %v6242
    %v6280 = vunpack.c.l.b16 %v6243
    %v6281 = vunpack.c.l.b16 %v6244
    %v6282 = vunpack.c.l.b16 %v6245
    %v6283 = vunpack.c.l.b16 %v6246
    %v6284 = vunpack.c.l.b16 %v6247
    %v6285 = vunpack.c.l.b16 %v6248
    %v6286 = vunpack.c.l.b16 %v6249
    %v6287 = vunpack.c.l.b16 %v6250
    %v6288 = vunpack.c.l.b16 %v6251
    %v6289 = vunpack.c.l.b16 %v6252
    %v6290 = vunpack.c.l.b16 %v6253
    %v6291 = vunpack.c.l.b16 %v6254
    %v6292 = vunpack.c.l.b16 %v6255
    %v6293 = vpack.c.b16 %v6278, %v6277
    %v6294 = vpack.c.b16 %v6280, %v6279
    %v6295 = vpack.c.b16 %v6282, %v6281
    %v6296 = vpack.c.b16 %v6284, %v6283
    %v6297 = vpack.c.b16 %v6286, %v6285
    %v6298 = vpack.c.b16 %v6288, %v6287
    %v6299 = vpack.c.b16 %v6290, %v6289
    %v6300 = vpack.c.b16 %v6292, %v6291
    %6309 = vmatprep.subr.bf16.mxu0 0
    %6310 = vmatpush1.bf16.msra.mxu0 %v6300
    %6311 = vmatprep.subr.bf16.mxu0 0
    %6312 = vmatpush1.bf16.msra.mxu0 %v6299
    %6313 = vmatprep.subr.bf16.mxu0 0
    %6314 = vmatpush1.bf16.msra.mxu0 %v6298
    %6315 = vmatprep.subr.bf16.mxu0 0
    %6316 = vmatpush1.bf16.msra.mxu0 %v6297
    %6317 = vmatprep.subr.bf16.mxu0 0
    %6318 = vmatpush1.bf16.msra.mxu0 %v6296
    %6319 = vmatprep.subr.bf16.mxu0 0
    %6320 = vmatpush1.bf16.msra.mxu0 %v6295
    %6321 = vmatprep.subr.bf16.mxu0 0
    %6322 = vmatpush1.bf16.msra.mxu0 %v6294
    %6323 = vmatprep.subr.bf16.mxu0 0
    %6324 = vmatpush1.bf16.msra.mxu0 %v6293
    %6325 = vmatprep.subr.bf16.mxu0 0
    %6326 = vmatpush2.bf16.msra.mxu0 0
    %6327 = vmatprep.subr.bf16.mxu0 0
    %6328 = vmatpush2.bf16.msra.mxu0 0
    %6329 = vmatprep.subr.bf16.mxu0 0
    %6330 = vmatpush2.bf16.msra.mxu0 0
    %6331 = vmatprep.subr.bf16.mxu0 0
    %6332 = vmatpush2.bf16.msra.mxu0 0
    %6333 = vmatprep.subr.bf16.mxu0 0
    %6334 = vmatpush2.bf16.msra.mxu0 0
    %6335 = vmatprep.subr.bf16.mxu0 0
    %6336 = vmatpush2.bf16.msra.mxu0 0
    %6337 = vmatprep.subr.bf16.mxu0 0
    %6338 = vmatpush2.bf16.msra.mxu0 0
    %6339 = vmatprep.subr.bf16.mxu0 0
    %6340 = vmatpush2.bf16.msra.mxu0 0
    %6341 = vmatprep.mubr.bf16.mxu0 0
    %6342 = vmatmul.mubr.bf16.gmra.mxu0 %v6259
    %v6343 = vpop.f32.mrf.mxu0
    %v6344 = vadd.f32 0.0, %v6343
    %v6345 = vpop.f32.mrf.mxu0
    %v6346 = vpop.f32.mrf.mxu0
    %v6347 = vpop.f32.mrf.mxu0
    %6348 = vdwg.mxu0
    %v6349 = vadd.f32 %v6234, %v6344
    %s6350 = scalar_lea.vmem [#allocation15], 192
    %v6351 = vld [vmem:[%s6350] sm:$0xf]
    %v6352 = vld [vmem:[%s6350 + $0x4] sm:$0xf]
    %v6353 = vld [vmem:[%s6350 + $0x8] sm:$0xf]
    %v6354 = vld [vmem:[%s6350 + $0xc] sm:$0xf]
    %v6355 = vld [vmem:[%s6350 + $0x10] sm:$0xf]
    %v6356 = vld [vmem:[%s6350 + $0x14] sm:$0xf]
    %v6357 = vld [vmem:[%s6350 + $0x18] sm:$0xf]
    %v6358 = vld [vmem:[%s6350 + $0x1c] sm:$0xf]
    %v6359 = vld [vmem:[%s6350 + $0x20] sm:$0xf]
    %v6360 = vld [vmem:[%s6350 + $0x24] sm:$0xf]
    %v6361 = vld [vmem:[%s6350 + $0x28] sm:$0xf]
    %v6362 = vld [vmem:[%s6350 + $0x2c] sm:$0xf]
    %v6363 = vld [vmem:[%s6350 + $0x30] sm:$0xf]
    %v6364 = vld [vmem:[%s6350 + $0x34] sm:$0xf]
    %v6365 = vld [vmem:[%s6350 + $0x38] sm:$0xf]
    %v6366 = vld [vmem:[%s6350 + $0x3c] sm:$0xf]
    %v6367 = vrot.slane %v6052, 3
    %v6368 = vrot.slane %v6053, 2
    %v6369 = vsel %vm6055, %v6368, %v6367
    %v6370 = vpack.c.b16 %v6369, %v6369
    %v6388 = vunpack.c.l.b16 %v6351
    %v6389 = vunpack.c.l.b16 %v6352
    %v6390 = vunpack.c.l.b16 %v6353
    %v6391 = vunpack.c.l.b16 %v6354
    %v6392 = vunpack.c.l.b16 %v6355
    %v6393 = vunpack.c.l.b16 %v6356
    %v6394 = vunpack.c.l.b16 %v6357
    %v6395 = vunpack.c.l.b16 %v6358
    %v6396 = vunpack.c.l.b16 %v6359
    %v6397 = vunpack.c.l.b16 %v6360
    %v6398 = vunpack.c.l.b16 %v6361
    %v6399 = vunpack.c.l.b16 %v6362
    %v6400 = vunpack.c.l.b16 %v6363
    %v6401 = vunpack.c.l.b16 %v6364
    %v6402 = vunpack.c.l.b16 %v6365
    %v6403 = vunpack.c.l.b16 %v6366
    %v6404 = vpack.c.b16 %v6389, %v6388
    %v6405 = vpack.c.b16 %v6391, %v6390
    %v6406 = vpack.c.b16 %v6393, %v6392
    %v6407 = vpack.c.b16 %v6395, %v6394
    %v6408 = vpack.c.b16 %v6397, %v6396
    %v6409 = vpack.c.b16 %v6399, %v6398
    %v6410 = vpack.c.b16 %v6401, %v6400
    %v6411 = vpack.c.b16 %v6403, %v6402
    %6420 = vmatprep.subr.bf16.mxu0 0
    %6421 = vmatpush1.bf16.msra.mxu0 %v6411
    %6422 = vmatprep.subr.bf16.mxu0 0
    %6423 = vmatpush1.bf16.msra.mxu0 %v6410
    %6424 = vmatprep.subr.bf16.mxu0 0
    %6425 = vmatpush1.bf16.msra.mxu0 %v6409
    %6426 = vmatprep.subr.bf16.mxu0 0
    %6427 = vmatpush1.bf16.msra.mxu0 %v6408
    %6428 = vmatprep.subr.bf16.mxu0 0
    %6429 = vmatpush1.bf16.msra.mxu0 %v6407
    %6430 = vmatprep.subr.bf16.mxu0 0
    %6431 = vmatpush1.bf16.msra.mxu0 %v6406
    %6432 = vmatprep.subr.bf16.mxu0 0
    %6433 = vmatpush1.bf16.msra.mxu0 %v6405
    %6434 = vmatprep.subr.bf16.mxu0 0
    %6435 = vmatpush1.bf16.msra.mxu0 %v6404
    %6436 = vmatprep.subr.bf16.mxu0 0
    %6437 = vmatpush2.bf16.msra.mxu0 0
    %6438 = vmatprep.subr.bf16.mxu0 0
    %6439 = vmatpush2.bf16.msra.mxu0 0
    %6440 = vmatprep.subr.bf16.mxu0 0
    %6441 = vmatpush2.bf16.msra.mxu0 0
    %6442 = vmatprep.subr.bf16.mxu0 0
    %6443 = vmatpush2.bf16.msra.mxu0 0
    %6444 = vmatprep.subr.bf16.mxu0 0
    %6445 = vmatpush2.bf16.msra.mxu0 0
    %6446 = vmatprep.subr.bf16.mxu0 0
    %6447 = vmatpush2.bf16.msra.mxu0 0
    %6448 = vmatprep.subr.bf16.mxu0 0
    %6449 = vmatpush2.bf16.msra.mxu0 0
    %6450 = vmatprep.subr.bf16.mxu0 0
    %6451 = vmatpush2.bf16.msra.mxu0 0
    %6452 = vmatprep.mubr.bf16.mxu0 0
    %6453 = vmatmul.mubr.bf16.gmra.mxu0 %v6370
    %v6454 = vpop.f32.mrf.mxu0
    %v6455 = vadd.f32 0.0, %v6454
    %v6456 = vpop.f32.mrf.mxu0
    %v6457 = vpop.f32.mrf.mxu0
    %v6458 = vpop.f32.mrf.mxu0
    %6459 = vdwg.mxu0
    %v6460 = vadd.f32 %v6349, %v6455
    %s6461 = scalar_lea.vmem [#allocation15], 256
    %v6462 = vld [vmem:[%s6461] sm:$0xf]
    %v6463 = vld [vmem:[%s6461 + $0x4] sm:$0xf]
    %v6464 = vld [vmem:[%s6461 + $0x8] sm:$0xf]
    %v6465 = vld [vmem:[%s6461 + $0xc] sm:$0xf]
    %v6466 = vld [vmem:[%s6461 + $0x10] sm:$0xf]
    %v6467 = vld [vmem:[%s6461 + $0x14] sm:$0xf]
    %v6468 = vld [vmem:[%s6461 + $0x18] sm:$0xf]
    %v6469 = vld [vmem:[%s6461 + $0x1c] sm:$0xf]
    %v6470 = vld [vmem:[%s6461 + $0x20] sm:$0xf]
    %v6471 = vld [vmem:[%s6461 + $0x24] sm:$0xf]
    %v6472 = vld [vmem:[%s6461 + $0x28] sm:$0xf]
    %v6473 = vld [vmem:[%s6461 + $0x2c] sm:$0xf]
    %v6474 = vld [vmem:[%s6461 + $0x30] sm:$0xf]
    %v6475 = vld [vmem:[%s6461 + $0x34] sm:$0xf]
    %v6476 = vld [vmem:[%s6461 + $0x38] sm:$0xf]
    %v6477 = vld [vmem:[%s6461 + $0x3c] sm:$0xf]
    %v6478 = vrot.slane %v6052, 4
    %v6479 = vrot.slane %v6053, 3
    %v6480 = vsel %vm6055, %v6479, %v6478
    %v6481 = vpack.c.b16 %v6480, %v6480
    %v6499 = vunpack.c.l.b16 %v6462
    %v6500 = vunpack.c.l.b16 %v6463
    %v6501 = vunpack.c.l.b16 %v6464
    %v6502 = vunpack.c.l.b16 %v6465
    %v6503 = vunpack.c.l.b16 %v6466
    %v6504 = vunpack.c.l.b16 %v6467
    %v6505 = vunpack.c.l.b16 %v6468
    %v6506 = vunpack.c.l.b16 %v6469
    %v6507 = vunpack.c.l.b16 %v6470
    %v6508 = vunpack.c.l.b16 %v6471
    %v6509 = vunpack.c.l.b16 %v6472
    %v6510 = vunpack.c.l.b16 %v6473
    %v6511 = vunpack.c.l.b16 %v6474
    %v6512 = vunpack.c.l.b16 %v6475
    %v6513 = vunpack.c.l.b16 %v6476
    %v6514 = vunpack.c.l.b16 %v6477
    %v6515 = vpack.c.b16 %v6500, %v6499
    %v6516 = vpack.c.b16 %v6502, %v6501
    %v6517 = vpack.c.b16 %v6504, %v6503
    %v6518 = vpack.c.b16 %v6506, %v6505
    %v6519 = vpack.c.b16 %v6508, %v6507
    %v6520 = vpack.c.b16 %v6510, %v6509
    %v6521 = vpack.c.b16 %v6512, %v6511
    %v6522 = vpack.c.b16 %v6514, %v6513
    %6531 = vmatprep.subr.bf16.mxu0 0
    %6532 = vmatpush1.bf16.msra.mxu0 %v6522
    %6533 = vmatprep.subr.bf16.mxu0 0
    %6534 = vmatpush1.bf16.msra.mxu0 %v6521
    %6535 = vmatprep.subr.bf16.mxu0 0
    %6536 = vmatpush1.bf16.msra.mxu0 %v6520
    %6537 = vmatprep.subr.bf16.mxu0 0
    %6538 = vmatpush1.bf16.msra.mxu0 %v6519
    %6539 = vmatprep.subr.bf16.mxu0 0
    %6540 = vmatpush1.bf16.msra.mxu0 %v6518
    %6541 = vmatprep.subr.bf16.mxu0 0
    %6542 = vmatpush1.bf16.msra.mxu0 %v6517
    %6543 = vmatprep.subr.bf16.mxu0 0
    %6544 = vmatpush1.bf16.msra.mxu0 %v6516
    %6545 = vmatprep.subr.bf16.mxu0 0
    %6546 = vmatpush1.bf16.msra.mxu0 %v6515
    %6547 = vmatprep.subr.bf16.mxu0 0
    %6548 = vmatpush2.bf16.msra.mxu0 0
    %6549 = vmatprep.subr.bf16.mxu0 0
    %6550 = vmatpush2.bf16.msra.mxu0 0
    %6551 = vmatprep.subr.bf16.mxu0 0
    %6552 = vmatpush2.bf16.msra.mxu0 0
    %6553 = vmatprep.subr.bf16.mxu0 0
    %6554 = vmatpush2.bf16.msra.mxu0 0
    %6555 = vmatprep.subr.bf16.mxu0 0
    %6556 = vmatpush2.bf16.msra.mxu0 0
    %6557 = vmatprep.subr.bf16.mxu0 0
    %6558 = vmatpush2.bf16.msra.mxu0 0
    %6559 = vmatprep.subr.bf16.mxu0 0
    %6560 = vmatpush2.bf16.msra.mxu0 0
    %6561 = vmatprep.subr.bf16.mxu0 0
    %6562 = vmatpush2.bf16.msra.mxu0 0
    %6563 = vmatprep.mubr.bf16.mxu0 0
    %6564 = vmatmul.mubr.bf16.gmra.mxu0 %v6481
    %v6565 = vpop.f32.mrf.mxu0
    %v6566 = vadd.f32 0.0, %v6565
    %v6567 = vpop.f32.mrf.mxu0
    %v6568 = vpop.f32.mrf.mxu0
    %v6569 = vpop.f32.mrf.mxu0
    %6570 = vdwg.mxu0
    %v6571 = vadd.f32 %v6460, %v6566
    %s6572 = scalar_lea.vmem [#allocation15], 320
    %v6573 = vld [vmem:[%s6572] sm:$0xf]
    %v6574 = vld [vmem:[%s6572 + $0x4] sm:$0xf]
    %v6575 = vld [vmem:[%s6572 + $0x8] sm:$0xf]
    %v6576 = vld [vmem:[%s6572 + $0xc] sm:$0xf]
    %v6577 = vld [vmem:[%s6572 + $0x10] sm:$0xf]
    %v6578 = vld [vmem:[%s6572 + $0x14] sm:$0xf]
    %v6579 = vld [vmem:[%s6572 + $0x18] sm:$0xf]
    %v6580 = vld [vmem:[%s6572 + $0x1c] sm:$0xf]
    %v6581 = vld [vmem:[%s6572 + $0x20] sm:$0xf]
    %v6582 = vld [vmem:[%s6572 + $0x24] sm:$0xf]
    %v6583 = vld [vmem:[%s6572 + $0x28] sm:$0xf]
    %v6584 = vld [vmem:[%s6572 + $0x2c] sm:$0xf]
    %v6585 = vld [vmem:[%s6572 + $0x30] sm:$0xf]
    %v6586 = vld [vmem:[%s6572 + $0x34] sm:$0xf]
    %v6587 = vld [vmem:[%s6572 + $0x38] sm:$0xf]
    %v6588 = vld [vmem:[%s6572 + $0x3c] sm:$0xf]
    %v6589 = vrot.slane %v6052, 5
    %v6590 = vrot.slane %v6053, 4
    %v6591 = vsel %vm6055, %v6590, %v6589
    %v6592 = vpack.c.b16 %v6591, %v6591
    %v6610 = vunpack.c.l.b16 %v6573
    %v6611 = vunpack.c.l.b16 %v6574
    %v6612 = vunpack.c.l.b16 %v6575
    %v6613 = vunpack.c.l.b16 %v6576
    %v6614 = vunpack.c.l.b16 %v6577
    %v6615 = vunpack.c.l.b16 %v6578
    %v6616 = vunpack.c.l.b16 %v6579
    %v6617 = vunpack.c.l.b16 %v6580
    %v6618 = vunpack.c.l.b16 %v6581
    %v6619 = vunpack.c.l.b16 %v6582
    %v6620 = vunpack.c.l.b16 %v6583
    %v6621 = vunpack.c.l.b16 %v6584
    %v6622 = vunpack.c.l.b16 %v6585
    %v6623 = vunpack.c.l.b16 %v6586
    %v6624 = vunpack.c.l.b16 %v6587
    %v6625 = vunpack.c.l.b16 %v6588
    %v6626 = vpack.c.b16 %v6611, %v6610
    %v6627 = vpack.c.b16 %v6613, %v6612
    %v6628 = vpack.c.b16 %v6615, %v6614
    %v6629 = vpack.c.b16 %v6617, %v6616
    %v6630 = vpack.c.b16 %v6619, %v6618
    %v6631 = vpack.c.b16 %v6621, %v6620
    %v6632 = vpack.c.b16 %v6623, %v6622
    %v6633 = vpack.c.b16 %v6625, %v6624
    %6642 = vmatprep.subr.bf16.mxu0 0
    %6643 = vmatpush1.bf16.msra.mxu0 %v6633
    %6644 = vmatprep.subr.bf16.mxu0 0
    %6645 = vmatpush1.bf16.msra.mxu0 %v6632
    %6646 = vmatprep.subr.bf16.mxu0 0
    %6647 = vmatpush1.bf16.msra.mxu0 %v6631
    %6648 = vmatprep.subr.bf16.mxu0 0
    %6649 = vmatpush1.bf16.msra.mxu0 %v6630
    %6650 = vmatprep.subr.bf16.mxu0 0
    %6651 = vmatpush1.bf16.msra.mxu0 %v6629
    %6652 = vmatprep.subr.bf16.mxu0 0
    %6653 = vmatpush1.bf16.msra.mxu0 %v6628
    %6654 = vmatprep.subr.bf16.mxu0 0
    %6655 = vmatpush1.bf16.msra.mxu0 %v6627
    %6656 = vmatprep.subr.bf16.mxu0 0
    %6657 = vmatpush1.bf16.msra.mxu0 %v6626
    %6658 = vmatprep.subr.bf16.mxu0 0
    %6659 = vmatpush2.bf16.msra.mxu0 0
    %6660 = vmatprep.subr.bf16.mxu0 0
    %6661 = vmatpush2.bf16.msra.mxu0 0
    %6662 = vmatprep.subr.bf16.mxu0 0
    %6663 = vmatpush2.bf16.msra.mxu0 0
    %6664 = vmatprep.subr.bf16.mxu0 0
    %6665 = vmatpush2.bf16.msra.mxu0 0
    %6666 = vmatprep.subr.bf16.mxu0 0
    %6667 = vmatpush2.bf16.msra.mxu0 0
    %6668 = vmatprep.subr.bf16.mxu0 0
    %6669 = vmatpush2.bf16.msra.mxu0 0
    %6670 = vmatprep.subr.bf16.mxu0 0
    %6671 = vmatpush2.bf16.msra.mxu0 0
    %6672 = vmatprep.subr.bf16.mxu0 0
    %6673 = vmatpush2.bf16.msra.mxu0 0
    %6674 = vmatprep.mubr.bf16.mxu0 0
    %6675 = vmatmul.mubr.bf16.gmra.mxu0 %v6592
    %v6676 = vpop.f32.mrf.mxu0
    %v6677 = vadd.f32 0.0, %v6676
    %v6678 = vpop.f32.mrf.mxu0
    %v6679 = vpop.f32.mrf.mxu0
    %v6680 = vpop.f32.mrf.mxu0
    %6681 = vdwg.mxu0
    %v6682 = vadd.f32 %v6571, %v6677
    %s6683 = scalar_lea.vmem [#allocation15], 384
    %v6684 = vld [vmem:[%s6683] sm:$0xf]
    %v6685 = vld [vmem:[%s6683 + $0x4] sm:$0xf]
    %v6686 = vld [vmem:[%s6683 + $0x8] sm:$0xf]
    %v6687 = vld [vmem:[%s6683 + $0xc] sm:$0xf]
    %v6688 = vld [vmem:[%s6683 + $0x10] sm:$0xf]
    %v6689 = vld [vmem:[%s6683 + $0x14] sm:$0xf]
    %v6690 = vld [vmem:[%s6683 + $0x18] sm:$0xf]
    %v6691 = vld [vmem:[%s6683 + $0x1c] sm:$0xf]
    %v6692 = vld [vmem:[%s6683 + $0x20] sm:$0xf]
    %v6693 = vld [vmem:[%s6683 + $0x24] sm:$0xf]
    %v6694 = vld [vmem:[%s6683 + $0x28] sm:$0xf]
    %v6695 = vld [vmem:[%s6683 + $0x2c] sm:$0xf]
    %v6696 = vld [vmem:[%s6683 + $0x30] sm:$0xf]
    %v6697 = vld [vmem:[%s6683 + $0x34] sm:$0xf]
    %v6698 = vld [vmem:[%s6683 + $0x38] sm:$0xf]
    %v6699 = vld [vmem:[%s6683 + $0x3c] sm:$0xf]
    %v6700 = vrot.slane %v6052, 6
    %v6701 = vrot.slane %v6053, 5
    %v6702 = vsel %vm6055, %v6701, %v6700
    %v6703 = vpack.c.b16 %v6702, %v6702
    %v6721 = vunpack.c.l.b16 %v6684
    %v6722 = vunpack.c.l.b16 %v6685
    %v6723 = vunpack.c.l.b16 %v6686
    %v6724 = vunpack.c.l.b16 %v6687
    %v6725 = vunpack.c.l.b16 %v6688
    %v6726 = vunpack.c.l.b16 %v6689
    %v6727 = vunpack.c.l.b16 %v6690
    %v6728 = vunpack.c.l.b16 %v6691
    %v6729 = vunpack.c.l.b16 %v6692
    %v6730 = vunpack.c.l.b16 %v6693
    %v6731 = vunpack.c.l.b16 %v6694
    %v6732 = vunpack.c.l.b16 %v6695
    %v6733 = vunpack.c.l.b16 %v6696
    %v6734 = vunpack.c.l.b16 %v6697
    %v6735 = vunpack.c.l.b16 %v6698
    %v6736 = vunpack.c.l.b16 %v6699
    %v6737 = vpack.c.b16 %v6722, %v6721
    %v6738 = vpack.c.b16 %v6724, %v6723
    %v6739 = vpack.c.b16 %v6726, %v6725
    %v6740 = vpack.c.b16 %v6728, %v6727
    %v6741 = vpack.c.b16 %v6730, %v6729
    %v6742 = vpack.c.b16 %v6732, %v6731
    %v6743 = vpack.c.b16 %v6734, %v6733
    %v6744 = vpack.c.b16 %v6736, %v6735
    %6753 = vmatprep.subr.bf16.mxu0 0
    %6754 = vmatpush1.bf16.msra.mxu0 %v6744
    %6755 = vmatprep.subr.bf16.mxu0 0
    %6756 = vmatpush1.bf16.msra.mxu0 %v6743
    %6757 = vmatprep.subr.bf16.mxu0 0
    %6758 = vmatpush1.bf16.msra.mxu0 %v6742
    %6759 = vmatprep.subr.bf16.mxu0 0
    %6760 = vmatpush1.bf16.msra.mxu0 %v6741
    %6761 = vmatprep.subr.bf16.mxu0 0
    %6762 = vmatpush1.bf16.msra.mxu0 %v6740
    %6763 = vmatprep.subr.bf16.mxu0 0
    %6764 = vmatpush1.bf16.msra.mxu0 %v6739
    %6765 = vmatprep.subr.bf16.mxu0 0
    %6766 = vmatpush1.bf16.msra.mxu0 %v6738
    %6767 = vmatprep.subr.bf16.mxu0 0
    %6768 = vmatpush1.bf16.msra.mxu0 %v6737
    %6769 = vmatprep.subr.bf16.mxu0 0
    %6770 = vmatpush2.bf16.msra.mxu0 0
    %6771 = vmatprep.subr.bf16.mxu0 0
    %6772 = vmatpush2.bf16.msra.mxu0 0
    %6773 = vmatprep.subr.bf16.mxu0 0
    %6774 = vmatpush2.bf16.msra.mxu0 0
    %6775 = vmatprep.subr.bf16.mxu0 0
    %6776 = vmatpush2.bf16.msra.mxu0 0
    %6777 = vmatprep.subr.bf16.mxu0 0
    %6778 = vmatpush2.bf16.msra.mxu0 0
    %6779 = vmatprep.subr.bf16.mxu0 0
    %6780 = vmatpush2.bf16.msra.mxu0 0
    %6781 = vmatprep.subr.bf16.mxu0 0
    %6782 = vmatpush2.bf16.msra.mxu0 0
    %6783 = vmatprep.subr.bf16.mxu0 0
    %6784 = vmatpush2.bf16.msra.mxu0 0
    %6785 = vmatprep.mubr.bf16.mxu0 0
    %6786 = vmatmul.mubr.bf16.gmra.mxu0 %v6703
    %v6787 = vpop.f32.mrf.mxu0
    %v6788 = vadd.f32 0.0, %v6787
    %v6789 = vpop.f32.mrf.mxu0
    %v6790 = vpop.f32.mrf.mxu0
    %v6791 = vpop.f32.mrf.mxu0
    %6792 = vdwg.mxu0
    %v6793 = vadd.f32 %v6682, %v6788
    %s6794 = scalar_lea.vmem [#allocation15], 448
    %v6795 = vld [vmem:[%s6794] sm:$0xf]
    %v6796 = vld [vmem:[%s6794 + $0x4] sm:$0xf]
    %v6797 = vld [vmem:[%s6794 + $0x8] sm:$0xf]
    %v6798 = vld [vmem:[%s6794 + $0xc] sm:$0xf]
    %v6799 = vld [vmem:[%s6794 + $0x10] sm:$0xf]
    %v6800 = vld [vmem:[%s6794 + $0x14] sm:$0xf]
    %v6801 = vld [vmem:[%s6794 + $0x18] sm:$0xf]
    %v6802 = vld [vmem:[%s6794 + $0x1c] sm:$0xf]
    %v6803 = vld [vmem:[%s6794 + $0x20] sm:$0xf]
    %v6804 = vld [vmem:[%s6794 + $0x24] sm:$0xf]
    %v6805 = vld [vmem:[%s6794 + $0x28] sm:$0xf]
    %v6806 = vld [vmem:[%s6794 + $0x2c] sm:$0xf]
    %v6807 = vld [vmem:[%s6794 + $0x30] sm:$0xf]
    %v6808 = vld [vmem:[%s6794 + $0x34] sm:$0xf]
    %v6809 = vld [vmem:[%s6794 + $0x38] sm:$0xf]
    %v6810 = vld [vmem:[%s6794 + $0x3c] sm:$0xf]
    %v6811 = vrot.slane %v6052, 7
    %v6812 = vrot.slane %v6053, 6
    %v6813 = vsel %vm6055, %v6812, %v6811
    %v6814 = vpack.c.b16 %v6813, %v6813
    %v6832 = vunpack.c.l.b16 %v6795
    %v6833 = vunpack.c.l.b16 %v6796
    %v6834 = vunpack.c.l.b16 %v6797
    %v6835 = vunpack.c.l.b16 %v6798
    %v6836 = vunpack.c.l.b16 %v6799
    %v6837 = vunpack.c.l.b16 %v6800
    %v6838 = vunpack.c.l.b16 %v6801
    %v6839 = vunpack.c.l.b16 %v6802
    %v6840 = vunpack.c.l.b16 %v6803
    %v6841 = vunpack.c.l.b16 %v6804
    %v6842 = vunpack.c.l.b16 %v6805
    %v6843 = vunpack.c.l.b16 %v6806
    %v6844 = vunpack.c.l.b16 %v6807
    %v6845 = vunpack.c.l.b16 %v6808
    %v6846 = vunpack.c.l.b16 %v6809
    %v6847 = vunpack.c.l.b16 %v6810
    %v6848 = vpack.c.b16 %v6833, %v6832
    %v6849 = vpack.c.b16 %v6835, %v6834
    %v6850 = vpack.c.b16 %v6837, %v6836
    %v6851 = vpack.c.b16 %v6839, %v6838
    %v6852 = vpack.c.b16 %v6841, %v6840
    %v6853 = vpack.c.b16 %v6843, %v6842
    %v6854 = vpack.c.b16 %v6845, %v6844
    %v6855 = vpack.c.b16 %v6847, %v6846
    %6864 = vmatprep.subr.bf16.mxu0 0
    %6865 = vmatpush1.bf16.msra.mxu0 %v6855
    %6866 = vmatprep.subr.bf16.mxu0 0
    %6867 = vmatpush1.bf16.msra.mxu0 %v6854
    %6868 = vmatprep.subr.bf16.mxu0 0
    %6869 = vmatpush1.bf16.msra.mxu0 %v6853
    %6870 = vmatprep.subr.bf16.mxu0 0
    %6871 = vmatpush1.bf16.msra.mxu0 %v6852
    %6872 = vmatprep.subr.bf16.mxu0 0
    %6873 = vmatpush1.bf16.msra.mxu0 %v6851
    %6874 = vmatprep.subr.bf16.mxu0 0
    %6875 = vmatpush1.bf16.msra.mxu0 %v6850
    %6876 = vmatprep.subr.bf16.mxu0 0
    %6877 = vmatpush1.bf16.msra.mxu0 %v6849
    %6878 = vmatprep.subr.bf16.mxu0 0
    %6879 = vmatpush1.bf16.msra.mxu0 %v6848
    %6880 = vmatprep.subr.bf16.mxu0 0
    %6881 = vmatpush2.bf16.msra.mxu0 0
    %6882 = vmatprep.subr.bf16.mxu0 0
    %6883 = vmatpush2.bf16.msra.mxu0 0
    %6884 = vmatprep.subr.bf16.mxu0 0
    %6885 = vmatpush2.bf16.msra.mxu0 0
    %6886 = vmatprep.subr.bf16.mxu0 0
    %6887 = vmatpush2.bf16.msra.mxu0 0
    %6888 = vmatprep.subr.bf16.mxu0 0
    %6889 = vmatpush2.bf16.msra.mxu0 0
    %6890 = vmatprep.subr.bf16.mxu0 0
    %6891 = vmatpush2.bf16.msra.mxu0 0
    %6892 = vmatprep.subr.bf16.mxu0 0
    %6893 = vmatpush2.bf16.msra.mxu0 0
    %6894 = vmatprep.subr.bf16.mxu0 0
    %6895 = vmatpush2.bf16.msra.mxu0 0
    %6896 = vmatprep.mubr.bf16.mxu0 0
    %6897 = vmatmul.mubr.bf16.gmra.mxu0 %v6814
    %v6898 = vpop.f32.mrf.mxu0
    %v6899 = vadd.f32 0.0, %v6898
    %v6900 = vpop.f32.mrf.mxu0
    %v6901 = vpop.f32.mrf.mxu0
    %v6902 = vpop.f32.mrf.mxu0
    %6903 = vdwg.mxu0
    %v6904 = vadd.f32 %v6793, %v6899
    %s6905 = scalar_lea.vmem [#allocation15], 512
    %v6906 = vld [vmem:[%s6905] sm:$0xf]
    %v6907 = vld [vmem:[%s6905 + $0x4] sm:$0xf]
    %v6908 = vld [vmem:[%s6905 + $0x8] sm:$0xf]
    %v6909 = vld [vmem:[%s6905 + $0xc] sm:$0xf]
    %v6910 = vld [vmem:[%s6905 + $0x10] sm:$0xf]
    %v6911 = vld [vmem:[%s6905 + $0x14] sm:$0xf]
    %v6912 = vld [vmem:[%s6905 + $0x18] sm:$0xf]
    %v6913 = vld [vmem:[%s6905 + $0x1c] sm:$0xf]
    %v6914 = vld [vmem:[%s6905 + $0x20] sm:$0xf]
    %v6915 = vld [vmem:[%s6905 + $0x24] sm:$0xf]
    %v6916 = vld [vmem:[%s6905 + $0x28] sm:$0xf]
    %v6917 = vld [vmem:[%s6905 + $0x2c] sm:$0xf]
    %v6918 = vld [vmem:[%s6905 + $0x30] sm:$0xf]
    %v6919 = vld [vmem:[%s6905 + $0x34] sm:$0xf]
    %v6920 = vld [vmem:[%s6905 + $0x38] sm:$0xf]
    %v6921 = vld [vmem:[%s6905 + $0x3c] sm:$0xf]
    %v6922 = vunpack.c.h.b16 %v6015
    %v6923 = vunpack.c.h.b16 %v6016
    %v6924 = vrot.slane %v6923, 7
    %v6925 = vsel %vm6055, %v6924, %v6922
    %v6926 = vpack.c.b16 %v6925, %v6925
    %v6944 = vunpack.c.l.b16 %v6906
    %v6945 = vunpack.c.l.b16 %v6907
    %v6946 = vunpack.c.l.b16 %v6908
    %v6947 = vunpack.c.l.b16 %v6909
    %v6948 = vunpack.c.l.b16 %v6910
    %v6949 = vunpack.c.l.b16 %v6911
    %v6950 = vunpack.c.l.b16 %v6912
    %v6951 = vunpack.c.l.b16 %v6913
    %v6952 = vunpack.c.l.b16 %v6914
    %v6953 = vunpack.c.l.b16 %v6915
    %v6954 = vunpack.c.l.b16 %v6916
    %v6955 = vunpack.c.l.b16 %v6917
    %v6956 = vunpack.c.l.b16 %v6918
    %v6957 = vunpack.c.l.b16 %v6919
    %v6958 = vunpack.c.l.b16 %v6920
    %v6959 = vunpack.c.l.b16 %v6921
    %v6960 = vpack.c.b16 %v6945, %v6944
    %v6961 = vpack.c.b16 %v6947, %v6946
    %v6962 = vpack.c.b16 %v6949, %v6948
    %v6963 = vpack.c.b16 %v6951, %v6950
    %v6964 = vpack.c.b16 %v6953, %v6952
    %v6965 = vpack.c.b16 %v6955, %v6954
    %v6966 = vpack.c.b16 %v6957, %v6956
    %v6967 = vpack.c.b16 %v6959, %v6958
    %6976 = vmatprep.subr.bf16.mxu0 0
    %6977 = vmatpush1.bf16.msra.mxu0 %v6967
    %6978 = vmatprep.subr.bf16.mxu0 0
    %6979 = vmatpush1.bf16.msra.mxu0 %v6966
    %6980 = vmatprep.subr.bf16.mxu0 0
    %6981 = vmatpush1.bf16.msra.mxu0 %v6965
    %6982 = vmatprep.subr.bf16.mxu0 0
    %6983 = vmatpush1.bf16.msra.mxu0 %v6964
    %6984 = vmatprep.subr.bf16.mxu0 0
    %6985 = vmatpush1.bf16.msra.mxu0 %v6963
    %6986 = vmatprep.subr.bf16.mxu0 0
    %6987 = vmatpush1.bf16.msra.mxu0 %v6962
    %6988 = vmatprep.subr.bf16.mxu0 0
    %6989 = vmatpush1.bf16.msra.mxu0 %v6961
    %6990 = vmatprep.subr.bf16.mxu0 0
    %6991 = vmatpush1.bf16.msra.mxu0 %v6960
    %6992 = vmatprep.subr.bf16.mxu0 0
    %6993 = vmatpush2.bf16.msra.mxu0 0
    %6994 = vmatprep.subr.bf16.mxu0 0
    %6995 = vmatpush2.bf16.msra.mxu0 0
    %6996 = vmatprep.subr.bf16.mxu0 0
    %6997 = vmatpush2.bf16.msra.mxu0 0
    %6998 = vmatprep.subr.bf16.mxu0 0
    %6999 = vmatpush2.bf16.msra.mxu0 0
    %7000 = vmatprep.subr.bf16.mxu0 0
    %7001 = vmatpush2.bf16.msra.mxu0 0
    %7002 = vmatprep.subr.bf16.mxu0 0
    %7003 = vmatpush2.bf16.msra.mxu0 0
    %7004 = vmatprep.subr.bf16.mxu0 0
    %7005 = vmatpush2.bf16.msra.mxu0 0
    %7006 = vmatprep.subr.bf16.mxu0 0
    %7007 = vmatpush2.bf16.msra.mxu0 0
    %7008 = vmatprep.mubr.bf16.mxu0 0
    %7009 = vmatmul.mubr.bf16.gmra.mxu0 %v6926
    %v7010 = vpop.f32.mrf.mxu0
    %v7011 = vadd.f32 0.0, %v7010
    %v7012 = vpop.f32.mrf.mxu0
    %v7013 = vpop.f32.mrf.mxu0
    %v7014 = vpop.f32.mrf.mxu0
    %7015 = vdwg.mxu0
    %v7016 = vadd.f32 %v6904, %v7011
    %s7017 = scalar_lea.vmem [#allocation15], 576
    %v7018 = vld [vmem:[%s7017] sm:$0xf]
    %v7019 = vld [vmem:[%s7017 + $0x4] sm:$0xf]
    %v7020 = vld [vmem:[%s7017 + $0x8] sm:$0xf]
    %v7021 = vld [vmem:[%s7017 + $0xc] sm:$0xf]
    %v7022 = vld [vmem:[%s7017 + $0x10] sm:$0xf]
    %v7023 = vld [vmem:[%s7017 + $0x14] sm:$0xf]
    %v7024 = vld [vmem:[%s7017 + $0x18] sm:$0xf]
    %v7025 = vld [vmem:[%s7017 + $0x1c] sm:$0xf]
    %v7026 = vld [vmem:[%s7017 + $0x20] sm:$0xf]
    %v7027 = vld [vmem:[%s7017 + $0x24] sm:$0xf]
    %v7028 = vld [vmem:[%s7017 + $0x28] sm:$0xf]
    %v7029 = vld [vmem:[%s7017 + $0x2c] sm:$0xf]
    %v7030 = vld [vmem:[%s7017 + $0x30] sm:$0xf]
    %v7031 = vld [vmem:[%s7017 + $0x34] sm:$0xf]
    %v7032 = vld [vmem:[%s7017 + $0x38] sm:$0xf]
    %v7033 = vld [vmem:[%s7017 + $0x3c] sm:$0xf]
    %v7034 = vrot.slane %v6922, 1
    %v7035 = vsel %vm6055, %v6923, %v7034
    %v7036 = vpack.c.b16 %v7035, %v7035
    %v7054 = vunpack.c.l.b16 %v7018
    %v7055 = vunpack.c.l.b16 %v7019
    %v7056 = vunpack.c.l.b16 %v7020
    %v7057 = vunpack.c.l.b16 %v7021
    %v7058 = vunpack.c.l.b16 %v7022
    %v7059 = vunpack.c.l.b16 %v7023
    %v7060 = vunpack.c.l.b16 %v7024
    %v7061 = vunpack.c.l.b16 %v7025
    %v7062 = vunpack.c.l.b16 %v7026
    %v7063 = vunpack.c.l.b16 %v7027
    %v7064 = vunpack.c.l.b16 %v7028
    %v7065 = vunpack.c.l.b16 %v7029
    %v7066 = vunpack.c.l.b16 %v7030
    %v7067 = vunpack.c.l.b16 %v7031
    %v7068 = vunpack.c.l.b16 %v7032
    %v7069 = vunpack.c.l.b16 %v7033
    %v7070 = vpack.c.b16 %v7055, %v7054
    %v7071 = vpack.c.b16 %v7057, %v7056
    %v7072 = vpack.c.b16 %v7059, %v7058
    %v7073 = vpack.c.b16 %v7061, %v7060
    %v7074 = vpack.c.b16 %v7063, %v7062
    %v7075 = vpack.c.b16 %v7065, %v7064
    %v7076 = vpack.c.b16 %v7067, %v7066
    %v7077 = vpack.c.b16 %v7069, %v7068
    %7086 = vmatprep.subr.bf16.mxu0 0
    %7087 = vmatpush1.bf16.msra.mxu0 %v7077
    %7088 = vmatprep.subr.bf16.mxu0 0
    %7089 = vmatpush1.bf16.msra.mxu0 %v7076
    %7090 = vmatprep.subr.bf16.mxu0 0
    %7091 = vmatpush1.bf16.msra.mxu0 %v7075
    %7092 = vmatprep.subr.bf16.mxu0 0
    %7093 = vmatpush1.bf16.msra.mxu0 %v7074
    %7094 = vmatprep.subr.bf16.mxu0 0
    %7095 = vmatpush1.bf16.msra.mxu0 %v7073
    %7096 = vmatprep.subr.bf16.mxu0 0
    %7097 = vmatpush1.bf16.msra.mxu0 %v7072
    %7098 = vmatprep.subr.bf16.mxu0 0
    %7099 = vmatpush1.bf16.msra.mxu0 %v7071
    %7100 = vmatprep.subr.bf16.mxu0 0
    %7101 = vmatpush1.bf16.msra.mxu0 %v7070
    %7102 = vmatprep.subr.bf16.mxu0 0
    %7103 = vmatpush2.bf16.msra.mxu0 0
    %7104 = vmatprep.subr.bf16.mxu0 0
    %7105 = vmatpush2.bf16.msra.mxu0 0
    %7106 = vmatprep.subr.bf16.mxu0 0
    %7107 = vmatpush2.bf16.msra.mxu0 0
    %7108 = vmatprep.subr.bf16.mxu0 0
    %7109 = vmatpush2.bf16.msra.mxu0 0
    %7110 = vmatprep.subr.bf16.mxu0 0
    %7111 = vmatpush2.bf16.msra.mxu0 0
    %7112 = vmatprep.subr.bf16.mxu0 0
    %7113 = vmatpush2.bf16.msra.mxu0 0
    %7114 = vmatprep.subr.bf16.mxu0 0
    %7115 = vmatpush2.bf16.msra.mxu0 0
    %7116 = vmatprep.subr.bf16.mxu0 0
    %7117 = vmatpush2.bf16.msra.mxu0 0
    %7118 = vmatprep.mubr.bf16.mxu0 0
    %7119 = vmatmul.mubr.bf16.gmra.mxu0 %v7036
    %v7120 = vpop.f32.mrf.mxu0
    %v7121 = vadd.f32 0.0, %v7120
    %v7122 = vpop.f32.mrf.mxu0
    %v7123 = vpop.f32.mrf.mxu0
    %v7124 = vpop.f32.mrf.mxu0
    %7125 = vdwg.mxu0
    %v7126 = vadd.f32 %v7016, %v7121
    %s7127 = scalar_lea.vmem [#allocation15], 640
    %v7128 = vld [vmem:[%s7127] sm:$0xf]
    %v7129 = vld [vmem:[%s7127 + $0x4] sm:$0xf]
    %v7130 = vld [vmem:[%s7127 + $0x8] sm:$0xf]
    %v7131 = vld [vmem:[%s7127 + $0xc] sm:$0xf]
    %v7132 = vld [vmem:[%s7127 + $0x10] sm:$0xf]
    %v7133 = vld [vmem:[%s7127 + $0x14] sm:$0xf]
    %v7134 = vld [vmem:[%s7127 + $0x18] sm:$0xf]
    %v7135 = vld [vmem:[%s7127 + $0x1c] sm:$0xf]
    %v7136 = vld [vmem:[%s7127 + $0x20] sm:$0xf]
    %v7137 = vld [vmem:[%s7127 + $0x24] sm:$0xf]
    %v7138 = vld [vmem:[%s7127 + $0x28] sm:$0xf]
    %v7139 = vld [vmem:[%s7127 + $0x2c] sm:$0xf]
    %v7140 = vld [vmem:[%s7127 + $0x30] sm:$0xf]
    %v7141 = vld [vmem:[%s7127 + $0x34] sm:$0xf]
    %v7142 = vld [vmem:[%s7127 + $0x38] sm:$0xf]
    %v7143 = vld [vmem:[%s7127 + $0x3c] sm:$0xf]
    %v7144 = vrot.slane %v6922, 2
    %v7145 = vrot.slane %v6923, 1
    %v7146 = vsel %vm6055, %v7145, %v7144
    %v7147 = vpack.c.b16 %v7146, %v7146
    %v7165 = vunpack.c.l.b16 %v7128
    %v7166 = vunpack.c.l.b16 %v7129
    %v7167 = vunpack.c.l.b16 %v7130
    %v7168 = vunpack.c.l.b16 %v7131
    %v7169 = vunpack.c.l.b16 %v7132
    %v7170 = vunpack.c.l.b16 %v7133
    %v7171 = vunpack.c.l.b16 %v7134
    %v7172 = vunpack.c.l.b16 %v7135
    %v7173 = vunpack.c.l.b16 %v7136
    %v7174 = vunpack.c.l.b16 %v7137
    %v7175 = vunpack.c.l.b16 %v7138
    %v7176 = vunpack.c.l.b16 %v7139
    %v7177 = vunpack.c.l.b16 %v7140
    %v7178 = vunpack.c.l.b16 %v7141
    %v7179 = vunpack.c.l.b16 %v7142
    %v7180 = vunpack.c.l.b16 %v7143
    %v7181 = vpack.c.b16 %v7166, %v7165
    %v7182 = vpack.c.b16 %v7168, %v7167
    %v7183 = vpack.c.b16 %v7170, %v7169
    %v7184 = vpack.c.b16 %v7172, %v7171
    %v7185 = vpack.c.b16 %v7174, %v7173
    %v7186 = vpack.c.b16 %v7176, %v7175
    %v7187 = vpack.c.b16 %v7178, %v7177
    %v7188 = vpack.c.b16 %v7180, %v7179
    %7197 = vmatprep.subr.bf16.mxu0 0
    %7198 = vmatpush1.bf16.msra.mxu0 %v7188
    %7199 = vmatprep.subr.bf16.mxu0 0
    %7200 = vmatpush1.bf16.msra.mxu0 %v7187
    %7201 = vmatprep.subr.bf16.mxu0 0
    %7202 = vmatpush1.bf16.msra.mxu0 %v7186
    %7203 = vmatprep.subr.bf16.mxu0 0
    %7204 = vmatpush1.bf16.msra.mxu0 %v7185
    %7205 = vmatprep.subr.bf16.mxu0 0
    %7206 = vmatpush1.bf16.msra.mxu0 %v7184
    %7207 = vmatprep.subr.bf16.mxu0 0
    %7208 = vmatpush1.bf16.msra.mxu0 %v7183
    %7209 = vmatprep.subr.bf16.mxu0 0
    %7210 = vmatpush1.bf16.msra.mxu0 %v7182
    %7211 = vmatprep.subr.bf16.mxu0 0
    %7212 = vmatpush1.bf16.msra.mxu0 %v7181
    %7213 = vmatprep.subr.bf16.mxu0 0
    %7214 = vmatpush2.bf16.msra.mxu0 0
    %7215 = vmatprep.subr.bf16.mxu0 0
    %7216 = vmatpush2.bf16.msra.mxu0 0
    %7217 = vmatprep.subr.bf16.mxu0 0
    %7218 = vmatpush2.bf16.msra.mxu0 0
    %7219 = vmatprep.subr.bf16.mxu0 0
    %7220 = vmatpush2.bf16.msra.mxu0 0
    %7221 = vmatprep.subr.bf16.mxu0 0
    %7222 = vmatpush2.bf16.msra.mxu0 0
    %7223 = vmatprep.subr.bf16.mxu0 0
    %7224 = vmatpush2.bf16.msra.mxu0 0
    %7225 = vmatprep.subr.bf16.mxu0 0
    %7226 = vmatpush2.bf16.msra.mxu0 0
    %7227 = vmatprep.subr.bf16.mxu0 0
    %7228 = vmatpush2.bf16.msra.mxu0 0
    %7229 = vmatprep.mubr.bf16.mxu0 0
    %7230 = vmatmul.mubr.bf16.gmra.mxu0 %v7147
    %v7231 = vpop.f32.mrf.mxu0
    %v7232 = vadd.f32 0.0, %v7231
    %v7233 = vpop.f32.mrf.mxu0
    %v7234 = vpop.f32.mrf.mxu0
    %v7235 = vpop.f32.mrf.mxu0
    %7236 = vdwg.mxu0
    %v7237 = vadd.f32 %v7126, %v7232
    %s7238 = scalar_lea.vmem [#allocation15], 704
    %v7239 = vld [vmem:[%s7238] sm:$0xf]
    %v7240 = vld [vmem:[%s7238 + $0x4] sm:$0xf]
    %v7241 = vld [vmem:[%s7238 + $0x8] sm:$0xf]
    %v7242 = vld [vmem:[%s7238 + $0xc] sm:$0xf]
    %v7243 = vld [vmem:[%s7238 + $0x10] sm:$0xf]
    %v7244 = vld [vmem:[%s7238 + $0x14] sm:$0xf]
    %v7245 = vld [vmem:[%s7238 + $0x18] sm:$0xf]
    %v7246 = vld [vmem:[%s7238 + $0x1c] sm:$0xf]
    %v7247 = vld [vmem:[%s7238 + $0x20] sm:$0xf]
    %v7248 = vld [vmem:[%s7238 + $0x24] sm:$0xf]
    %v7249 = vld [vmem:[%s7238 + $0x28] sm:$0xf]
    %v7250 = vld [vmem:[%s7238 + $0x2c] sm:$0xf]
    %v7251 = vld [vmem:[%s7238 + $0x30] sm:$0xf]
    %v7252 = vld [vmem:[%s7238 + $0x34] sm:$0xf]
    %v7253 = vld [vmem:[%s7238 + $0x38] sm:$0xf]
    %v7254 = vld [vmem:[%s7238 + $0x3c] sm:$0xf]
    %v7255 = vrot.slane %v6922, 3
    %v7256 = vrot.slane %v6923, 2
    %v7257 = vsel %vm6055, %v7256, %v7255
    %v7258 = vpack.c.b16 %v7257, %v7257
    %v7276 = vunpack.c.l.b16 %v7239
    %v7277 = vunpack.c.l.b16 %v7240
    %v7278 = vunpack.c.l.b16 %v7241
    %v7279 = vunpack.c.l.b16 %v7242
    %v7280 = vunpack.c.l.b16 %v7243
    %v7281 = vunpack.c.l.b16 %v7244
    %v7282 = vunpack.c.l.b16 %v7245
    %v7283 = vunpack.c.l.b16 %v7246
    %v7284 = vunpack.c.l.b16 %v7247
    %v7285 = vunpack.c.l.b16 %v7248
    %v7286 = vunpack.c.l.b16 %v7249
    %v7287 = vunpack.c.l.b16 %v7250
    %v7288 = vunpack.c.l.b16 %v7251
    %v7289 = vunpack.c.l.b16 %v7252
    %v7290 = vunpack.c.l.b16 %v7253
    %v7291 = vunpack.c.l.b16 %v7254
    %v7292 = vpack.c.b16 %v7277, %v7276
    %v7293 = vpack.c.b16 %v7279, %v7278
    %v7294 = vpack.c.b16 %v7281, %v7280
    %v7295 = vpack.c.b16 %v7283, %v7282
    %v7296 = vpack.c.b16 %v7285, %v7284
    %v7297 = vpack.c.b16 %v7287, %v7286
    %v7298 = vpack.c.b16 %v7289, %v7288
    %v7299 = vpack.c.b16 %v7291, %v7290
    %7308 = vmatprep.subr.bf16.mxu0 0
    %7309 = vmatpush1.bf16.msra.mxu0 %v7299
    %7310 = vmatprep.subr.bf16.mxu0 0
    %7311 = vmatpush1.bf16.msra.mxu0 %v7298
    %7312 = vmatprep.subr.bf16.mxu0 0
    %7313 = vmatpush1.bf16.msra.mxu0 %v7297
    %7314 = vmatprep.subr.bf16.mxu0 0
    %7315 = vmatpush1.bf16.msra.mxu0 %v7296
    %7316 = vmatprep.subr.bf16.mxu0 0
    %7317 = vmatpush1.bf16.msra.mxu0 %v7295
    %7318 = vmatprep.subr.bf16.mxu0 0
    %7319 = vmatpush1.bf16.msra.mxu0 %v7294
    %7320 = vmatprep.subr.bf16.mxu0 0
    %7321 = vmatpush1.bf16.msra.mxu0 %v7293
    %7322 = vmatprep.subr.bf16.mxu0 0
    %7323 = vmatpush1.bf16.msra.mxu0 %v7292
    %7324 = vmatprep.subr.bf16.mxu0 0
    %7325 = vmatpush2.bf16.msra.mxu0 0
    %7326 = vmatprep.subr.bf16.mxu0 0
    %7327 = vmatpush2.bf16.msra.mxu0 0
    %7328 = vmatprep.subr.bf16.mxu0 0
    %7329 = vmatpush2.bf16.msra.mxu0 0
    %7330 = vmatprep.subr.bf16.mxu0 0
    %7331 = vmatpush2.bf16.msra.mxu0 0
    %7332 = vmatprep.subr.bf16.mxu0 0
    %7333 = vmatpush2.bf16.msra.mxu0 0
    %7334 = vmatprep.subr.bf16.mxu0 0
    %7335 = vmatpush2.bf16.msra.mxu0 0
    %7336 = vmatprep.subr.bf16.mxu0 0
    %7337 = vmatpush2.bf16.msra.mxu0 0
    %7338 = vmatprep.subr.bf16.mxu0 0
    %7339 = vmatpush2.bf16.msra.mxu0 0
    %7340 = vmatprep.mubr.bf16.mxu0 0
    %7341 = vmatmul.mubr.bf16.gmra.mxu0 %v7258
    %v7342 = vpop.f32.mrf.mxu0
    %v7343 = vadd.f32 0.0, %v7342
    %v7344 = vpop.f32.mrf.mxu0
    %v7345 = vpop.f32.mrf.mxu0
    %v7346 = vpop.f32.mrf.mxu0
    %7347 = vdwg.mxu0
    %v7348 = vadd.f32 %v7237, %v7343
    %s7349 = scalar_lea.vmem [#allocation15], 768
    %v7350 = vld [vmem:[%s7349] sm:$0xf]
    %v7351 = vld [vmem:[%s7349 + $0x4] sm:$0xf]
    %v7352 = vld [vmem:[%s7349 + $0x8] sm:$0xf]
    %v7353 = vld [vmem:[%s7349 + $0xc] sm:$0xf]
    %v7354 = vld [vmem:[%s7349 + $0x10] sm:$0xf]
    %v7355 = vld [vmem:[%s7349 + $0x14] sm:$0xf]
    %v7356 = vld [vmem:[%s7349 + $0x18] sm:$0xf]
    %v7357 = vld [vmem:[%s7349 + $0x1c] sm:$0xf]
    %v7358 = vld [vmem:[%s7349 + $0x20] sm:$0xf]
    %v7359 = vld [vmem:[%s7349 + $0x24] sm:$0xf]
    %v7360 = vld [vmem:[%s7349 + $0x28] sm:$0xf]
    %v7361 = vld [vmem:[%s7349 + $0x2c] sm:$0xf]
    %v7362 = vld [vmem:[%s7349 + $0x30] sm:$0xf]
    %v7363 = vld [vmem:[%s7349 + $0x34] sm:$0xf]
    %v7364 = vld [vmem:[%s7349 + $0x38] sm:$0xf]
    %v7365 = vld [vmem:[%s7349 + $0x3c] sm:$0xf]
    %v7366 = vrot.slane %v6922, 4
    %v7367 = vrot.slane %v6923, 3
    %v7368 = vsel %vm6055, %v7367, %v7366
    %v7369 = vpack.c.b16 %v7368, %v7368
    %v7387 = vunpack.c.l.b16 %v7350
    %v7388 = vunpack.c.l.b16 %v7351
    %v7389 = vunpack.c.l.b16 %v7352
    %v7390 = vunpack.c.l.b16 %v7353
    %v7391 = vunpack.c.l.b16 %v7354
    %v7392 = vunpack.c.l.b16 %v7355
    %v7393 = vunpack.c.l.b16 %v7356
    %v7394 = vunpack.c.l.b16 %v7357
    %v7395 = vunpack.c.l.b16 %v7358
    %v7396 = vunpack.c.l.b16 %v7359
    %v7397 = vunpack.c.l.b16 %v7360
    %v7398 = vunpack.c.l.b16 %v7361
    %v7399 = vunpack.c.l.b16 %v7362
    %v7400 = vunpack.c.l.b16 %v7363
    %v7401 = vunpack.c.l.b16 %v7364
    %v7402 = vunpack.c.l.b16 %v7365
    %v7403 = vpack.c.b16 %v7388, %v7387
    %v7404 = vpack.c.b16 %v7390, %v7389
    %v7405 = vpack.c.b16 %v7392, %v7391
    %v7406 = vpack.c.b16 %v7394, %v7393
    %v7407 = vpack.c.b16 %v7396, %v7395
    %v7408 = vpack.c.b16 %v7398, %v7397
    %v7409 = vpack.c.b16 %v7400, %v7399
    %v7410 = vpack.c.b16 %v7402, %v7401
    %7419 = vmatprep.subr.bf16.mxu0 0
    %7420 = vmatpush1.bf16.msra.mxu0 %v7410
    %7421 = vmatprep.subr.bf16.mxu0 0
    %7422 = vmatpush1.bf16.msra.mxu0 %v7409
    %7423 = vmatprep.subr.bf16.mxu0 0
    %7424 = vmatpush1.bf16.msra.mxu0 %v7408
    %7425 = vmatprep.subr.bf16.mxu0 0
    %7426 = vmatpush1.bf16.msra.mxu0 %v7407
    %7427 = vmatprep.subr.bf16.mxu0 0
    %7428 = vmatpush1.bf16.msra.mxu0 %v7406
    %7429 = vmatprep.subr.bf16.mxu0 0
    %7430 = vmatpush1.bf16.msra.mxu0 %v7405
    %7431 = vmatprep.subr.bf16.mxu0 0
    %7432 = vmatpush1.bf16.msra.mxu0 %v7404
    %7433 = vmatprep.subr.bf16.mxu0 0
    %7434 = vmatpush1.bf16.msra.mxu0 %v7403
    %7435 = vmatprep.subr.bf16.mxu0 0
    %7436 = vmatpush2.bf16.msra.mxu0 0
    %7437 = vmatprep.subr.bf16.mxu0 0
    %7438 = vmatpush2.bf16.msra.mxu0 0
    %7439 = vmatprep.subr.bf16.mxu0 0
    %7440 = vmatpush2.bf16.msra.mxu0 0
    %7441 = vmatprep.subr.bf16.mxu0 0
    %7442 = vmatpush2.bf16.msra.mxu0 0
    %7443 = vmatprep.subr.bf16.mxu0 0
    %7444 = vmatpush2.bf16.msra.mxu0 0
    %7445 = vmatprep.subr.bf16.mxu0 0
    %7446 = vmatpush2.bf16.msra.mxu0 0
    %7447 = vmatprep.subr.bf16.mxu0 0
    %7448 = vmatpush2.bf16.msra.mxu0 0
    %7449 = vmatprep.subr.bf16.mxu0 0
    %7450 = vmatpush2.bf16.msra.mxu0 0
    %7451 = vmatprep.mubr.bf16.mxu0 0
    %7452 = vmatmul.mubr.bf16.gmra.mxu0 %v7369
    %v7453 = vpop.f32.mrf.mxu0
    %v7454 = vadd.f32 0.0, %v7453
    %v7455 = vpop.f32.mrf.mxu0
    %v7456 = vpop.f32.mrf.mxu0
    %v7457 = vpop.f32.mrf.mxu0
    %7458 = vdwg.mxu0
    %v7459 = vadd.f32 %v7348, %v7454
    %s7460 = scalar_lea.vmem [#allocation15], 832
    %v7461 = vld [vmem:[%s7460] sm:$0xf]
    %v7462 = vld [vmem:[%s7460 + $0x4] sm:$0xf]
    %v7463 = vld [vmem:[%s7460 + $0x8] sm:$0xf]
    %v7464 = vld [vmem:[%s7460 + $0xc] sm:$0xf]
    %v7465 = vld [vmem:[%s7460 + $0x10] sm:$0xf]
    %v7466 = vld [vmem:[%s7460 + $0x14] sm:$0xf]
    %v7467 = vld [vmem:[%s7460 + $0x18] sm:$0xf]
    %v7468 = vld [vmem:[%s7460 + $0x1c] sm:$0xf]
    %v7469 = vld [vmem:[%s7460 + $0x20] sm:$0xf]
    %v7470 = vld [vmem:[%s7460 + $0x24] sm:$0xf]
    %v7471 = vld [vmem:[%s7460 + $0x28] sm:$0xf]
    %v7472 = vld [vmem:[%s7460 + $0x2c] sm:$0xf]
    %v7473 = vld [vmem:[%s7460 + $0x30] sm:$0xf]
    %v7474 = vld [vmem:[%s7460 + $0x34] sm:$0xf]
    %v7475 = vld [vmem:[%s7460 + $0x38] sm:$0xf]
    %v7476 = vld [vmem:[%s7460 + $0x3c] sm:$0xf]
    %v7477 = vrot.slane %v6922, 5
    %v7478 = vrot.slane %v6923, 4
    %v7479 = vsel %vm6055, %v7478, %v7477
    %v7480 = vpack.c.b16 %v7479, %v7479
    %v7498 = vunpack.c.l.b16 %v7461
    %v7499 = vunpack.c.l.b16 %v7462
    %v7500 = vunpack.c.l.b16 %v7463
    %v7501 = vunpack.c.l.b16 %v7464
    %v7502 = vunpack.c.l.b16 %v7465
    %v7503 = vunpack.c.l.b16 %v7466
    %v7504 = vunpack.c.l.b16 %v7467
    %v7505 = vunpack.c.l.b16 %v7468
    %v7506 = vunpack.c.l.b16 %v7469
    %v7507 = vunpack.c.l.b16 %v7470
    %v7508 = vunpack.c.l.b16 %v7471
    %v7509 = vunpack.c.l.b16 %v7472
    %v7510 = vunpack.c.l.b16 %v7473
    %v7511 = vunpack.c.l.b16 %v7474
    %v7512 = vunpack.c.l.b16 %v7475
    %v7513 = vunpack.c.l.b16 %v7476
    %v7514 = vpack.c.b16 %v7499, %v7498
    %v7515 = vpack.c.b16 %v7501, %v7500
    %v7516 = vpack.c.b16 %v7503, %v7502
    %v7517 = vpack.c.b16 %v7505, %v7504
    %v7518 = vpack.c.b16 %v7507, %v7506
    %v7519 = vpack.c.b16 %v7509, %v7508
    %v7520 = vpack.c.b16 %v7511, %v7510
    %v7521 = vpack.c.b16 %v7513, %v7512
    %7530 = vmatprep.subr.bf16.mxu0 0
    %7531 = vmatpush1.bf16.msra.mxu0 %v7521
    %7532 = vmatprep.subr.bf16.mxu0 0
    %7533 = vmatpush1.bf16.msra.mxu0 %v7520
    %7534 = vmatprep.subr.bf16.mxu0 0
    %7535 = vmatpush1.bf16.msra.mxu0 %v7519
    %7536 = vmatprep.subr.bf16.mxu0 0
    %7537 = vmatpush1.bf16.msra.mxu0 %v7518
    %7538 = vmatprep.subr.bf16.mxu0 0
    %7539 = vmatpush1.bf16.msra.mxu0 %v7517
    %7540 = vmatprep.subr.bf16.mxu0 0
    %7541 = vmatpush1.bf16.msra.mxu0 %v7516
    %7542 = vmatprep.subr.bf16.mxu0 0
    %7543 = vmatpush1.bf16.msra.mxu0 %v7515
    %7544 = vmatprep.subr.bf16.mxu0 0
    %7545 = vmatpush1.bf16.msra.mxu0 %v7514
    %7546 = vmatprep.subr.bf16.mxu0 0
    %7547 = vmatpush2.bf16.msra.mxu0 0
    %7548 = vmatprep.subr.bf16.mxu0 0
    %7549 = vmatpush2.bf16.msra.mxu0 0
    %7550 = vmatprep.subr.bf16.mxu0 0
    %7551 = vmatpush2.bf16.msra.mxu0 0
    %7552 = vmatprep.subr.bf16.mxu0 0
    %7553 = vmatpush2.bf16.msra.mxu0 0
    %7554 = vmatprep.subr.bf16.mxu0 0
    %7555 = vmatpush2.bf16.msra.mxu0 0
    %7556 = vmatprep.subr.bf16.mxu0 0
    %7557 = vmatpush2.bf16.msra.mxu0 0
    %7558 = vmatprep.subr.bf16.mxu0 0
    %7559 = vmatpush2.bf16.msra.mxu0 0
    %7560 = vmatprep.subr.bf16.mxu0 0
    %7561 = vmatpush2.bf16.msra.mxu0 0
    %7562 = vmatprep.mubr.bf16.mxu0 0
    %7563 = vmatmul.mubr.bf16.gmra.mxu0 %v7480
    %v7564 = vpop.f32.mrf.mxu0
    %v7565 = vadd.f32 0.0, %v7564
    %v7566 = vpop.f32.mrf.mxu0
    %v7567 = vpop.f32.mrf.mxu0
    %v7568 = vpop.f32.mrf.mxu0
    %7569 = vdwg.mxu0
    %v7570 = vadd.f32 %v7459, %v7565
    %s7571 = scalar_lea.vmem [#allocation15], 896
    %v7572 = vld [vmem:[%s7571] sm:$0xf]
    %v7573 = vld [vmem:[%s7571 + $0x4] sm:$0xf]
    %v7574 = vld [vmem:[%s7571 + $0x8] sm:$0xf]
    %v7575 = vld [vmem:[%s7571 + $0xc] sm:$0xf]
    %v7576 = vld [vmem:[%s7571 + $0x10] sm:$0xf]
    %v7577 = vld [vmem:[%s7571 + $0x14] sm:$0xf]
    %v7578 = vld [vmem:[%s7571 + $0x18] sm:$0xf]
    %v7579 = vld [vmem:[%s7571 + $0x1c] sm:$0xf]
    %v7580 = vld [vmem:[%s7571 + $0x20] sm:$0xf]
    %v7581 = vld [vmem:[%s7571 + $0x24] sm:$0xf]
    %v7582 = vld [vmem:[%s7571 + $0x28] sm:$0xf]
    %v7583 = vld [vmem:[%s7571 + $0x2c] sm:$0xf]
    %v7584 = vld [vmem:[%s7571 + $0x30] sm:$0xf]
    %v7585 = vld [vmem:[%s7571 + $0x34] sm:$0xf]
    %v7586 = vld [vmem:[%s7571 + $0x38] sm:$0xf]
    %v7587 = vld [vmem:[%s7571 + $0x3c] sm:$0xf]
    %v7588 = vrot.slane %v6922, 6
    %v7589 = vrot.slane %v6923, 5
    %v7590 = vsel %vm6055, %v7589, %v7588
    %v7591 = vpack.c.b16 %v7590, %v7590
    %v7609 = vunpack.c.l.b16 %v7572
    %v7610 = vunpack.c.l.b16 %v7573
    %v7611 = vunpack.c.l.b16 %v7574
    %v7612 = vunpack.c.l.b16 %v7575
    %v7613 = vunpack.c.l.b16 %v7576
    %v7614 = vunpack.c.l.b16 %v7577
    %v7615 = vunpack.c.l.b16 %v7578
    %v7616 = vunpack.c.l.b16 %v7579
    %v7617 = vunpack.c.l.b16 %v7580
    %v7618 = vunpack.c.l.b16 %v7581
    %v7619 = vunpack.c.l.b16 %v7582
    %v7620 = vunpack.c.l.b16 %v7583
    %v7621 = vunpack.c.l.b16 %v7584
    %v7622 = vunpack.c.l.b16 %v7585
    %v7623 = vunpack.c.l.b16 %v7586
    %v7624 = vunpack.c.l.b16 %v7587
    %v7625 = vpack.c.b16 %v7610, %v7609
    %v7626 = vpack.c.b16 %v7612, %v7611
    %v7627 = vpack.c.b16 %v7614, %v7613
    %v7628 = vpack.c.b16 %v7616, %v7615
    %v7629 = vpack.c.b16 %v7618, %v7617
    %v7630 = vpack.c.b16 %v7620, %v7619
    %v7631 = vpack.c.b16 %v7622, %v7621
    %v7632 = vpack.c.b16 %v7624, %v7623
    %7641 = vmatprep.subr.bf16.mxu0 0
    %7642 = vmatpush1.bf16.msra.mxu0 %v7632
    %7643 = vmatprep.subr.bf16.mxu0 0
    %7644 = vmatpush1.bf16.msra.mxu0 %v7631
    %7645 = vmatprep.subr.bf16.mxu0 0
    %7646 = vmatpush1.bf16.msra.mxu0 %v7630
    %7647 = vmatprep.subr.bf16.mxu0 0
    %7648 = vmatpush1.bf16.msra.mxu0 %v7629
    %7649 = vmatprep.subr.bf16.mxu0 0
    %7650 = vmatpush1.bf16.msra.mxu0 %v7628
    %7651 = vmatprep.subr.bf16.mxu0 0
    %7652 = vmatpush1.bf16.msra.mxu0 %v7627
    %7653 = vmatprep.subr.bf16.mxu0 0
    %7654 = vmatpush1.bf16.msra.mxu0 %v7626
    %7655 = vmatprep.subr.bf16.mxu0 0
    %7656 = vmatpush1.bf16.msra.mxu0 %v7625
    %7657 = vmatprep.subr.bf16.mxu0 0
    %7658 = vmatpush2.bf16.msra.mxu0 0
    %7659 = vmatprep.subr.bf16.mxu0 0
    %7660 = vmatpush2.bf16.msra.mxu0 0
    %7661 = vmatprep.subr.bf16.mxu0 0
    %7662 = vmatpush2.bf16.msra.mxu0 0
    %7663 = vmatprep.subr.bf16.mxu0 0
    %7664 = vmatpush2.bf16.msra.mxu0 0
    %7665 = vmatprep.subr.bf16.mxu0 0
    %7666 = vmatpush2.bf16.msra.mxu0 0
    %7667 = vmatprep.subr.bf16.mxu0 0
    %7668 = vmatpush2.bf16.msra.mxu0 0
    %7669 = vmatprep.subr.bf16.mxu0 0
    %7670 = vmatpush2.bf16.msra.mxu0 0
    %7671 = vmatprep.subr.bf16.mxu0 0
    %7672 = vmatpush2.bf16.msra.mxu0 0
    %7673 = vmatprep.mubr.bf16.mxu0 0
    %7674 = vmatmul.mubr.bf16.gmra.mxu0 %v7591
    %v7675 = vpop.f32.mrf.mxu0
    %v7676 = vadd.f32 0.0, %v7675
    %v7677 = vpop.f32.mrf.mxu0
    %v7678 = vpop.f32.mrf.mxu0
    %v7679 = vpop.f32.mrf.mxu0
    %7680 = vdwg.mxu0
    %v7681 = vadd.f32 %v7570, %v7676
    %s7682 = scalar_lea.vmem [#allocation15], 960
    %v7683 = vld [vmem:[%s7682] sm:$0xf]
    %v7684 = vld [vmem:[%s7682 + $0x4] sm:$0xf]
    %v7685 = vld [vmem:[%s7682 + $0x8] sm:$0xf]
    %v7686 = vld [vmem:[%s7682 + $0xc] sm:$0xf]
    %v7687 = vld [vmem:[%s7682 + $0x10] sm:$0xf]
    %v7688 = vld [vmem:[%s7682 + $0x14] sm:$0xf]
    %v7689 = vld [vmem:[%s7682 + $0x18] sm:$0xf]
    %v7690 = vld [vmem:[%s7682 + $0x1c] sm:$0xf]
    %v7691 = vld [vmem:[%s7682 + $0x20] sm:$0xf]
    %v7692 = vld [vmem:[%s7682 + $0x24] sm:$0xf]
    %v7693 = vld [vmem:[%s7682 + $0x28] sm:$0xf]
    %v7694 = vld [vmem:[%s7682 + $0x2c] sm:$0xf]
    %v7695 = vld [vmem:[%s7682 + $0x30] sm:$0xf]
    %v7696 = vld [vmem:[%s7682 + $0x34] sm:$0xf]
    %v7697 = vld [vmem:[%s7682 + $0x38] sm:$0xf]
    %v7698 = vld [vmem:[%s7682 + $0x3c] sm:$0xf]
    %v7699 = vrot.slane %v6922, 7
    %v7700 = vrot.slane %v6923, 6
    %v7701 = vsel %vm6055, %v7700, %v7699
    %v7702 = vpack.c.b16 %v7701, %v7701
    %v7720 = vunpack.c.l.b16 %v7683
    %v7721 = vunpack.c.l.b16 %v7684
    %v7722 = vunpack.c.l.b16 %v7685
    %v7723 = vunpack.c.l.b16 %v7686
    %v7724 = vunpack.c.l.b16 %v7687
    %v7725 = vunpack.c.l.b16 %v7688
    %v7726 = vunpack.c.l.b16 %v7689
    %v7727 = vunpack.c.l.b16 %v7690
    %v7728 = vunpack.c.l.b16 %v7691
    %v7729 = vunpack.c.l.b16 %v7692
    %v7730 = vunpack.c.l.b16 %v7693
    %v7731 = vunpack.c.l.b16 %v7694
    %v7732 = vunpack.c.l.b16 %v7695
    %v7733 = vunpack.c.l.b16 %v7696
    %v7734 = vunpack.c.l.b16 %v7697
    %v7735 = vunpack.c.l.b16 %v7698
    %v7736 = vpack.c.b16 %v7721, %v7720
    %v7737 = vpack.c.b16 %v7723, %v7722
    %v7738 = vpack.c.b16 %v7725, %v7724
    %v7739 = vpack.c.b16 %v7727, %v7726
    %v7740 = vpack.c.b16 %v7729, %v7728
    %v7741 = vpack.c.b16 %v7731, %v7730
    %v7742 = vpack.c.b16 %v7733, %v7732
    %v7743 = vpack.c.b16 %v7735, %v7734
    %7752 = vmatprep.subr.bf16.mxu0 0
    %7753 = vmatpush1.bf16.msra.mxu0 %v7743
    %7754 = vmatprep.subr.bf16.mxu0 0
    %7755 = vmatpush1.bf16.msra.mxu0 %v7742
    %7756 = vmatprep.subr.bf16.mxu0 0
    %7757 = vmatpush1.bf16.msra.mxu0 %v7741
    %7758 = vmatprep.subr.bf16.mxu0 0
    %7759 = vmatpush1.bf16.msra.mxu0 %v7740
    %7760 = vmatprep.subr.bf16.mxu0 0
    %7761 = vmatpush1.bf16.msra.mxu0 %v7739
    %7762 = vmatprep.subr.bf16.mxu0 0
    %7763 = vmatpush1.bf16.msra.mxu0 %v7738
    %7764 = vmatprep.subr.bf16.mxu0 0
    %7765 = vmatpush1.bf16.msra.mxu0 %v7737
    %7766 = vmatprep.subr.bf16.mxu0 0
    %7767 = vmatpush1.bf16.msra.mxu0 %v7736
    %7768 = vmatprep.subr.bf16.mxu0 0
    %7769 = vmatpush2.bf16.msra.mxu0 0
    %7770 = vmatprep.subr.bf16.mxu0 0
    %7771 = vmatpush2.bf16.msra.mxu0 0
    %7772 = vmatprep.subr.bf16.mxu0 0
    %7773 = vmatpush2.bf16.msra.mxu0 0
    %7774 = vmatprep.subr.bf16.mxu0 0
    %7775 = vmatpush2.bf16.msra.mxu0 0
    %7776 = vmatprep.subr.bf16.mxu0 0
    %7777 = vmatpush2.bf16.msra.mxu0 0
    %7778 = vmatprep.subr.bf16.mxu0 0
    %7779 = vmatpush2.bf16.msra.mxu0 0
    %7780 = vmatprep.subr.bf16.mxu0 0
    %7781 = vmatpush2.bf16.msra.mxu0 0
    %7782 = vmatprep.subr.bf16.mxu0 0
    %7783 = vmatpush2.bf16.msra.mxu0 0
    %7784 = vmatprep.mubr.bf16.mxu0 0
    %7785 = vmatmul.mubr.bf16.gmra.mxu0 %v7702
    %v7786 = vpop.f32.mrf.mxu0
    %v7787 = vadd.f32 0.0, %v7786
    %v7788 = vpop.f32.mrf.mxu0
    %v7789 = vpop.f32.mrf.mxu0
    %v7790 = vpop.f32.mrf.mxu0
    %7791 = vdwg.mxu0
    %v7792 = vadd.f32 %v7681, %v7787
    %v7793 = vld [vmem:[%s9] sm:$0x1]
    %v7795 = vlaneseq
    %v7796 = vshrl.u32 %v7795, 7
    %v7797 = vsub.s32 0, %v7796
    %v7798 = vrot.slane %v7793, %v7797
    %v7800 = vadd.f32 %v7792, %v7798
    %7801 = vst [vmem:[#allocation16] sm:$0x3] %v7800
    // Predicated region
    $region70: #{tpu_custom_call.1} parent=1 // pred_check
      _
    $region71: #{tpu_custom_call.1} parent=1 // pred_check_branch
      %7803 = sbr.rel (0) target = $region73
    $region72: #{tpu_custom_call.1} parent=1 // pred_region
      %s7805 = ssub.s32 32, 32
      %7806 = vsyncadd [#allocation6], %s7805
      %s7808 = sshll.u32 [#allocation16], 4
      %s7809 = int_to_ptr.vmem [resolvable:$true] %s7808
      %7811 = dma.vmem_to_hbm [thread:$0]  %s7809, 32, %s10, [#allocation6]
    $region73: #{tpu_custom_call.1} parent=1 // pred_fallthru
      _
    // Predicated region
    $region74: #{tpu_custom_call.1} parent=1 // pred_check
      _
    $region75: #{tpu_custom_call.1} parent=1 // pred_check_branch
      %7813 = sbr.rel (0) target = $region77
    $region76: #{tpu_custom_call.1} parent=1 // pred_region
      %7814 = dma.done [#allocation6], 32
    $region77: #{tpu_custom_call.1} parent=1 // pred_fallthru
      _
    %7815 = vsyncpa [#allocation5], 1
    %7816 = vsyncpa [#allocation8], 1
    %7817 = vsyncpa [#allocation11], 1
    %7818 = vsyncpa [#allocation14], 1
    %7819 = vsyncpa [#allocation6], 1

</llo_original>
